<compile_context>
chip_gen: v7x
topology: tpu7x:2x2x1
jax: 0.10.0
libtpu: 0.0.40
codegen_flags: <defaults>
</compile_context>

<pallas_src>
import math
from functools import partial

import numpy as np
import jax
import jax.numpy as jnp
from jax import lax
from jax.experimental import pallas as pl
from jax.experimental.pallas import tpu as pltpu


# Flipped off (process-wide) if this Pallas build rejects pipeline_mode=Buffered(1).
_WEIGHT_SINGLE_BUFFER = [True]


def _vmem_capacity_bytes():
    """Physical per-core VMEM bytes; conservative 64 MiB fallback (v7x-safe)."""
    try:
        cap = getattr(pltpu.get_tpu_info(), "vmem_capacity_bytes", None)
        if cap:
            return int(cap)
    except Exception:
        pass
    try:
        kind = jax.devices()[0].device_kind.lower()
        if "v5" in kind or "v6" in kind:
            return 128 * 2 ** 20
    except Exception:
        pass
    return 64 * 2 ** 20


# --------------------------------------------------------------------------
# Pallas kernel: point head (positional encoding + bilinear sample + MLP)
# Grid: (B, NP, NWC) with NWC (the W*C lane-chunk axis) as the reduction axis.
# --------------------------------------------------------------------------
def _point_head_kernel(coords_ref, feat_ref, g2_ref, phase_ref, wof_ref,
                       w0pe_ref, rw0_ref, b0_ref, wh_ref, bh_ref,
                       wot_ref, bot_ref, out_ref, acc_ref, *, ax, ay):
    wcc = pl.program_id(2)
    coords = coords_ref[0]                            # (TP, 2)  float32
    TP = coords.shape[0]
    H = feat_ref.shape[1]

    @pl.when(wcc == 0)
    def _():
        acc_ref[...] = jnp.zeros_like(acc_ref)

    # ---- separable bilinear sample (grid_sample, align_corners=False,
    #      padding_mode='zeros'); hat-function weights: max(0, 1 - |idx - pos|)
    #      reproduce the exact bilinear weights incl. zero padding ----
    ix = coords[:, 0:1] * ax - 0.5                    # (TP, 1) pixel x
    iy = coords[:, 1:2] * ay - 0.5                    # (TP, 1) pixel y

    h_idx = lax.broadcasted_iota(jnp.int32, (TP, H), 1).astype(jnp.float32)
    ry = jnp.maximum(1.0 - jnp.abs(h_idx - iy), 0.0)  # (TP, H) row weights
    # bf16 row weights straight into the MXU against the bf16 feature chunk
    rowmix = jnp.dot(ry.astype(jnp.bfloat16), feat_ref[0],
                     preferred_element_type=jnp.float32)          # (TP, WCc)

    wof = wof_ref[...]                                # (1, WCc) lane -> w index
    rxe = jnp.maximum(1.0 - jnp.abs(wof - ix), 0.0)   # (TP, WCc) col weights
    weighted = (rowmix * rxe).astype(jnp.bfloat16)

    # first-layer image contribution; the "sum over w" is folded into
    # rw0 = tile(W0_img, (W, 1)) (bf16); accumulate over W*C chunks in fp32.
    acc_ref[...] += jnp.dot(weighted, rw0_ref[...],
                            preferred_element_type=jnp.float32)   # (TP, ch)

    @pl.when(wcc == pl.num_programs(2) - 1)
    def _():
        # positional encoding: pe = [sin(2*pi*loc@G) | cos(..)] as one sin
        # over a duplicated projection + pi/2 phase (single EUP pass).
        loc = 2.0 * coords - 1.0
        proj = (2.0 * math.pi) * (loc[:, 0:1] * g2_ref[0:1, :]
                                  + loc[:, 1:2] * g2_ref[1:2, :])
        pe = jnp.sin(proj + phase_ref[...])                       # (TP, ch)

        h = (acc_ref[...]
             + jnp.dot(pe, w0pe_ref[...], preferred_element_type=jnp.float32)
             + b0_ref[...])
        h = jnp.maximum(h, 0.0)
        for l in range(wh_ref.shape[0]):              # static unroll (Dropout = id)
            h = jnp.maximum(
                jnp.dot(h, wh_ref[l], preferred_element_type=jnp.float32)
                + bh_ref[l], 0.0)

        # final layer emitted already transposed -> lane-dense (nc, TP) block
        out = lax.dot_general(wot_ref[...], h, (((1,), (1,)), ((), ())),
                              preferred_element_type=jnp.float32) + bot_ref[...]
        out_ref[0] = out


def _pick_wc_chunk(WC, target=2048):
    """Largest multiple of 128 that divides WC and is <= target (else full WC)."""
    if WC <= target:
        return WC
    c = (target // 128) * 128
    while c >= 128:
        if WC % c == 0:
            return c
        c -= 128
    return WC


def _pick_tp(P_pad, WCc, H, ch, nc, cap_bytes):
    """Largest TP (multiple of 128, dividing P_pad) fitting the VMEM budget."""
    fixed = (2 * H * WCc * 2        # feature chunk, double-buffered bf16
             + 2 * WCc * ch * 2     # rw0 chunk, double-buffered bf16
             + 2 * WCc * 4          # lane->w map
             + 8 * ch * ch * 4      # pe / hidden / output weights (generous)
             + (6 << 20))           # compiler-internal slack
    per_tp = 4 * (4 * WCc           # ~4 live (TP, WCc) temporaries
                  + H               # ry
                  + 8 * ch          # acc / pe / h / out block
                  + 2 * nc + 8)
    tp_budget = max((cap_bytes - fixed) // per_tp, 128)
    m = P_pad // 128
    d = max(1, min(m, int(tp_budget) // 128))
    while d > 1 and m % d != 0:
        d -= 1
    return 128 * d


def point_head_pallas(coords, feats_hwc, params, H, W, C, scale):
    """coords: (B, P, 2) f32, feats_hwc: (B, H, W*C) bf16 -> logits (B, nc, P)."""
    B, P, _ = coords.shape
    WC = W * C
    ch = params["w0"].shape[1]
    nc = params["wo_t"].shape[0]
    nh = params["wh"].shape[0]
    assert W / scale != 1.0 and H / scale != 1.0, "degenerate scale (division by zero)"

    # coordinate transform folded from point_sample_fine_grained_features +
    # grid_sample(align_corners=False):  pixel_x = px*(W/s-2)/(W/s-1)*W - 0.5
    ax = float((W / scale - 2.0) / (W / scale - 1.0) * W)
    ay = float((H / scale - 2.0) / (H / scale - 1.0) * H)

    # pad P up to a multiple of 128 -> lane-dense (nc, TP) output block
    # (unmasked stores, full MXU M-dim); padded rows are sliced off afterwards.
    P_pad = ((P + 127) // 128) * 128
    if P_pad != P:
        pad = jnp.broadcast_to(coords[:, -1:, :], (B, P_pad - P, 2))
        coords = jnp.concatenate([coords, pad], axis=1)

    cap = int(0.8 * _vmem_capacity_bytes())           # leave compiler headroom
    WCc = _pick_wc_chunk(WC)                          # W*C lane chunk (reduction axis)
    NWC = WC // WCc
    TP = _pick_tp(P_pad, WCc, H, ch, nc, cap)
    NP = P_pad // TP

    # kernel-side weight precomputes (tiny host-side XLA ops)
    w0pe = params["w0"][:ch]                                        # (ch, ch)
    rw0 = jnp.tile(params["w0"][ch:], (W, 1)).astype(jnp.bfloat16)  # (W*C, ch)
    wof = (jnp.arange(WC, dtype=jnp.int32) // C).astype(jnp.float32).reshape(1, WC)

    # ---- VMEM budget -> scoped limit (generation-aware cap) ----
    wgt_once = sum(int(a.size) * a.dtype.itemsize
                   for a in (params["g2"], params["phase"], w0pe, params["b0"],
                             params["wh"], params["bh"], params["wo_t"],
                             params["bo_t"]))
    blk = 2 * (TP * 2 * 4 + H * WCc * 2 + WCc * ch * 2 + WCc * 4 + nc * TP * 4)
    inter = 4 * (4 * TP * WCc + TP * H + 6 * TP * ch)
    need = blk + 2 * wgt_once + inter + TP * ch * 4
    vmem_limit = int(min(max(int(1.25 * need), 32 * 2 ** 20), cap))
    # TODO(synk): if H ever grows so large that an (H, WCc) bf16 chunk itself is
    # a VMEM problem, add an H-chunk "arbitrary" grid axis (ry rows outside the
    # chunk are zero, so partial sums just add).

    kernel = partial(_point_head_kernel, ax=ax, ay=ay)
    out_shape = jax.ShapeDtypeStruct((B, nc, P_pad), jnp.float32)

    def run(single_buffer_weights):
        if single_buffer_weights:
            def const(shape):
                return pl.BlockSpec(shape, lambda b, p, w: (0,) * len(shape),
                                    pipeline_mode=pl.Buffered(1))
        else:
            def const(shape):
                return pl.BlockSpec(shape, lambda b, p, w: (0,) * len(shape))

        return pl.pallas_call(
            kernel,
            out_shape=out_shape,
            grid=(B, NP, NWC),
            in_specs=[
                pl.BlockSpec((1, TP, 2), lambda b, p, w: (b, p, 0)),   # coords
                pl.BlockSpec((1, H, WCc), lambda b, p, w: (b, 0, w)),  # feature chunk
                const((2, ch)),                                        # g2
                const((1, ch)),                                        # phase
                pl.BlockSpec((1, WCc), lambda b, p, w: (0, w)),        # lane -> w map
                const((ch, ch)),                                       # first layer, pe slice
                pl.BlockSpec((WCc, ch), lambda b, p, w: (w, 0)),       # rw0 chunk (bf16)
                const((1, ch)),                                        # b0
                const((nh, ch, ch)),                                   # hidden weights
                const((nh, 1, ch)),                                    # hidden biases
                const((nc, ch)),                                       # last layer (T)
                const((nc, 1)),                                        # last bias (T)
            ],
            out_specs=pl.BlockSpec((1, nc, TP), lambda b, p, w: (b, 0, p)),
            scratch_shapes=[pltpu.VMEM((TP, ch), jnp.float32)],
            compiler_params=pltpu.CompilerParams(
                dimension_semantics=("parallel", "parallel", "arbitrary"),
                vmem_limit_bytes=vmem_limit),
        )(coords, feats_hwc, params["g2"], params["phase"], wof,
          w0pe, rw0, params["b0"], params["wh"], params["bh"],
          params["wo_t"], params["bo_t"])

    if _WEIGHT_SINGLE_BUFFER[0]:
        try:
            out = run(True)
        except Exception:
            _WEIGHT_SINGLE_BUFFER[0] = False
            out = run(False)
    else:
        out = run(False)
    return out[:, :, :P]


# --------------------------------------------------------------------------
# Pure-JAX glue (matches PyTorch helpers exactly)
# --------------------------------------------------------------------------
def calculate_uncertainty(logits):
    if logits.shape[1] == 1:
        g = logits
    else:
        s = -jnp.sort(-logits, axis=1)
        g = s[:, 0:1] - s[:, 1:2]
    return -jnp.abs(g)


def upsample2x_bilinear(x):
    """F.interpolate(scale_factor=2, mode='bilinear', align_corners=False)."""
    def interp_axis(a, axis, size):
        o = jnp.arange(2 * size, dtype=jnp.float32)
        src = jnp.maximum((o + 0.5) / 2.0 - 0.5, 0.0)
        i0 = jnp.clip(jnp.floor(src).astype(jnp.int32), 0, size - 1)
        i1 = jnp.minimum(i0 + 1, size - 1)
        lam = src - i0.astype(jnp.float32)
        a0 = jnp.take(a, i0, axis=axis)
        a1 = jnp.take(a, i1, axis=axis)
        shape = [1] * a.ndim
        shape[axis] = 2 * size
        lam = lam.reshape(shape)
        return a0 * (1.0 - lam) + a1 * lam

    B, C, H, W = x.shape
    x = interp_axis(x, 2, H)
    x = interp_axis(x, 3, W)
    return x


def _point_head_reference(coords, feats_hwc, params, H, W, scale):
    """Pure-jnp reference of the kernel (PyTorch-faithful formulation, fp32)."""
    B, P, _ = coords.shape
    C = feats_hwc.shape[-1] // W
    feats = feats_hwc.reshape(B, H, W, C)
    loc = 2.0 * coords - 1.0
    proj = 2.0 * math.pi * (loc @ params["g"])
    pe = jnp.concatenate([jnp.sin(proj), jnp.cos(proj)], axis=-1)
    ax = (W / scale - 2.0) / (W / scale - 1.0) * W
    ay = (H / scale - 2.0) / (H / scale - 1.0) * H
    ix = coords[..., 0] * ax - 0.5
    iy = coords[..., 1] * ay - 0.5
    ix0 = jnp.floor(ix); iy0 = jnp.floor(iy)
    fx = ix - ix0; fy = iy - iy0

    def gather(cy, cx):
        valid = (cy >= 0) & (cy <= H - 1) & (cx >= 0) & (cx <= W - 1)
        iyi = jnp.clip(cy, 0, H - 1).astype(jnp.int32)
        ixi = jnp.clip(cx, 0, W - 1).astype(jnp.int32)
        v = feats[jnp.arange(B)[:, None], iyi, ixi]
        return jnp.where(valid[..., None], v, 0.0)

    sampled = (gather(iy0, ix0) * ((1 - fy) * (1 - fx))[..., None]
               + gather(iy0, ix0 + 1) * ((1 - fy) * fx)[..., None]
               + gather(iy0 + 1, ix0) * (fy * (1 - fx))[..., None]
               + gather(iy0 + 1, ix0 + 1) * (fy * fx)[..., None])
    x = jnp.concatenate([pe, sampled], axis=-1)
    h = jnp.maximum(x @ params["w0"] + params["b0"][0], 0.0)
    for l in range(params["wh"].shape[0]):
        h = jnp.maximum(h @ params["wh"][l] + params["bh"][l, 0], 0.0)
    return h @ params["wo"] + params["bo"][0]        # (B, P, nc)


# --------------------------------------------------------------------------
# BodyMaskHead
# --------------------------------------------------------------------------
class BodyMaskHeadPallas:
    def __init__(self, in_channels, train_num_points, subdivision_steps, scale,
                 num_layers, channels, image_feature_enabled,
                 positional_encoding_enabled, num_classes=1, key=None):
        # kernel is specialized for the standard config (both feature paths on)
        assert image_feature_enabled and positional_encoding_enabled
        assert channels % 2 == 0 and num_layers >= 2
        self.num_classes = num_classes
        self.train_num_points = train_num_points
        self.subdivision_steps = subdivision_steps
        self.scale = scale
        self.feat_scale = int(2 ** subdivision_steps * scale)
        self.channels = channels
        self.in_feat_channels = in_channels
        n_hidden = (num_layers + 1) - 2          # ch->ch Linear layers
        in_total = channels + in_channels

        if key is None:
            key = jax.random.PRNGKey(0)
        ks = jax.random.split(key, 4)

        def lin(k, fan_in, fan_out):
            bound = 1.0 / np.sqrt(fan_in)
            kw, kb = jax.random.split(k)
            w = jax.random.uniform(kw, (fan_in, fan_out), jnp.float32, -bound, bound)
            b = jax.random.uniform(kb, (1, fan_out), jnp.float32, -bound, bound)
            return w, b

        g = jax.random.normal(ks[0], (2, channels // 2), jnp.float32)
        w0, b0 = lin(ks[1], in_total, channels)
        wh_list, bh_list = [], []
        for l in range(n_hidden):
            w, b = lin(jax.random.fold_in(ks[2], l), channels, channels)
            wh_list.append(w)
            bh_list.append(b)
        wh = jnp.stack(wh_list, axis=0)          # (n_hidden, ch, ch)
        bh = jnp.stack(bh_list, axis=0)          # (n_hidden, 1, ch)
        wo, bo = lin(ks[3], channels, num_classes)

        ch = channels
        self.params = {
            # reference-layout parameters (match the PyTorch module exactly)
            "g": g, "w0": w0, "b0": b0, "wh": wh, "bh": bh, "wo": wo, "bo": bo,
            # kernel-side precomputes:
            #   pe = sin(2*pi*loc@[g|g] + [0 | pi/2]) == [sin(..) | cos(..)]
            "g2": jnp.concatenate([g, g], axis=1),                         # (2, ch)
            "phase": jnp.concatenate(
                [jnp.zeros((1, ch // 2), jnp.float32),
                 jnp.full((1, ch // 2), 0.5 * math.pi, jnp.float32)], axis=1),
            "wo_t": jnp.transpose(wo),                                     # (nc, ch)
            "bo_t": jnp.transpose(bo),                                     # (nc, 1)
        }

    # ---- BodyMaskHead.forward ----
    def forward(self, features, skls=None, gt_masks=None, mode="fit"):
        if mode == "fit":
            # TODO(synk): _sample_train_points_with_skeleton uses torch.nonzero /
            # randperm with data-dependent shapes — no static-shape Pallas/JAX
            # equivalent; training path is not implemented here.
            raise NotImplementedError("mode='fit' is not implemented")
        return jax.nn.sigmoid(self._subdivision_inference(features))

    # ---- SimplifiedPointRendMaskHead._subdivision_inference ----
    def _subdivision_inference(self, features):
        B, C, H, W = features.shape
        fs = self.feat_scale
        # one-time repack to (B, H, W*C) bf16: lane-dense, half the HBM stream
        feats_hwc = (jnp.transpose(features, (0, 2, 3, 1))
                     .reshape(B, H, W * C).astype(jnp.bfloat16))
        num_points = (H * W) // (fs ** 2)
        Hg, Wg = H // fs, W // fs

        mask_logits = None
        point_indices = None
        for _ in range(self.subdivision_steps + 1):
            if mask_logits is None:
                # regular (Hg, Wg) grid of centers in [0,1]^2 (affine_grid semantics)
                xs = (jnp.arange(Wg, dtype=jnp.float32) + 0.5) / Wg
                ys = (jnp.arange(Hg, dtype=jnp.float32) + 0.5) / Hg
                gx, gy = jnp.meshgrid(xs, ys, indexing="xy")
                coords = jnp.stack([gx.reshape(-1), gy.reshape(-1)], axis=-1)
                coords = jnp.broadcast_to(coords[None], (B, Hg * Wg, 2))
            else:
                mask_logits = upsample2x_bilinear(mask_logits)
                unc = calculate_uncertainty(mask_logits)
                _, _, hm, wm = mask_logits.shape
                k = min(hm * wm, num_points)
                _, point_indices = lax.top_k(unc.reshape(B, hm * wm), k)
                px = 1.0 / (2.0 * wm) + (point_indices % wm).astype(jnp.float32) / wm
                py = 1.0 / (2.0 * hm) + (point_indices // wm).astype(jnp.float32) / hm
                coords = jnp.stack([px, py], axis=-1)

            # kernel already emits lane-dense (B, nc, P); no transpose needed
            logits = point_head_pallas(coords, feats_hwc, self.params,
                                       H, W, C, self.scale)

            if mask_logits is None:
                mask_logits = logits.reshape(B, self.num_classes, Hg, Wg)
            else:
                _, nc, hm, wm = mask_logits.shape
                flat = mask_logits.reshape(B, nc, hm * wm)
                bidx = jnp.arange(B)[:, None, None]
                cidx = jnp.arange(nc)[None, :, None]
                flat = flat.at[bidx, cidx, point_indices[:, None, :]].set(logits)
                mask_logits = flat.reshape(B, nc, hm, wm)
        return mask_logits


# --------------------------------------------------------------------------
if __name__ == "__main__":
    B, C, H, W = 2, 4, 16, 16
    key = jax.random.PRNGKey(0)
    k_feat, k_params = jax.random.split(key)
    features = jax.random.normal(k_feat, (B, C, H, W), jnp.float32)

    head = BodyMaskHeadPallas(
        in_channels=C, train_num_points=8, subdivision_steps=1, scale=1,
        num_layers=2, channels=32, image_feature_enabled=True,
        positional_encoding_enabled=True, num_classes=1, key=k_params)

    # sanity check: Pallas point head vs pure-jnp reference on the regular grid
    # (kernel uses bf16 ry/weighted/rw0 on the MXU path -> slightly wider tol)
    fs = head.feat_scale
    Hg, Wg = H // fs, W // fs
    xs = (jnp.arange(Wg, dtype=jnp.float32) + 0.5) / Wg
    ys = (jnp.arange(Hg, dtype=jnp.float32) + 0.5) / Hg
    gx, gy = jnp.meshgrid(xs, ys, indexing="xy")
    coords0 = jnp.broadcast_to(
        jnp.stack([gx.reshape(-1), gy.reshape(-1)], axis=-1)[None], (B, Hg * Wg, 2))
    feats_hwc = (jnp.transpose(features, (0, 2, 3, 1))
                 .reshape(B, H, W * C).astype(jnp.bfloat16))
    got = point_head_pallas(coords0, feats_hwc, head.params, H, W, C, head.scale)
    want = _point_head_reference(coords0, feats_hwc.astype(jnp.float32),
                                 head.params, H, W, head.scale)
    np.testing.assert_allclose(np.asarray(got),
                               np.asarray(jnp.transpose(want, (0, 2, 1))),
                               rtol=3e-2, atol=2e-2)

    out = head.forward(features, mode="predict")
    jax.block_until_ready(out)
    assert out.shape == (B, 1, H, W)
    assert bool(jnp.all(jnp.isfinite(out)))
    print("KERNEL_OK")
</pallas_src>

<mosaic_0001>
module attributes {stable_mosaic.version = 11 : i64} {
  func.func @_point_head_kernel(%arg0: i32, %arg1: i32, %arg2: i32, %arg3: memref<1x128x2xf32, #tpu.memory_space<vmem>>, %arg4: memref<1x16x64xbf16, #tpu.memory_space<vmem>>, %arg5: memref<2x32xf32, #tpu.memory_space<vmem>>, %arg6: memref<1x32xf32, #tpu.memory_space<vmem>>, %arg7: memref<1x64xf32, #tpu.memory_space<vmem>>, %arg8: memref<32x32xf32, #tpu.memory_space<vmem>>, %arg9: memref<64x32xbf16, #tpu.memory_space<vmem>>, %arg10: memref<1x32xf32, #tpu.memory_space<vmem>>, %arg11: memref<1x32x32xf32, #tpu.memory_space<vmem>>, %arg12: memref<1x1x32xf32, #tpu.memory_space<vmem>>, %arg13: memref<1x32xf32, #tpu.memory_space<vmem>>, %arg14: memref<1x1xf32, #tpu.memory_space<vmem>>, %arg15: memref<1x1x128xf32, #tpu.memory_space<vmem>>, %arg16: memref<128x32xf32, #tpu.memory_space<vmem>>) attributes {dimension_semantics = [#tpu.dimension_semantics<parallel>, #tpu.dimension_semantics<parallel>, #tpu.dimension_semantics<arbitrary>], iteration_bounds = array<i64: 2, 1, 1>, scalar_prefetch = 0 : i64, scratch_operands = 1 : i64, tpu.core_type = #tpu.core_type<tc>, window_params = [{transform_indices = @transform_0, window_bounds = array<i64: 1, 128, 2>}, {transform_indices = @transform_1, window_bounds = array<i64: 1, 16, 64>}, {pipeline_mode = #tpu.pipeline_mode<synchronous>, transform_indices = @transform_2, window_bounds = array<i64: 2, 32>}, {pipeline_mode = #tpu.pipeline_mode<synchronous>, transform_indices = @transform_3, window_bounds = array<i64: 1, 32>}, {transform_indices = @transform_4, window_bounds = array<i64: 1, 64>}, {pipeline_mode = #tpu.pipeline_mode<synchronous>, transform_indices = @transform_5, window_bounds = array<i64: 32, 32>}, {transform_indices = @transform_6, window_bounds = array<i64: 64, 32>}, {pipeline_mode = #tpu.pipeline_mode<synchronous>, transform_indices = @transform_7, window_bounds = array<i64: 1, 32>}, {pipeline_mode = #tpu.pipeline_mode<synchronous>, transform_indices = @transform_8, window_bounds = array<i64: 1, 32, 32>}, {pipeline_mode = #tpu.pipeline_mode<synchronous>, transform_indices = @transform_9, window_bounds = array<i64: 1, 1, 32>}, {pipeline_mode = #tpu.pipeline_mode<synchronous>, transform_indices = @transform_10, window_bounds = array<i64: 1, 32>}, {pipeline_mode = #tpu.pipeline_mode<synchronous>, transform_indices = @transform_11, window_bounds = array<i64: 1, 1>}, {transform_indices = @transform_12, window_bounds = array<i64: 1, 1, 128>}]} {
    %c0 = arith.constant 0 : index
    %c0_0 = arith.constant 0 : index
    %c0_1 = arith.constant 0 : index
    %0 = vector.load %arg3[%c0, %c0_0, %c0_1] : memref<1x128x2xf32, #tpu.memory_space<vmem>>, vector<1x128x2xf32>
    %1 = vector.shape_cast %0 : vector<1x128x2xf32> to vector<128x2xf32>
    %c0_i32 = arith.constant 0 : i32
    %2 = arith.cmpi eq, %arg2, %c0_i32 : i32
    %3 = arith.extui %2 : i1 to i32
    %c0_i32_2 = arith.constant 0 : i32
    %4 = arith.cmpi ne, %3, %c0_i32_2 : i32
    scf.if %4 {
      %cst_25 = arith.constant 0.000000e+00 : f32
      %47 = vector.broadcast %cst_25 : f32 to vector<128x32xf32>
      %c0_26 = arith.constant 0 : index
      %c0_27 = arith.constant 0 : index
      %48 = vector.load %arg16[%c0_26, %c0_27] : memref<128x32xf32, #tpu.memory_space<vmem>>, vector<128x32xf32>
      tpu.vector_store %arg16[%c0_26, %c0_27], %47 {strides = array<i32>} : memref<128x32xf32, #tpu.memory_space<vmem>>, vector<128x32xf32>,
    } else {
    }
    %5 = vector.extract_strided_slice %1 {offsets = [0, 0], sizes = [128, 1], strides = [1, 1]} : vector<128x2xf32> to vector<128x1xf32>
    %cst = arith.constant 14.9333334 : f32
    %6 = vector.broadcast %cst : f32 to vector<128x1xf32>
    %7 = arith.mulf %5, %6 : vector<128x1xf32>
    %cst_3 = arith.constant 5.000000e-01 : f32
    %8 = vector.broadcast %cst_3 : f32 to vector<128x1xf32>
    %9 = arith.subf %7, %8 : vector<128x1xf32>
    %10 = vector.extract_strided_slice %1 {offsets = [0, 1], sizes = [128, 1], strides = [1, 1]} : vector<128x2xf32> to vector<128x1xf32>
    %cst_4 = arith.constant 14.9333334 : f32
    %11 = vector.broadcast %cst_4 : f32 to vector<128x1xf32>
    %12 = arith.mulf %10, %11 : vector<128x1xf32>
    %cst_5 = arith.constant 5.000000e-01 : f32
    %13 = vector.broadcast %cst_5 : f32 to vector<128x1xf32>
    %14 = arith.subf %12, %13 : vector<128x1xf32>
    %15 = tpu.iota {dimensions = array<i32: 1>} : vector<128x16xi32>
    %16 = arith.sitofp %15 : vector<128x16xi32> to vector<128x16xf32>
    %17 = vector.broadcast %14 : vector<128x1xf32> to vector<128x16xf32>
    %18 = arith.subf %16, %17 : vector<128x16xf32>
    %19 = math.absf %18 : vector<128x16xf32>
    %cst_6 = arith.constant 1.000000e+00 : f32
    %20 = vector.broadcast %cst_6 : f32 to vector<128x16xf32>
    %21 = arith.subf %20, %19 : vector<128x16xf32>
    %cst_7 = arith.constant 0.000000e+00 : f32
    %22 = vector.broadcast %cst_7 : f32 to vector<128x16xf32>
    %23 = arith.maximumf %21, %22 : vector<128x16xf32>
    %24 = arith.truncf %23 : vector<128x16xf32> to vector<128x16xbf16>
    %c0_8 = arith.constant 0 : index
    %c0_9 = arith.constant 0 : index
    %c0_10 = arith.constant 0 : index
    %25 = vector.load %arg4[%c0_8, %c0_9, %c0_10] : memref<1x16x64xbf16, #tpu.memory_space<vmem>>, vector<1x16x64xbf16>
    %26 = vector.shape_cast %25 : vector<1x16x64xbf16> to vector<16x64xbf16>
    %cst_11 = arith.constant dense<0.000000e+00> : vector<128x64xf32>
    %27 = tpu.matmul %24, %26, %cst_11 {dimension_numbers = #tpu.dot_dimension_numbers<[1], [0], [0], [1], [0, 0, 1, 1], [], []>} : vector<128x16xbf16>, vector<16x64xbf16>, vector<128x64xf32> -> vector<128x64xf32>
    %c0_12 = arith.constant 0 : index
    %c0_13 = arith.constant 0 : index
    %28 = vector.load %arg7[%c0_12, %c0_13] : memref<1x64xf32, #tpu.memory_space<vmem>>, vector<1x64xf32>
    %29 = vector.broadcast %28 : vector<1x64xf32> to vector<128x64xf32>
    %30 = vector.broadcast %9 : vector<128x1xf32> to vector<128x64xf32>
    %31 = arith.subf %29, %30 : vector<128x64xf32>
    %32 = math.absf %31 : vector<128x64xf32>
    %cst_14 = arith.constant 1.000000e+00 : f32
    %33 = vector.broadcast %cst_14 : f32 to vector<128x64xf32>
    %34 = arith.subf %33, %32 : vector<128x64xf32>
    %cst_15 = arith.constant 0.000000e+00 : f32
    %35 = vector.broadcast %cst_15 : f32 to vector<128x64xf32>
    %36 = arith.maximumf %34, %35 : vector<128x64xf32>
    %37 = arith.mulf %27, %36 : vector<128x64xf32>
    %38 = arith.truncf %37 : vector<128x64xf32> to vector<128x64xbf16>
    %c0_16 = arith.constant 0 : index
    %c0_17 = arith.constant 0 : index
    %39 = vector.load %arg16[%c0_16, %c0_17] : memref<128x32xf32, #tpu.memory_space<vmem>>, vector<128x32xf32>
    %c0_18 = arith.constant 0 : index
    %c0_19 = arith.constant 0 : index
    %40 = vector.load %arg9[%c0_18, %c0_19] : memref<64x32xbf16, #tpu.memory_space<vmem>>, vector<64x32xbf16>
    %cst_20 = arith.constant dense<0.000000e+00> : vector<128x32xf32>
    %41 = tpu.matmul %38, %40, %cst_20 {dimension_numbers = #tpu.dot_dimension_numbers<[1], [0], [0], [1], [0, 0, 1, 1], [], []>} : vector<128x64xbf16>, vector<64x32xbf16>, vector<128x32xf32> -> vector<128x32xf32>
    %42 = arith.addf %39, %41 : vector<128x32xf32>
    %c0_21 = arith.constant 0 : index
    %c0_22 = arith.constant 0 : index
    %43 = vector.load %arg16[%c0_21, %c0_22] : memref<128x32xf32, #tpu.memory_space<vmem>>, vector<128x32xf32>
    tpu.vector_store %arg16[%c0_21, %c0_22], %42 {strides = array<i32>} : memref<128x32xf32, #tpu.memory_space<vmem>>, vector<128x32xf32>,
    %c0_i32_23 = arith.constant 0 : i32
    %44 = arith.cmpi eq, %arg2, %c0_i32_23 : i32
    %45 = arith.extui %44 : i1 to i32
    %c0_i32_24 = arith.constant 0 : i32
    %46 = arith.cmpi ne, %45, %c0_i32_24 : i32
    scf.if %46 {
      %cst_25 = arith.constant 2.000000e+00 : f32
      %47 = vector.broadcast %cst_25 : f32 to vector<128x2xf32>
      %48 = arith.mulf %47, %1 : vector<128x2xf32>
      %cst_26 = arith.constant 1.000000e+00 : f32
      %49 = vector.broadcast %cst_26 : f32 to vector<128x2xf32>
      %50 = arith.subf %48, %49 : vector<128x2xf32>
      %51 = vector.extract_strided_slice %50 {offsets = [0, 0], sizes = [128, 1], strides = [1, 1]} : vector<128x2xf32> to vector<128x1xf32>
      %c0_27 = arith.constant 0 : index
      %c0_28 = arith.constant 0 : index
      %52 = vector.load %arg5[%c0_27, %c0_28] : memref<2x32xf32, #tpu.memory_space<vmem>>, vector<1x32xf32>
      %53 = vector.broadcast %51 : vector<128x1xf32> to vector<128x32xf32>
      %54 = vector.broadcast %52 : vector<1x32xf32> to vector<128x32xf32>
      %55 = arith.mulf %53, %54 : vector<128x32xf32>
      %56 = vector.extract_strided_slice %50 {offsets = [0, 1], sizes = [128, 1], strides = [1, 1]} : vector<128x2xf32> to vector<128x1xf32>
      %c1 = arith.constant 1 : index
      %c0_29 = arith.constant 0 : index
      %57 = vector.load %arg5[%c1, %c0_29] : memref<2x32xf32, #tpu.memory_space<vmem>>, vector<1x32xf32>
      %58 = vector.broadcast %56 : vector<128x1xf32> to vector<128x32xf32>
      %59 = vector.broadcast %57 : vector<1x32xf32> to vector<128x32xf32>
      %60 = arith.mulf %58, %59 : vector<128x32xf32>
      %61 = arith.addf %55, %60 : vector<128x32xf32>
      %cst_30 = arith.constant 6.28318548 : f32
      %62 = vector.broadcast %cst_30 : f32 to vector<128x32xf32>
      %63 = arith.mulf %62, %61 : vector<128x32xf32>
      %c0_31 = arith.constant 0 : index
      %c0_32 = arith.constant 0 : index
      %64 = vector.load %arg6[%c0_31, %c0_32] : memref<1x32xf32, #tpu.memory_space<vmem>>, vector<1x32xf32>
      %65 = vector.broadcast %64 : vector<1x32xf32> to vector<128x32xf32>
      %66 = arith.addf %63, %65 : vector<128x32xf32>
      %67 = math.sin %66 : vector<128x32xf32>
      %c0_33 = arith.constant 0 : index
      %c0_34 = arith.constant 0 : index
      %68 = vector.load %arg16[%c0_33, %c0_34] : memref<128x32xf32, #tpu.memory_space<vmem>>, vector<128x32xf32>
      %c0_35 = arith.constant 0 : index
      %c0_36 = arith.constant 0 : index
      %69 = vector.load %arg8[%c0_35, %c0_36] : memref<32x32xf32, #tpu.memory_space<vmem>>, vector<32x32xf32>
      %cst_37 = arith.constant dense<0.000000e+00> : vector<128x32xf32>
      %70 = tpu.matmul %67, %69, %cst_37 {dimension_numbers = #tpu.dot_dimension_numbers<[1], [0], [0], [1], [0, 0, 1, 1], [], []>} : vector<128x32xf32>, vector<32x32xf32>, vector<128x32xf32> -> vector<128x32xf32>
      %71 = arith.addf %68, %70 : vector<128x32xf32>
      %c0_38 = arith.constant 0 : index
      %c0_39 = arith.constant 0 : index
      %72 = vector.load %arg10[%c0_38, %c0_39] : memref<1x32xf32, #tpu.memory_space<vmem>>, vector<1x32xf32>
      %73 = vector.broadcast %72 : vector<1x32xf32> to vector<128x32xf32>
      %74 = arith.addf %71, %73 : vector<128x32xf32>
      %cst_40 = arith.constant 0.000000e+00 : f32
      %75 = vector.broadcast %cst_40 : f32 to vector<128x32xf32>
      %76 = arith.maximumf %74, %75 : vector<128x32xf32>
      %c0_41 = arith.constant 0 : index
      %c0_42 = arith.constant 0 : index
      %c0_43 = arith.constant 0 : index
      %77 = vector.load %arg11[%c0_41, %c0_42, %c0_43] : memref<1x32x32xf32, #tpu.memory_space<vmem>>, vector<1x32x32xf32>
      %78 = vector.shape_cast %77 : vector<1x32x32xf32> to vector<32x32xf32>
      %cst_44 = arith.constant dense<0.000000e+00> : vector<128x32xf32>
      %79 = tpu.matmul %76, %78, %cst_44 {dimension_numbers = #tpu.dot_dimension_numbers<[1], [0], [0], [1], [0, 0, 1, 1], [], []>} : vector<128x32xf32>, vector<32x32xf32>, vector<128x32xf32> -> vector<128x32xf32>
      %c0_45 = arith.constant 0 : index
      %c0_46 = arith.constant 0 : index
      %c0_47 = arith.constant 0 : index
      %80 = vector.load %arg12[%c0_45, %c0_46, %c0_47] : memref<1x1x32xf32, #tpu.memory_space<vmem>>, vector<1x1x32xf32>
      %81 = vector.shape_cast %80 : vector<1x1x32xf32> to vector<1x32xf32>
      %82 = vector.broadcast %81 : vector<1x32xf32> to vector<128x32xf32>
      %83 = arith.addf %79, %82 : vector<128x32xf32>
      %cst_48 = arith.constant 0.000000e+00 : f32
      %84 = vector.broadcast %cst_48 : f32 to vector<128x32xf32>
      %85 = arith.maximumf %83, %84 : vector<128x32xf32>
      %c0_49 = arith.constant 0 : index
      %c0_50 = arith.constant 0 : index
      %86 = vector.load %arg13[%c0_49, %c0_50] : memref<1x32xf32, #tpu.memory_space<vmem>>, vector<1x32xf32>
      %cst_51 = arith.constant dense<0.000000e+00> : vector<1x128xf32>
      %87 = tpu.matmul %86, %85, %cst_51 {dimension_numbers = #tpu.dot_dimension_numbers<[1], [1], [0], [0], [0, 0, 1, 0], [], []>} : vector<1x32xf32>, vector<128x32xf32>, vector<1x128xf32> -> vector<1x128xf32>
      %c0_52 = arith.constant 0 : index
      %c0_53 = arith.constant 0 : index
      %88 = vector.load %arg14[%c0_52, %c0_53] : memref<1x1xf32, #tpu.memory_space<vmem>>, vector<1x1xf32>
      %89 = vector.broadcast %88 : vector<1x1xf32> to vector<1x128xf32>
      %90 = arith.addf %87, %89 : vector<1x128xf32>
      %c0_54 = arith.constant 0 : index
      %c0_55 = arith.constant 0 : index
      %c0_56 = arith.constant 0 : index
      %91 = vector.load %arg15[%c0_54, %c0_55, %c0_56] : memref<1x1x128xf32, #tpu.memory_space<vmem>>, vector<1x1x128xf32>
      %92 = vector.shape_cast %91 : vector<1x1x128xf32> to vector<1x128xf32>
      %93 = vector.shape_cast %90 : vector<1x128xf32> to vector<1x1x128xf32>
      tpu.vector_store %arg15[%c0_54, %c0_55, %c0_56], %93 {strides = array<i32>} : memref<1x1x128xf32, #tpu.memory_space<vmem>>, vector<1x1x128xf32>,
    } else {
    }
    return
  }
  func.func @transform_0(%arg0: i32, %arg1: i32, %arg2: i32) -> (i32, i32, i32) {
    %c0_i32 = arith.constant 0 : i32
    %c0_i32_0 = arith.constant 0 : i32
    return %arg0, %arg1, %c0_i32 : i32, i32, i32
  }
  func.func @transform_1(%arg0: i32, %arg1: i32, %arg2: i32) -> (i32, i32, i32) {
    %c0_i32 = arith.constant 0 : i32
    %c0_i32_0 = arith.constant 0 : i32
    return %arg0, %c0_i32, %arg2 : i32, i32, i32
  }
  func.func @transform_2(%arg0: i32, %arg1: i32, %arg2: i32) -> (i32, i32) {
    %c0_i32 = arith.constant 0 : i32
    %c0_i32_0 = arith.constant 0 : i32
    %c0_i32_1 = arith.constant 0 : i32
    return %c0_i32, %c0_i32_0 : i32, i32
  }
  func.func @transform_3(%arg0: i32, %arg1: i32, %arg2: i32) -> (i32, i32) {
    %c0_i32 = arith.constant 0 : i32
    %c0_i32_0 = arith.constant 0 : i32
    %c0_i32_1 = arith.constant 0 : i32
    return %c0_i32, %c0_i32_0 : i32, i32
  }
  func.func @transform_4(%arg0: i32, %arg1: i32, %arg2: i32) -> (i32, i32) {
    %c0_i32 = arith.constant 0 : i32
    %c0_i32_0 = arith.constant 0 : i32
    return %c0_i32, %arg2 : i32, i32
  }
  func.func @transform_5(%arg0: i32, %arg1: i32, %arg2: i32) -> (i32, i32) {
    %c0_i32 = arith.constant 0 : i32
    %c0_i32_0 = arith.constant 0 : i32
    %c0_i32_1 = arith.constant 0 : i32
    return %c0_i32, %c0_i32_0 : i32, i32
  }
  func.func @transform_6(%arg0: i32, %arg1: i32, %arg2: i32) -> (i32, i32) {
    %c0_i32 = arith.constant 0 : i32
    %c0_i32_0 = arith.constant 0 : i32
    return %arg2, %c0_i32 : i32, i32
  }
  func.func @transform_7(%arg0: i32, %arg1: i32, %arg2: i32) -> (i32, i32) {
    %c0_i32 = arith.constant 0 : i32
    %c0_i32_0 = arith.constant 0 : i32
    %c0_i32_1 = arith.constant 0 : i32
    return %c0_i32, %c0_i32_0 : i32, i32
  }
  func.func @transform_8(%arg0: i32, %arg1: i32, %arg2: i32) -> (i32, i32, i32) {
    %c0_i32 = arith.constant 0 : i32
    %c0_i32_0 = arith.constant 0 : i32
    %c0_i32_1 = arith.constant 0 : i32
    %c0_i32_2 = arith.constant 0 : i32
    return %c0_i32, %c0_i32_0, %c0_i32_1 : i32, i32, i32
  }
  func.func @transform_9(%arg0: i32, %arg1: i32, %arg2: i32) -> (i32, i32, i32) {
    %c0_i32 = arith.constant 0 : i32
    %c0_i32_0 = arith.constant 0 : i32
    %c0_i32_1 = arith.constant 0 : i32
    %c0_i32_2 = arith.constant 0 : i32
    return %c0_i32, %c0_i32_0, %c0_i32_1 : i32, i32, i32
  }
  func.func @transform_10(%arg0: i32, %arg1: i32, %arg2: i32) -> (i32, i32) {
    %c0_i32 = arith.constant 0 : i32
    %c0_i32_0 = arith.constant 0 : i32
    %c0_i32_1 = arith.constant 0 : i32
    return %c0_i32, %c0_i32_0 : i32, i32
  }
  func.func @transform_11(%arg0: i32, %arg1: i32, %arg2: i32) -> (i32, i32) {
    %c0_i32 = arith.constant 0 : i32
    %c0_i32_0 = arith.constant 0 : i32
    %c0_i32_1 = arith.constant 0 : i32
    return %c0_i32, %c0_i32_0 : i32, i32
  }
  func.func @transform_12(%arg0: i32, %arg1: i32, %arg2: i32) -> (i32, i32, i32) {
    %c0_i32 = arith.constant 0 : i32
    %c0_i32_0 = arith.constant 0 : i32
    return %arg0, %c0_i32, %arg1 : i32, i32, i32
  }
}

module attributes {stable_mosaic.version = 11 : i64} {
  func.func @_point_head_kernel(%arg0: i32, %arg1: i32, %arg2: i32, %arg3: memref<1x128x2xf32, #tpu.memory_space<vmem>>, %arg4: memref<1x16x64xbf16, #tpu.memory_space<vmem>>, %arg5: memref<2x32xf32, #tpu.memory_space<vmem>>, %arg6: memref<1x32xf32, #tpu.memory_space<vmem>>, %arg7: memref<1x64xf32, #tpu.memory_space<vmem>>, %arg8: memref<32x32xf32, #tpu.memory_space<vmem>>, %arg9: memref<64x32xbf16, #tpu.memory_space<vmem>>, %arg10: memref<1x32xf32, #tpu.memory_space<vmem>>, %arg11: memref<1x32x32xf32, #tpu.memory_space<vmem>>, %arg12: memref<1x1x32xf32, #tpu.memory_space<vmem>>, %arg13: memref<1x32xf32, #tpu.memory_space<vmem>>, %arg14: memref<1x1xf32, #tpu.memory_space<vmem>>, %arg15: memref<1x1x128xf32, #tpu.memory_space<vmem>>, %arg16: memref<128x32xf32, #tpu.memory_space<vmem>>) attributes {dimension_semantics = [#tpu.dimension_semantics<parallel>, #tpu.dimension_semantics<parallel>, #tpu.dimension_semantics<arbitrary>], iteration_bounds = array<i64: 2, 1, 1>, scalar_prefetch = 0 : i64, scratch_operands = 1 : i64, tpu.core_type = #tpu.core_type<tc>, window_params = [{transform_indices = @transform_0, window_bounds = array<i64: 1, 128, 2>}, {transform_indices = @transform_1, window_bounds = array<i64: 1, 16, 64>}, {pipeline_mode = #tpu.pipeline_mode<synchronous>, transform_indices = @transform_2, window_bounds = array<i64: 2, 32>}, {pipeline_mode = #tpu.pipeline_mode<synchronous>, transform_indices = @transform_3, window_bounds = array<i64: 1, 32>}, {transform_indices = @transform_4, window_bounds = array<i64: 1, 64>}, {pipeline_mode = #tpu.pipeline_mode<synchronous>, transform_indices = @transform_5, window_bounds = array<i64: 32, 32>}, {transform_indices = @transform_6, window_bounds = array<i64: 64, 32>}, {pipeline_mode = #tpu.pipeline_mode<synchronous>, transform_indices = @transform_7, window_bounds = array<i64: 1, 32>}, {pipeline_mode = #tpu.pipeline_mode<synchronous>, transform_indices = @transform_8, window_bounds = array<i64: 1, 32, 32>}, {pipeline_mode = #tpu.pipeline_mode<synchronous>, transform_indices = @transform_9, window_bounds = array<i64: 1, 1, 32>}, {pipeline_mode = #tpu.pipeline_mode<synchronous>, transform_indices = @transform_10, window_bounds = array<i64: 1, 32>}, {pipeline_mode = #tpu.pipeline_mode<synchronous>, transform_indices = @transform_11, window_bounds = array<i64: 1, 1>}, {transform_indices = @transform_12, window_bounds = array<i64: 1, 1, 128>}]} {
    %c0 = arith.constant 0 : index
    %c0_0 = arith.constant 0 : index
    %c0_1 = arith.constant 0 : index
    %0 = vector.load %arg3[%c0, %c0_0, %c0_1] : memref<1x128x2xf32, #tpu.memory_space<vmem>>, vector<1x128x2xf32>
    %1 = vector.shape_cast %0 : vector<1x128x2xf32> to vector<128x2xf32>
    %c0_i32 = arith.constant 0 : i32
    %2 = arith.cmpi eq, %arg2, %c0_i32 : i32
    %3 = arith.extui %2 : i1 to i32
    %c0_i32_2 = arith.constant 0 : i32
    %4 = arith.cmpi ne, %3, %c0_i32_2 : i32
    scf.if %4 {
      %cst_25 = arith.constant 0.000000e+00 : f32
      %47 = vector.broadcast %cst_25 : f32 to vector<128x32xf32>
      %c0_26 = arith.constant 0 : index
      %c0_27 = arith.constant 0 : index
      %48 = vector.load %arg16[%c0_26, %c0_27] : memref<128x32xf32, #tpu.memory_space<vmem>>, vector<128x32xf32>
      tpu.vector_store %arg16[%c0_26, %c0_27], %47 {strides = array<i32>} : memref<128x32xf32, #tpu.memory_space<vmem>>, vector<128x32xf32>,
    } else {
    }
    %5 = vector.extract_strided_slice %1 {offsets = [0, 0], sizes = [128, 1], strides = [1, 1]} : vector<128x2xf32> to vector<128x1xf32>
    %cst = arith.constant 14.9333334 : f32
    %6 = vector.broadcast %cst : f32 to vector<128x1xf32>
    %7 = arith.mulf %5, %6 : vector<128x1xf32>
    %cst_3 = arith.constant 5.000000e-01 : f32
    %8 = vector.broadcast %cst_3 : f32 to vector<128x1xf32>
    %9 = arith.subf %7, %8 : vector<128x1xf32>
    %10 = vector.extract_strided_slice %1 {offsets = [0, 1], sizes = [128, 1], strides = [1, 1]} : vector<128x2xf32> to vector<128x1xf32>
    %cst_4 = arith.constant 14.9333334 : f32
    %11 = vector.broadcast %cst_4 : f32 to vector<128x1xf32>
    %12 = arith.mulf %10, %11 : vector<128x1xf32>
    %cst_5 = arith.constant 5.000000e-01 : f32
    %13 = vector.broadcast %cst_5 : f32 to vector<128x1xf32>
    %14 = arith.subf %12, %13 : vector<128x1xf32>
    %15 = tpu.iota {dimensions = array<i32: 1>} : vector<128x16xi32>
    %16 = arith.sitofp %15 : vector<128x16xi32> to vector<128x16xf32>
    %17 = vector.broadcast %14 : vector<128x1xf32> to vector<128x16xf32>
    %18 = arith.subf %16, %17 : vector<128x16xf32>
    %19 = math.absf %18 : vector<128x16xf32>
    %cst_6 = arith.constant 1.000000e+00 : f32
    %20 = vector.broadcast %cst_6 : f32 to vector<128x16xf32>
    %21 = arith.subf %20, %19 : vector<128x16xf32>
    %cst_7 = arith.constant 0.000000e+00 : f32
    %22 = vector.broadcast %cst_7 : f32 to vector<128x16xf32>
    %23 = arith.maximumf %21, %22 : vector<128x16xf32>
    %24 = arith.truncf %23 : vector<128x16xf32> to vector<128x16xbf16>
    %c0_8 = arith.constant 0 : index
    %c0_9 = arith.constant 0 : index
    %c0_10 = arith.constant 0 : index
    %25 = vector.load %arg4[%c0_8, %c0_9, %c0_10] : memref<1x16x64xbf16, #tpu.memory_space<vmem>>, vector<1x16x64xbf16>
    %26 = vector.shape_cast %25 : vector<1x16x64xbf16> to vector<16x64xbf16>
    %cst_11 = arith.constant dense<0.000000e+00> : vector<128x64xf32>
    %27 = tpu.matmul %24, %26, %cst_11 {dimension_numbers = #tpu.dot_dimension_numbers<[1], [0], [0], [1], [0, 0, 1, 1], [], []>} : vector<128x16xbf16>, vector<16x64xbf16>, vector<128x64xf32> -> vector<128x64xf32>
    %c0_12 = arith.constant 0 : index
    %c0_13 = arith.constant 0 : index
    %28 = vector.load %arg7[%c0_12, %c0_13] : memref<1x64xf32, #tpu.memory_space<vmem>>, vector<1x64xf32>
    %29 = vector.broadcast %28 : vector<1x64xf32> to vector<128x64xf32>
    %30 = vector.broadcast %9 : vector<128x1xf32> to vector<128x64xf32>
    %31 = arith.subf %29, %30 : vector<128x64xf32>
    %32 = math.absf %31 : vector<128x64xf32>
    %cst_14 = arith.constant 1.000000e+00 : f32
    %33 = vector.broadcast %cst_14 : f32 to vector<128x64xf32>
    %34 = arith.subf %33, %32 : vector<128x64xf32>
    %cst_15 = arith.constant 0.000000e+00 : f32
    %35 = vector.broadcast %cst_15 : f32 to vector<128x64xf32>
    %36 = arith.maximumf %34, %35 : vector<128x64xf32>
    %37 = arith.mulf %27, %36 : vector<128x64xf32>
    %38 = arith.truncf %37 : vector<128x64xf32> to vector<128x64xbf16>
    %c0_16 = arith.constant 0 : index
    %c0_17 = arith.constant 0 : index
    %39 = vector.load %arg16[%c0_16, %c0_17] : memref<128x32xf32, #tpu.memory_space<vmem>>, vector<128x32xf32>
    %c0_18 = arith.constant 0 : index
    %c0_19 = arith.constant 0 : index
    %40 = vector.load %arg9[%c0_18, %c0_19] : memref<64x32xbf16, #tpu.memory_space<vmem>>, vector<64x32xbf16>
    %cst_20 = arith.constant dense<0.000000e+00> : vector<128x32xf32>
    %41 = tpu.matmul %38, %40, %cst_20 {dimension_numbers = #tpu.dot_dimension_numbers<[1], [0], [0], [1], [0, 0, 1, 1], [], []>} : vector<128x64xbf16>, vector<64x32xbf16>, vector<128x32xf32> -> vector<128x32xf32>
    %42 = arith.addf %39, %41 : vector<128x32xf32>
    %c0_21 = arith.constant 0 : index
    %c0_22 = arith.constant 0 : index
    %43 = vector.load %arg16[%c0_21, %c0_22] : memref<128x32xf32, #tpu.memory_space<vmem>>, vector<128x32xf32>
    tpu.vector_store %arg16[%c0_21, %c0_22], %42 {strides = array<i32>} : memref<128x32xf32, #tpu.memory_space<vmem>>, vector<128x32xf32>,
    %c0_i32_23 = arith.constant 0 : i32
    %44 = arith.cmpi eq, %arg2, %c0_i32_23 : i32
    %45 = arith.extui %44 : i1 to i32
    %c0_i32_24 = arith.constant 0 : i32
    %46 = arith.cmpi ne, %45, %c0_i32_24 : i32
    scf.if %46 {
      %cst_25 = arith.constant 2.000000e+00 : f32
      %47 = vector.broadcast %cst_25 : f32 to vector<128x2xf32>
      %48 = arith.mulf %47, %1 : vector<128x2xf32>
      %cst_26 = arith.constant 1.000000e+00 : f32
      %49 = vector.broadcast %cst_26 : f32 to vector<128x2xf32>
      %50 = arith.subf %48, %49 : vector<128x2xf32>
      %51 = vector.extract_strided_slice %50 {offsets = [0, 0], sizes = [128, 1], strides = [1, 1]} : vector<128x2xf32> to vector<128x1xf32>
      %c0_27 = arith.constant 0 : index
      %c0_28 = arith.constant 0 : index
      %52 = vector.load %arg5[%c0_27, %c0_28] : memref<2x32xf32, #tpu.memory_space<vmem>>, vector<1x32xf32>
      %53 = vector.broadcast %51 : vector<128x1xf32> to vector<128x32xf32>
      %54 = vector.broadcast %52 : vector<1x32xf32> to vector<128x32xf32>
      %55 = arith.mulf %53, %54 : vector<128x32xf32>
      %56 = vector.extract_strided_slice %50 {offsets = [0, 1], sizes = [128, 1], strides = [1, 1]} : vector<128x2xf32> to vector<128x1xf32>
      %c1 = arith.constant 1 : index
      %c0_29 = arith.constant 0 : index
      %57 = vector.load %arg5[%c1, %c0_29] : memref<2x32xf32, #tpu.memory_space<vmem>>, vector<1x32xf32>
      %58 = vector.broadcast %56 : vector<128x1xf32> to vector<128x32xf32>
      %59 = vector.broadcast %57 : vector<1x32xf32> to vector<128x32xf32>
      %60 = arith.mulf %58, %59 : vector<128x32xf32>
      %61 = arith.addf %55, %60 : vector<128x32xf32>
      %cst_30 = arith.constant 6.28318548 : f32
      %62 = vector.broadcast %cst_30 : f32 to vector<128x32xf32>
      %63 = arith.mulf %62, %61 : vector<128x32xf32>
      %c0_31 = arith.constant 0 : index
      %c0_32 = arith.constant 0 : index
      %64 = vector.load %arg6[%c0_31, %c0_32] : memref<1x32xf32, #tpu.memory_space<vmem>>, vector<1x32xf32>
      %65 = vector.broadcast %64 : vector<1x32xf32> to vector<128x32xf32>
      %66 = arith.addf %63, %65 : vector<128x32xf32>
      %67 = math.sin %66 : vector<128x32xf32>
      %c0_33 = arith.constant 0 : index
      %c0_34 = arith.constant 0 : index
      %68 = vector.load %arg16[%c0_33, %c0_34] : memref<128x32xf32, #tpu.memory_space<vmem>>, vector<128x32xf32>
      %c0_35 = arith.constant 0 : index
      %c0_36 = arith.constant 0 : index
      %69 = vector.load %arg8[%c0_35, %c0_36] : memref<32x32xf32, #tpu.memory_space<vmem>>, vector<32x32xf32>
      %cst_37 = arith.constant dense<0.000000e+00> : vector<128x32xf32>
      %70 = tpu.matmul %67, %69, %cst_37 {dimension_numbers = #tpu.dot_dimension_numbers<[1], [0], [0], [1], [0, 0, 1, 1], [], []>} : vector<128x32xf32>, vector<32x32xf32>, vector<128x32xf32> -> vector<128x32xf32>
      %71 = arith.addf %68, %70 : vector<128x32xf32>
      %c0_38 = arith.constant 0 : index
      %c0_39 = arith.constant 0 : index
      %72 = vector.load %arg10[%c0_38, %c0_39] : memref<1x32xf32, #tpu.memory_space<vmem>>, vector<1x32xf32>
      %73 = vector.broadcast %72 : vector<1x32xf32> to vector<128x32xf32>
      %74 = arith.addf %71, %73 : vector<128x32xf32>
      %cst_40 = arith.constant 0.000000e+00 : f32
      %75 = vector.broadcast %cst_40 : f32 to vector<128x32xf32>
      %76 = arith.maximumf %74, %75 : vector<128x32xf32>
      %c0_41 = arith.constant 0 : index
      %c0_42 = arith.constant 0 : index
      %c0_43 = arith.constant 0 : index
      %77 = vector.load %arg11[%c0_41, %c0_42, %c0_43] : memref<1x32x32xf32, #tpu.memory_space<vmem>>, vector<1x32x32xf32>
      %78 = vector.shape_cast %77 : vector<1x32x32xf32> to vector<32x32xf32>
      %cst_44 = arith.constant dense<0.000000e+00> : vector<128x32xf32>
      %79 = tpu.matmul %76, %78, %cst_44 {dimension_numbers = #tpu.dot_dimension_numbers<[1], [0], [0], [1], [0, 0, 1, 1], [], []>} : vector<128x32xf32>, vector<32x32xf32>, vector<128x32xf32> -> vector<128x32xf32>
      %c0_45 = arith.constant 0 : index
      %c0_46 = arith.constant 0 : index
      %c0_47 = arith.constant 0 : index
      %80 = vector.load %arg12[%c0_45, %c0_46, %c0_47] : memref<1x1x32xf32, #tpu.memory_space<vmem>>, vector<1x1x32xf32>
      %81 = vector.shape_cast %80 : vector<1x1x32xf32> to vector<1x32xf32>
      %82 = vector.broadcast %81 : vector<1x32xf32> to vector<128x32xf32>
      %83 = arith.addf %79, %82 : vector<128x32xf32>
      %cst_48 = arith.constant 0.000000e+00 : f32
      %84 = vector.broadcast %cst_48 : f32 to vector<128x32xf32>
      %85 = arith.maximumf %83, %84 : vector<128x32xf32>
      %c0_49 = arith.constant 0 : index
      %c0_50 = arith.constant 0 : index
      %86 = vector.load %arg13[%c0_49, %c0_50] : memref<1x32xf32, #tpu.memory_space<vmem>>, vector<1x32xf32>
      %cst_51 = arith.constant dense<0.000000e+00> : vector<1x128xf32>
      %87 = tpu.matmul %86, %85, %cst_51 {dimension_numbers = #tpu.dot_dimension_numbers<[1], [1], [0], [0], [0, 0, 1, 0], [], []>} : vector<1x32xf32>, vector<128x32xf32>, vector<1x128xf32> -> vector<1x128xf32>
      %c0_52 = arith.constant 0 : index
      %c0_53 = arith.constant 0 : index
      %88 = vector.load %arg14[%c0_52, %c0_53] : memref<1x1xf32, #tpu.memory_space<vmem>>, vector<1x1xf32>
      %89 = vector.broadcast %88 : vector<1x1xf32> to vector<1x128xf32>
      %90 = arith.addf %87, %89 : vector<1x128xf32>
      %c0_54 = arith.constant 0 : index
      %c0_55 = arith.constant 0 : index
      %c0_56 = arith.constant 0 : index
      %91 = vector.load %arg15[%c0_54, %c0_55, %c0_56] : memref<1x1x128xf32, #tpu.memory_space<vmem>>, vector<1x1x128xf32>
      %92 = vector.shape_cast %91 : vector<1x1x128xf32> to vector<1x128xf32>
      %93 = vector.shape_cast %90 : vector<1x128xf32> to vector<1x1x128xf32>
      tpu.vector_store %arg15[%c0_54, %c0_55, %c0_56], %93 {strides = array<i32>} : memref<1x1x128xf32, #tpu.memory_space<vmem>>, vector<1x1x128xf32>,
    } else {
    }
    return
  }
  func.func @transform_0(%arg0: i32, %arg1: i32, %arg2: i32) -> (i32, i32, i32) {
    %c0_i32 = arith.constant 0 : i32
    %c0_i32_0 = arith.constant 0 : i32
    return %arg0, %arg1, %c0_i32 : i32, i32, i32
  }
  func.func @transform_1(%arg0: i32, %arg1: i32, %arg2: i32) -> (i32, i32, i32) {
    %c0_i32 = arith.constant 0 : i32
    %c0_i32_0 = arith.constant 0 : i32
    return %arg0, %c0_i32, %arg2 : i32, i32, i32
  }
  func.func @transform_2(%arg0: i32, %arg1: i32, %arg2: i32) -> (i32, i32) {
    %c0_i32 = arith.constant 0 : i32
    %c0_i32_0 = arith.constant 0 : i32
    %c0_i32_1 = arith.constant 0 : i32
    return %c0_i32, %c0_i32_0 : i32, i32
  }
  func.func @transform_3(%arg0: i32, %arg1: i32, %arg2: i32) -> (i32, i32) {
    %c0_i32 = arith.constant 0 : i32
    %c0_i32_0 = arith.constant 0 : i32
    %c0_i32_1 = arith.constant 0 : i32
    return %c0_i32, %c0_i32_0 : i32, i32
  }
  func.func @transform_4(%arg0: i32, %arg1: i32, %arg2: i32) -> (i32, i32) {
    %c0_i32 = arith.constant 0 : i32
    %c0_i32_0 = arith.constant 0 : i32
    return %c0_i32, %arg2 : i32, i32
  }
  func.func @transform_5(%arg0: i32, %arg1: i32, %arg2: i32) -> (i32, i32) {
    %c0_i32 = arith.constant 0 : i32
    %c0_i32_0 = arith.constant 0 : i32
    %c0_i32_1 = arith.constant 0 : i32
    return %c0_i32, %c0_i32_0 : i32, i32
  }
  func.func @transform_6(%arg0: i32, %arg1: i32, %arg2: i32) -> (i32, i32) {
    %c0_i32 = arith.constant 0 : i32
    %c0_i32_0 = arith.constant 0 : i32
    return %arg2, %c0_i32 : i32, i32
  }
  func.func @transform_7(%arg0: i32, %arg1: i32, %arg2: i32) -> (i32, i32) {
    %c0_i32 = arith.constant 0 : i32
    %c0_i32_0 = arith.constant 0 : i32
    %c0_i32_1 = arith.constant 0 : i32
    return %c0_i32, %c0_i32_0 : i32, i32
  }
  func.func @transform_8(%arg0: i32, %arg1: i32, %arg2: i32) -> (i32, i32, i32) {
    %c0_i32 = arith.constant 0 : i32
    %c0_i32_0 = arith.constant 0 : i32
    %c0_i32_1 = arith.constant 0 : i32
    %c0_i32_2 = arith.constant 0 : i32
    return %c0_i32, %c0_i32_0, %c0_i32_1 : i32, i32, i32
  }
  func.func @transform_9(%arg0: i32, %arg1: i32, %arg2: i32) -> (i32, i32, i32) {
    %c0_i32 = arith.constant 0 : i32
    %c0_i32_0 = arith.constant 0 : i32
    %c0_i32_1 = arith.constant 0 : i32
    %c0_i32_2 = arith.constant 0 : i32
    return %c0_i32, %c0_i32_0, %c0_i32_1 : i32, i32, i32
  }
  func.func @transform_10(%arg0: i32, %arg1: i32, %arg2: i32) -> (i32, i32) {
    %c0_i32 = arith.constant 0 : i32
    %c0_i32_0 = arith.constant 0 : i32
    %c0_i32_1 = arith.constant 0 : i32
    return %c0_i32, %c0_i32_0 : i32, i32
  }
  func.func @transform_11(%arg0: i32, %arg1: i32, %arg2: i32) -> (i32, i32) {
    %c0_i32 = arith.constant 0 : i32
    %c0_i32_0 = arith.constant 0 : i32
    %c0_i32_1 = arith.constant 0 : i32
    return %c0_i32, %c0_i32_0 : i32, i32
  }
  func.func @transform_12(%arg0: i32, %arg1: i32, %arg2: i32) -> (i32, i32, i32) {
    %c0_i32 = arith.constant 0 : i32
    %c0_i32_0 = arith.constant 0 : i32
    return %arg0, %c0_i32, %arg1 : i32, i32, i32
  }
}

</mosaic_0001>

<llo_original>
// kernel: tpu_custom_call.1
$region0: #{tpu_custom_call.1}
  #allocation0 [shape = 'u32[]', space=smem, size = 0x4, offset = 0x4, fixed_abs, tag = 'smem constant byte address 0x4 - core index']
  #allocation1 [shape = 'u32[144,128]{1,0:T(1,128)}', space=vmem, size = 0x12000, scoped, tag = 'internal scratch']
  #allocation2 [shape = 'f32[128,32]{1,0:T(8,128)}', space=vmem, size = 0x10000, scoped, tag = 'scratch operand']
  #allocation3 [shape = 'f32[1,1]{1,0:T(1,128)S(1)}', space=vmem, size = 0x200, scoped, tag = 'scoped memory for tpu_custom_call.1']
  %s0 = inlined_call_operand.vmem [shape: f32[2,128,2], index: 0, kind: input, shape index: {}]
  %s1 = inlined_call_operand.vmem [shape: bf16[2,16,64], index: 1, kind: input, shape index: {}]
  %s2 = inlined_call_operand.vmem [shape: f32[2,32], index: 2, kind: input, shape index: {}]
  %s3 = inlined_call_operand.vmem [shape: f32[1,32], index: 3, kind: input, shape index: {}]
  %s4 = inlined_call_operand.vmem [shape: f32[1,64], index: 4, kind: input, shape index: {}]
  %s5 = inlined_call_operand.vmem [shape: f32[32,32], index: 5, kind: input, shape index: {}]
  %s6 = inlined_call_operand.vmem [shape: bf16[64,32], index: 6, kind: input, shape index: {}]
  %s7 = inlined_call_operand.vmem [shape: f32[1,32], index: 7, kind: input, shape index: {}]
  %s8 = inlined_call_operand.vmem [shape: f32[1,32,32], index: 8, kind: input, shape index: {}]
  %s9 = inlined_call_operand.vmem [shape: f32[1,1,32], index: 9, kind: input, shape index: {}]
  %s10 = inlined_call_operand.vmem [shape: f32[1,32], index: 10, kind: input, shape index: {}]
  %s11 = inlined_call_operand.<no memory space> [shape: f32[1,1], index: 11, kind: input, shape index: {}]
  %s12 = inlined_call_operand.hbm [shape: f32[2,1,128], index: 12, kind: output, shape index: {}]
  %s13 = sld [smem:[#allocation0]]
  $region89: #{tpu_custom_call.1} parent=0
    _
  %s15 = ssub.s32 1, %s13
  %s16 = scalar_select 0, %s15, %s13
  %v17 = vstv %s11
  %18 = vst [vmem:[#allocation3] sm:$0x1] %v17
  $region1: #{tpu_custom_call.1} parent=0
    #allocation4 [shape = 'u8[1024]{0}', space=vmem, size = 0x400, scoped, tag = 'output window, operand 0']
    #allocation5 [shape = 's32[2]{0}', space=sflag, size = 0x8, scoped, tag = 'scoped memory for tpu_custom_call.1']
    %19 = vsyncpa [#allocation5], 0
    %s20 = scalar_lea.sflag [#allocation5], 1
    %21 = vsyncpa %s20, 0
    loop: start=0, step=1, limit=4
    $region2: #{tpu_custom_call.1} parent=1 // loop_pre_header
      _
    $region3: #{tpu_custom_call.1} parent=1 // loop_header
      %s23 = sphi 0, %s27
      %p24 = scmp.ge.s32.totalorder %s23, 4
      %s30 = sphi 0, %s49
      %s31 = sphi 0, %s45
      %s32 = sphi 0, %s41
      %s33 = sphi 0, %s30
      %s34 = sphi 0, %s31
      %s35 = sphi 0, %s32
      %s36 = sphi 0, %s33
      %s37 = sphi 0, %s34
      %s38 = sphi 0, %s35
      %s54 = sphi 0, %s56
      %s57 = sphi 0, %s54
      %s58 = sphi 0, %s57
      %s74 = sphi 0, %s58
      %s82 = sphi 0, %s84
      %s85 = sphi 0, %s82
      %s86 = sphi 0, %s85
      %s102 = sphi 0, %s86
      %s106 = sphi 0, %s106
      %s108 = sphi 0, %s106
      %s109 = sphi 0, %s108
      %s123 = sphi 0, %s109
      %s127 = sphi 0, %s127
      %s129 = sphi 0, %s127
      %s130 = sphi 0, %s129
      %s144 = sphi 0, %s130
      %s150 = sphi 0, %s152
      %s153 = sphi 0, %s150
      %s154 = sphi 0, %s153
      %s170 = sphi 0, %s154
      %s174 = sphi 0, %s174
      %s176 = sphi 0, %s174
      %s177 = sphi 0, %s176
      %s191 = sphi 0, %s177
      %s197 = sphi 0, %s199
      %s200 = sphi 0, %s197
      %s201 = sphi 0, %s200
      %s217 = sphi 0, %s201
      %s221 = sphi 0, %s221
      %s223 = sphi 0, %s221
      %s224 = sphi 0, %s223
      %s238 = sphi 0, %s224
      %s242 = sphi 0, %s242
      %s244 = sphi 0, %s242
      %s245 = sphi 0, %s244
      %s259 = sphi 0, %s245
      %s263 = sphi 0, %s263
      %s265 = sphi 0, %s263
      %s266 = sphi 0, %s265
      %s280 = sphi 0, %s266
      %s284 = sphi 0, %s284
      %s286 = sphi 0, %s284
      %s287 = sphi 0, %s286
      %s301 = sphi 0, %s287
      %s305 = sphi 0, %s305
      %s307 = sphi 0, %s305
      %s308 = sphi 0, %s307
      %s322 = sphi 0, %s308
      %s330 = sphi 0, %s332
      %s333 = sphi 0, %s330
      %s334 = sphi 0, %s333
      %s350 = sphi 0, %s334
    $region4: #{tpu_custom_call.1} parent=1 // loop_header_branch
      %26 = sbr.rel (%p24) target = $region8
    $region5: #{tpu_custom_call.1} parent=1 // loop_body
      %s28 = ssub.s32 %s23, 1
      %s29 = ssub.s32 %s23, 2
      %s39 = sadd.s32 1, %s32
      %p40 = scmp.ge.s32.totalorder %s39, 1
      %s41 = scalar_select %p40, 0, %s39
      %s42 = sadd.s32 1, %s31
      %s43 = scalar_select %p40, %s42, %s31
      %p44 = scmp.ge.s32.totalorder %s43, 1
      %s45 = scalar_select %p44, 0, %s43
      %s46 = sadd.s32 1, %s30
      %s47 = scalar_select %p44, %s46, %s30
      %p48 = scmp.ge.s32.totalorder %s47, 2
      %s49 = scalar_select %p48, 0, %s47
      %s50 = ssub.s32 %s30, %s49
      %s51 = ssub.s32 %s31, %s45
      %s52 = sor.u32 %s50, %s51
      %p53 = scmp.eq.s32.totalorder %s52, 0
      %s55 = sadd.s32 %s54, 1
      %s56 = scalar_select %p53, %s54, %s55
      %p59 = pneg %p53
      %p60 = scmp.eq.s32.totalorder %s23, 1
      %p61 = por %p59, %p60
      %p62 = scmp.ne.s32.totalorder %s54, %s57
      %p63 = scmp.eq.s32.totalorder %s23, 0
      %p64 = por %p62, %p63
      %p65 = scmp.ne.s32.totalorder %s54, %s57
      %p66 = scmp.eq.s32.totalorder %s28, 1
      %p67 = por %p65, %p66
      %p68 = scmp.ne.s32.totalorder %s57, %s58
      %p69 = scmp.eq.s32.totalorder %s28, 0
      %p70 = por %p68, %p69
      %p71 = scmp.ne.s32.totalorder %s57, %s58
      %p72 = scmp.eq.s32.totalorder %s29, 1
      %p73 = por %p71, %p72
      %p75 = scmp.ne.s32.totalorder %s58, %s74
      %p76 = scmp.eq.s32.totalorder %s29, 0
      %p77 = por %p75, %p76
      %s78 = ssub.s32 %s30, %s49
      %s79 = ssub.s32 %s32, %s41
      %s80 = sor.u32 %s78, %s79
      %p81 = scmp.eq.s32.totalorder %s80, 0
      %s83 = sadd.s32 %s82, 1
      %s84 = scalar_select %p81, %s82, %s83
      %p87 = pneg %p81
      %p88 = scmp.eq.s32.totalorder %s23, 1
      %p89 = por %p87, %p88
      %p90 = scmp.ne.s32.totalorder %s82, %s85
      %p91 = scmp.eq.s32.totalorder %s23, 0
      %p92 = por %p90, %p91
      %p93 = scmp.ne.s32.totalorder %s82, %s85
      %p94 = scmp.eq.s32.totalorder %s28, 1
      %p95 = por %p93, %p94
      %p96 = scmp.ne.s32.totalorder %s85, %s86
      %p97 = scmp.eq.s32.totalorder %s28, 0
      %p98 = por %p96, %p97
      %p99 = scmp.ne.s32.totalorder %s85, %s86
      %p100 = scmp.eq.s32.totalorder %s29, 1
      %p101 = por %p99, %p100
      %p103 = scmp.ne.s32.totalorder %s86, %s102
      %p104 = scmp.eq.s32.totalorder %s29, 0
      %p105 = por %p103, %p104
      %s107 = sadd.s32 %s106, 1
      %p110 = scmp.eq.s32.totalorder %s23, 1
      %p111 = scmp.ne.s32.totalorder %s106, %s108
      %p112 = scmp.eq.s32.totalorder %s23, 0
      %p113 = por %p111, %p112
      %p114 = scmp.ne.s32.totalorder %s106, %s108
      %p115 = scmp.eq.s32.totalorder %s28, 1
      %p116 = por %p114, %p115
      %p117 = scmp.ne.s32.totalorder %s108, %s109
      %p118 = scmp.eq.s32.totalorder %s28, 0
      %p119 = por %p117, %p118
      %p120 = scmp.ne.s32.totalorder %s108, %s109
      %p121 = scmp.eq.s32.totalorder %s29, 1
      %p122 = por %p120, %p121
      %p124 = scmp.ne.s32.totalorder %s109, %s123
      %p125 = scmp.eq.s32.totalorder %s29, 0
      %p126 = por %p124, %p125
      %s128 = sadd.s32 %s127, 1
      %p131 = scmp.eq.s32.totalorder %s23, 1
      %p132 = scmp.ne.s32.totalorder %s127, %s129
      %p133 = scmp.eq.s32.totalorder %s23, 0
      %p134 = por %p132, %p133
      %p135 = scmp.ne.s32.totalorder %s127, %s129
      %p136 = scmp.eq.s32.totalorder %s28, 1
      %p137 = por %p135, %p136
      %p138 = scmp.ne.s32.totalorder %s129, %s130
      %p139 = scmp.eq.s32.totalorder %s28, 0
      %p140 = por %p138, %p139
      %p141 = scmp.ne.s32.totalorder %s129, %s130
      %p142 = scmp.eq.s32.totalorder %s29, 1
      %p143 = por %p141, %p142
      %p145 = scmp.ne.s32.totalorder %s130, %s144
      %p146 = scmp.eq.s32.totalorder %s29, 0
      %p147 = por %p145, %p146
      %s148 = ssub.s32 %s32, %s41
      %p149 = scmp.eq.s32.totalorder %s148, 0
      %s151 = sadd.s32 %s150, 1
      %s152 = scalar_select %p149, %s150, %s151
      %p155 = pneg %p149
      %p156 = scmp.eq.s32.totalorder %s23, 1
      %p157 = por %p155, %p156
      %p158 = scmp.ne.s32.totalorder %s150, %s153
      %p159 = scmp.eq.s32.totalorder %s23, 0
      %p160 = por %p158, %p159
      %p161 = scmp.ne.s32.totalorder %s150, %s153
      %p162 = scmp.eq.s32.totalorder %s28, 1
      %p163 = por %p161, %p162
      %p164 = scmp.ne.s32.totalorder %s153, %s154
      %p165 = scmp.eq.s32.totalorder %s28, 0
      %p166 = por %p164, %p165
      %p167 = scmp.ne.s32.totalorder %s153, %s154
      %p168 = scmp.eq.s32.totalorder %s29, 1
      %p169 = por %p167, %p168
      %p171 = scmp.ne.s32.totalorder %s154, %s170
      %p172 = scmp.eq.s32.totalorder %s29, 0
      %p173 = por %p171, %p172
      %s175 = sadd.s32 %s174, 1
      %p178 = scmp.eq.s32.totalorder %s23, 1
      %p179 = scmp.ne.s32.totalorder %s174, %s176
      %p180 = scmp.eq.s32.totalorder %s23, 0
      %p181 = por %p179, %p180
      %p182 = scmp.ne.s32.totalorder %s174, %s176
      %p183 = scmp.eq.s32.totalorder %s28, 1
      %p184 = por %p182, %p183
      %p185 = scmp.ne.s32.totalorder %s176, %s177
      %p186 = scmp.eq.s32.totalorder %s28, 0
      %p187 = por %p185, %p186
      %p188 = scmp.ne.s32.totalorder %s176, %s177
      %p189 = scmp.eq.s32.totalorder %s29, 1
      %p190 = por %p188, %p189
      %p192 = scmp.ne.s32.totalorder %s177, %s191
      %p193 = scmp.eq.s32.totalorder %s29, 0
      %p194 = por %p192, %p193
      %s195 = ssub.s32 %s32, %s41
      %p196 = scmp.eq.s32.totalorder %s195, 0
      %s198 = sadd.s32 %s197, 1
      %s199 = scalar_select %p196, %s197, %s198
      %p202 = pneg %p196
      %p203 = scmp.eq.s32.totalorder %s23, 1
      %p204 = por %p202, %p203
      %p205 = scmp.ne.s32.totalorder %s197, %s200
      %p206 = scmp.eq.s32.totalorder %s23, 0
      %p207 = por %p205, %p206
      %p208 = scmp.ne.s32.totalorder %s197, %s200
      %p209 = scmp.eq.s32.totalorder %s28, 1
      %p210 = por %p208, %p209
      %p211 = scmp.ne.s32.totalorder %s200, %s201
      %p212 = scmp.eq.s32.totalorder %s28, 0
      %p213 = por %p211, %p212
      %p214 = scmp.ne.s32.totalorder %s200, %s201
      %p215 = scmp.eq.s32.totalorder %s29, 1
      %p216 = por %p214, %p215
      %p218 = scmp.ne.s32.totalorder %s201, %s217
      %p219 = scmp.eq.s32.totalorder %s29, 0
      %p220 = por %p218, %p219
      %s222 = sadd.s32 %s221, 1
      %p225 = scmp.eq.s32.totalorder %s23, 1
      %p226 = scmp.ne.s32.totalorder %s221, %s223
      %p227 = scmp.eq.s32.totalorder %s23, 0
      %p228 = por %p226, %p227
      %p229 = scmp.ne.s32.totalorder %s221, %s223
      %p230 = scmp.eq.s32.totalorder %s28, 1
      %p231 = por %p229, %p230
      %p232 = scmp.ne.s32.totalorder %s223, %s224
      %p233 = scmp.eq.s32.totalorder %s28, 0
      %p234 = por %p232, %p233
      %p235 = scmp.ne.s32.totalorder %s223, %s224
      %p236 = scmp.eq.s32.totalorder %s29, 1
      %p237 = por %p235, %p236
      %p239 = scmp.ne.s32.totalorder %s224, %s238
      %p240 = scmp.eq.s32.totalorder %s29, 0
      %p241 = por %p239, %p240
      %s243 = sadd.s32 %s242, 1
      %p246 = scmp.eq.s32.totalorder %s23, 1
      %p247 = scmp.ne.s32.totalorder %s242, %s244
      %p248 = scmp.eq.s32.totalorder %s23, 0
      %p249 = por %p247, %p248
      %p250 = scmp.ne.s32.totalorder %s242, %s244
      %p251 = scmp.eq.s32.totalorder %s28, 1
      %p252 = por %p250, %p251
      %p253 = scmp.ne.s32.totalorder %s244, %s245
      %p254 = scmp.eq.s32.totalorder %s28, 0
      %p255 = por %p253, %p254
      %p256 = scmp.ne.s32.totalorder %s244, %s245
      %p257 = scmp.eq.s32.totalorder %s29, 1
      %p258 = por %p256, %p257
      %p260 = scmp.ne.s32.totalorder %s245, %s259
      %p261 = scmp.eq.s32.totalorder %s29, 0
      %p262 = por %p260, %p261
      %s264 = sadd.s32 %s263, 1
      %p267 = scmp.eq.s32.totalorder %s23, 1
      %p268 = scmp.ne.s32.totalorder %s263, %s265
      %p269 = scmp.eq.s32.totalorder %s23, 0
      %p270 = por %p268, %p269
      %p271 = scmp.ne.s32.totalorder %s263, %s265
      %p272 = scmp.eq.s32.totalorder %s28, 1
      %p273 = por %p271, %p272
      %p274 = scmp.ne.s32.totalorder %s265, %s266
      %p275 = scmp.eq.s32.totalorder %s28, 0
      %p276 = por %p274, %p275
      %p277 = scmp.ne.s32.totalorder %s265, %s266
      %p278 = scmp.eq.s32.totalorder %s29, 1
      %p279 = por %p277, %p278
      %p281 = scmp.ne.s32.totalorder %s266, %s280
      %p282 = scmp.eq.s32.totalorder %s29, 0
      %p283 = por %p281, %p282
      %s285 = sadd.s32 %s284, 1
      %p288 = scmp.eq.s32.totalorder %s23, 1
      %p289 = scmp.ne.s32.totalorder %s284, %s286
      %p290 = scmp.eq.s32.totalorder %s23, 0
      %p291 = por %p289, %p290
      %p292 = scmp.ne.s32.totalorder %s284, %s286
      %p293 = scmp.eq.s32.totalorder %s28, 1
      %p294 = por %p292, %p293
      %p295 = scmp.ne.s32.totalorder %s286, %s287
      %p296 = scmp.eq.s32.totalorder %s28, 0
      %p297 = por %p295, %p296
      %p298 = scmp.ne.s32.totalorder %s286, %s287
      %p299 = scmp.eq.s32.totalorder %s29, 1
      %p300 = por %p298, %p299
      %p302 = scmp.ne.s32.totalorder %s287, %s301
      %p303 = scmp.eq.s32.totalorder %s29, 0
      %p304 = por %p302, %p303
      %s306 = sadd.s32 %s305, 1
      %p309 = scmp.eq.s32.totalorder %s23, 1
      %p310 = scmp.ne.s32.totalorder %s305, %s307
      %p311 = scmp.eq.s32.totalorder %s23, 0
      %p312 = por %p310, %p311
      %p313 = scmp.ne.s32.totalorder %s305, %s307
      %p314 = scmp.eq.s32.totalorder %s28, 1
      %p315 = por %p313, %p314
      %p316 = scmp.ne.s32.totalorder %s307, %s308
      %p317 = scmp.eq.s32.totalorder %s28, 0
      %p318 = por %p316, %p317
      %p319 = scmp.ne.s32.totalorder %s307, %s308
      %p320 = scmp.eq.s32.totalorder %s29, 1
      %p321 = por %p319, %p320
      %p323 = scmp.ne.s32.totalorder %s308, %s322
      %p324 = scmp.eq.s32.totalorder %s29, 0
      %p325 = por %p323, %p324
      %s326 = ssub.s32 %s30, %s49
      %s327 = ssub.s32 %s31, %s45
      %s328 = sor.u32 %s326, %s327
      %p329 = scmp.eq.s32.totalorder %s328, 0
      %s331 = sadd.s32 %s330, 1
      %s332 = scalar_select %p329, %s330, %s331
      %p335 = pneg %p329
      %p336 = scmp.eq.s32.totalorder %s23, 1
      %p337 = por %p335, %p336
      %p338 = scmp.ne.s32.totalorder %s330, %s333
      %p339 = scmp.eq.s32.totalorder %s23, 0
      %p340 = por %p338, %p339
      %p341 = scmp.ne.s32.totalorder %s330, %s333
      %p342 = scmp.eq.s32.totalorder %s28, 1
      %p343 = por %p341, %p342
      %p344 = scmp.ne.s32.totalorder %s333, %s334
      %p345 = scmp.eq.s32.totalorder %s28, 0
      %p346 = por %p344, %p345
      %p347 = scmp.ne.s32.totalorder %s333, %s334
      %p348 = scmp.eq.s32.totalorder %s29, 1
      %p349 = por %p347, %p348
      %p351 = scmp.ne.s32.totalorder %s334, %s350
      %p352 = scmp.eq.s32.totalorder %s29, 0
      %p353 = por %p351, %p352
      %p354 = scmp.le.s32.totalorder 1, %s23
      %p355 = scmp.lt.s32.totalorder %s23, 3
      %p356 = pnand %p354, %p355
      %p357 = pneg %p356
      // Predicated region
      $region9: #{tpu_custom_call.1} parent=5 // pred_check
        _
      $region10: #{tpu_custom_call.1} parent=5 // pred_check_branch
        %359 = sbr.rel (%p356) target = $region12
      $region11: #{tpu_custom_call.1} parent=5 // pred_region
        %s360 = ssub.s32 %s23, 1
        // Predicated region
        $region13: #{tpu_custom_call.1} parent=11 // pred_check
          %p361 = pneg %p119
        $region14: #{tpu_custom_call.1} parent=11 // pred_check_branch
          %363 = sbr.rel (%p361) target = $region16
        $region15: #{tpu_custom_call.1} parent=11 // pred_region
          _
        $region16: #{tpu_custom_call.1} parent=11 // pred_fallthru
          _
        // Predicated region
        $region17: #{tpu_custom_call.1} parent=11 // pred_check
          %p364 = pneg %p140
        $region18: #{tpu_custom_call.1} parent=11 // pred_check_branch
          %366 = sbr.rel (%p364) target = $region20
        $region19: #{tpu_custom_call.1} parent=11 // pred_region
          _
        $region20: #{tpu_custom_call.1} parent=11 // pred_fallthru
          _
        // Predicated region
        $region21: #{tpu_custom_call.1} parent=11 // pred_check
          %p367 = pneg %p166
        $region22: #{tpu_custom_call.1} parent=11 // pred_check_branch
          %369 = sbr.rel (%p367) target = $region24
        $region23: #{tpu_custom_call.1} parent=11 // pred_region
          %p370 = scmp.lt.s32.totalorder %s35, 0
          %s371 = scalar_select %p370, %s35, 0
          %s372 = scalar_lea.vmem %s4, %s371
        $region24: #{tpu_custom_call.1} parent=11 // pred_fallthru
          _
        // Predicated region
        $region25: #{tpu_custom_call.1} parent=11 // pred_check
          %p373 = pneg %p187
        $region26: #{tpu_custom_call.1} parent=11 // pred_check_branch
          %375 = sbr.rel (%p373) target = $region28
        $region27: #{tpu_custom_call.1} parent=11 // pred_region
          _
        $region28: #{tpu_custom_call.1} parent=11 // pred_fallthru
          _
        // Predicated region
        $region29: #{tpu_custom_call.1} parent=11 // pred_check
          %p376 = pneg %p213
        $region30: #{tpu_custom_call.1} parent=11 // pred_check_branch
          %378 = sbr.rel (%p376) target = $region32
        $region31: #{tpu_custom_call.1} parent=11 // pred_region
          %s379 = smul.u32 8, %s35
          %p380 = scmp.lt.s32.totalorder %s379, 7
          %s381 = scalar_select %p380, %s379, 7
          %s382 = smul.addr %s381, 4
          %s383 = scalar_lea.vmem %s6, %s382
          %s384 = smul.u32 8, %s35
        $region32: #{tpu_custom_call.1} parent=11 // pred_fallthru
          _
        // Predicated region
        $region33: #{tpu_custom_call.1} parent=11 // pred_check
          %p385 = pneg %p234
        $region34: #{tpu_custom_call.1} parent=11 // pred_check_branch
          %387 = sbr.rel (%p385) target = $region36
        $region35: #{tpu_custom_call.1} parent=11 // pred_region
          _
        $region36: #{tpu_custom_call.1} parent=11 // pred_fallthru
          _
        // Predicated region
        $region37: #{tpu_custom_call.1} parent=11 // pred_check
          %p388 = pneg %p255
        $region38: #{tpu_custom_call.1} parent=11 // pred_check_branch
          %390 = sbr.rel (%p388) target = $region40
        $region39: #{tpu_custom_call.1} parent=11 // pred_region
          _
        $region40: #{tpu_custom_call.1} parent=11 // pred_fallthru
          _
        // Predicated region
        $region41: #{tpu_custom_call.1} parent=11 // pred_check
          %p391 = pneg %p276
        $region42: #{tpu_custom_call.1} parent=11 // pred_check_branch
          %393 = sbr.rel (%p391) target = $region44
        $region43: #{tpu_custom_call.1} parent=11 // pred_region
          _
        $region44: #{tpu_custom_call.1} parent=11 // pred_fallthru
          _
        // Predicated region
        $region45: #{tpu_custom_call.1} parent=11 // pred_check
          %p394 = pneg %p297
        $region46: #{tpu_custom_call.1} parent=11 // pred_check_branch
          %396 = sbr.rel (%p394) target = $region48
        $region47: #{tpu_custom_call.1} parent=11 // pred_region
          _
        $region48: #{tpu_custom_call.1} parent=11 // pred_fallthru
          _
        // Predicated region
        $region49: #{tpu_custom_call.1} parent=11 // pred_check
          %p397 = pneg %p318
        $region50: #{tpu_custom_call.1} parent=11 // pred_check_branch
          %399 = sbr.rel (%p397) target = $region52
        $region51: #{tpu_custom_call.1} parent=11 // pred_region
          _
        $region52: #{tpu_custom_call.1} parent=11 // pred_fallthru
          _
      $region12: #{tpu_custom_call.1} parent=5 // pred_fallthru
        _
      %p400 = scmp.lt.s32.totalorder %s23, 2
      // Predicated region
      $region53: #{tpu_custom_call.1} parent=5 // pred_check
        %p401 = pneg %p400
      $region54: #{tpu_custom_call.1} parent=5 // pred_check_branch
        %403 = sbr.rel (%p401) target = $region56
      $region55: #{tpu_custom_call.1} parent=5 // pred_region
        // Predicated region
        $region57: #{tpu_custom_call.1} parent=55 // pred_check
          %p404 = pneg %p64
        $region58: #{tpu_custom_call.1} parent=55 // pred_check_branch
          %406 = sbr.rel (%p404) target = $region60
        $region59: #{tpu_custom_call.1} parent=55 // pred_region
          %s407 = smul.u32 16, %s31
          %p408 = scmp.lt.s32.totalorder %s30, 1
          %s409 = scalar_select %p408, %s30, 1
          %p410 = scmp.lt.s32.totalorder %s407, 15
          %s411 = scalar_select %p410, %s407, 15
          %s412 = smul.addr %s409, 16
          %s413 = sadd.s32 %s411, %s412
          %s414 = smul.addr %s413, 8
          %s415 = scalar_lea.vmem %s0, %s414
          %s416 = smul.u32 16, %s31
        $region60: #{tpu_custom_call.1} parent=55 // pred_fallthru
          _
        // Predicated region
        $region61: #{tpu_custom_call.1} parent=55 // pred_check
          %p417 = pneg %p92
        $region62: #{tpu_custom_call.1} parent=55 // pred_check_branch
          %419 = sbr.rel (%p417) target = $region64
        $region63: #{tpu_custom_call.1} parent=55 // pred_region
          %p420 = scmp.lt.s32.totalorder %s30, 1
          %s421 = scalar_select %p420, %s30, 1
          %p422 = scmp.lt.s32.totalorder %s32, 0
          %s423 = scalar_select %p422, %s32, 0
          %s424 = smul.addr %s421, 2
          %s425 = sadd.s32 %s423, %s424
          %s426 = smul.addr %s425, 4
          %s427 = scalar_lea.vmem %s1, %s426
        $region64: #{tpu_custom_call.1} parent=55 // pred_fallthru
          _
      $region56: #{tpu_custom_call.1} parent=5 // pred_fallthru
        _
      %p428 = scmp.le.s32.totalorder 1, %s23
      %p429 = scmp.lt.s32.totalorder %s23, 3
      %p430 = pnand %p428, %p429
      %p431 = pneg %p430
      // Predicated region
      $region65: #{tpu_custom_call.1} parent=5 // pred_check
        _
      $region66: #{tpu_custom_call.1} parent=5 // pred_check_branch
        %433 = sbr.rel (%p430) target = $region68
      $region67: #{tpu_custom_call.1} parent=5 // pred_region
        %s434 = ssub.s32 %s23, 1
        %s435 = smul.u32 16, %s34
        %p436 = scmp.lt.s32.totalorder %s33, 1
        %s437 = scalar_select %p436, %s33, 1
        %p438 = scmp.lt.s32.totalorder %s435, 15
        %s439 = scalar_select %p438, %s435, 15
        %s440 = smul.addr %s437, 16
        %s441 = sadd.s32 %s439, %s440
        %s442 = smul.addr %s441, 8
        %s443 = scalar_lea.vmem %s0, %s442
        %p444 = pneg %p70
        %p445 = pneg %p67
        %p446 = scmp.lt.s32.totalorder %s33, 1
        %s447 = scalar_select %p446, %s33, 1
        %p448 = scmp.lt.s32.totalorder %s35, 0
        %s449 = scalar_select %p448, %s35, 0
        %s450 = smul.addr %s447, 2
        %s451 = sadd.s32 %s449, %s450
        %s452 = smul.addr %s451, 4
        %s453 = scalar_lea.vmem %s1, %s452
        %p454 = pneg %p98
        %p455 = pneg %p95
        %p456 = pneg %p119
        %p457 = pneg %p116
        %p458 = pneg %p140
        %p459 = pneg %p137
        %p460 = scmp.lt.s32.totalorder %s35, 0
        %s461 = scalar_select %p460, %s35, 0
        %s462 = scalar_lea.vmem %s4, %s461
        %p463 = pneg %p166
        %p464 = pneg %p163
        %p465 = pneg %p187
        %p466 = pneg %p184
        %s467 = smul.u32 8, %s35
        %p468 = scmp.lt.s32.totalorder %s467, 7
        %s469 = scalar_select %p468, %s467, 7
        %s470 = smul.addr %s469, 4
        %s471 = scalar_lea.vmem %s6, %s470
        %p472 = pneg %p213
        %p473 = pneg %p210
        %p474 = pneg %p234
        %p475 = pneg %p231
        %p476 = pneg %p255
        %p477 = pneg %p252
        %p478 = pneg %p276
        %p479 = pneg %p273
        %p480 = pneg %p297
        %p481 = pneg %p294
        %p482 = pneg %p318
        %p483 = pneg %p315
        %p484 = pneg %p346
        %p485 = pneg %p343
        %s486 = sand.u32 %s333, 1
        %s487 = scalar_lea.sflag [#allocation5], %s486
        %s488 = sand.u32 %s333, 1
        %s489 = scalar_lea.vmem [#allocation4], %s488
        %s490 = smul.u32 16, %s34
        %p491 = scmp.lt.s32.totalorder %s33, 1
        %s492 = scalar_select %p491, %s33, 1
        %p493 = scmp.lt.s32.totalorder %s490, 15
        %s494 = scalar_select %p493, %s490, 15
        %s495 = smul.addr %s492, 16
        %s496 = sadd.s32 %s494, %s495
        %s497 = smul.addr %s496, 8
        %s498 = scalar_lea.vmem %s0, %s497
        %s499 = smul.u32 16, %s34
        %p500 = scmp.lt.s32.totalorder %s33, 1
        %s501 = scalar_select %p500, %s33, 1
        %p502 = scmp.lt.s32.totalorder %s35, 0
        %s503 = scalar_select %p502, %s35, 0
        %s504 = smul.addr %s501, 2
        %s505 = sadd.s32 %s503, %s504
        %s506 = smul.addr %s505, 4
        %s507 = scalar_lea.vmem %s1, %s506
        %p508 = scmp.lt.s32.totalorder %s35, 0
        %s509 = scalar_select %p508, %s35, 0
        %s510 = scalar_lea.vmem %s4, %s509
        %s511 = smul.u32 8, %s35
        %p512 = scmp.lt.s32.totalorder %s511, 7
        %s513 = scalar_select %p512, %s511, 7
        %s514 = smul.addr %s513, 4
        %s515 = scalar_lea.vmem %s6, %s514
        %s516 = smul.u32 8, %s35
        %v518 = vld [vmem:[%s498] sm:$0xff]
        %v519 = vld [vmem:[%s498 + $0x8] sm:$0xff]
        %v520 = vld [vmem:[%s498 + $0x10] sm:$0xff]
        %v521 = vld [vmem:[%s498 + $0x18] sm:$0xff]
        %v522 = vld [vmem:[%s498 + $0x20] sm:$0xff]
        %v523 = vld [vmem:[%s498 + $0x28] sm:$0xff]
        %v524 = vld [vmem:[%s498 + $0x30] sm:$0xff]
        %v525 = vld [vmem:[%s498 + $0x38] sm:$0xff]
        %v526 = vld [vmem:[%s498 + $0x40] sm:$0xff]
        %v527 = vld [vmem:[%s498 + $0x48] sm:$0xff]
        %v528 = vld [vmem:[%s498 + $0x50] sm:$0xff]
        %v529 = vld [vmem:[%s498 + $0x58] sm:$0xff]
        %v530 = vld [vmem:[%s498 + $0x60] sm:$0xff]
        %v531 = vld [vmem:[%s498 + $0x68] sm:$0xff]
        %v532 = vld [vmem:[%s498 + $0x70] sm:$0xff]
        %v533 = vld [vmem:[%s498 + $0x78] sm:$0xff]
        %p534 = scmp.eq.s32.totalorder %s35, 0
        // Predicated region
        $region69: #{tpu_custom_call.1} parent=67 // pred_check
          %p535 = pneg %p534
        $region70: #{tpu_custom_call.1} parent=67 // pred_check_branch
          %537 = sbr.rel (%p535) target = $region72
        $region71: #{tpu_custom_call.1} parent=67 // pred_region
          %vm538 = vcmask 261120
          %539 = vst.msk [vmem:[#allocation2] sm:$0xff] %vm538, 0.0
          %540 = vst.msk [vmem:[#allocation2 + $0x8] sm:$0xff] %vm538, 0.0
          %541 = vst.msk [vmem:[#allocation2 + $0x10] sm:$0xff] %vm538, 0.0
          %542 = vst.msk [vmem:[#allocation2 + $0x18] sm:$0xff] %vm538, 0.0
          %543 = vst.msk [vmem:[#allocation2 + $0x20] sm:$0xff] %vm538, 0.0
          %544 = vst.msk [vmem:[#allocation2 + $0x28] sm:$0xff] %vm538, 0.0
          %545 = vst.msk [vmem:[#allocation2 + $0x30] sm:$0xff] %vm538, 0.0
          %546 = vst.msk [vmem:[#allocation2 + $0x38] sm:$0xff] %vm538, 0.0
          %547 = vst.msk [vmem:[#allocation2 + $0x40] sm:$0xff] %vm538, 0.0
          %548 = vst.msk [vmem:[#allocation2 + $0x48] sm:$0xff] %vm538, 0.0
          %549 = vst.msk [vmem:[#allocation2 + $0x50] sm:$0xff] %vm538, 0.0
          %550 = vst.msk [vmem:[#allocation2 + $0x58] sm:$0xff] %vm538, 0.0
          %551 = vst.msk [vmem:[#allocation2 + $0x60] sm:$0xff] %vm538, 0.0
          %552 = vst.msk [vmem:[#allocation2 + $0x68] sm:$0xff] %vm538, 0.0
          %553 = vst.msk [vmem:[#allocation2 + $0x70] sm:$0xff] %vm538, 0.0
          %554 = vst.msk [vmem:[#allocation2 + $0x78] sm:$0xff] %vm538, 0.0
        $region72: #{tpu_custom_call.1} parent=67 // pred_fallthru
          _
        %v555 = vmul.f32 %v518, 14.933333
        %v556 = vmul.f32 %v519, 14.933333
        %v557 = vmul.f32 %v520, 14.933333
        %v558 = vmul.f32 %v521, 14.933333
        %v559 = vmul.f32 %v522, 14.933333
        %v560 = vmul.f32 %v523, 14.933333
        %v561 = vmul.f32 %v524, 14.933333
        %v562 = vmul.f32 %v525, 14.933333
        %v563 = vmul.f32 %v526, 14.933333
        %v564 = vmul.f32 %v527, 14.933333
        %v565 = vmul.f32 %v528, 14.933333
        %v566 = vmul.f32 %v529, 14.933333
        %v567 = vmul.f32 %v530, 14.933333
        %v568 = vmul.f32 %v531, 14.933333
        %v569 = vmul.f32 %v532, 14.933333
        %v570 = vmul.f32 %v533, 14.933333
        %v571 = vsub.f32 %v555, 0.5
        %v572 = vsub.f32 %v556, 0.5
        %v573 = vsub.f32 %v557, 0.5
        %v574 = vsub.f32 %v558, 0.5
        %v575 = vsub.f32 %v559, 0.5
        %v576 = vsub.f32 %v560, 0.5
        %v577 = vsub.f32 %v561, 0.5
        %v578 = vsub.f32 %v562, 0.5
        %v579 = vsub.f32 %v563, 0.5
        %v580 = vsub.f32 %v564, 0.5
        %v581 = vsub.f32 %v565, 0.5
        %v582 = vsub.f32 %v566, 0.5
        %v583 = vsub.f32 %v567, 0.5
        %v584 = vsub.f32 %v568, 0.5
        %v585 = vsub.f32 %v569, 0.5
        %v586 = vsub.f32 %v570, 0.5
        %v587 = vlaneseq
        %v588 = vand.u32 %v587, 127
        %v589 = vcvt.s32.f32 %v588
        %591 = vset.pattern.permute.xlu0 1
        %592 = vperm.xlu0 %591, %v571
        %v593 = vpop.permute.xlu0 %592
        %596 = vset.pattern.permute.xlu0 1
        %597 = vperm.xlu0 %596, %v572
        %v598 = vpop.permute.xlu0 %597
        %601 = vset.pattern.permute.xlu0 1
        %602 = vperm.xlu0 %601, %v573
        %v603 = vpop.permute.xlu0 %602
        %606 = vset.pattern.permute.xlu0 1
        %607 = vperm.xlu0 %606, %v574
        %v608 = vpop.permute.xlu0 %607
        %611 = vset.pattern.permute.xlu0 1
        %612 = vperm.xlu0 %611, %v575
        %v613 = vpop.permute.xlu0 %612
        %616 = vset.pattern.permute.xlu0 1
        %617 = vperm.xlu0 %616, %v576
        %v618 = vpop.permute.xlu0 %617
        %621 = vset.pattern.permute.xlu0 1
        %622 = vperm.xlu0 %621, %v577
        %v623 = vpop.permute.xlu0 %622
        %626 = vset.pattern.permute.xlu0 1
        %627 = vperm.xlu0 %626, %v578
        %v628 = vpop.permute.xlu0 %627
        %631 = vset.pattern.permute.xlu0 1
        %632 = vperm.xlu0 %631, %v579
        %v633 = vpop.permute.xlu0 %632
        %636 = vset.pattern.permute.xlu0 1
        %637 = vperm.xlu0 %636, %v580
        %v638 = vpop.permute.xlu0 %637
        %641 = vset.pattern.permute.xlu0 1
        %642 = vperm.xlu0 %641, %v581
        %v643 = vpop.permute.xlu0 %642
        %646 = vset.pattern.permute.xlu0 1
        %647 = vperm.xlu0 %646, %v582
        %v648 = vpop.permute.xlu0 %647
        %651 = vset.pattern.permute.xlu0 1
        %652 = vperm.xlu0 %651, %v583
        %v653 = vpop.permute.xlu0 %652
        %656 = vset.pattern.permute.xlu0 1
        %657 = vperm.xlu0 %656, %v584
        %v658 = vpop.permute.xlu0 %657
        %661 = vset.pattern.permute.xlu0 1
        %662 = vperm.xlu0 %661, %v585
        %v663 = vpop.permute.xlu0 %662
        %666 = vset.pattern.permute.xlu0 1
        %667 = vperm.xlu0 %666, %v586
        %v668 = vpop.permute.xlu0 %667
        %v670 = vsub.f32 %v589, %v593
        %v671 = vsub.f32 %v589, %v598
        %v672 = vsub.f32 %v589, %v603
        %v673 = vsub.f32 %v589, %v608
        %v674 = vsub.f32 %v589, %v613
        %v675 = vsub.f32 %v589, %v618
        %v676 = vsub.f32 %v589, %v623
        %v677 = vsub.f32 %v589, %v628
        %v678 = vsub.f32 %v589, %v633
        %v679 = vsub.f32 %v589, %v638
        %v680 = vsub.f32 %v589, %v643
        %v681 = vsub.f32 %v589, %v648
        %v682 = vsub.f32 %v589, %v653
        %v683 = vsub.f32 %v589, %v658
        %v684 = vsub.f32 %v589, %v663
        %v685 = vsub.f32 %v589, %v668
        %v686 = vand.u32 2147483647, %v670
        %v687 = vand.u32 2147483647, %v671
        %v688 = vand.u32 2147483647, %v672
        %v689 = vand.u32 2147483647, %v673
        %v690 = vand.u32 2147483647, %v674
        %v691 = vand.u32 2147483647, %v675
        %v692 = vand.u32 2147483647, %v676
        %v693 = vand.u32 2147483647, %v677
        %v694 = vand.u32 2147483647, %v678
        %v695 = vand.u32 2147483647, %v679
        %v696 = vand.u32 2147483647, %v680
        %v697 = vand.u32 2147483647, %v681
        %v698 = vand.u32 2147483647, %v682
        %v699 = vand.u32 2147483647, %v683
        %v700 = vand.u32 2147483647, %v684
        %v701 = vand.u32 2147483647, %v685
        %v702 = vsub.f32 1.0, %v686
        %v703 = vsub.f32 1.0, %v687
        %v704 = vsub.f32 1.0, %v688
        %v705 = vsub.f32 1.0, %v689
        %v706 = vsub.f32 1.0, %v690
        %v707 = vsub.f32 1.0, %v691
        %v708 = vsub.f32 1.0, %v692
        %v709 = vsub.f32 1.0, %v693
        %v710 = vsub.f32 1.0, %v694
        %v711 = vsub.f32 1.0, %v695
        %v712 = vsub.f32 1.0, %v696
        %v713 = vsub.f32 1.0, %v697
        %v714 = vsub.f32 1.0, %v698
        %v715 = vsub.f32 1.0, %v699
        %v716 = vsub.f32 1.0, %v700
        %v717 = vsub.f32 1.0, %v701
        %v718 = vmax.f32 %v702, 0.0
        %v719 = vmax.f32 %v703, 0.0
        %v720 = vmax.f32 %v704, 0.0
        %v721 = vmax.f32 %v705, 0.0
        %v722 = vmax.f32 %v706, 0.0
        %v723 = vmax.f32 %v707, 0.0
        %v724 = vmax.f32 %v708, 0.0
        %v725 = vmax.f32 %v709, 0.0
        %v726 = vmax.f32 %v710, 0.0
        %v727 = vmax.f32 %v711, 0.0
        %v728 = vmax.f32 %v712, 0.0
        %v729 = vmax.f32 %v713, 0.0
        %v730 = vmax.f32 %v714, 0.0
        %v731 = vmax.f32 %v715, 0.0
        %v732 = vmax.f32 %v716, 0.0
        %v733 = vmax.f32 %v717, 0.0
        %v734 = vpack.c.bf16 %v719, %v718
        %v735 = vpack.c.bf16 %v721, %v720
        %v736 = vpack.c.bf16 %v723, %v722
        %v737 = vpack.c.bf16 %v725, %v724
        %v738 = vpack.c.bf16 %v727, %v726
        %v739 = vpack.c.bf16 %v729, %v728
        %v740 = vpack.c.bf16 %v731, %v730
        %v741 = vpack.c.bf16 %v733, %v732
        %v742 = vld [vmem:[%s507] sm:$0xf]
        %v743 = vld [vmem:[%s507 + $0x4] sm:$0xf]
        %v746 = vunpack.c.l.b16 %v742
        %v747 = vunpack.c.l.b16 %v743
        %v748 = vpack.c.b16 %v747, %v746
        %vm750 = vcmask 130048
        %v752 = vsel %vm750, %v734, 0
        %v755 = vsel %vm750, %v735, 0
        %v758 = vsel %vm750, %v736, 0
        %v761 = vsel %vm750, %v737, 0
        %v764 = vsel %vm750, %v738, 0
        %v767 = vsel %vm750, %v739, 0
        %v770 = vsel %vm750, %v740, 0
        %v773 = vsel %vm750, %v741, 0
        %775 = vmatprep.subr.bf16.mxu0 0
        %776 = vmatpush1.bf16.msra.mxu0 %v748
        %777 = vmatprep.subr.bf16.mxu0 0
        %778 = vmatpush1.bf16.msra.mxu0 0
        %779 = vmatprep.subr.bf16.mxu0 0
        %780 = vmatpush1.bf16.msra.mxu0 0
        %781 = vmatprep.subr.bf16.mxu0 0
        %782 = vmatpush1.bf16.msra.mxu0 0
        %783 = vmatprep.subr.bf16.mxu0 0
        %784 = vmatpush1.bf16.msra.mxu0 0
        %785 = vmatprep.subr.bf16.mxu0 0
        %786 = vmatpush1.bf16.msra.mxu0 0
        %787 = vmatprep.subr.bf16.mxu0 0
        %788 = vmatpush1.bf16.msra.mxu0 0
        %789 = vmatprep.subr.bf16.mxu0 0
        %790 = vmatpush1.bf16.msra.mxu0 0
        %791 = vmatprep.subr.bf16.mxu0 0
        %792 = vmatpush1.bf16.msra.mxu0 0
        %793 = vmatprep.subr.bf16.mxu0 0
        %794 = vmatpush1.bf16.msra.mxu0 0
        %795 = vmatprep.subr.bf16.mxu0 0
        %796 = vmatpush1.bf16.msra.mxu0 0
        %797 = vmatprep.subr.bf16.mxu0 0
        %798 = vmatpush1.bf16.msra.mxu0 0
        %799 = vmatprep.subr.bf16.mxu0 0
        %800 = vmatpush1.bf16.msra.mxu0 0
        %801 = vmatprep.subr.bf16.mxu0 0
        %802 = vmatpush1.bf16.msra.mxu0 0
        %803 = vmatprep.subr.bf16.mxu0 0
        %804 = vmatpush1.bf16.msra.mxu0 0
        %805 = vmatprep.subr.bf16.mxu0 0
        %806 = vmatpush1.bf16.msra.mxu0 0
        %807 = vmatprep.mubr.bf16.mxu0 0
        %808 = vmatmul.mubr.bf16.gmra.mrb[0].mxu0 %v752
        %v809 = vpop.f32.mrb[0].mxu0
        %v810 = vadd.f32 0.0, %v809
        %v811 = vpop.f32.mrb[0].mxu0
        %v812 = vpop.f32.mrb[0].mxu0
        %v813 = vadd.f32 0.0, %v812
        %v814 = vpop.f32.mrb[0].mxu0
        %815 = vmatprep.mubr.bf16.mxu0 0
        %816 = vmatmul.mubr.bf16.gmra.mrb[0].mxu0 %v755
        %v817 = vpop.f32.mrb[0].mxu0
        %v818 = vadd.f32 0.0, %v817
        %v819 = vpop.f32.mrb[0].mxu0
        %v820 = vpop.f32.mrb[0].mxu0
        %v821 = vadd.f32 0.0, %v820
        %v822 = vpop.f32.mrb[0].mxu0
        %823 = vmatprep.mubr.bf16.mxu0 0
        %824 = vmatmul.mubr.bf16.gmra.mrb[0].mxu0 %v758
        %v825 = vpop.f32.mrb[0].mxu0
        %v826 = vadd.f32 0.0, %v825
        %v827 = vpop.f32.mrb[0].mxu0
        %v828 = vpop.f32.mrb[0].mxu0
        %v829 = vadd.f32 0.0, %v828
        %v830 = vpop.f32.mrb[0].mxu0
        %831 = vmatprep.mubr.bf16.mxu0 0
        %832 = vmatmul.mubr.bf16.gmra.mrb[0].mxu0 %v761
        %v833 = vpop.f32.mrb[0].mxu0
        %v834 = vadd.f32 0.0, %v833
        %v835 = vpop.f32.mrb[0].mxu0
        %v836 = vpop.f32.mrb[0].mxu0
        %v837 = vadd.f32 0.0, %v836
        %v838 = vpop.f32.mrb[0].mxu0
        %839 = vmatprep.mubr.bf16.mxu0 0
        %840 = vmatmul.mubr.bf16.gmra.mrb[0].mxu0 %v764
        %v841 = vpop.f32.mrb[0].mxu0
        %v842 = vadd.f32 0.0, %v841
        %v843 = vpop.f32.mrb[0].mxu0
        %v844 = vpop.f32.mrb[0].mxu0
        %v845 = vadd.f32 0.0, %v844
        %v846 = vpop.f32.mrb[0].mxu0
        %847 = vmatprep.mubr.bf16.mxu0 0
        %848 = vmatmul.mubr.bf16.gmra.mrb[0].mxu0 %v767
        %v849 = vpop.f32.mrb[0].mxu0
        %v850 = vadd.f32 0.0, %v849
        %v851 = vpop.f32.mrb[0].mxu0
        %v852 = vpop.f32.mrb[0].mxu0
        %v853 = vadd.f32 0.0, %v852
        %v854 = vpop.f32.mrb[0].mxu0
        %855 = vmatprep.mubr.bf16.mxu0 0
        %856 = vmatmul.mubr.bf16.gmra.mrb[0].mxu0 %v770
        %v857 = vpop.f32.mrb[0].mxu0
        %v858 = vadd.f32 0.0, %v857
        %v859 = vpop.f32.mrb[0].mxu0
        %v860 = vpop.f32.mrb[0].mxu0
        %v861 = vadd.f32 0.0, %v860
        %v862 = vpop.f32.mrb[0].mxu0
        %863 = vmatprep.mubr.bf16.mxu0 0
        %864 = vmatmul.mubr.bf16.gmra.mrb[0].mxu0 %v773
        %v865 = vpop.f32.mrb[0].mxu0
        %v866 = vadd.f32 0.0, %v865
        %v867 = vpop.f32.mrb[0].mxu0
        %v868 = vpop.f32.mrb[0].mxu0
        %v869 = vadd.f32 0.0, %v868
        %v870 = vpop.f32.mrb[0].mxu0
        %871 = vdwg.mxu0
        %v872 = vld [vmem:[%s510] sm:$0x1]
        %v874 = vlaneseq
        %v875 = vshrl.u32 %v874, 7
        %v876 = vsub.s32 0, %v875
        %v877 = vrot.slane %v872, %v876
        %879 = vset.pattern.permute.xlu0 0
        %880 = vperm.xlu0 %879, %v571
        %v881 = vpop.permute.xlu0 %880
        %883 = vset.pattern.permute.xlu0 0
        %884 = vperm.xlu0 %883, %v572
        %v885 = vpop.permute.xlu0 %884
        %887 = vset.pattern.permute.xlu0 0
        %888 = vperm.xlu0 %887, %v573
        %v889 = vpop.permute.xlu0 %888
        %891 = vset.pattern.permute.xlu0 0
        %892 = vperm.xlu0 %891, %v574
        %v893 = vpop.permute.xlu0 %892
        %895 = vset.pattern.permute.xlu0 0
        %896 = vperm.xlu0 %895, %v575
        %v897 = vpop.permute.xlu0 %896
        %899 = vset.pattern.permute.xlu0 0
        %900 = vperm.xlu0 %899, %v576
        %v901 = vpop.permute.xlu0 %900
        %903 = vset.pattern.permute.xlu0 0
        %904 = vperm.xlu0 %903, %v577
        %v905 = vpop.permute.xlu0 %904
        %907 = vset.pattern.permute.xlu0 0
        %908 = vperm.xlu0 %907, %v578
        %v909 = vpop.permute.xlu0 %908
        %911 = vset.pattern.permute.xlu0 0
        %912 = vperm.xlu0 %911, %v579
        %v913 = vpop.permute.xlu0 %912
        %915 = vset.pattern.permute.xlu0 0
        %916 = vperm.xlu0 %915, %v580
        %v917 = vpop.permute.xlu0 %916
        %919 = vset.pattern.permute.xlu0 0
        %920 = vperm.xlu0 %919, %v581
        %v921 = vpop.permute.xlu0 %920
        %923 = vset.pattern.permute.xlu0 0
        %924 = vperm.xlu0 %923, %v582
        %v925 = vpop.permute.xlu0 %924
        %927 = vset.pattern.permute.xlu0 0
        %928 = vperm.xlu0 %927, %v583
        %v929 = vpop.permute.xlu0 %928
        %931 = vset.pattern.permute.xlu0 0
        %932 = vperm.xlu0 %931, %v584
        %v933 = vpop.permute.xlu0 %932
        %935 = vset.pattern.permute.xlu0 0
        %936 = vperm.xlu0 %935, %v585
        %v937 = vpop.permute.xlu0 %936
        %939 = vset.pattern.permute.xlu0 0
        %940 = vperm.xlu0 %939, %v586
        %v941 = vpop.permute.xlu0 %940
        %v943 = vsub.f32 %v877, %v881
        %v944 = vsub.f32 %v877, %v885
        %v945 = vsub.f32 %v877, %v889
        %v946 = vsub.f32 %v877, %v893
        %v947 = vsub.f32 %v877, %v897
        %v948 = vsub.f32 %v877, %v901
        %v949 = vsub.f32 %v877, %v905
        %v950 = vsub.f32 %v877, %v909
        %v951 = vsub.f32 %v877, %v913
        %v952 = vsub.f32 %v877, %v917
        %v953 = vsub.f32 %v877, %v921
        %v954 = vsub.f32 %v877, %v925
        %v955 = vsub.f32 %v877, %v929
        %v956 = vsub.f32 %v877, %v933
        %v957 = vsub.f32 %v877, %v937
        %v958 = vsub.f32 %v877, %v941
        %v959 = vand.u32 2147483647, %v943
        %v960 = vand.u32 2147483647, %v944
        %v961 = vand.u32 2147483647, %v945
        %v962 = vand.u32 2147483647, %v946
        %v963 = vand.u32 2147483647, %v947
        %v964 = vand.u32 2147483647, %v948
        %v965 = vand.u32 2147483647, %v949
        %v966 = vand.u32 2147483647, %v950
        %v967 = vand.u32 2147483647, %v951
        %v968 = vand.u32 2147483647, %v952
        %v969 = vand.u32 2147483647, %v953
        %v970 = vand.u32 2147483647, %v954
        %v971 = vand.u32 2147483647, %v955
        %v972 = vand.u32 2147483647, %v956
        %v973 = vand.u32 2147483647, %v957
        %v974 = vand.u32 2147483647, %v958
        %v975 = vsub.f32 1.0, %v959
        %v976 = vsub.f32 1.0, %v960
        %v977 = vsub.f32 1.0, %v961
        %v978 = vsub.f32 1.0, %v962
        %v979 = vsub.f32 1.0, %v963
        %v980 = vsub.f32 1.0, %v964
        %v981 = vsub.f32 1.0, %v965
        %v982 = vsub.f32 1.0, %v966
        %v983 = vsub.f32 1.0, %v967
        %v984 = vsub.f32 1.0, %v968
        %v985 = vsub.f32 1.0, %v969
        %v986 = vsub.f32 1.0, %v970
        %v987 = vsub.f32 1.0, %v971
        %v988 = vsub.f32 1.0, %v972
        %v989 = vsub.f32 1.0, %v973
        %v990 = vsub.f32 1.0, %v974
        %v991 = vmax.f32 %v975, 0.0
        %v992 = vmax.f32 %v976, 0.0
        %v993 = vmax.f32 %v977, 0.0
        %v994 = vmax.f32 %v978, 0.0
        %v995 = vmax.f32 %v979, 0.0
        %v996 = vmax.f32 %v980, 0.0
        %v997 = vmax.f32 %v981, 0.0
        %v998 = vmax.f32 %v982, 0.0
        %v999 = vmax.f32 %v983, 0.0
        %v1000 = vmax.f32 %v984, 0.0
        %v1001 = vmax.f32 %v985, 0.0
        %v1002 = vmax.f32 %v986, 0.0
        %v1003 = vmax.f32 %v987, 0.0
        %v1004 = vmax.f32 %v988, 0.0
        %v1005 = vmax.f32 %v989, 0.0
        %v1006 = vmax.f32 %v990, 0.0
        %v1007 = vmul.f32 %v810, %v991
        %v1008 = vmul.f32 %v813, %v992
        %v1009 = vmul.f32 %v818, %v993
        %v1010 = vmul.f32 %v821, %v994
        %v1011 = vmul.f32 %v826, %v995
        %v1012 = vmul.f32 %v829, %v996
        %v1013 = vmul.f32 %v834, %v997
        %v1014 = vmul.f32 %v837, %v998
        %v1015 = vmul.f32 %v842, %v999
        %v1016 = vmul.f32 %v845, %v1000
        %v1017 = vmul.f32 %v850, %v1001
        %v1018 = vmul.f32 %v853, %v1002
        %v1019 = vmul.f32 %v858, %v1003
        %v1020 = vmul.f32 %v861, %v1004
        %v1021 = vmul.f32 %v866, %v1005
        %v1022 = vmul.f32 %v869, %v1006
        %v1023 = vpack.c.bf16 %v1008, %v1007
        %v1024 = vpack.c.bf16 %v1010, %v1009
        %v1025 = vpack.c.bf16 %v1012, %v1011
        %v1026 = vpack.c.bf16 %v1014, %v1013
        %v1027 = vpack.c.bf16 %v1016, %v1015
        %v1028 = vpack.c.bf16 %v1018, %v1017
        %v1029 = vpack.c.bf16 %v1020, %v1019
        %v1030 = vpack.c.bf16 %v1022, %v1021
        %v1031 = vld [vmem:[#allocation2] sm:$0xff]
        %v1032 = vld [vmem:[#allocation2 + $0x8] sm:$0xff]
        %v1033 = vld [vmem:[#allocation2 + $0x10] sm:$0xff]
        %v1034 = vld [vmem:[#allocation2 + $0x18] sm:$0xff]
        %v1035 = vld [vmem:[#allocation2 + $0x20] sm:$0xff]
        %v1036 = vld [vmem:[#allocation2 + $0x28] sm:$0xff]
        %v1037 = vld [vmem:[#allocation2 + $0x30] sm:$0xff]
        %v1038 = vld [vmem:[#allocation2 + $0x38] sm:$0xff]
        %v1039 = vld [vmem:[#allocation2 + $0x40] sm:$0xff]
        %v1040 = vld [vmem:[#allocation2 + $0x48] sm:$0xff]
        %v1041 = vld [vmem:[#allocation2 + $0x50] sm:$0xff]
        %v1042 = vld [vmem:[#allocation2 + $0x58] sm:$0xff]
        %v1043 = vld [vmem:[#allocation2 + $0x60] sm:$0xff]
        %v1044 = vld [vmem:[#allocation2 + $0x68] sm:$0xff]
        %v1045 = vld [vmem:[#allocation2 + $0x70] sm:$0xff]
        %v1046 = vld [vmem:[#allocation2 + $0x78] sm:$0xff]
        %v1047 = vld [vmem:[%s515] sm:$0xf]
        %v1048 = vld [vmem:[%s515 + $0x4] sm:$0xf]
        %v1049 = vld [vmem:[%s515 + $0x8] sm:$0xf]
        %v1050 = vld [vmem:[%s515 + $0xc] sm:$0xf]
        %v1051 = vld [vmem:[%s515 + $0x10] sm:$0xf]
        %v1052 = vld [vmem:[%s515 + $0x14] sm:$0xf]
        %v1053 = vld [vmem:[%s515 + $0x18] sm:$0xf]
        %v1054 = vld [vmem:[%s515 + $0x1c] sm:$0xf]
        %v1063 = vunpack.c.l.b16 %v1047
        %v1064 = vunpack.c.l.b16 %v1048
        %v1065 = vunpack.c.l.b16 %v1049
        %v1066 = vunpack.c.l.b16 %v1050
        %v1067 = vunpack.c.l.b16 %v1051
        %v1068 = vunpack.c.l.b16 %v1052
        %v1069 = vunpack.c.l.b16 %v1053
        %v1070 = vunpack.c.l.b16 %v1054
        %v1071 = vpack.c.b16 %v1064, %v1063
        %v1072 = vpack.c.b16 %v1066, %v1065
        %v1073 = vpack.c.b16 %v1068, %v1067
        %v1074 = vpack.c.b16 %v1070, %v1069
        %vm1079 = vcmask 523264
        %v1081 = vsel %vm1079, %v1023, 0
        %v1084 = vsel %vm1079, %v1024, 0
        %v1087 = vsel %vm1079, %v1025, 0
        %v1090 = vsel %vm1079, %v1026, 0
        %v1093 = vsel %vm1079, %v1027, 0
        %v1096 = vsel %vm1079, %v1028, 0
        %v1099 = vsel %vm1079, %v1029, 0
        %v1102 = vsel %vm1079, %v1030, 0
        %1104 = vmatprep.subr.bf16.mxu0 0
        %1105 = vmatpush1.bf16.msra.mxu0 %v1071
        %1106 = vmatprep.subr.bf16.mxu0 0
        %1107 = vmatpush1.bf16.msra.mxu0 %v1072
        %1108 = vmatprep.subr.bf16.mxu0 0
        %1109 = vmatpush1.bf16.msra.mxu0 %v1073
        %1110 = vmatprep.subr.bf16.mxu0 0
        %1111 = vmatpush1.bf16.msra.mxu0 %v1074
        %1112 = vmatprep.subr.bf16.mxu0 0
        %1113 = vmatpush1.bf16.msra.mxu0 0
        %1114 = vmatprep.subr.bf16.mxu0 0
        %1115 = vmatpush1.bf16.msra.mxu0 0
        %1116 = vmatprep.subr.bf16.mxu0 0
        %1117 = vmatpush1.bf16.msra.mxu0 0
        %1118 = vmatprep.subr.bf16.mxu0 0
        %1119 = vmatpush1.bf16.msra.mxu0 0
        %1120 = vmatprep.subr.bf16.mxu0 0
        %1121 = vmatpush1.bf16.msra.mxu0 0
        %1122 = vmatprep.subr.bf16.mxu0 0
        %1123 = vmatpush1.bf16.msra.mxu0 0
        %1124 = vmatprep.subr.bf16.mxu0 0
        %1125 = vmatpush1.bf16.msra.mxu0 0
        %1126 = vmatprep.subr.bf16.mxu0 0
        %1127 = vmatpush1.bf16.msra.mxu0 0
        %1128 = vmatprep.subr.bf16.mxu0 0
        %1129 = vmatpush1.bf16.msra.mxu0 0
        %1130 = vmatprep.subr.bf16.mxu0 0
        %1131 = vmatpush1.bf16.msra.mxu0 0
        %1132 = vmatprep.subr.bf16.mxu0 0
        %1133 = vmatpush1.bf16.msra.mxu0 0
        %1134 = vmatprep.subr.bf16.mxu0 0
        %1135 = vmatpush1.bf16.msra.mxu0 0
        %1136 = vmatprep.mubr.bf16.mxu0 0
        %1137 = vmatmul.mubr.bf16.gmra.mrb[0].mxu0 %v1081
        %v1138 = vpop.f32.mrb[0].mxu0
        %v1139 = vadd.f32 0.0, %v1138
        %v1140 = vpop.f32.mrb[0].mxu0
        %v1141 = vpop.f32.mrb[0].mxu0
        %v1142 = vadd.f32 0.0, %v1141
        %v1143 = vpop.f32.mrb[0].mxu0
        %1144 = vmatprep.mubr.bf16.mxu0 0
        %1145 = vmatmul.mubr.bf16.gmra.mrb[0].mxu0 %v1084
        %v1146 = vpop.f32.mrb[0].mxu0
        %v1147 = vadd.f32 0.0, %v1146
        %v1148 = vpop.f32.mrb[0].mxu0
        %v1149 = vpop.f32.mrb[0].mxu0
        %v1150 = vadd.f32 0.0, %v1149
        %v1151 = vpop.f32.mrb[0].mxu0
        %1152 = vmatprep.mubr.bf16.mxu0 0
        %1153 = vmatmul.mubr.bf16.gmra.mrb[0].mxu0 %v1087
        %v1154 = vpop.f32.mrb[0].mxu0
        %v1155 = vadd.f32 0.0, %v1154
        %v1156 = vpop.f32.mrb[0].mxu0
        %v1157 = vpop.f32.mrb[0].mxu0
        %v1158 = vadd.f32 0.0, %v1157
        %v1159 = vpop.f32.mrb[0].mxu0
        %1160 = vmatprep.mubr.bf16.mxu0 0
        %1161 = vmatmul.mubr.bf16.gmra.mrb[0].mxu0 %v1090
        %v1162 = vpop.f32.mrb[0].mxu0
        %v1163 = vadd.f32 0.0, %v1162
        %v1164 = vpop.f32.mrb[0].mxu0
        %v1165 = vpop.f32.mrb[0].mxu0
        %v1166 = vadd.f32 0.0, %v1165
        %v1167 = vpop.f32.mrb[0].mxu0
        %1168 = vmatprep.mubr.bf16.mxu0 0
        %1169 = vmatmul.mubr.bf16.gmra.mrb[0].mxu0 %v1093
        %v1170 = vpop.f32.mrb[0].mxu0
        %v1171 = vadd.f32 0.0, %v1170
        %v1172 = vpop.f32.mrb[0].mxu0
        %v1173 = vpop.f32.mrb[0].mxu0
        %v1174 = vadd.f32 0.0, %v1173
        %v1175 = vpop.f32.mrb[0].mxu0
        %1176 = vmatprep.mubr.bf16.mxu0 0
        %1177 = vmatmul.mubr.bf16.gmra.mrb[0].mxu0 %v1096
        %v1178 = vpop.f32.mrb[0].mxu0
        %v1179 = vadd.f32 0.0, %v1178
        %v1180 = vpop.f32.mrb[0].mxu0
        %v1181 = vpop.f32.mrb[0].mxu0
        %v1182 = vadd.f32 0.0, %v1181
        %v1183 = vpop.f32.mrb[0].mxu0
        %1184 = vmatprep.mubr.bf16.mxu0 0
        %1185 = vmatmul.mubr.bf16.gmra.mrb[0].mxu0 %v1099
        %v1186 = vpop.f32.mrb[0].mxu0
        %v1187 = vadd.f32 0.0, %v1186
        %v1188 = vpop.f32.mrb[0].mxu0
        %v1189 = vpop.f32.mrb[0].mxu0
        %v1190 = vadd.f32 0.0, %v1189
        %v1191 = vpop.f32.mrb[0].mxu0
        %1192 = vmatprep.mubr.bf16.mxu0 0
        %1193 = vmatmul.mubr.bf16.gmra.mrb[0].mxu0 %v1102
        %v1194 = vpop.f32.mrb[0].mxu0
        %v1195 = vadd.f32 0.0, %v1194
        %v1196 = vpop.f32.mrb[0].mxu0
        %v1197 = vpop.f32.mrb[0].mxu0
        %v1198 = vadd.f32 0.0, %v1197
        %v1199 = vpop.f32.mrb[0].mxu0
        %1200 = vdwg.mxu0
        %v1201 = vadd.f32 %v1031, %v1139
        %v1202 = vadd.f32 %v1032, %v1142
        %v1203 = vadd.f32 %v1033, %v1147
        %v1204 = vadd.f32 %v1034, %v1150
        %v1205 = vadd.f32 %v1035, %v1155
        %v1206 = vadd.f32 %v1036, %v1158
        %v1207 = vadd.f32 %v1037, %v1163
        %v1208 = vadd.f32 %v1038, %v1166
        %v1209 = vadd.f32 %v1039, %v1171
        %v1210 = vadd.f32 %v1040, %v1174
        %v1211 = vadd.f32 %v1041, %v1179
        %v1212 = vadd.f32 %v1042, %v1182
        %v1213 = vadd.f32 %v1043, %v1187
        %v1214 = vadd.f32 %v1044, %v1190
        %v1215 = vadd.f32 %v1045, %v1195
        %v1216 = vadd.f32 %v1046, %v1198
        %vm1217 = vcmask 261120
        %1218 = vst.msk [vmem:[#allocation2] sm:$0xff] %vm1217, %v1201
        %1219 = vst.msk [vmem:[#allocation2 + $0x8] sm:$0xff] %vm1217, %v1202
        %1220 = vst.msk [vmem:[#allocation2 + $0x10] sm:$0xff] %vm1217, %v1203
        %1221 = vst.msk [vmem:[#allocation2 + $0x18] sm:$0xff] %vm1217, %v1204
        %1222 = vst.msk [vmem:[#allocation2 + $0x20] sm:$0xff] %vm1217, %v1205
        %1223 = vst.msk [vmem:[#allocation2 + $0x28] sm:$0xff] %vm1217, %v1206
        %1224 = vst.msk [vmem:[#allocation2 + $0x30] sm:$0xff] %vm1217, %v1207
        %1225 = vst.msk [vmem:[#allocation2 + $0x38] sm:$0xff] %vm1217, %v1208
        %1226 = vst.msk [vmem:[#allocation2 + $0x40] sm:$0xff] %vm1217, %v1209
        %1227 = vst.msk [vmem:[#allocation2 + $0x48] sm:$0xff] %vm1217, %v1210
        %1228 = vst.msk [vmem:[#allocation2 + $0x50] sm:$0xff] %vm1217, %v1211
        %1229 = vst.msk [vmem:[#allocation2 + $0x58] sm:$0xff] %vm1217, %v1212
        %1230 = vst.msk [vmem:[#allocation2 + $0x60] sm:$0xff] %vm1217, %v1213
        %1231 = vst.msk [vmem:[#allocation2 + $0x68] sm:$0xff] %vm1217, %v1214
        %1232 = vst.msk [vmem:[#allocation2 + $0x70] sm:$0xff] %vm1217, %v1215
        %1233 = vst.msk [vmem:[#allocation2 + $0x78] sm:$0xff] %vm1217, %v1216
        // Predicated region
        $region73: #{tpu_custom_call.1} parent=67 // pred_check
          %p1234 = pneg %p534
        $region74: #{tpu_custom_call.1} parent=67 // pred_check_branch
          %1236 = sbr.rel (%p1234) target = $region76
        $region75: #{tpu_custom_call.1} parent=67 // pred_region
          %v1237 = vmul.f32 %v518, 2.0
          %v1238 = vmul.f32 %v519, 2.0
          %v1239 = vmul.f32 %v520, 2.0
          %v1240 = vmul.f32 %v521, 2.0
          %v1241 = vmul.f32 %v522, 2.0
          %v1242 = vmul.f32 %v523, 2.0
          %v1243 = vmul.f32 %v524, 2.0
          %v1244 = vmul.f32 %v525, 2.0
          %v1245 = vmul.f32 %v526, 2.0
          %v1246 = vmul.f32 %v527, 2.0
          %v1247 = vmul.f32 %v528, 2.0
          %v1248 = vmul.f32 %v529, 2.0
          %v1249 = vmul.f32 %v530, 2.0
          %v1250 = vmul.f32 %v531, 2.0
          %v1251 = vmul.f32 %v532, 2.0
          %v1252 = vmul.f32 %v533, 2.0
          %v1253 = vsub.f32 %v1237, 1.0
          %v1254 = vsub.f32 %v1238, 1.0
          %v1255 = vsub.f32 %v1239, 1.0
          %v1256 = vsub.f32 %v1240, 1.0
          %v1257 = vsub.f32 %v1241, 1.0
          %v1258 = vsub.f32 %v1242, 1.0
          %v1259 = vsub.f32 %v1243, 1.0
          %v1260 = vsub.f32 %v1244, 1.0
          %v1261 = vsub.f32 %v1245, 1.0
          %v1262 = vsub.f32 %v1246, 1.0
          %v1263 = vsub.f32 %v1247, 1.0
          %v1264 = vsub.f32 %v1248, 1.0
          %v1265 = vsub.f32 %v1249, 1.0
          %v1266 = vsub.f32 %v1250, 1.0
          %v1267 = vsub.f32 %v1251, 1.0
          %v1268 = vsub.f32 %v1252, 1.0
          %v1269 = vld [vmem:[%s2] sm:$0x1]
          %1271 = vset.pattern.permute.xlu0 0
          %1272 = vperm.xlu0 %1271, %v1253
          %v1273 = vpop.permute.xlu0 %1272
          %1276 = vset.pattern.permute.xlu0 0
          %1277 = vperm.xlu0 %1276, %v1254
          %v1278 = vpop.permute.xlu0 %1277
          %1281 = vset.pattern.permute.xlu0 0
          %1282 = vperm.xlu0 %1281, %v1255
          %v1283 = vpop.permute.xlu0 %1282
          %1286 = vset.pattern.permute.xlu0 0
          %1287 = vperm.xlu0 %1286, %v1256
          %v1288 = vpop.permute.xlu0 %1287
          %1291 = vset.pattern.permute.xlu0 0
          %1292 = vperm.xlu0 %1291, %v1257
          %v1293 = vpop.permute.xlu0 %1292
          %1296 = vset.pattern.permute.xlu0 0
          %1297 = vperm.xlu0 %1296, %v1258
          %v1298 = vpop.permute.xlu0 %1297
          %1301 = vset.pattern.permute.xlu0 0
          %1302 = vperm.xlu0 %1301, %v1259
          %v1303 = vpop.permute.xlu0 %1302
          %1306 = vset.pattern.permute.xlu0 0
          %1307 = vperm.xlu0 %1306, %v1260
          %v1308 = vpop.permute.xlu0 %1307
          %1311 = vset.pattern.permute.xlu0 0
          %1312 = vperm.xlu0 %1311, %v1261
          %v1313 = vpop.permute.xlu0 %1312
          %1316 = vset.pattern.permute.xlu0 0
          %1317 = vperm.xlu0 %1316, %v1262
          %v1318 = vpop.permute.xlu0 %1317
          %1321 = vset.pattern.permute.xlu0 0
          %1322 = vperm.xlu0 %1321, %v1263
          %v1323 = vpop.permute.xlu0 %1322
          %1326 = vset.pattern.permute.xlu0 0
          %1327 = vperm.xlu0 %1326, %v1264
          %v1328 = vpop.permute.xlu0 %1327
          %1331 = vset.pattern.permute.xlu0 0
          %1332 = vperm.xlu0 %1331, %v1265
          %v1333 = vpop.permute.xlu0 %1332
          %1336 = vset.pattern.permute.xlu0 0
          %1337 = vperm.xlu0 %1336, %v1266
          %v1338 = vpop.permute.xlu0 %1337
          %1341 = vset.pattern.permute.xlu0 0
          %1342 = vperm.xlu0 %1341, %v1267
          %v1343 = vpop.permute.xlu0 %1342
          %1346 = vset.pattern.permute.xlu0 0
          %1347 = vperm.xlu0 %1346, %v1268
          %v1348 = vpop.permute.xlu0 %1347
          %v1350 = vlaneseq
          %v1351 = vshrl.u32 %v1350, 7
          %v1352 = vsub.s32 0, %v1351
          %v1353 = vrot.slane %v1269, %v1352
          %v1354 = vmul.f32 %v1273, %v1353
          %v1355 = vmul.f32 %v1278, %v1353
          %v1356 = vmul.f32 %v1283, %v1353
          %v1357 = vmul.f32 %v1288, %v1353
          %v1358 = vmul.f32 %v1293, %v1353
          %v1359 = vmul.f32 %v1298, %v1353
          %v1360 = vmul.f32 %v1303, %v1353
          %v1361 = vmul.f32 %v1308, %v1353
          %v1362 = vmul.f32 %v1313, %v1353
          %v1363 = vmul.f32 %v1318, %v1353
          %v1364 = vmul.f32 %v1323, %v1353
          %v1365 = vmul.f32 %v1328, %v1353
          %v1366 = vmul.f32 %v1333, %v1353
          %v1367 = vmul.f32 %v1338, %v1353
          %v1368 = vmul.f32 %v1343, %v1353
          %v1369 = vmul.f32 %v1348, %v1353
          %v1370 = vld [vmem:[%s2 + $0x1] sm:$0x1]
          %1371 = vset.pattern.permute.xlu0 1
          %1372 = vperm.xlu0 %1371, %v1253
          %v1373 = vpop.permute.xlu0 %1372
          %1375 = vset.pattern.permute.xlu0 1
          %1376 = vperm.xlu0 %1375, %v1254
          %v1377 = vpop.permute.xlu0 %1376
          %1379 = vset.pattern.permute.xlu0 1
          %1380 = vperm.xlu0 %1379, %v1255
          %v1381 = vpop.permute.xlu0 %1380
          %1383 = vset.pattern.permute.xlu0 1
          %1384 = vperm.xlu0 %1383, %v1256
          %v1385 = vpop.permute.xlu0 %1384
          %1387 = vset.pattern.permute.xlu0 1
          %1388 = vperm.xlu0 %1387, %v1257
          %v1389 = vpop.permute.xlu0 %1388
          %1391 = vset.pattern.permute.xlu0 1
          %1392 = vperm.xlu0 %1391, %v1258
          %v1393 = vpop.permute.xlu0 %1392
          %1395 = vset.pattern.permute.xlu0 1
          %1396 = vperm.xlu0 %1395, %v1259
          %v1397 = vpop.permute.xlu0 %1396
          %1399 = vset.pattern.permute.xlu0 1
          %1400 = vperm.xlu0 %1399, %v1260
          %v1401 = vpop.permute.xlu0 %1400
          %1403 = vset.pattern.permute.xlu0 1
          %1404 = vperm.xlu0 %1403, %v1261
          %v1405 = vpop.permute.xlu0 %1404
          %1407 = vset.pattern.permute.xlu0 1
          %1408 = vperm.xlu0 %1407, %v1262
          %v1409 = vpop.permute.xlu0 %1408
          %1411 = vset.pattern.permute.xlu0 1
          %1412 = vperm.xlu0 %1411, %v1263
          %v1413 = vpop.permute.xlu0 %1412
          %1415 = vset.pattern.permute.xlu0 1
          %1416 = vperm.xlu0 %1415, %v1264
          %v1417 = vpop.permute.xlu0 %1416
          %1419 = vset.pattern.permute.xlu0 1
          %1420 = vperm.xlu0 %1419, %v1265
          %v1421 = vpop.permute.xlu0 %1420
          %1423 = vset.pattern.permute.xlu0 1
          %1424 = vperm.xlu0 %1423, %v1266
          %v1425 = vpop.permute.xlu0 %1424
          %1427 = vset.pattern.permute.xlu0 1
          %1428 = vperm.xlu0 %1427, %v1267
          %v1429 = vpop.permute.xlu0 %1428
          %1431 = vset.pattern.permute.xlu0 1
          %1432 = vperm.xlu0 %1431, %v1268
          %v1433 = vpop.permute.xlu0 %1432
          %v1435 = vlaneseq
          %v1436 = vshrl.u32 %v1435, 7
          %v1437 = vsub.s32 0, %v1436
          %v1438 = vrot.slane %v1370, %v1437
          %v1439 = vmul.f32 %v1373, %v1438
          %v1440 = vmul.f32 %v1377, %v1438
          %v1441 = vmul.f32 %v1381, %v1438
          %v1442 = vmul.f32 %v1385, %v1438
          %v1443 = vmul.f32 %v1389, %v1438
          %v1444 = vmul.f32 %v1393, %v1438
          %v1445 = vmul.f32 %v1397, %v1438
          %v1446 = vmul.f32 %v1401, %v1438
          %v1447 = vmul.f32 %v1405, %v1438
          %v1448 = vmul.f32 %v1409, %v1438
          %v1449 = vmul.f32 %v1413, %v1438
          %v1450 = vmul.f32 %v1417, %v1438
          %v1451 = vmul.f32 %v1421, %v1438
          %v1452 = vmul.f32 %v1425, %v1438
          %v1453 = vmul.f32 %v1429, %v1438
          %v1454 = vmul.f32 %v1433, %v1438
          %v1455 = vadd.f32 %v1354, %v1439
          %v1456 = vadd.f32 %v1355, %v1440
          %v1457 = vadd.f32 %v1356, %v1441
          %v1458 = vadd.f32 %v1357, %v1442
          %v1459 = vadd.f32 %v1358, %v1443
          %v1460 = vadd.f32 %v1359, %v1444
          %v1461 = vadd.f32 %v1360, %v1445
          %v1462 = vadd.f32 %v1361, %v1446
          %v1463 = vadd.f32 %v1362, %v1447
          %v1464 = vadd.f32 %v1363, %v1448
          %v1465 = vadd.f32 %v1364, %v1449
          %v1466 = vadd.f32 %v1365, %v1450
          %v1467 = vadd.f32 %v1366, %v1451
          %v1468 = vadd.f32 %v1367, %v1452
          %v1469 = vadd.f32 %v1368, %v1453
          %v1470 = vadd.f32 %v1369, %v1454
          %v1471 = vmul.f32 %v1455, 6.2831855
          %v1472 = vmul.f32 %v1456, 6.2831855
          %v1473 = vmul.f32 %v1457, 6.2831855
          %v1474 = vmul.f32 %v1458, 6.2831855
          %v1475 = vmul.f32 %v1459, 6.2831855
          %v1476 = vmul.f32 %v1460, 6.2831855
          %v1477 = vmul.f32 %v1461, 6.2831855
          %v1478 = vmul.f32 %v1462, 6.2831855
          %v1479 = vmul.f32 %v1463, 6.2831855
          %v1480 = vmul.f32 %v1464, 6.2831855
          %v1481 = vmul.f32 %v1465, 6.2831855
          %v1482 = vmul.f32 %v1466, 6.2831855
          %v1483 = vmul.f32 %v1467, 6.2831855
          %v1484 = vmul.f32 %v1468, 6.2831855
          %v1485 = vmul.f32 %v1469, 6.2831855
          %v1486 = vmul.f32 %v1470, 6.2831855
          %v1487 = vld [vmem:[%s3] sm:$0x1]
          %v1489 = vlaneseq
          %v1490 = vshrl.u32 %v1489, 7
          %v1491 = vsub.s32 0, %v1490
          %v1492 = vrot.slane %v1487, %v1491
          %v1494 = vadd.f32 %v1471, %v1492
          %v1495 = vadd.f32 %v1472, %v1492
          %v1496 = vadd.f32 %v1473, %v1492
          %v1497 = vadd.f32 %v1474, %v1492
          %v1498 = vadd.f32 %v1475, %v1492
          %v1499 = vadd.f32 %v1476, %v1492
          %v1500 = vadd.f32 %v1477, %v1492
          %v1501 = vadd.f32 %v1478, %v1492
          %v1502 = vadd.f32 %v1479, %v1492
          %v1503 = vadd.f32 %v1480, %v1492
          %v1504 = vadd.f32 %v1481, %v1492
          %v1505 = vadd.f32 %v1482, %v1492
          %v1506 = vadd.f32 %v1483, %v1492
          %v1507 = vadd.f32 %v1484, %v1492
          %v1508 = vadd.f32 %v1485, %v1492
          %v1509 = vadd.f32 %v1486, %v1492
          %v1510 = vand.u32 2147483647, %v1494
          %vm1511 = vcmp.le.f32.partialorder %v1510, 0.7853982
          %vm1512 = vcmp.lt.s32.totalorder %v1494, 0
          %v1513 = vand.u32 %v1494, 2139095040
          %v1514 = vshrl.u32 %v1513, 23
          %v1515 = vsub.s32 %v1514, 127
          %v1516 = vand.u32 2147483647, %v1494
          %v1517 = vand.u32 %v1516, 8388607
          %v1518 = vor.u32 %v1517, 8388608
          %v1519 = vsub.s32 0, %v1518
          %v1520 = vadd.s32 %v1515, 1
          %vm1521 = vcmp.gt.s32.totalorder %v1520, 0
          %v1522 = vsel %vm1521, %v1520, 0
          %v1523 = vshrl.u32 %v1522, 5
          %v1524 = vand.u32 %v1522, 31
          %v1525 = vsub.s32 32, %v1524
          %v1526 = vshrl.u32 683565275, %v1525
          %v1527 = vshll.u32 683565275, %v1524
          %v1528 = vshrl.u32 2475754826, %v1525
          %v1529 = vor.u32 %v1527, %v1528
          %v1530 = vshll.u32 2475754826, %v1524
          %v1531 = vshrl.u32 2131351028, %v1525
          %v1532 = vor.u32 %v1530, %v1531
          %v1533 = vshll.u32 2131351028, %v1524
          %v1534 = vshrl.u32 2102212464, %v1525
          %v1535 = vor.u32 %v1533, %v1534
          %v1536 = vshll.u32 2102212464, %v1524
          %v1537 = vshrl.u32 920167782, %v1525
          %v1538 = vor.u32 %v1536, %v1537
          %v1539 = vshll.u32 920167782, %v1524
          %v1540 = vshrl.u32 1326507024, %v1525
          %v1541 = vor.u32 %v1539, %v1540
          %vm1542 = vcmp.lt.s32.totalorder %v1523, 1
          %vm1543 = vcmp.lt.s32.totalorder %v1523, 2
          %vm1544 = vcmp.lt.s32.totalorder %v1523, 3
          %vm1545 = vcmp.lt.s32.totalorder %v1523, 4
          %v1546 = vsel %vm1542, %v1526, %v1529
          %v1547 = vsel %vm1545, %v1535, 2102212464
          %v1548 = vsel %vm1544, %v1532, %v1547
          %v1549 = vsel %vm1543, %v1546, %v1548
          %v1550 = vsel %vm1542, %v1529, %v1532
          %v1551 = vsel %vm1545, %v1538, 920167782
          %v1552 = vsel %vm1544, %v1535, %v1551
          %v1553 = vsel %vm1543, %v1550, %v1552
          %v1554 = vsel %vm1542, %v1532, %v1535
          %v1555 = vsel %vm1545, %v1541, 1326507024
          %v1556 = vsel %vm1544, %v1538, %v1555
          %v1557 = vsel %vm1543, %v1554, %v1556
          %v1558 = vshll.u32 %v1518, 8
          %v1559 = vmul.u32.u64.compose %v1558, %v1557
          %v1560 = vextract.low.u32 %v1559
          %v1561 = vextract.high.u32 %v1559
          %v1562 = vmul.u32.u64.compose %v1558, %v1553
          %v1563 = vextract.low.u32 %v1562
          %v1564 = vextract.high.u32 %v1562
          %v1565 = vmul.u32 %v1558, %v1549
          %v1566 = vadd.s32 %v1561, %v1563
          %vm1567 = vc.u32 %v1561, %v1563
          %v1568 = vadd.s32 %v1564, 1
          %v1569 = vsel %vm1567, %v1568, %v1564
          %v1570 = vadd.s32 %v1565, %v1569
          %v1571 = vadd.s32 %v1570, 536870912
          %v1572 = vshrl.u32 %v1571, 30
          %v1573 = vshll.u32 %v1572, 30
          %v1574 = vsub.s32 %v1570, %v1573
          %vm1575 = vcmp.lt.s32.totalorder %v1574, 0
          %v1576 = vsub.s32 0, %v1574
          %v1577 = vsel %vm1575, %v1576, %v1574
          %v1578 = vclz %v1577
          %v1579 = vsub.s32 %v1578, 2
          %vm1580 = vcmp.gt.s32.totalorder 0, %v1579
          %v1581 = vsel %vm1580, 0, %v1579
          %v1582 = vsub.s32 32, %v1581
          %v1583 = vshll.u32 %v1574, %v1581
          %v1584 = vshrl.u32 %v1566, %v1582
          %v1585 = vor.u32 %v1583, %v1584
          %v1586 = vsub.s32 4294967266, %v1581
          %v1587 = vadd.s32 %v1586, 127
          %v1588 = vshll.u32 %v1587, 23
          %v1589 = vor.u32 4788187, %v1588
          %v1590 = vand.u32 2147483647, %v1589
          %v1592 = vcvt.s32.f32 %v1585
          %v1593 = vmul.f32 %v1592, %v1590
          %v1594 = vxor.u32 %v1593, 2147483648
          %v1595 = vsel %vm1512, %v1594, %v1593
          %v1596 = vsub.s32 4, %v1572
          %v1597 = vsel %vm1512, %v1596, %v1572
          %v1598 = vsel %vm1511, %v1494, %v1595
          %v1599 = vsel %vm1511, 0, %v1597
          %v1600 = vcosq.f32.pop %v1598
          %v1601 = vsinq.f32.pop %v1598
          %vm1602 = vweird.f32 %v1494
          %v1603 = vadd.s32 %v1599, 3
          %v1604 = vand.u32 %v1603, 3
          %vm1605 = vcmp.lt.s32.totalorder %v1604, 2
          %vm1606 = vcmp.eq.s32.totalorder %v1604, 0
          %v1607 = vxor.u32 %v1601, 2147483648
          %v1608 = vsel %vm1606, %v1600, %v1607
          %vm1609 = vcmp.eq.s32.totalorder %v1604, 2
          %v1610 = vxor.u32 %v1600, 2147483648
          %v1611 = vsel %vm1609, %v1610, %v1601
          %v1612 = vsel %vm1605, %v1608, %v1611
          %v1613 = vsel %vm1602, nan, %v1612
          %v1614 = vand.u32 2147483647, %v1495
          %vm1615 = vcmp.le.f32.partialorder %v1614, 0.7853982
          %vm1616 = vcmp.lt.s32.totalorder %v1495, 0
          %v1617 = vand.u32 %v1495, 2139095040
          %v1618 = vshrl.u32 %v1617, 23
          %v1619 = vsub.s32 %v1618, 127
          %v1620 = vand.u32 2147483647, %v1495
          %v1621 = vand.u32 %v1620, 8388607
          %v1622 = vor.u32 %v1621, 8388608
          %v1623 = vsub.s32 0, %v1622
          %v1624 = vadd.s32 %v1619, 1
          %vm1625 = vcmp.gt.s32.totalorder %v1624, 0
          %v1626 = vsel %vm1625, %v1624, 0
          %v1627 = vshrl.u32 %v1626, 5
          %v1628 = vand.u32 %v1626, 31
          %v1629 = vsub.s32 32, %v1628
          %v1630 = vshrl.u32 683565275, %v1629
          %v1631 = vshll.u32 683565275, %v1628
          %v1632 = vshrl.u32 2475754826, %v1629
          %v1633 = vor.u32 %v1631, %v1632
          %v1634 = vshll.u32 2475754826, %v1628
          %v1635 = vshrl.u32 2131351028, %v1629
          %v1636 = vor.u32 %v1634, %v1635
          %v1637 = vshll.u32 2131351028, %v1628
          %v1638 = vshrl.u32 2102212464, %v1629
          %v1639 = vor.u32 %v1637, %v1638
          %v1640 = vshll.u32 2102212464, %v1628
          %v1641 = vshrl.u32 920167782, %v1629
          %v1642 = vor.u32 %v1640, %v1641
          %v1643 = vshll.u32 920167782, %v1628
          %v1644 = vshrl.u32 1326507024, %v1629
          %v1645 = vor.u32 %v1643, %v1644
          %vm1646 = vcmp.lt.s32.totalorder %v1627, 1
          %vm1647 = vcmp.lt.s32.totalorder %v1627, 2
          %vm1648 = vcmp.lt.s32.totalorder %v1627, 3
          %vm1649 = vcmp.lt.s32.totalorder %v1627, 4
          %v1650 = vsel %vm1646, %v1630, %v1633
          %v1651 = vsel %vm1649, %v1639, 2102212464
          %v1652 = vsel %vm1648, %v1636, %v1651
          %v1653 = vsel %vm1647, %v1650, %v1652
          %v1654 = vsel %vm1646, %v1633, %v1636
          %v1655 = vsel %vm1649, %v1642, 920167782
          %v1656 = vsel %vm1648, %v1639, %v1655
          %v1657 = vsel %vm1647, %v1654, %v1656
          %v1658 = vsel %vm1646, %v1636, %v1639
          %v1659 = vsel %vm1649, %v1645, 1326507024
          %v1660 = vsel %vm1648, %v1642, %v1659
          %v1661 = vsel %vm1647, %v1658, %v1660
          %v1662 = vshll.u32 %v1622, 8
          %v1663 = vmul.u32.u64.compose %v1662, %v1661
          %v1664 = vextract.low.u32 %v1663
          %v1665 = vextract.high.u32 %v1663
          %v1666 = vmul.u32.u64.compose %v1662, %v1657
          %v1667 = vextract.low.u32 %v1666
          %v1668 = vextract.high.u32 %v1666
          %v1669 = vmul.u32 %v1662, %v1653
          %v1670 = vadd.s32 %v1665, %v1667
          %vm1671 = vc.u32 %v1665, %v1667
          %v1672 = vadd.s32 %v1668, 1
          %v1673 = vsel %vm1671, %v1672, %v1668
          %v1674 = vadd.s32 %v1669, %v1673
          %v1675 = vadd.s32 %v1674, 536870912
          %v1676 = vshrl.u32 %v1675, 30
          %v1677 = vshll.u32 %v1676, 30
          %v1678 = vsub.s32 %v1674, %v1677
          %vm1679 = vcmp.lt.s32.totalorder %v1678, 0
          %v1680 = vsub.s32 0, %v1678
          %v1681 = vsel %vm1679, %v1680, %v1678
          %v1682 = vclz %v1681
          %v1683 = vsub.s32 %v1682, 2
          %vm1684 = vcmp.gt.s32.totalorder 0, %v1683
          %v1685 = vsel %vm1684, 0, %v1683
          %v1686 = vsub.s32 32, %v1685
          %v1687 = vshll.u32 %v1678, %v1685
          %v1688 = vshrl.u32 %v1670, %v1686
          %v1689 = vor.u32 %v1687, %v1688
          %v1690 = vsub.s32 4294967266, %v1685
          %v1691 = vadd.s32 %v1690, 127
          %v1692 = vshll.u32 %v1691, 23
          %v1693 = vor.u32 4788187, %v1692
          %v1694 = vand.u32 2147483647, %v1693
          %v1696 = vcvt.s32.f32 %v1689
          %v1697 = vmul.f32 %v1696, %v1694
          %v1698 = vxor.u32 %v1697, 2147483648
          %v1699 = vsel %vm1616, %v1698, %v1697
          %v1700 = vsub.s32 4, %v1676
          %v1701 = vsel %vm1616, %v1700, %v1676
          %v1702 = vsel %vm1615, %v1495, %v1699
          %v1703 = vsel %vm1615, 0, %v1701
          %v1704 = vcosq.f32.pop %v1702
          %v1705 = vsinq.f32.pop %v1702
          %vm1706 = vweird.f32 %v1495
          %v1707 = vadd.s32 %v1703, 3
          %v1708 = vand.u32 %v1707, 3
          %vm1709 = vcmp.lt.s32.totalorder %v1708, 2
          %vm1710 = vcmp.eq.s32.totalorder %v1708, 0
          %v1711 = vxor.u32 %v1705, 2147483648
          %v1712 = vsel %vm1710, %v1704, %v1711
          %vm1713 = vcmp.eq.s32.totalorder %v1708, 2
          %v1714 = vxor.u32 %v1704, 2147483648
          %v1715 = vsel %vm1713, %v1714, %v1705
          %v1716 = vsel %vm1709, %v1712, %v1715
          %v1717 = vsel %vm1706, nan, %v1716
          %v1718 = vand.u32 2147483647, %v1496
          %vm1719 = vcmp.le.f32.partialorder %v1718, 0.7853982
          %vm1720 = vcmp.lt.s32.totalorder %v1496, 0
          %v1721 = vand.u32 %v1496, 2139095040
          %v1722 = vshrl.u32 %v1721, 23
          %v1723 = vsub.s32 %v1722, 127
          %v1724 = vand.u32 2147483647, %v1496
          %v1725 = vand.u32 %v1724, 8388607
          %v1726 = vor.u32 %v1725, 8388608
          %v1727 = vsub.s32 0, %v1726
          %v1728 = vadd.s32 %v1723, 1
          %vm1729 = vcmp.gt.s32.totalorder %v1728, 0
          %v1730 = vsel %vm1729, %v1728, 0
          %v1731 = vshrl.u32 %v1730, 5
          %v1732 = vand.u32 %v1730, 31
          %v1733 = vsub.s32 32, %v1732
          %v1734 = vshrl.u32 683565275, %v1733
          %v1735 = vshll.u32 683565275, %v1732
          %v1736 = vshrl.u32 2475754826, %v1733
          %v1737 = vor.u32 %v1735, %v1736
          %v1738 = vshll.u32 2475754826, %v1732
          %v1739 = vshrl.u32 2131351028, %v1733
          %v1740 = vor.u32 %v1738, %v1739
          %v1741 = vshll.u32 2131351028, %v1732
          %v1742 = vshrl.u32 2102212464, %v1733
          %v1743 = vor.u32 %v1741, %v1742
          %v1744 = vshll.u32 2102212464, %v1732
          %v1745 = vshrl.u32 920167782, %v1733
          %v1746 = vor.u32 %v1744, %v1745
          %v1747 = vshll.u32 920167782, %v1732
          %v1748 = vshrl.u32 1326507024, %v1733
          %v1749 = vor.u32 %v1747, %v1748
          %vm1750 = vcmp.lt.s32.totalorder %v1731, 1
          %vm1751 = vcmp.lt.s32.totalorder %v1731, 2
          %vm1752 = vcmp.lt.s32.totalorder %v1731, 3
          %vm1753 = vcmp.lt.s32.totalorder %v1731, 4
          %v1754 = vsel %vm1750, %v1734, %v1737
          %v1755 = vsel %vm1753, %v1743, 2102212464
          %v1756 = vsel %vm1752, %v1740, %v1755
          %v1757 = vsel %vm1751, %v1754, %v1756
          %v1758 = vsel %vm1750, %v1737, %v1740
          %v1759 = vsel %vm1753, %v1746, 920167782
          %v1760 = vsel %vm1752, %v1743, %v1759
          %v1761 = vsel %vm1751, %v1758, %v1760
          %v1762 = vsel %vm1750, %v1740, %v1743
          %v1763 = vsel %vm1753, %v1749, 1326507024
          %v1764 = vsel %vm1752, %v1746, %v1763
          %v1765 = vsel %vm1751, %v1762, %v1764
          %v1766 = vshll.u32 %v1726, 8
          %v1767 = vmul.u32.u64.compose %v1766, %v1765
          %v1768 = vextract.low.u32 %v1767
          %v1769 = vextract.high.u32 %v1767
          %v1770 = vmul.u32.u64.compose %v1766, %v1761
          %v1771 = vextract.low.u32 %v1770
          %v1772 = vextract.high.u32 %v1770
          %v1773 = vmul.u32 %v1766, %v1757
          %v1774 = vadd.s32 %v1769, %v1771
          %vm1775 = vc.u32 %v1769, %v1771
          %v1776 = vadd.s32 %v1772, 1
          %v1777 = vsel %vm1775, %v1776, %v1772
          %v1778 = vadd.s32 %v1773, %v1777
          %v1779 = vadd.s32 %v1778, 536870912
          %v1780 = vshrl.u32 %v1779, 30
          %v1781 = vshll.u32 %v1780, 30
          %v1782 = vsub.s32 %v1778, %v1781
          %vm1783 = vcmp.lt.s32.totalorder %v1782, 0
          %v1784 = vsub.s32 0, %v1782
          %v1785 = vsel %vm1783, %v1784, %v1782
          %v1786 = vclz %v1785
          %v1787 = vsub.s32 %v1786, 2
          %vm1788 = vcmp.gt.s32.totalorder 0, %v1787
          %v1789 = vsel %vm1788, 0, %v1787
          %v1790 = vsub.s32 32, %v1789
          %v1791 = vshll.u32 %v1782, %v1789
          %v1792 = vshrl.u32 %v1774, %v1790
          %v1793 = vor.u32 %v1791, %v1792
          %v1794 = vsub.s32 4294967266, %v1789
          %v1795 = vadd.s32 %v1794, 127
          %v1796 = vshll.u32 %v1795, 23
          %v1797 = vor.u32 4788187, %v1796
          %v1798 = vand.u32 2147483647, %v1797
          %v1800 = vcvt.s32.f32 %v1793
          %v1801 = vmul.f32 %v1800, %v1798
          %v1802 = vxor.u32 %v1801, 2147483648
          %v1803 = vsel %vm1720, %v1802, %v1801
          %v1804 = vsub.s32 4, %v1780
          %v1805 = vsel %vm1720, %v1804, %v1780
          %v1806 = vsel %vm1719, %v1496, %v1803
          %v1807 = vsel %vm1719, 0, %v1805
          %v1808 = vcosq.f32.pop %v1806
          %v1809 = vsinq.f32.pop %v1806
          %vm1810 = vweird.f32 %v1496
          %v1811 = vadd.s32 %v1807, 3
          %v1812 = vand.u32 %v1811, 3
          %vm1813 = vcmp.lt.s32.totalorder %v1812, 2
          %vm1814 = vcmp.eq.s32.totalorder %v1812, 0
          %v1815 = vxor.u32 %v1809, 2147483648
          %v1816 = vsel %vm1814, %v1808, %v1815
          %vm1817 = vcmp.eq.s32.totalorder %v1812, 2
          %v1818 = vxor.u32 %v1808, 2147483648
          %v1819 = vsel %vm1817, %v1818, %v1809
          %v1820 = vsel %vm1813, %v1816, %v1819
          %v1821 = vsel %vm1810, nan, %v1820
          %v1822 = vand.u32 2147483647, %v1497
          %vm1823 = vcmp.le.f32.partialorder %v1822, 0.7853982
          %vm1824 = vcmp.lt.s32.totalorder %v1497, 0
          %v1825 = vand.u32 %v1497, 2139095040
          %v1826 = vshrl.u32 %v1825, 23
          %v1827 = vsub.s32 %v1826, 127
          %v1828 = vand.u32 2147483647, %v1497
          %v1829 = vand.u32 %v1828, 8388607
          %v1830 = vor.u32 %v1829, 8388608
          %v1831 = vsub.s32 0, %v1830
          %v1832 = vadd.s32 %v1827, 1
          %vm1833 = vcmp.gt.s32.totalorder %v1832, 0
          %v1834 = vsel %vm1833, %v1832, 0
          %v1835 = vshrl.u32 %v1834, 5
          %v1836 = vand.u32 %v1834, 31
          %v1837 = vsub.s32 32, %v1836
          %v1838 = vshrl.u32 683565275, %v1837
          %v1839 = vshll.u32 683565275, %v1836
          %v1840 = vshrl.u32 2475754826, %v1837
          %v1841 = vor.u32 %v1839, %v1840
          %v1842 = vshll.u32 2475754826, %v1836
          %v1843 = vshrl.u32 2131351028, %v1837
          %v1844 = vor.u32 %v1842, %v1843
          %v1845 = vshll.u32 2131351028, %v1836
          %v1846 = vshrl.u32 2102212464, %v1837
          %v1847 = vor.u32 %v1845, %v1846
          %v1848 = vshll.u32 2102212464, %v1836
          %v1849 = vshrl.u32 920167782, %v1837
          %v1850 = vor.u32 %v1848, %v1849
          %v1851 = vshll.u32 920167782, %v1836
          %v1852 = vshrl.u32 1326507024, %v1837
          %v1853 = vor.u32 %v1851, %v1852
          %vm1854 = vcmp.lt.s32.totalorder %v1835, 1
          %vm1855 = vcmp.lt.s32.totalorder %v1835, 2
          %vm1856 = vcmp.lt.s32.totalorder %v1835, 3
          %vm1857 = vcmp.lt.s32.totalorder %v1835, 4
          %v1858 = vsel %vm1854, %v1838, %v1841
          %v1859 = vsel %vm1857, %v1847, 2102212464
          %v1860 = vsel %vm1856, %v1844, %v1859
          %v1861 = vsel %vm1855, %v1858, %v1860
          %v1862 = vsel %vm1854, %v1841, %v1844
          %v1863 = vsel %vm1857, %v1850, 920167782
          %v1864 = vsel %vm1856, %v1847, %v1863
          %v1865 = vsel %vm1855, %v1862, %v1864
          %v1866 = vsel %vm1854, %v1844, %v1847
          %v1867 = vsel %vm1857, %v1853, 1326507024
          %v1868 = vsel %vm1856, %v1850, %v1867
          %v1869 = vsel %vm1855, %v1866, %v1868
          %v1870 = vshll.u32 %v1830, 8
          %v1871 = vmul.u32.u64.compose %v1870, %v1869
          %v1872 = vextract.low.u32 %v1871
          %v1873 = vextract.high.u32 %v1871
          %v1874 = vmul.u32.u64.compose %v1870, %v1865
          %v1875 = vextract.low.u32 %v1874
          %v1876 = vextract.high.u32 %v1874
          %v1877 = vmul.u32 %v1870, %v1861
          %v1878 = vadd.s32 %v1873, %v1875
          %vm1879 = vc.u32 %v1873, %v1875
          %v1880 = vadd.s32 %v1876, 1
          %v1881 = vsel %vm1879, %v1880, %v1876
          %v1882 = vadd.s32 %v1877, %v1881
          %v1883 = vadd.s32 %v1882, 536870912
          %v1884 = vshrl.u32 %v1883, 30
          %v1885 = vshll.u32 %v1884, 30
          %v1886 = vsub.s32 %v1882, %v1885
          %vm1887 = vcmp.lt.s32.totalorder %v1886, 0
          %v1888 = vsub.s32 0, %v1886
          %v1889 = vsel %vm1887, %v1888, %v1886
          %v1890 = vclz %v1889
          %v1891 = vsub.s32 %v1890, 2
          %vm1892 = vcmp.gt.s32.totalorder 0, %v1891
          %v1893 = vsel %vm1892, 0, %v1891
          %v1894 = vsub.s32 32, %v1893
          %v1895 = vshll.u32 %v1886, %v1893
          %v1896 = vshrl.u32 %v1878, %v1894
          %v1897 = vor.u32 %v1895, %v1896
          %v1898 = vsub.s32 4294967266, %v1893
          %v1899 = vadd.s32 %v1898, 127
          %v1900 = vshll.u32 %v1899, 23
          %v1901 = vor.u32 4788187, %v1900
          %v1902 = vand.u32 2147483647, %v1901
          %v1904 = vcvt.s32.f32 %v1897
          %v1905 = vmul.f32 %v1904, %v1902
          %v1906 = vxor.u32 %v1905, 2147483648
          %v1907 = vsel %vm1824, %v1906, %v1905
          %v1908 = vsub.s32 4, %v1884
          %v1909 = vsel %vm1824, %v1908, %v1884
          %v1910 = vsel %vm1823, %v1497, %v1907
          %v1911 = vsel %vm1823, 0, %v1909
          %v1912 = vcosq.f32.pop %v1910
          %v1913 = vsinq.f32.pop %v1910
          %vm1914 = vweird.f32 %v1497
          %v1915 = vadd.s32 %v1911, 3
          %v1916 = vand.u32 %v1915, 3
          %vm1917 = vcmp.lt.s32.totalorder %v1916, 2
          %vm1918 = vcmp.eq.s32.totalorder %v1916, 0
          %v1919 = vxor.u32 %v1913, 2147483648
          %v1920 = vsel %vm1918, %v1912, %v1919
          %vm1921 = vcmp.eq.s32.totalorder %v1916, 2
          %v1922 = vxor.u32 %v1912, 2147483648
          %v1923 = vsel %vm1921, %v1922, %v1913
          %v1924 = vsel %vm1917, %v1920, %v1923
          %v1925 = vsel %vm1914, nan, %v1924
          %v1926 = vand.u32 2147483647, %v1498
          %vm1927 = vcmp.le.f32.partialorder %v1926, 0.7853982
          %vm1928 = vcmp.lt.s32.totalorder %v1498, 0
          %v1929 = vand.u32 %v1498, 2139095040
          %v1930 = vshrl.u32 %v1929, 23
          %v1931 = vsub.s32 %v1930, 127
          %v1932 = vand.u32 2147483647, %v1498
          %v1933 = vand.u32 %v1932, 8388607
          %v1934 = vor.u32 %v1933, 8388608
          %v1935 = vsub.s32 0, %v1934
          %v1936 = vadd.s32 %v1931, 1
          %vm1937 = vcmp.gt.s32.totalorder %v1936, 0
          %v1938 = vsel %vm1937, %v1936, 0
          %v1939 = vshrl.u32 %v1938, 5
          %v1940 = vand.u32 %v1938, 31
          %v1941 = vsub.s32 32, %v1940
          %v1942 = vshrl.u32 683565275, %v1941
          %v1943 = vshll.u32 683565275, %v1940
          %v1944 = vshrl.u32 2475754826, %v1941
          %v1945 = vor.u32 %v1943, %v1944
          %v1946 = vshll.u32 2475754826, %v1940
          %v1947 = vshrl.u32 2131351028, %v1941
          %v1948 = vor.u32 %v1946, %v1947
          %v1949 = vshll.u32 2131351028, %v1940
          %v1950 = vshrl.u32 2102212464, %v1941
          %v1951 = vor.u32 %v1949, %v1950
          %v1952 = vshll.u32 2102212464, %v1940
          %v1953 = vshrl.u32 920167782, %v1941
          %v1954 = vor.u32 %v1952, %v1953
          %v1955 = vshll.u32 920167782, %v1940
          %v1956 = vshrl.u32 1326507024, %v1941
          %v1957 = vor.u32 %v1955, %v1956
          %vm1958 = vcmp.lt.s32.totalorder %v1939, 1
          %vm1959 = vcmp.lt.s32.totalorder %v1939, 2
          %vm1960 = vcmp.lt.s32.totalorder %v1939, 3
          %vm1961 = vcmp.lt.s32.totalorder %v1939, 4
          %v1962 = vsel %vm1958, %v1942, %v1945
          %v1963 = vsel %vm1961, %v1951, 2102212464
          %v1964 = vsel %vm1960, %v1948, %v1963
          %v1965 = vsel %vm1959, %v1962, %v1964
          %v1966 = vsel %vm1958, %v1945, %v1948
          %v1967 = vsel %vm1961, %v1954, 920167782
          %v1968 = vsel %vm1960, %v1951, %v1967
          %v1969 = vsel %vm1959, %v1966, %v1968
          %v1970 = vsel %vm1958, %v1948, %v1951
          %v1971 = vsel %vm1961, %v1957, 1326507024
          %v1972 = vsel %vm1960, %v1954, %v1971
          %v1973 = vsel %vm1959, %v1970, %v1972
          %v1974 = vshll.u32 %v1934, 8
          %v1975 = vmul.u32.u64.compose %v1974, %v1973
          %v1976 = vextract.low.u32 %v1975
          %v1977 = vextract.high.u32 %v1975
          %v1978 = vmul.u32.u64.compose %v1974, %v1969
          %v1979 = vextract.low.u32 %v1978
          %v1980 = vextract.high.u32 %v1978
          %v1981 = vmul.u32 %v1974, %v1965
          %v1982 = vadd.s32 %v1977, %v1979
          %vm1983 = vc.u32 %v1977, %v1979
          %v1984 = vadd.s32 %v1980, 1
          %v1985 = vsel %vm1983, %v1984, %v1980
          %v1986 = vadd.s32 %v1981, %v1985
          %v1987 = vadd.s32 %v1986, 536870912
          %v1988 = vshrl.u32 %v1987, 30
          %v1989 = vshll.u32 %v1988, 30
          %v1990 = vsub.s32 %v1986, %v1989
          %vm1991 = vcmp.lt.s32.totalorder %v1990, 0
          %v1992 = vsub.s32 0, %v1990
          %v1993 = vsel %vm1991, %v1992, %v1990
          %v1994 = vclz %v1993
          %v1995 = vsub.s32 %v1994, 2
          %vm1996 = vcmp.gt.s32.totalorder 0, %v1995
          %v1997 = vsel %vm1996, 0, %v1995
          %v1998 = vsub.s32 32, %v1997
          %v1999 = vshll.u32 %v1990, %v1997
          %v2000 = vshrl.u32 %v1982, %v1998
          %v2001 = vor.u32 %v1999, %v2000
          %v2002 = vsub.s32 4294967266, %v1997
          %v2003 = vadd.s32 %v2002, 127
          %v2004 = vshll.u32 %v2003, 23
          %v2005 = vor.u32 4788187, %v2004
          %v2006 = vand.u32 2147483647, %v2005
          %v2008 = vcvt.s32.f32 %v2001
          %v2009 = vmul.f32 %v2008, %v2006
          %v2010 = vxor.u32 %v2009, 2147483648
          %v2011 = vsel %vm1928, %v2010, %v2009
          %v2012 = vsub.s32 4, %v1988
          %v2013 = vsel %vm1928, %v2012, %v1988
          %v2014 = vsel %vm1927, %v1498, %v2011
          %v2015 = vsel %vm1927, 0, %v2013
          %v2016 = vcosq.f32.pop %v2014
          %v2017 = vsinq.f32.pop %v2014
          %vm2018 = vweird.f32 %v1498
          %v2019 = vadd.s32 %v2015, 3
          %v2020 = vand.u32 %v2019, 3
          %vm2021 = vcmp.lt.s32.totalorder %v2020, 2
          %vm2022 = vcmp.eq.s32.totalorder %v2020, 0
          %v2023 = vxor.u32 %v2017, 2147483648
          %v2024 = vsel %vm2022, %v2016, %v2023
          %vm2025 = vcmp.eq.s32.totalorder %v2020, 2
          %v2026 = vxor.u32 %v2016, 2147483648
          %v2027 = vsel %vm2025, %v2026, %v2017
          %v2028 = vsel %vm2021, %v2024, %v2027
          %v2029 = vsel %vm2018, nan, %v2028
          %v2030 = vand.u32 2147483647, %v1499
          %vm2031 = vcmp.le.f32.partialorder %v2030, 0.7853982
          %vm2032 = vcmp.lt.s32.totalorder %v1499, 0
          %v2033 = vand.u32 %v1499, 2139095040
          %v2034 = vshrl.u32 %v2033, 23
          %v2035 = vsub.s32 %v2034, 127
          %v2036 = vand.u32 2147483647, %v1499
          %v2037 = vand.u32 %v2036, 8388607
          %v2038 = vor.u32 %v2037, 8388608
          %v2039 = vsub.s32 0, %v2038
          %v2040 = vadd.s32 %v2035, 1
          %vm2041 = vcmp.gt.s32.totalorder %v2040, 0
          %v2042 = vsel %vm2041, %v2040, 0
          %v2043 = vshrl.u32 %v2042, 5
          %v2044 = vand.u32 %v2042, 31
          %v2045 = vsub.s32 32, %v2044
          %v2046 = vshrl.u32 683565275, %v2045
          %v2047 = vshll.u32 683565275, %v2044
          %v2048 = vshrl.u32 2475754826, %v2045
          %v2049 = vor.u32 %v2047, %v2048
          %v2050 = vshll.u32 2475754826, %v2044
          %v2051 = vshrl.u32 2131351028, %v2045
          %v2052 = vor.u32 %v2050, %v2051
          %v2053 = vshll.u32 2131351028, %v2044
          %v2054 = vshrl.u32 2102212464, %v2045
          %v2055 = vor.u32 %v2053, %v2054
          %v2056 = vshll.u32 2102212464, %v2044
          %v2057 = vshrl.u32 920167782, %v2045
          %v2058 = vor.u32 %v2056, %v2057
          %v2059 = vshll.u32 920167782, %v2044
          %v2060 = vshrl.u32 1326507024, %v2045
          %v2061 = vor.u32 %v2059, %v2060
          %vm2062 = vcmp.lt.s32.totalorder %v2043, 1
          %vm2063 = vcmp.lt.s32.totalorder %v2043, 2
          %vm2064 = vcmp.lt.s32.totalorder %v2043, 3
          %vm2065 = vcmp.lt.s32.totalorder %v2043, 4
          %v2066 = vsel %vm2062, %v2046, %v2049
          %v2067 = vsel %vm2065, %v2055, 2102212464
          %v2068 = vsel %vm2064, %v2052, %v2067
          %v2069 = vsel %vm2063, %v2066, %v2068
          %v2070 = vsel %vm2062, %v2049, %v2052
          %v2071 = vsel %vm2065, %v2058, 920167782
          %v2072 = vsel %vm2064, %v2055, %v2071
          %v2073 = vsel %vm2063, %v2070, %v2072
          %v2074 = vsel %vm2062, %v2052, %v2055
          %v2075 = vsel %vm2065, %v2061, 1326507024
          %v2076 = vsel %vm2064, %v2058, %v2075
          %v2077 = vsel %vm2063, %v2074, %v2076
          %v2078 = vshll.u32 %v2038, 8
          %v2079 = vmul.u32.u64.compose %v2078, %v2077
          %v2080 = vextract.low.u32 %v2079
          %v2081 = vextract.high.u32 %v2079
          %v2082 = vmul.u32.u64.compose %v2078, %v2073
          %v2083 = vextract.low.u32 %v2082
          %v2084 = vextract.high.u32 %v2082
          %v2085 = vmul.u32 %v2078, %v2069
          %v2086 = vadd.s32 %v2081, %v2083
          %vm2087 = vc.u32 %v2081, %v2083
          %v2088 = vadd.s32 %v2084, 1
          %v2089 = vsel %vm2087, %v2088, %v2084
          %v2090 = vadd.s32 %v2085, %v2089
          %v2091 = vadd.s32 %v2090, 536870912
          %v2092 = vshrl.u32 %v2091, 30
          %v2093 = vshll.u32 %v2092, 30
          %v2094 = vsub.s32 %v2090, %v2093
          %vm2095 = vcmp.lt.s32.totalorder %v2094, 0
          %v2096 = vsub.s32 0, %v2094
          %v2097 = vsel %vm2095, %v2096, %v2094
          %v2098 = vclz %v2097
          %v2099 = vsub.s32 %v2098, 2
          %vm2100 = vcmp.gt.s32.totalorder 0, %v2099
          %v2101 = vsel %vm2100, 0, %v2099
          %v2102 = vsub.s32 32, %v2101
          %v2103 = vshll.u32 %v2094, %v2101
          %v2104 = vshrl.u32 %v2086, %v2102
          %v2105 = vor.u32 %v2103, %v2104
          %v2106 = vsub.s32 4294967266, %v2101
          %v2107 = vadd.s32 %v2106, 127
          %v2108 = vshll.u32 %v2107, 23
          %v2109 = vor.u32 4788187, %v2108
          %v2110 = vand.u32 2147483647, %v2109
          %v2112 = vcvt.s32.f32 %v2105
          %v2113 = vmul.f32 %v2112, %v2110
          %v2114 = vxor.u32 %v2113, 2147483648
          %v2115 = vsel %vm2032, %v2114, %v2113
          %v2116 = vsub.s32 4, %v2092
          %v2117 = vsel %vm2032, %v2116, %v2092
          %v2118 = vsel %vm2031, %v1499, %v2115
          %v2119 = vsel %vm2031, 0, %v2117
          %v2120 = vcosq.f32.pop %v2118
          %v2121 = vsinq.f32.pop %v2118
          %vm2122 = vweird.f32 %v1499
          %v2123 = vadd.s32 %v2119, 3
          %v2124 = vand.u32 %v2123, 3
          %vm2125 = vcmp.lt.s32.totalorder %v2124, 2
          %vm2126 = vcmp.eq.s32.totalorder %v2124, 0
          %v2127 = vxor.u32 %v2121, 2147483648
          %v2128 = vsel %vm2126, %v2120, %v2127
          %vm2129 = vcmp.eq.s32.totalorder %v2124, 2
          %v2130 = vxor.u32 %v2120, 2147483648
          %v2131 = vsel %vm2129, %v2130, %v2121
          %v2132 = vsel %vm2125, %v2128, %v2131
          %v2133 = vsel %vm2122, nan, %v2132
          %v2134 = vand.u32 2147483647, %v1500
          %vm2135 = vcmp.le.f32.partialorder %v2134, 0.7853982
          %vm2136 = vcmp.lt.s32.totalorder %v1500, 0
          %v2137 = vand.u32 %v1500, 2139095040
          %v2138 = vshrl.u32 %v2137, 23
          %v2139 = vsub.s32 %v2138, 127
          %v2140 = vand.u32 2147483647, %v1500
          %v2141 = vand.u32 %v2140, 8388607
          %v2142 = vor.u32 %v2141, 8388608
          %v2143 = vsub.s32 0, %v2142
          %v2144 = vadd.s32 %v2139, 1
          %vm2145 = vcmp.gt.s32.totalorder %v2144, 0
          %v2146 = vsel %vm2145, %v2144, 0
          %v2147 = vshrl.u32 %v2146, 5
          %v2148 = vand.u32 %v2146, 31
          %v2149 = vsub.s32 32, %v2148
          %v2150 = vshrl.u32 683565275, %v2149
          %v2151 = vshll.u32 683565275, %v2148
          %v2152 = vshrl.u32 2475754826, %v2149
          %v2153 = vor.u32 %v2151, %v2152
          %v2154 = vshll.u32 2475754826, %v2148
          %v2155 = vshrl.u32 2131351028, %v2149
          %v2156 = vor.u32 %v2154, %v2155
          %v2157 = vshll.u32 2131351028, %v2148
          %v2158 = vshrl.u32 2102212464, %v2149
          %v2159 = vor.u32 %v2157, %v2158
          %v2160 = vshll.u32 2102212464, %v2148
          %v2161 = vshrl.u32 920167782, %v2149
          %v2162 = vor.u32 %v2160, %v2161
          %v2163 = vshll.u32 920167782, %v2148
          %v2164 = vshrl.u32 1326507024, %v2149
          %v2165 = vor.u32 %v2163, %v2164
          %vm2166 = vcmp.lt.s32.totalorder %v2147, 1
          %vm2167 = vcmp.lt.s32.totalorder %v2147, 2
          %vm2168 = vcmp.lt.s32.totalorder %v2147, 3
          %vm2169 = vcmp.lt.s32.totalorder %v2147, 4
          %v2170 = vsel %vm2166, %v2150, %v2153
          %v2171 = vsel %vm2169, %v2159, 2102212464
          %v2172 = vsel %vm2168, %v2156, %v2171
          %v2173 = vsel %vm2167, %v2170, %v2172
          %v2174 = vsel %vm2166, %v2153, %v2156
          %v2175 = vsel %vm2169, %v2162, 920167782
          %v2176 = vsel %vm2168, %v2159, %v2175
          %v2177 = vsel %vm2167, %v2174, %v2176
          %v2178 = vsel %vm2166, %v2156, %v2159
          %v2179 = vsel %vm2169, %v2165, 1326507024
          %v2180 = vsel %vm2168, %v2162, %v2179
          %v2181 = vsel %vm2167, %v2178, %v2180
          %v2182 = vshll.u32 %v2142, 8
          %v2183 = vmul.u32.u64.compose %v2182, %v2181
          %v2184 = vextract.low.u32 %v2183
          %v2185 = vextract.high.u32 %v2183
          %v2186 = vmul.u32.u64.compose %v2182, %v2177
          %v2187 = vextract.low.u32 %v2186
          %v2188 = vextract.high.u32 %v2186
          %v2189 = vmul.u32 %v2182, %v2173
          %v2190 = vadd.s32 %v2185, %v2187
          %vm2191 = vc.u32 %v2185, %v2187
          %v2192 = vadd.s32 %v2188, 1
          %v2193 = vsel %vm2191, %v2192, %v2188
          %v2194 = vadd.s32 %v2189, %v2193
          %v2195 = vadd.s32 %v2194, 536870912
          %v2196 = vshrl.u32 %v2195, 30
          %v2197 = vshll.u32 %v2196, 30
          %v2198 = vsub.s32 %v2194, %v2197
          %vm2199 = vcmp.lt.s32.totalorder %v2198, 0
          %v2200 = vsub.s32 0, %v2198
          %v2201 = vsel %vm2199, %v2200, %v2198
          %v2202 = vclz %v2201
          %v2203 = vsub.s32 %v2202, 2
          %vm2204 = vcmp.gt.s32.totalorder 0, %v2203
          %v2205 = vsel %vm2204, 0, %v2203
          %v2206 = vsub.s32 32, %v2205
          %v2207 = vshll.u32 %v2198, %v2205
          %v2208 = vshrl.u32 %v2190, %v2206
          %v2209 = vor.u32 %v2207, %v2208
          %v2210 = vsub.s32 4294967266, %v2205
          %v2211 = vadd.s32 %v2210, 127
          %v2212 = vshll.u32 %v2211, 23
          %v2213 = vor.u32 4788187, %v2212
          %v2214 = vand.u32 2147483647, %v2213
          %v2216 = vcvt.s32.f32 %v2209
          %v2217 = vmul.f32 %v2216, %v2214
          %v2218 = vxor.u32 %v2217, 2147483648
          %v2219 = vsel %vm2136, %v2218, %v2217
          %v2220 = vsub.s32 4, %v2196
          %v2221 = vsel %vm2136, %v2220, %v2196
          %v2222 = vsel %vm2135, %v1500, %v2219
          %v2223 = vsel %vm2135, 0, %v2221
          %v2224 = vcosq.f32.pop %v2222
          %v2225 = vsinq.f32.pop %v2222
          %vm2226 = vweird.f32 %v1500
          %v2227 = vadd.s32 %v2223, 3
          %v2228 = vand.u32 %v2227, 3
          %vm2229 = vcmp.lt.s32.totalorder %v2228, 2
          %vm2230 = vcmp.eq.s32.totalorder %v2228, 0
          %v2231 = vxor.u32 %v2225, 2147483648
          %v2232 = vsel %vm2230, %v2224, %v2231
          %vm2233 = vcmp.eq.s32.totalorder %v2228, 2
          %v2234 = vxor.u32 %v2224, 2147483648
          %v2235 = vsel %vm2233, %v2234, %v2225
          %v2236 = vsel %vm2229, %v2232, %v2235
          %v2237 = vsel %vm2226, nan, %v2236
          %v2238 = vand.u32 2147483647, %v1501
          %vm2239 = vcmp.le.f32.partialorder %v2238, 0.7853982
          %vm2240 = vcmp.lt.s32.totalorder %v1501, 0
          %v2241 = vand.u32 %v1501, 2139095040
          %v2242 = vshrl.u32 %v2241, 23
          %v2243 = vsub.s32 %v2242, 127
          %v2244 = vand.u32 2147483647, %v1501
          %v2245 = vand.u32 %v2244, 8388607
          %v2246 = vor.u32 %v2245, 8388608
          %v2247 = vsub.s32 0, %v2246
          %v2248 = vadd.s32 %v2243, 1
          %vm2249 = vcmp.gt.s32.totalorder %v2248, 0
          %v2250 = vsel %vm2249, %v2248, 0
          %v2251 = vshrl.u32 %v2250, 5
          %v2252 = vand.u32 %v2250, 31
          %v2253 = vsub.s32 32, %v2252
          %v2254 = vshrl.u32 683565275, %v2253
          %v2255 = vshll.u32 683565275, %v2252
          %v2256 = vshrl.u32 2475754826, %v2253
          %v2257 = vor.u32 %v2255, %v2256
          %v2258 = vshll.u32 2475754826, %v2252
          %v2259 = vshrl.u32 2131351028, %v2253
          %v2260 = vor.u32 %v2258, %v2259
          %v2261 = vshll.u32 2131351028, %v2252
          %v2262 = vshrl.u32 2102212464, %v2253
          %v2263 = vor.u32 %v2261, %v2262
          %v2264 = vshll.u32 2102212464, %v2252
          %v2265 = vshrl.u32 920167782, %v2253
          %v2266 = vor.u32 %v2264, %v2265
          %v2267 = vshll.u32 920167782, %v2252
          %v2268 = vshrl.u32 1326507024, %v2253
          %v2269 = vor.u32 %v2267, %v2268
          %vm2270 = vcmp.lt.s32.totalorder %v2251, 1
          %vm2271 = vcmp.lt.s32.totalorder %v2251, 2
          %vm2272 = vcmp.lt.s32.totalorder %v2251, 3
          %vm2273 = vcmp.lt.s32.totalorder %v2251, 4
          %v2274 = vsel %vm2270, %v2254, %v2257
          %v2275 = vsel %vm2273, %v2263, 2102212464
          %v2276 = vsel %vm2272, %v2260, %v2275
          %v2277 = vsel %vm2271, %v2274, %v2276
          %v2278 = vsel %vm2270, %v2257, %v2260
          %v2279 = vsel %vm2273, %v2266, 920167782
          %v2280 = vsel %vm2272, %v2263, %v2279
          %v2281 = vsel %vm2271, %v2278, %v2280
          %v2282 = vsel %vm2270, %v2260, %v2263
          %v2283 = vsel %vm2273, %v2269, 1326507024
          %v2284 = vsel %vm2272, %v2266, %v2283
          %v2285 = vsel %vm2271, %v2282, %v2284
          %v2286 = vshll.u32 %v2246, 8
          %v2287 = vmul.u32.u64.compose %v2286, %v2285
          %v2288 = vextract.low.u32 %v2287
          %v2289 = vextract.high.u32 %v2287
          %v2290 = vmul.u32.u64.compose %v2286, %v2281
          %v2291 = vextract.low.u32 %v2290
          %v2292 = vextract.high.u32 %v2290
          %v2293 = vmul.u32 %v2286, %v2277
          %v2294 = vadd.s32 %v2289, %v2291
          %vm2295 = vc.u32 %v2289, %v2291
          %v2296 = vadd.s32 %v2292, 1
          %v2297 = vsel %vm2295, %v2296, %v2292
          %v2298 = vadd.s32 %v2293, %v2297
          %v2299 = vadd.s32 %v2298, 536870912
          %v2300 = vshrl.u32 %v2299, 30
          %v2301 = vshll.u32 %v2300, 30
          %v2302 = vsub.s32 %v2298, %v2301
          %vm2303 = vcmp.lt.s32.totalorder %v2302, 0
          %v2304 = vsub.s32 0, %v2302
          %v2305 = vsel %vm2303, %v2304, %v2302
          %v2306 = vclz %v2305
          %v2307 = vsub.s32 %v2306, 2
          %vm2308 = vcmp.gt.s32.totalorder 0, %v2307
          %v2309 = vsel %vm2308, 0, %v2307
          %v2310 = vsub.s32 32, %v2309
          %v2311 = vshll.u32 %v2302, %v2309
          %v2312 = vshrl.u32 %v2294, %v2310
          %v2313 = vor.u32 %v2311, %v2312
          %v2314 = vsub.s32 4294967266, %v2309
          %v2315 = vadd.s32 %v2314, 127
          %v2316 = vshll.u32 %v2315, 23
          %v2317 = vor.u32 4788187, %v2316
          %v2318 = vand.u32 2147483647, %v2317
          %v2320 = vcvt.s32.f32 %v2313
          %v2321 = vmul.f32 %v2320, %v2318
          %v2322 = vxor.u32 %v2321, 2147483648
          %v2323 = vsel %vm2240, %v2322, %v2321
          %v2324 = vsub.s32 4, %v2300
          %v2325 = vsel %vm2240, %v2324, %v2300
          %v2326 = vsel %vm2239, %v1501, %v2323
          %v2327 = vsel %vm2239, 0, %v2325
          %v2328 = vcosq.f32.pop %v2326
          %v2329 = vsinq.f32.pop %v2326
          %vm2330 = vweird.f32 %v1501
          %v2331 = vadd.s32 %v2327, 3
          %v2332 = vand.u32 %v2331, 3
          %vm2333 = vcmp.lt.s32.totalorder %v2332, 2
          %vm2334 = vcmp.eq.s32.totalorder %v2332, 0
          %v2335 = vxor.u32 %v2329, 2147483648
          %v2336 = vsel %vm2334, %v2328, %v2335
          %vm2337 = vcmp.eq.s32.totalorder %v2332, 2
          %v2338 = vxor.u32 %v2328, 2147483648
          %v2339 = vsel %vm2337, %v2338, %v2329
          %v2340 = vsel %vm2333, %v2336, %v2339
          %v2341 = vsel %vm2330, nan, %v2340
          %v2342 = vand.u32 2147483647, %v1502
          %vm2343 = vcmp.le.f32.partialorder %v2342, 0.7853982
          %vm2344 = vcmp.lt.s32.totalorder %v1502, 0
          %v2345 = vand.u32 %v1502, 2139095040
          %v2346 = vshrl.u32 %v2345, 23
          %v2347 = vsub.s32 %v2346, 127
          %v2348 = vand.u32 2147483647, %v1502
          %v2349 = vand.u32 %v2348, 8388607
          %v2350 = vor.u32 %v2349, 8388608
          %v2351 = vsub.s32 0, %v2350
          %v2352 = vadd.s32 %v2347, 1
          %vm2353 = vcmp.gt.s32.totalorder %v2352, 0
          %v2354 = vsel %vm2353, %v2352, 0
          %v2355 = vshrl.u32 %v2354, 5
          %v2356 = vand.u32 %v2354, 31
          %v2357 = vsub.s32 32, %v2356
          %v2358 = vshrl.u32 683565275, %v2357
          %v2359 = vshll.u32 683565275, %v2356
          %v2360 = vshrl.u32 2475754826, %v2357
          %v2361 = vor.u32 %v2359, %v2360
          %v2362 = vshll.u32 2475754826, %v2356
          %v2363 = vshrl.u32 2131351028, %v2357
          %v2364 = vor.u32 %v2362, %v2363
          %v2365 = vshll.u32 2131351028, %v2356
          %v2366 = vshrl.u32 2102212464, %v2357
          %v2367 = vor.u32 %v2365, %v2366
          %v2368 = vshll.u32 2102212464, %v2356
          %v2369 = vshrl.u32 920167782, %v2357
          %v2370 = vor.u32 %v2368, %v2369
          %v2371 = vshll.u32 920167782, %v2356
          %v2372 = vshrl.u32 1326507024, %v2357
          %v2373 = vor.u32 %v2371, %v2372
          %vm2374 = vcmp.lt.s32.totalorder %v2355, 1
          %vm2375 = vcmp.lt.s32.totalorder %v2355, 2
          %vm2376 = vcmp.lt.s32.totalorder %v2355, 3
          %vm2377 = vcmp.lt.s32.totalorder %v2355, 4
          %v2378 = vsel %vm2374, %v2358, %v2361
          %v2379 = vsel %vm2377, %v2367, 2102212464
          %v2380 = vsel %vm2376, %v2364, %v2379
          %v2381 = vsel %vm2375, %v2378, %v2380
          %v2382 = vsel %vm2374, %v2361, %v2364
          %v2383 = vsel %vm2377, %v2370, 920167782
          %v2384 = vsel %vm2376, %v2367, %v2383
          %v2385 = vsel %vm2375, %v2382, %v2384
          %v2386 = vsel %vm2374, %v2364, %v2367
          %v2387 = vsel %vm2377, %v2373, 1326507024
          %v2388 = vsel %vm2376, %v2370, %v2387
          %v2389 = vsel %vm2375, %v2386, %v2388
          %v2390 = vshll.u32 %v2350, 8
          %v2391 = vmul.u32.u64.compose %v2390, %v2389
          %v2392 = vextract.low.u32 %v2391
          %v2393 = vextract.high.u32 %v2391
          %v2394 = vmul.u32.u64.compose %v2390, %v2385
          %v2395 = vextract.low.u32 %v2394
          %v2396 = vextract.high.u32 %v2394
          %v2397 = vmul.u32 %v2390, %v2381
          %v2398 = vadd.s32 %v2393, %v2395
          %vm2399 = vc.u32 %v2393, %v2395
          %v2400 = vadd.s32 %v2396, 1
          %v2401 = vsel %vm2399, %v2400, %v2396
          %v2402 = vadd.s32 %v2397, %v2401
          %v2403 = vadd.s32 %v2402, 536870912
          %v2404 = vshrl.u32 %v2403, 30
          %v2405 = vshll.u32 %v2404, 30
          %v2406 = vsub.s32 %v2402, %v2405
          %vm2407 = vcmp.lt.s32.totalorder %v2406, 0
          %v2408 = vsub.s32 0, %v2406
          %v2409 = vsel %vm2407, %v2408, %v2406
          %v2410 = vclz %v2409
          %v2411 = vsub.s32 %v2410, 2
          %vm2412 = vcmp.gt.s32.totalorder 0, %v2411
          %v2413 = vsel %vm2412, 0, %v2411
          %v2414 = vsub.s32 32, %v2413
          %v2415 = vshll.u32 %v2406, %v2413
          %v2416 = vshrl.u32 %v2398, %v2414
          %v2417 = vor.u32 %v2415, %v2416
          %v2418 = vsub.s32 4294967266, %v2413
          %v2419 = vadd.s32 %v2418, 127
          %v2420 = vshll.u32 %v2419, 23
          %v2421 = vor.u32 4788187, %v2420
          %v2422 = vand.u32 2147483647, %v2421
          %v2424 = vcvt.s32.f32 %v2417
          %v2425 = vmul.f32 %v2424, %v2422
          %v2426 = vxor.u32 %v2425, 2147483648
          %v2427 = vsel %vm2344, %v2426, %v2425
          %v2428 = vsub.s32 4, %v2404
          %v2429 = vsel %vm2344, %v2428, %v2404
          %v2430 = vsel %vm2343, %v1502, %v2427
          %v2431 = vsel %vm2343, 0, %v2429
          %v2432 = vcosq.f32.pop %v2430
          %v2433 = vsinq.f32.pop %v2430
          %vm2434 = vweird.f32 %v1502
          %v2435 = vadd.s32 %v2431, 3
          %v2436 = vand.u32 %v2435, 3
          %vm2437 = vcmp.lt.s32.totalorder %v2436, 2
          %vm2438 = vcmp.eq.s32.totalorder %v2436, 0
          %v2439 = vxor.u32 %v2433, 2147483648
          %v2440 = vsel %vm2438, %v2432, %v2439
          %vm2441 = vcmp.eq.s32.totalorder %v2436, 2
          %v2442 = vxor.u32 %v2432, 2147483648
          %v2443 = vsel %vm2441, %v2442, %v2433
          %v2444 = vsel %vm2437, %v2440, %v2443
          %v2445 = vsel %vm2434, nan, %v2444
          %v2446 = vand.u32 2147483647, %v1503
          %vm2447 = vcmp.le.f32.partialorder %v2446, 0.7853982
          %vm2448 = vcmp.lt.s32.totalorder %v1503, 0
          %v2449 = vand.u32 %v1503, 2139095040
          %v2450 = vshrl.u32 %v2449, 23
          %v2451 = vsub.s32 %v2450, 127
          %v2452 = vand.u32 2147483647, %v1503
          %v2453 = vand.u32 %v2452, 8388607
          %v2454 = vor.u32 %v2453, 8388608
          %v2455 = vsub.s32 0, %v2454
          %v2456 = vadd.s32 %v2451, 1
          %vm2457 = vcmp.gt.s32.totalorder %v2456, 0
          %v2458 = vsel %vm2457, %v2456, 0
          %v2459 = vshrl.u32 %v2458, 5
          %v2460 = vand.u32 %v2458, 31
          %v2461 = vsub.s32 32, %v2460
          %v2462 = vshrl.u32 683565275, %v2461
          %v2463 = vshll.u32 683565275, %v2460
          %v2464 = vshrl.u32 2475754826, %v2461
          %v2465 = vor.u32 %v2463, %v2464
          %v2466 = vshll.u32 2475754826, %v2460
          %v2467 = vshrl.u32 2131351028, %v2461
          %v2468 = vor.u32 %v2466, %v2467
          %v2469 = vshll.u32 2131351028, %v2460
          %v2470 = vshrl.u32 2102212464, %v2461
          %v2471 = vor.u32 %v2469, %v2470
          %v2472 = vshll.u32 2102212464, %v2460
          %v2473 = vshrl.u32 920167782, %v2461
          %v2474 = vor.u32 %v2472, %v2473
          %v2475 = vshll.u32 920167782, %v2460
          %v2476 = vshrl.u32 1326507024, %v2461
          %v2477 = vor.u32 %v2475, %v2476
          %vm2478 = vcmp.lt.s32.totalorder %v2459, 1
          %vm2479 = vcmp.lt.s32.totalorder %v2459, 2
          %vm2480 = vcmp.lt.s32.totalorder %v2459, 3
          %vm2481 = vcmp.lt.s32.totalorder %v2459, 4
          %v2482 = vsel %vm2478, %v2462, %v2465
          %v2483 = vsel %vm2481, %v2471, 2102212464
          %v2484 = vsel %vm2480, %v2468, %v2483
          %v2485 = vsel %vm2479, %v2482, %v2484
          %v2486 = vsel %vm2478, %v2465, %v2468
          %v2487 = vsel %vm2481, %v2474, 920167782
          %v2488 = vsel %vm2480, %v2471, %v2487
          %v2489 = vsel %vm2479, %v2486, %v2488
          %v2490 = vsel %vm2478, %v2468, %v2471
          %v2491 = vsel %vm2481, %v2477, 1326507024
          %v2492 = vsel %vm2480, %v2474, %v2491
          %v2493 = vsel %vm2479, %v2490, %v2492
          %v2494 = vshll.u32 %v2454, 8
          %v2495 = vmul.u32.u64.compose %v2494, %v2493
          %v2496 = vextract.low.u32 %v2495
          %v2497 = vextract.high.u32 %v2495
          %v2498 = vmul.u32.u64.compose %v2494, %v2489
          %v2499 = vextract.low.u32 %v2498
          %v2500 = vextract.high.u32 %v2498
          %v2501 = vmul.u32 %v2494, %v2485
          %v2502 = vadd.s32 %v2497, %v2499
          %vm2503 = vc.u32 %v2497, %v2499
          %v2504 = vadd.s32 %v2500, 1
          %v2505 = vsel %vm2503, %v2504, %v2500
          %v2506 = vadd.s32 %v2501, %v2505
          %v2507 = vadd.s32 %v2506, 536870912
          %v2508 = vshrl.u32 %v2507, 30
          %v2509 = vshll.u32 %v2508, 30
          %v2510 = vsub.s32 %v2506, %v2509
          %vm2511 = vcmp.lt.s32.totalorder %v2510, 0
          %v2512 = vsub.s32 0, %v2510
          %v2513 = vsel %vm2511, %v2512, %v2510
          %v2514 = vclz %v2513
          %v2515 = vsub.s32 %v2514, 2
          %vm2516 = vcmp.gt.s32.totalorder 0, %v2515
          %v2517 = vsel %vm2516, 0, %v2515
          %v2518 = vsub.s32 32, %v2517
          %v2519 = vshll.u32 %v2510, %v2517
          %v2520 = vshrl.u32 %v2502, %v2518
          %v2521 = vor.u32 %v2519, %v2520
          %v2522 = vsub.s32 4294967266, %v2517
          %v2523 = vadd.s32 %v2522, 127
          %v2524 = vshll.u32 %v2523, 23
          %v2525 = vor.u32 4788187, %v2524
          %v2526 = vand.u32 2147483647, %v2525
          %v2528 = vcvt.s32.f32 %v2521
          %v2529 = vmul.f32 %v2528, %v2526
          %v2530 = vxor.u32 %v2529, 2147483648
          %v2531 = vsel %vm2448, %v2530, %v2529
          %v2532 = vsub.s32 4, %v2508
          %v2533 = vsel %vm2448, %v2532, %v2508
          %v2534 = vsel %vm2447, %v1503, %v2531
          %v2535 = vsel %vm2447, 0, %v2533
          %v2536 = vcosq.f32.pop %v2534
          %v2537 = vsinq.f32.pop %v2534
          %vm2538 = vweird.f32 %v1503
          %v2539 = vadd.s32 %v2535, 3
          %v2540 = vand.u32 %v2539, 3
          %vm2541 = vcmp.lt.s32.totalorder %v2540, 2
          %vm2542 = vcmp.eq.s32.totalorder %v2540, 0
          %v2543 = vxor.u32 %v2537, 2147483648
          %v2544 = vsel %vm2542, %v2536, %v2543
          %vm2545 = vcmp.eq.s32.totalorder %v2540, 2
          %v2546 = vxor.u32 %v2536, 2147483648
          %v2547 = vsel %vm2545, %v2546, %v2537
          %v2548 = vsel %vm2541, %v2544, %v2547
          %v2549 = vsel %vm2538, nan, %v2548
          %v2550 = vand.u32 2147483647, %v1504
          %vm2551 = vcmp.le.f32.partialorder %v2550, 0.7853982
          %vm2552 = vcmp.lt.s32.totalorder %v1504, 0
          %v2553 = vand.u32 %v1504, 2139095040
          %v2554 = vshrl.u32 %v2553, 23
          %v2555 = vsub.s32 %v2554, 127
          %v2556 = vand.u32 2147483647, %v1504
          %v2557 = vand.u32 %v2556, 8388607
          %v2558 = vor.u32 %v2557, 8388608
          %v2559 = vsub.s32 0, %v2558
          %v2560 = vadd.s32 %v2555, 1
          %vm2561 = vcmp.gt.s32.totalorder %v2560, 0
          %v2562 = vsel %vm2561, %v2560, 0
          %v2563 = vshrl.u32 %v2562, 5
          %v2564 = vand.u32 %v2562, 31
          %v2565 = vsub.s32 32, %v2564
          %v2566 = vshrl.u32 683565275, %v2565
          %v2567 = vshll.u32 683565275, %v2564
          %v2568 = vshrl.u32 2475754826, %v2565
          %v2569 = vor.u32 %v2567, %v2568
          %v2570 = vshll.u32 2475754826, %v2564
          %v2571 = vshrl.u32 2131351028, %v2565
          %v2572 = vor.u32 %v2570, %v2571
          %v2573 = vshll.u32 2131351028, %v2564
          %v2574 = vshrl.u32 2102212464, %v2565
          %v2575 = vor.u32 %v2573, %v2574
          %v2576 = vshll.u32 2102212464, %v2564
          %v2577 = vshrl.u32 920167782, %v2565
          %v2578 = vor.u32 %v2576, %v2577
          %v2579 = vshll.u32 920167782, %v2564
          %v2580 = vshrl.u32 1326507024, %v2565
          %v2581 = vor.u32 %v2579, %v2580
          %vm2582 = vcmp.lt.s32.totalorder %v2563, 1
          %vm2583 = vcmp.lt.s32.totalorder %v2563, 2
          %vm2584 = vcmp.lt.s32.totalorder %v2563, 3
          %vm2585 = vcmp.lt.s32.totalorder %v2563, 4
          %v2586 = vsel %vm2582, %v2566, %v2569
          %v2587 = vsel %vm2585, %v2575, 2102212464
          %v2588 = vsel %vm2584, %v2572, %v2587
          %v2589 = vsel %vm2583, %v2586, %v2588
          %v2590 = vsel %vm2582, %v2569, %v2572
          %v2591 = vsel %vm2585, %v2578, 920167782
          %v2592 = vsel %vm2584, %v2575, %v2591
          %v2593 = vsel %vm2583, %v2590, %v2592
          %v2594 = vsel %vm2582, %v2572, %v2575
          %v2595 = vsel %vm2585, %v2581, 1326507024
          %v2596 = vsel %vm2584, %v2578, %v2595
          %v2597 = vsel %vm2583, %v2594, %v2596
          %v2598 = vshll.u32 %v2558, 8
          %v2599 = vmul.u32.u64.compose %v2598, %v2597
          %v2600 = vextract.low.u32 %v2599
          %v2601 = vextract.high.u32 %v2599
          %v2602 = vmul.u32.u64.compose %v2598, %v2593
          %v2603 = vextract.low.u32 %v2602
          %v2604 = vextract.high.u32 %v2602
          %v2605 = vmul.u32 %v2598, %v2589
          %v2606 = vadd.s32 %v2601, %v2603
          %vm2607 = vc.u32 %v2601, %v2603
          %v2608 = vadd.s32 %v2604, 1
          %v2609 = vsel %vm2607, %v2608, %v2604
          %v2610 = vadd.s32 %v2605, %v2609
          %v2611 = vadd.s32 %v2610, 536870912
          %v2612 = vshrl.u32 %v2611, 30
          %v2613 = vshll.u32 %v2612, 30
          %v2614 = vsub.s32 %v2610, %v2613
          %vm2615 = vcmp.lt.s32.totalorder %v2614, 0
          %v2616 = vsub.s32 0, %v2614
          %v2617 = vsel %vm2615, %v2616, %v2614
          %v2618 = vclz %v2617
          %v2619 = vsub.s32 %v2618, 2
          %vm2620 = vcmp.gt.s32.totalorder 0, %v2619
          %v2621 = vsel %vm2620, 0, %v2619
          %v2622 = vsub.s32 32, %v2621
          %v2623 = vshll.u32 %v2614, %v2621
          %v2624 = vshrl.u32 %v2606, %v2622
          %v2625 = vor.u32 %v2623, %v2624
          %v2626 = vsub.s32 4294967266, %v2621
          %v2627 = vadd.s32 %v2626, 127
          %v2628 = vshll.u32 %v2627, 23
          %v2629 = vor.u32 4788187, %v2628
          %v2630 = vand.u32 2147483647, %v2629
          %v2632 = vcvt.s32.f32 %v2625
          %v2633 = vmul.f32 %v2632, %v2630
          %v2634 = vxor.u32 %v2633, 2147483648
          %v2635 = vsel %vm2552, %v2634, %v2633
          %v2636 = vsub.s32 4, %v2612
          %v2637 = vsel %vm2552, %v2636, %v2612
          %v2638 = vsel %vm2551, %v1504, %v2635
          %v2639 = vsel %vm2551, 0, %v2637
          %v2640 = vcosq.f32.pop %v2638
          %v2641 = vsinq.f32.pop %v2638
          %vm2642 = vweird.f32 %v1504
          %v2643 = vadd.s32 %v2639, 3
          %v2644 = vand.u32 %v2643, 3
          %vm2645 = vcmp.lt.s32.totalorder %v2644, 2
          %vm2646 = vcmp.eq.s32.totalorder %v2644, 0
          %v2647 = vxor.u32 %v2641, 2147483648
          %v2648 = vsel %vm2646, %v2640, %v2647
          %vm2649 = vcmp.eq.s32.totalorder %v2644, 2
          %v2650 = vxor.u32 %v2640, 2147483648
          %v2651 = vsel %vm2649, %v2650, %v2641
          %v2652 = vsel %vm2645, %v2648, %v2651
          %v2653 = vsel %vm2642, nan, %v2652
          %v2654 = vand.u32 2147483647, %v1505
          %vm2655 = vcmp.le.f32.partialorder %v2654, 0.7853982
          %vm2656 = vcmp.lt.s32.totalorder %v1505, 0
          %v2657 = vand.u32 %v1505, 2139095040
          %v2658 = vshrl.u32 %v2657, 23
          %v2659 = vsub.s32 %v2658, 127
          %v2660 = vand.u32 2147483647, %v1505
          %v2661 = vand.u32 %v2660, 8388607
          %v2662 = vor.u32 %v2661, 8388608
          %v2663 = vsub.s32 0, %v2662
          %v2664 = vadd.s32 %v2659, 1
          %vm2665 = vcmp.gt.s32.totalorder %v2664, 0
          %v2666 = vsel %vm2665, %v2664, 0
          %v2667 = vshrl.u32 %v2666, 5
          %v2668 = vand.u32 %v2666, 31
          %v2669 = vsub.s32 32, %v2668
          %v2670 = vshrl.u32 683565275, %v2669
          %v2671 = vshll.u32 683565275, %v2668
          %v2672 = vshrl.u32 2475754826, %v2669
          %v2673 = vor.u32 %v2671, %v2672
          %v2674 = vshll.u32 2475754826, %v2668
          %v2675 = vshrl.u32 2131351028, %v2669
          %v2676 = vor.u32 %v2674, %v2675
          %v2677 = vshll.u32 2131351028, %v2668
          %v2678 = vshrl.u32 2102212464, %v2669
          %v2679 = vor.u32 %v2677, %v2678
          %v2680 = vshll.u32 2102212464, %v2668
          %v2681 = vshrl.u32 920167782, %v2669
          %v2682 = vor.u32 %v2680, %v2681
          %v2683 = vshll.u32 920167782, %v2668
          %v2684 = vshrl.u32 1326507024, %v2669
          %v2685 = vor.u32 %v2683, %v2684
          %vm2686 = vcmp.lt.s32.totalorder %v2667, 1
          %vm2687 = vcmp.lt.s32.totalorder %v2667, 2
          %vm2688 = vcmp.lt.s32.totalorder %v2667, 3
          %vm2689 = vcmp.lt.s32.totalorder %v2667, 4
          %v2690 = vsel %vm2686, %v2670, %v2673
          %v2691 = vsel %vm2689, %v2679, 2102212464
          %v2692 = vsel %vm2688, %v2676, %v2691
          %v2693 = vsel %vm2687, %v2690, %v2692
          %v2694 = vsel %vm2686, %v2673, %v2676
          %v2695 = vsel %vm2689, %v2682, 920167782
          %v2696 = vsel %vm2688, %v2679, %v2695
          %v2697 = vsel %vm2687, %v2694, %v2696
          %v2698 = vsel %vm2686, %v2676, %v2679
          %v2699 = vsel %vm2689, %v2685, 1326507024
          %v2700 = vsel %vm2688, %v2682, %v2699
          %v2701 = vsel %vm2687, %v2698, %v2700
          %v2702 = vshll.u32 %v2662, 8
          %v2703 = vmul.u32.u64.compose %v2702, %v2701
          %v2704 = vextract.low.u32 %v2703
          %v2705 = vextract.high.u32 %v2703
          %v2706 = vmul.u32.u64.compose %v2702, %v2697
          %v2707 = vextract.low.u32 %v2706
          %v2708 = vextract.high.u32 %v2706
          %v2709 = vmul.u32 %v2702, %v2693
          %v2710 = vadd.s32 %v2705, %v2707
          %vm2711 = vc.u32 %v2705, %v2707
          %v2712 = vadd.s32 %v2708, 1
          %v2713 = vsel %vm2711, %v2712, %v2708
          %v2714 = vadd.s32 %v2709, %v2713
          %v2715 = vadd.s32 %v2714, 536870912
          %v2716 = vshrl.u32 %v2715, 30
          %v2717 = vshll.u32 %v2716, 30
          %v2718 = vsub.s32 %v2714, %v2717
          %vm2719 = vcmp.lt.s32.totalorder %v2718, 0
          %v2720 = vsub.s32 0, %v2718
          %v2721 = vsel %vm2719, %v2720, %v2718
          %v2722 = vclz %v2721
          %v2723 = vsub.s32 %v2722, 2
          %vm2724 = vcmp.gt.s32.totalorder 0, %v2723
          %v2725 = vsel %vm2724, 0, %v2723
          %v2726 = vsub.s32 32, %v2725
          %v2727 = vshll.u32 %v2718, %v2725
          %v2728 = vshrl.u32 %v2710, %v2726
          %v2729 = vor.u32 %v2727, %v2728
          %v2730 = vsub.s32 4294967266, %v2725
          %v2731 = vadd.s32 %v2730, 127
          %v2732 = vshll.u32 %v2731, 23
          %v2733 = vor.u32 4788187, %v2732
          %v2734 = vand.u32 2147483647, %v2733
          %v2736 = vcvt.s32.f32 %v2729
          %v2737 = vmul.f32 %v2736, %v2734
          %v2738 = vxor.u32 %v2737, 2147483648
          %v2739 = vsel %vm2656, %v2738, %v2737
          %v2740 = vsub.s32 4, %v2716
          %v2741 = vsel %vm2656, %v2740, %v2716
          %v2742 = vsel %vm2655, %v1505, %v2739
          %v2743 = vsel %vm2655, 0, %v2741
          %v2744 = vcosq.f32.pop %v2742
          %v2745 = vsinq.f32.pop %v2742
          %vm2746 = vweird.f32 %v1505
          %v2747 = vadd.s32 %v2743, 3
          %v2748 = vand.u32 %v2747, 3
          %vm2749 = vcmp.lt.s32.totalorder %v2748, 2
          %vm2750 = vcmp.eq.s32.totalorder %v2748, 0
          %v2751 = vxor.u32 %v2745, 2147483648
          %v2752 = vsel %vm2750, %v2744, %v2751
          %vm2753 = vcmp.eq.s32.totalorder %v2748, 2
          %v2754 = vxor.u32 %v2744, 2147483648
          %v2755 = vsel %vm2753, %v2754, %v2745
          %v2756 = vsel %vm2749, %v2752, %v2755
          %v2757 = vsel %vm2746, nan, %v2756
          %v2758 = vand.u32 2147483647, %v1506
          %vm2759 = vcmp.le.f32.partialorder %v2758, 0.7853982
          %vm2760 = vcmp.lt.s32.totalorder %v1506, 0
          %v2761 = vand.u32 %v1506, 2139095040
          %v2762 = vshrl.u32 %v2761, 23
          %v2763 = vsub.s32 %v2762, 127
          %v2764 = vand.u32 2147483647, %v1506
          %v2765 = vand.u32 %v2764, 8388607
          %v2766 = vor.u32 %v2765, 8388608
          %v2767 = vsub.s32 0, %v2766
          %v2768 = vadd.s32 %v2763, 1
          %vm2769 = vcmp.gt.s32.totalorder %v2768, 0
          %v2770 = vsel %vm2769, %v2768, 0
          %v2771 = vshrl.u32 %v2770, 5
          %v2772 = vand.u32 %v2770, 31
          %v2773 = vsub.s32 32, %v2772
          %v2774 = vshrl.u32 683565275, %v2773
          %v2775 = vshll.u32 683565275, %v2772
          %v2776 = vshrl.u32 2475754826, %v2773
          %v2777 = vor.u32 %v2775, %v2776
          %v2778 = vshll.u32 2475754826, %v2772
          %v2779 = vshrl.u32 2131351028, %v2773
          %v2780 = vor.u32 %v2778, %v2779
          %v2781 = vshll.u32 2131351028, %v2772
          %v2782 = vshrl.u32 2102212464, %v2773
          %v2783 = vor.u32 %v2781, %v2782
          %v2784 = vshll.u32 2102212464, %v2772
          %v2785 = vshrl.u32 920167782, %v2773
          %v2786 = vor.u32 %v2784, %v2785
          %v2787 = vshll.u32 920167782, %v2772
          %v2788 = vshrl.u32 1326507024, %v2773
          %v2789 = vor.u32 %v2787, %v2788
          %vm2790 = vcmp.lt.s32.totalorder %v2771, 1
          %vm2791 = vcmp.lt.s32.totalorder %v2771, 2
          %vm2792 = vcmp.lt.s32.totalorder %v2771, 3
          %vm2793 = vcmp.lt.s32.totalorder %v2771, 4
          %v2794 = vsel %vm2790, %v2774, %v2777
          %v2795 = vsel %vm2793, %v2783, 2102212464
          %v2796 = vsel %vm2792, %v2780, %v2795
          %v2797 = vsel %vm2791, %v2794, %v2796
          %v2798 = vsel %vm2790, %v2777, %v2780
          %v2799 = vsel %vm2793, %v2786, 920167782
          %v2800 = vsel %vm2792, %v2783, %v2799
          %v2801 = vsel %vm2791, %v2798, %v2800
          %v2802 = vsel %vm2790, %v2780, %v2783
          %v2803 = vsel %vm2793, %v2789, 1326507024
          %v2804 = vsel %vm2792, %v2786, %v2803
          %v2805 = vsel %vm2791, %v2802, %v2804
          %v2806 = vshll.u32 %v2766, 8
          %v2807 = vmul.u32.u64.compose %v2806, %v2805
          %v2808 = vextract.low.u32 %v2807
          %v2809 = vextract.high.u32 %v2807
          %v2810 = vmul.u32.u64.compose %v2806, %v2801
          %v2811 = vextract.low.u32 %v2810
          %v2812 = vextract.high.u32 %v2810
          %v2813 = vmul.u32 %v2806, %v2797
          %v2814 = vadd.s32 %v2809, %v2811
          %vm2815 = vc.u32 %v2809, %v2811
          %v2816 = vadd.s32 %v2812, 1
          %v2817 = vsel %vm2815, %v2816, %v2812
          %v2818 = vadd.s32 %v2813, %v2817
          %v2819 = vadd.s32 %v2818, 536870912
          %v2820 = vshrl.u32 %v2819, 30
          %v2821 = vshll.u32 %v2820, 30
          %v2822 = vsub.s32 %v2818, %v2821
          %vm2823 = vcmp.lt.s32.totalorder %v2822, 0
          %v2824 = vsub.s32 0, %v2822
          %v2825 = vsel %vm2823, %v2824, %v2822
          %v2826 = vclz %v2825
          %v2827 = vsub.s32 %v2826, 2
          %vm2828 = vcmp.gt.s32.totalorder 0, %v2827
          %v2829 = vsel %vm2828, 0, %v2827
          %v2830 = vsub.s32 32, %v2829
          %v2831 = vshll.u32 %v2822, %v2829
          %v2832 = vshrl.u32 %v2814, %v2830
          %v2833 = vor.u32 %v2831, %v2832
          %v2834 = vsub.s32 4294967266, %v2829
          %v2835 = vadd.s32 %v2834, 127
          %v2836 = vshll.u32 %v2835, 23
          %v2837 = vor.u32 4788187, %v2836
          %v2838 = vand.u32 2147483647, %v2837
          %v2840 = vcvt.s32.f32 %v2833
          %v2841 = vmul.f32 %v2840, %v2838
          %v2842 = vxor.u32 %v2841, 2147483648
          %v2843 = vsel %vm2760, %v2842, %v2841
          %v2844 = vsub.s32 4, %v2820
          %v2845 = vsel %vm2760, %v2844, %v2820
          %v2846 = vsel %vm2759, %v1506, %v2843
          %v2847 = vsel %vm2759, 0, %v2845
          %v2848 = vcosq.f32.pop %v2846
          %v2849 = vsinq.f32.pop %v2846
          %vm2850 = vweird.f32 %v1506
          %v2851 = vadd.s32 %v2847, 3
          %v2852 = vand.u32 %v2851, 3
          %vm2853 = vcmp.lt.s32.totalorder %v2852, 2
          %vm2854 = vcmp.eq.s32.totalorder %v2852, 0
          %v2855 = vxor.u32 %v2849, 2147483648
          %v2856 = vsel %vm2854, %v2848, %v2855
          %vm2857 = vcmp.eq.s32.totalorder %v2852, 2
          %v2858 = vxor.u32 %v2848, 2147483648
          %v2859 = vsel %vm2857, %v2858, %v2849
          %v2860 = vsel %vm2853, %v2856, %v2859
          %v2861 = vsel %vm2850, nan, %v2860
          %v2862 = vand.u32 2147483647, %v1507
          %vm2863 = vcmp.le.f32.partialorder %v2862, 0.7853982
          %vm2864 = vcmp.lt.s32.totalorder %v1507, 0
          %v2865 = vand.u32 %v1507, 2139095040
          %v2866 = vshrl.u32 %v2865, 23
          %v2867 = vsub.s32 %v2866, 127
          %v2868 = vand.u32 2147483647, %v1507
          %v2869 = vand.u32 %v2868, 8388607
          %v2870 = vor.u32 %v2869, 8388608
          %v2871 = vsub.s32 0, %v2870
          %v2872 = vadd.s32 %v2867, 1
          %vm2873 = vcmp.gt.s32.totalorder %v2872, 0
          %v2874 = vsel %vm2873, %v2872, 0
          %v2875 = vshrl.u32 %v2874, 5
          %v2876 = vand.u32 %v2874, 31
          %v2877 = vsub.s32 32, %v2876
          %v2878 = vshrl.u32 683565275, %v2877
          %v2879 = vshll.u32 683565275, %v2876
          %v2880 = vshrl.u32 2475754826, %v2877
          %v2881 = vor.u32 %v2879, %v2880
          %v2882 = vshll.u32 2475754826, %v2876
          %v2883 = vshrl.u32 2131351028, %v2877
          %v2884 = vor.u32 %v2882, %v2883
          %v2885 = vshll.u32 2131351028, %v2876
          %v2886 = vshrl.u32 2102212464, %v2877
          %v2887 = vor.u32 %v2885, %v2886
          %v2888 = vshll.u32 2102212464, %v2876
          %v2889 = vshrl.u32 920167782, %v2877
          %v2890 = vor.u32 %v2888, %v2889
          %v2891 = vshll.u32 920167782, %v2876
          %v2892 = vshrl.u32 1326507024, %v2877
          %v2893 = vor.u32 %v2891, %v2892
          %vm2894 = vcmp.lt.s32.totalorder %v2875, 1
          %vm2895 = vcmp.lt.s32.totalorder %v2875, 2
          %vm2896 = vcmp.lt.s32.totalorder %v2875, 3
          %vm2897 = vcmp.lt.s32.totalorder %v2875, 4
          %v2898 = vsel %vm2894, %v2878, %v2881
          %v2899 = vsel %vm2897, %v2887, 2102212464
          %v2900 = vsel %vm2896, %v2884, %v2899
          %v2901 = vsel %vm2895, %v2898, %v2900
          %v2902 = vsel %vm2894, %v2881, %v2884
          %v2903 = vsel %vm2897, %v2890, 920167782
          %v2904 = vsel %vm2896, %v2887, %v2903
          %v2905 = vsel %vm2895, %v2902, %v2904
          %v2906 = vsel %vm2894, %v2884, %v2887
          %v2907 = vsel %vm2897, %v2893, 1326507024
          %v2908 = vsel %vm2896, %v2890, %v2907
          %v2909 = vsel %vm2895, %v2906, %v2908
          %v2910 = vshll.u32 %v2870, 8
          %v2911 = vmul.u32.u64.compose %v2910, %v2909
          %v2912 = vextract.low.u32 %v2911
          %v2913 = vextract.high.u32 %v2911
          %v2914 = vmul.u32.u64.compose %v2910, %v2905
          %v2915 = vextract.low.u32 %v2914
          %v2916 = vextract.high.u32 %v2914
          %v2917 = vmul.u32 %v2910, %v2901
          %v2918 = vadd.s32 %v2913, %v2915
          %vm2919 = vc.u32 %v2913, %v2915
          %v2920 = vadd.s32 %v2916, 1
          %v2921 = vsel %vm2919, %v2920, %v2916
          %v2922 = vadd.s32 %v2917, %v2921
          %v2923 = vadd.s32 %v2922, 536870912
          %v2924 = vshrl.u32 %v2923, 30
          %v2925 = vshll.u32 %v2924, 30
          %v2926 = vsub.s32 %v2922, %v2925
          %vm2927 = vcmp.lt.s32.totalorder %v2926, 0
          %v2928 = vsub.s32 0, %v2926
          %v2929 = vsel %vm2927, %v2928, %v2926
          %v2930 = vclz %v2929
          %v2931 = vsub.s32 %v2930, 2
          %vm2932 = vcmp.gt.s32.totalorder 0, %v2931
          %v2933 = vsel %vm2932, 0, %v2931
          %v2934 = vsub.s32 32, %v2933
          %v2935 = vshll.u32 %v2926, %v2933
          %v2936 = vshrl.u32 %v2918, %v2934
          %v2937 = vor.u32 %v2935, %v2936
          %v2938 = vsub.s32 4294967266, %v2933
          %v2939 = vadd.s32 %v2938, 127
          %v2940 = vshll.u32 %v2939, 23
          %v2941 = vor.u32 4788187, %v2940
          %v2942 = vand.u32 2147483647, %v2941
          %v2944 = vcvt.s32.f32 %v2937
          %v2945 = vmul.f32 %v2944, %v2942
          %v2946 = vxor.u32 %v2945, 2147483648
          %v2947 = vsel %vm2864, %v2946, %v2945
          %v2948 = vsub.s32 4, %v2924
          %v2949 = vsel %vm2864, %v2948, %v2924
          %v2950 = vsel %vm2863, %v1507, %v2947
          %v2951 = vsel %vm2863, 0, %v2949
          %v2952 = vcosq.f32.pop %v2950
          %v2953 = vsinq.f32.pop %v2950
          %vm2954 = vweird.f32 %v1507
          %v2955 = vadd.s32 %v2951, 3
          %v2956 = vand.u32 %v2955, 3
          %vm2957 = vcmp.lt.s32.totalorder %v2956, 2
          %vm2958 = vcmp.eq.s32.totalorder %v2956, 0
          %v2959 = vxor.u32 %v2953, 2147483648
          %v2960 = vsel %vm2958, %v2952, %v2959
          %vm2961 = vcmp.eq.s32.totalorder %v2956, 2
          %v2962 = vxor.u32 %v2952, 2147483648
          %v2963 = vsel %vm2961, %v2962, %v2953
          %v2964 = vsel %vm2957, %v2960, %v2963
          %v2965 = vsel %vm2954, nan, %v2964
          %v2966 = vand.u32 2147483647, %v1508
          %vm2967 = vcmp.le.f32.partialorder %v2966, 0.7853982
          %vm2968 = vcmp.lt.s32.totalorder %v1508, 0
          %v2969 = vand.u32 %v1508, 2139095040
          %v2970 = vshrl.u32 %v2969, 23
          %v2971 = vsub.s32 %v2970, 127
          %v2972 = vand.u32 2147483647, %v1508
          %v2973 = vand.u32 %v2972, 8388607
          %v2974 = vor.u32 %v2973, 8388608
          %v2975 = vsub.s32 0, %v2974
          %v2976 = vadd.s32 %v2971, 1
          %vm2977 = vcmp.gt.s32.totalorder %v2976, 0
          %v2978 = vsel %vm2977, %v2976, 0
          %v2979 = vshrl.u32 %v2978, 5
          %v2980 = vand.u32 %v2978, 31
          %v2981 = vsub.s32 32, %v2980
          %v2982 = vshrl.u32 683565275, %v2981
          %v2983 = vshll.u32 683565275, %v2980
          %v2984 = vshrl.u32 2475754826, %v2981
          %v2985 = vor.u32 %v2983, %v2984
          %v2986 = vshll.u32 2475754826, %v2980
          %v2987 = vshrl.u32 2131351028, %v2981
          %v2988 = vor.u32 %v2986, %v2987
          %v2989 = vshll.u32 2131351028, %v2980
          %v2990 = vshrl.u32 2102212464, %v2981
          %v2991 = vor.u32 %v2989, %v2990
          %v2992 = vshll.u32 2102212464, %v2980
          %v2993 = vshrl.u32 920167782, %v2981
          %v2994 = vor.u32 %v2992, %v2993
          %v2995 = vshll.u32 920167782, %v2980
          %v2996 = vshrl.u32 1326507024, %v2981
          %v2997 = vor.u32 %v2995, %v2996
          %vm2998 = vcmp.lt.s32.totalorder %v2979, 1
          %vm2999 = vcmp.lt.s32.totalorder %v2979, 2
          %vm3000 = vcmp.lt.s32.totalorder %v2979, 3
          %vm3001 = vcmp.lt.s32.totalorder %v2979, 4
          %v3002 = vsel %vm2998, %v2982, %v2985
          %v3003 = vsel %vm3001, %v2991, 2102212464
          %v3004 = vsel %vm3000, %v2988, %v3003
          %v3005 = vsel %vm2999, %v3002, %v3004
          %v3006 = vsel %vm2998, %v2985, %v2988
          %v3007 = vsel %vm3001, %v2994, 920167782
          %v3008 = vsel %vm3000, %v2991, %v3007
          %v3009 = vsel %vm2999, %v3006, %v3008
          %v3010 = vsel %vm2998, %v2988, %v2991
          %v3011 = vsel %vm3001, %v2997, 1326507024
          %v3012 = vsel %vm3000, %v2994, %v3011
          %v3013 = vsel %vm2999, %v3010, %v3012
          %v3014 = vshll.u32 %v2974, 8
          %v3015 = vmul.u32.u64.compose %v3014, %v3013
          %v3016 = vextract.low.u32 %v3015
          %v3017 = vextract.high.u32 %v3015
          %v3018 = vmul.u32.u64.compose %v3014, %v3009
          %v3019 = vextract.low.u32 %v3018
          %v3020 = vextract.high.u32 %v3018
          %v3021 = vmul.u32 %v3014, %v3005
          %v3022 = vadd.s32 %v3017, %v3019
          %vm3023 = vc.u32 %v3017, %v3019
          %v3024 = vadd.s32 %v3020, 1
          %v3025 = vsel %vm3023, %v3024, %v3020
          %v3026 = vadd.s32 %v3021, %v3025
          %v3027 = vadd.s32 %v3026, 536870912
          %v3028 = vshrl.u32 %v3027, 30
          %v3029 = vshll.u32 %v3028, 30
          %v3030 = vsub.s32 %v3026, %v3029
          %vm3031 = vcmp.lt.s32.totalorder %v3030, 0
          %v3032 = vsub.s32 0, %v3030
          %v3033 = vsel %vm3031, %v3032, %v3030
          %v3034 = vclz %v3033
          %v3035 = vsub.s32 %v3034, 2
          %vm3036 = vcmp.gt.s32.totalorder 0, %v3035
          %v3037 = vsel %vm3036, 0, %v3035
          %v3038 = vsub.s32 32, %v3037
          %v3039 = vshll.u32 %v3030, %v3037
          %v3040 = vshrl.u32 %v3022, %v3038
          %v3041 = vor.u32 %v3039, %v3040
          %v3042 = vsub.s32 4294967266, %v3037
          %v3043 = vadd.s32 %v3042, 127
          %v3044 = vshll.u32 %v3043, 23
          %v3045 = vor.u32 4788187, %v3044
          %v3046 = vand.u32 2147483647, %v3045
          %v3048 = vcvt.s32.f32 %v3041
          %v3049 = vmul.f32 %v3048, %v3046
          %v3050 = vxor.u32 %v3049, 2147483648
          %v3051 = vsel %vm2968, %v3050, %v3049
          %v3052 = vsub.s32 4, %v3028
          %v3053 = vsel %vm2968, %v3052, %v3028
          %v3054 = vsel %vm2967, %v1508, %v3051
          %v3055 = vsel %vm2967, 0, %v3053
          %v3056 = vcosq.f32.pop %v3054
          %v3057 = vsinq.f32.pop %v3054
          %vm3058 = vweird.f32 %v1508
          %v3059 = vadd.s32 %v3055, 3
          %v3060 = vand.u32 %v3059, 3
          %vm3061 = vcmp.lt.s32.totalorder %v3060, 2
          %vm3062 = vcmp.eq.s32.totalorder %v3060, 0
          %v3063 = vxor.u32 %v3057, 2147483648
          %v3064 = vsel %vm3062, %v3056, %v3063
          %vm3065 = vcmp.eq.s32.totalorder %v3060, 2
          %v3066 = vxor.u32 %v3056, 2147483648
          %v3067 = vsel %vm3065, %v3066, %v3057
          %v3068 = vsel %vm3061, %v3064, %v3067
          %v3069 = vsel %vm3058, nan, %v3068
          %v3070 = vand.u32 2147483647, %v1509
          %vm3071 = vcmp.le.f32.partialorder %v3070, 0.7853982
          %vm3072 = vcmp.lt.s32.totalorder %v1509, 0
          %v3073 = vand.u32 %v1509, 2139095040
          %v3074 = vshrl.u32 %v3073, 23
          %v3075 = vsub.s32 %v3074, 127
          %v3076 = vand.u32 2147483647, %v1509
          %v3077 = vand.u32 %v3076, 8388607
          %v3078 = vor.u32 %v3077, 8388608
          %v3079 = vsub.s32 0, %v3078
          %v3080 = vadd.s32 %v3075, 1
          %vm3081 = vcmp.gt.s32.totalorder %v3080, 0
          %v3082 = vsel %vm3081, %v3080, 0
          %v3083 = vshrl.u32 %v3082, 5
          %v3084 = vand.u32 %v3082, 31
          %v3085 = vsub.s32 32, %v3084
          %v3086 = vshrl.u32 683565275, %v3085
          %v3087 = vshll.u32 683565275, %v3084
          %v3088 = vshrl.u32 2475754826, %v3085
          %v3089 = vor.u32 %v3087, %v3088
          %v3090 = vshll.u32 2475754826, %v3084
          %v3091 = vshrl.u32 2131351028, %v3085
          %v3092 = vor.u32 %v3090, %v3091
          %v3093 = vshll.u32 2131351028, %v3084
          %v3094 = vshrl.u32 2102212464, %v3085
          %v3095 = vor.u32 %v3093, %v3094
          %v3096 = vshll.u32 2102212464, %v3084
          %v3097 = vshrl.u32 920167782, %v3085
          %v3098 = vor.u32 %v3096, %v3097
          %v3099 = vshll.u32 920167782, %v3084
          %v3100 = vshrl.u32 1326507024, %v3085
          %v3101 = vor.u32 %v3099, %v3100
          %vm3102 = vcmp.lt.s32.totalorder %v3083, 1
          %vm3103 = vcmp.lt.s32.totalorder %v3083, 2
          %vm3104 = vcmp.lt.s32.totalorder %v3083, 3
          %vm3105 = vcmp.lt.s32.totalorder %v3083, 4
          %v3106 = vsel %vm3102, %v3086, %v3089
          %v3107 = vsel %vm3105, %v3095, 2102212464
          %v3108 = vsel %vm3104, %v3092, %v3107
          %v3109 = vsel %vm3103, %v3106, %v3108
          %v3110 = vsel %vm3102, %v3089, %v3092
          %v3111 = vsel %vm3105, %v3098, 920167782
          %v3112 = vsel %vm3104, %v3095, %v3111
          %v3113 = vsel %vm3103, %v3110, %v3112
          %v3114 = vsel %vm3102, %v3092, %v3095
          %v3115 = vsel %vm3105, %v3101, 1326507024
          %v3116 = vsel %vm3104, %v3098, %v3115
          %v3117 = vsel %vm3103, %v3114, %v3116
          %v3118 = vshll.u32 %v3078, 8
          %v3119 = vmul.u32.u64.compose %v3118, %v3117
          %v3120 = vextract.low.u32 %v3119
          %v3121 = vextract.high.u32 %v3119
          %v3122 = vmul.u32.u64.compose %v3118, %v3113
          %v3123 = vextract.low.u32 %v3122
          %v3124 = vextract.high.u32 %v3122
          %v3125 = vmul.u32 %v3118, %v3109
          %v3126 = vadd.s32 %v3121, %v3123
          %vm3127 = vc.u32 %v3121, %v3123
          %v3128 = vadd.s32 %v3124, 1
          %v3129 = vsel %vm3127, %v3128, %v3124
          %v3130 = vadd.s32 %v3125, %v3129
          %v3131 = vadd.s32 %v3130, 536870912
          %v3132 = vshrl.u32 %v3131, 30
          %v3133 = vshll.u32 %v3132, 30
          %v3134 = vsub.s32 %v3130, %v3133
          %vm3135 = vcmp.lt.s32.totalorder %v3134, 0
          %v3136 = vsub.s32 0, %v3134
          %v3137 = vsel %vm3135, %v3136, %v3134
          %v3138 = vclz %v3137
          %v3139 = vsub.s32 %v3138, 2
          %vm3140 = vcmp.gt.s32.totalorder 0, %v3139
          %v3141 = vsel %vm3140, 0, %v3139
          %v3142 = vsub.s32 32, %v3141
          %v3143 = vshll.u32 %v3134, %v3141
          %v3144 = vshrl.u32 %v3126, %v3142
          %v3145 = vor.u32 %v3143, %v3144
          %v3146 = vsub.s32 4294967266, %v3141
          %v3147 = vadd.s32 %v3146, 127
          %v3148 = vshll.u32 %v3147, 23
          %v3149 = vor.u32 4788187, %v3148
          %v3150 = vand.u32 2147483647, %v3149
          %v3152 = vcvt.s32.f32 %v3145
          %v3153 = vmul.f32 %v3152, %v3150
          %v3154 = vxor.u32 %v3153, 2147483648
          %v3155 = vsel %vm3072, %v3154, %v3153
          %v3156 = vsub.s32 4, %v3132
          %v3157 = vsel %vm3072, %v3156, %v3132
          %v3158 = vsel %vm3071, %v1509, %v3155
          %v3159 = vsel %vm3071, 0, %v3157
          %v3160 = vcosq.f32.pop %v3158
          %v3161 = vsinq.f32.pop %v3158
          %vm3162 = vweird.f32 %v1509
          %v3163 = vadd.s32 %v3159, 3
          %v3164 = vand.u32 %v3163, 3
          %vm3165 = vcmp.lt.s32.totalorder %v3164, 2
          %vm3166 = vcmp.eq.s32.totalorder %v3164, 0
          %v3167 = vxor.u32 %v3161, 2147483648
          %v3168 = vsel %vm3166, %v3160, %v3167
          %vm3169 = vcmp.eq.s32.totalorder %v3164, 2
          %v3170 = vxor.u32 %v3160, 2147483648
          %v3171 = vsel %vm3169, %v3170, %v3161
          %v3172 = vsel %vm3165, %v3168, %v3171
          %v3173 = vsel %vm3162, nan, %v3172
          %v3174 = vld [vmem:[#allocation2] sm:$0xff]
          %v3175 = vld [vmem:[#allocation2 + $0x8] sm:$0xff]
          %v3176 = vld [vmem:[#allocation2 + $0x10] sm:$0xff]
          %v3177 = vld [vmem:[#allocation2 + $0x18] sm:$0xff]
          %v3178 = vld [vmem:[#allocation2 + $0x20] sm:$0xff]
          %v3179 = vld [vmem:[#allocation2 + $0x28] sm:$0xff]
          %v3180 = vld [vmem:[#allocation2 + $0x30] sm:$0xff]
          %v3181 = vld [vmem:[#allocation2 + $0x38] sm:$0xff]
          %v3182 = vld [vmem:[#allocation2 + $0x40] sm:$0xff]
          %v3183 = vld [vmem:[#allocation2 + $0x48] sm:$0xff]
          %v3184 = vld [vmem:[#allocation2 + $0x50] sm:$0xff]
          %v3185 = vld [vmem:[#allocation2 + $0x58] sm:$0xff]
          %v3186 = vld [vmem:[#allocation2 + $0x60] sm:$0xff]
          %v3187 = vld [vmem:[#allocation2 + $0x68] sm:$0xff]
          %v3188 = vld [vmem:[#allocation2 + $0x70] sm:$0xff]
          %v3189 = vld [vmem:[#allocation2 + $0x78] sm:$0xff]
          %v3190 = vld [vmem:[%s5] sm:$0xff]
          %v3191 = vld [vmem:[%s5 + $0x8] sm:$0xff]
          %v3192 = vld [vmem:[%s5 + $0x10] sm:$0xff]
          %v3193 = vld [vmem:[%s5 + $0x18] sm:$0xff]
          %v3195 = vsel %vm1217, %v1613, 0
          %v3198 = vsel %vm1217, %v1717, 0
          %v3201 = vsel %vm1217, %v1821, 0
          %v3204 = vsel %vm1217, %v1925, 0
          %v3207 = vsel %vm1217, %v2029, 0
          %v3210 = vsel %vm1217, %v2133, 0
          %v3213 = vsel %vm1217, %v2237, 0
          %v3216 = vsel %vm1217, %v2341, 0
          %v3219 = vsel %vm1217, %v2445, 0
          %v3222 = vsel %vm1217, %v2549, 0
          %v3225 = vsel %vm1217, %v2653, 0
          %v3228 = vsel %vm1217, %v2757, 0
          %v3231 = vsel %vm1217, %v2861, 0
          %v3234 = vsel %vm1217, %v2965, 0
          %v3237 = vsel %vm1217, %v3069, 0
          %v3240 = vsel %vm1217, %v3173, 0
          %3242 = vmatprep.subr.mxu0 0.0
          %3243 = vmatpush1.msra.mxu0 %v3190
          %3244 = vmatprep.subr.mxu0 0.0
          %3245 = vmatpush1.msra.mxu0 %v3191
          %3246 = vmatprep.subr.mxu0 0.0
          %3247 = vmatpush1.msra.mxu0 %v3192
          %3248 = vmatprep.subr.mxu0 0.0
          %3249 = vmatpush1.msra.mxu0 %v3193
          %3250 = vmatprep.subr.mxu0 0.0
          %3251 = vmatpush1.msra.mxu0 0.0
          %3252 = vmatprep.subr.mxu0 0.0
          %3253 = vmatpush1.msra.mxu0 0.0
          %3254 = vmatprep.subr.mxu0 0.0
          %3255 = vmatpush1.msra.mxu0 0.0
          %3256 = vmatprep.subr.mxu0 0.0
          %3257 = vmatpush1.msra.mxu0 0.0
          %3258 = vmatprep.subr.mxu0 0.0
          %3259 = vmatpush1.msra.mxu0 0.0
          %3260 = vmatprep.subr.mxu0 0.0
          %3261 = vmatpush1.msra.mxu0 0.0
          %3262 = vmatprep.subr.mxu0 0.0
          %3263 = vmatpush1.msra.mxu0 0.0
          %3264 = vmatprep.subr.mxu0 0.0
          %3265 = vmatpush1.msra.mxu0 0.0
          %3266 = vmatprep.subr.mxu0 0.0
          %3267 = vmatpush1.msra.mxu0 0.0
          %3268 = vmatprep.subr.mxu0 0.0
          %3269 = vmatpush1.msra.mxu0 0.0
          %3270 = vmatprep.subr.mxu0 0.0
          %3271 = vmatpush1.msra.mxu0 0.0
          %3272 = vmatprep.subr.mxu0 0.0
          %3273 = vmatpush1.msra.mxu0 0.0
          %3274 = vmatprep.subr.mxu0 0.0
          %3275 = vmatpush1.msra.mxu0 0.0
          %3276 = vmatprep.subr.mxu0 0.0
          %3277 = vmatpush1.msra.mxu0 0.0
          %3278 = vmatprep.subr.mxu0 0.0
          %3279 = vmatpush1.msra.mxu0 0.0
          %3280 = vmatprep.subr.mxu0 0.0
          %3281 = vmatpush1.msra.mxu0 0.0
          %3282 = vmatprep.subr.mxu0 0.0
          %3283 = vmatpush1.msra.mxu0 0.0
          %3284 = vmatprep.subr.mxu0 0.0
          %3285 = vmatpush1.msra.mxu0 0.0
          %3286 = vmatprep.subr.mxu0 0.0
          %3287 = vmatpush1.msra.mxu0 0.0
          %3288 = vmatprep.subr.mxu0 0.0
          %3289 = vmatpush1.msra.mxu0 0.0
          %3290 = vmatprep.subr.mxu0 0.0
          %3291 = vmatpush1.msra.mxu0 0.0
          %3292 = vmatprep.subr.mxu0 0.0
          %3293 = vmatpush1.msra.mxu0 0.0
          %3294 = vmatprep.subr.mxu0 0.0
          %3295 = vmatpush1.msra.mxu0 0.0
          %3296 = vmatprep.subr.mxu0 0.0
          %3297 = vmatpush1.msra.mxu0 0.0
          %3298 = vmatprep.subr.mxu0 0.0
          %3299 = vmatpush1.msra.mxu0 0.0
          %3300 = vmatprep.subr.mxu0 0.0
          %3301 = vmatpush1.msra.mxu0 0.0
          %3302 = vmatprep.subr.mxu0 0.0
          %3303 = vmatpush1.msra.mxu0 0.0
          %3304 = vmatprep.subr.mxu0 0.0
          %3305 = vmatpush1.msra.mxu0 0.0
          %3306 = vmatprep.mubr.f32.mxu0 0.0
          %3307 = vmatmul.mubr.f32.gmra.mrb[0].mxu0 %v3195
          %v3308 = vpop.f32.mrb[0].mxu0
          %v3309 = vadd.f32 0.0, %v3308
          %v3310 = vpop.f32.mrb[0].mxu0
          %3311 = vmatprep.mubr.f32.mxu0 0.0
          %3312 = vmatmul.mubr.f32.gmra.mrb[0].mxu0 %v3198
          %v3313 = vpop.f32.mrb[0].mxu0
          %v3314 = vadd.f32 0.0, %v3313
          %v3315 = vpop.f32.mrb[0].mxu0
          %3316 = vmatprep.mubr.f32.mxu0 0.0
          %3317 = vmatmul.mubr.f32.gmra.mrb[0].mxu0 %v3201
          %v3318 = vpop.f32.mrb[0].mxu0
          %v3319 = vadd.f32 0.0, %v3318
          %v3320 = vpop.f32.mrb[0].mxu0
          %3321 = vmatprep.mubr.f32.mxu0 0.0
          %3322 = vmatmul.mubr.f32.gmra.mrb[0].mxu0 %v3204
          %v3323 = vpop.f32.mrb[0].mxu0
          %v3324 = vadd.f32 0.0, %v3323
          %v3325 = vpop.f32.mrb[0].mxu0
          %3326 = vmatprep.mubr.f32.mxu0 0.0
          %3327 = vmatmul.mubr.f32.gmra.mrb[0].mxu0 %v3207
          %v3328 = vpop.f32.mrb[0].mxu0
          %v3329 = vadd.f32 0.0, %v3328
          %v3330 = vpop.f32.mrb[0].mxu0
          %3331 = vmatprep.mubr.f32.mxu0 0.0
          %3332 = vmatmul.mubr.f32.gmra.mrb[0].mxu0 %v3210
          %v3333 = vpop.f32.mrb[0].mxu0
          %v3334 = vadd.f32 0.0, %v3333
          %v3335 = vpop.f32.mrb[0].mxu0
          %3336 = vmatprep.mubr.f32.mxu0 0.0
          %3337 = vmatmul.mubr.f32.gmra.mrb[0].mxu0 %v3213
          %v3338 = vpop.f32.mrb[0].mxu0
          %v3339 = vadd.f32 0.0, %v3338
          %v3340 = vpop.f32.mrb[0].mxu0
          %3341 = vmatprep.mubr.f32.mxu0 0.0
          %3342 = vmatmul.mubr.f32.gmra.mrb[0].mxu0 %v3216
          %v3343 = vpop.f32.mrb[0].mxu0
          %v3344 = vadd.f32 0.0, %v3343
          %v3345 = vpop.f32.mrb[0].mxu0
          %3346 = vmatprep.mubr.f32.mxu0 0.0
          %3347 = vmatmul.mubr.f32.gmra.mrb[0].mxu0 %v3219
          %v3348 = vpop.f32.mrb[0].mxu0
          %v3349 = vadd.f32 0.0, %v3348
          %v3350 = vpop.f32.mrb[0].mxu0
          %3351 = vmatprep.mubr.f32.mxu0 0.0
          %3352 = vmatmul.mubr.f32.gmra.mrb[0].mxu0 %v3222
          %v3353 = vpop.f32.mrb[0].mxu0
          %v3354 = vadd.f32 0.0, %v3353
          %v3355 = vpop.f32.mrb[0].mxu0
          %3356 = vmatprep.mubr.f32.mxu0 0.0
          %3357 = vmatmul.mubr.f32.gmra.mrb[0].mxu0 %v3225
          %v3358 = vpop.f32.mrb[0].mxu0
          %v3359 = vadd.f32 0.0, %v3358
          %v3360 = vpop.f32.mrb[0].mxu0
          %3361 = vmatprep.mubr.f32.mxu0 0.0
          %3362 = vmatmul.mubr.f32.gmra.mrb[0].mxu0 %v3228
          %v3363 = vpop.f32.mrb[0].mxu0
          %v3364 = vadd.f32 0.0, %v3363
          %v3365 = vpop.f32.mrb[0].mxu0
          %3366 = vmatprep.mubr.f32.mxu0 0.0
          %3367 = vmatmul.mubr.f32.gmra.mrb[0].mxu0 %v3231
          %v3368 = vpop.f32.mrb[0].mxu0
          %v3369 = vadd.f32 0.0, %v3368
          %v3370 = vpop.f32.mrb[0].mxu0
          %3371 = vmatprep.mubr.f32.mxu0 0.0
          %3372 = vmatmul.mubr.f32.gmra.mrb[0].mxu0 %v3234
          %v3373 = vpop.f32.mrb[0].mxu0
          %v3374 = vadd.f32 0.0, %v3373
          %v3375 = vpop.f32.mrb[0].mxu0
          %3376 = vmatprep.mubr.f32.mxu0 0.0
          %3377 = vmatmul.mubr.f32.gmra.mrb[0].mxu0 %v3237
          %v3378 = vpop.f32.mrb[0].mxu0
          %v3379 = vadd.f32 0.0, %v3378
          %v3380 = vpop.f32.mrb[0].mxu0
          %3381 = vmatprep.mubr.f32.mxu0 0.0
          %3382 = vmatmul.mubr.f32.gmra.mrb[0].mxu0 %v3240
          %v3383 = vpop.f32.mrb[0].mxu0
          %v3384 = vadd.f32 0.0, %v3383
          %v3385 = vpop.f32.mrb[0].mxu0
          %3386 = vdwg.mxu0
          %v3387 = vadd.f32 %v3174, %v3309
          %v3388 = vadd.f32 %v3175, %v3314
          %v3389 = vadd.f32 %v3176, %v3319
          %v3390 = vadd.f32 %v3177, %v3324
          %v3391 = vadd.f32 %v3178, %v3329
          %v3392 = vadd.f32 %v3179, %v3334
          %v3393 = vadd.f32 %v3180, %v3339
          %v3394 = vadd.f32 %v3181, %v3344
          %v3395 = vadd.f32 %v3182, %v3349
          %v3396 = vadd.f32 %v3183, %v3354
          %v3397 = vadd.f32 %v3184, %v3359
          %v3398 = vadd.f32 %v3185, %v3364
          %v3399 = vadd.f32 %v3186, %v3369
          %v3400 = vadd.f32 %v3187, %v3374
          %v3401 = vadd.f32 %v3188, %v3379
          %v3402 = vadd.f32 %v3189, %v3384
          %v3403 = vld [vmem:[%s7] sm:$0x1]
          %v3405 = vlaneseq
          %v3406 = vshrl.u32 %v3405, 7
          %v3407 = vsub.s32 0, %v3406
          %v3408 = vrot.slane %v3403, %v3407
          %v3410 = vadd.f32 %v3387, %v3408
          %v3411 = vadd.f32 %v3388, %v3408
          %v3412 = vadd.f32 %v3389, %v3408
          %v3413 = vadd.f32 %v3390, %v3408
          %v3414 = vadd.f32 %v3391, %v3408
          %v3415 = vadd.f32 %v3392, %v3408
          %v3416 = vadd.f32 %v3393, %v3408
          %v3417 = vadd.f32 %v3394, %v3408
          %v3418 = vadd.f32 %v3395, %v3408
          %v3419 = vadd.f32 %v3396, %v3408
          %v3420 = vadd.f32 %v3397, %v3408
          %v3421 = vadd.f32 %v3398, %v3408
          %v3422 = vadd.f32 %v3399, %v3408
          %v3423 = vadd.f32 %v3400, %v3408
          %v3424 = vadd.f32 %v3401, %v3408
          %v3425 = vadd.f32 %v3402, %v3408
          %v3426 = vmax.f32 %v3410, 0.0
          %v3427 = vmax.f32 %v3411, 0.0
          %v3428 = vmax.f32 %v3412, 0.0
          %v3429 = vmax.f32 %v3413, 0.0
          %v3430 = vmax.f32 %v3414, 0.0
          %v3431 = vmax.f32 %v3415, 0.0
          %v3432 = vmax.f32 %v3416, 0.0
          %v3433 = vmax.f32 %v3417, 0.0
          %v3434 = vmax.f32 %v3418, 0.0
          %v3435 = vmax.f32 %v3419, 0.0
          %v3436 = vmax.f32 %v3420, 0.0
          %v3437 = vmax.f32 %v3421, 0.0
          %v3438 = vmax.f32 %v3422, 0.0
          %v3439 = vmax.f32 %v3423, 0.0
          %v3440 = vmax.f32 %v3424, 0.0
          %v3441 = vmax.f32 %v3425, 0.0
          %v3442 = vld [vmem:[%s8] sm:$0xff]
          %v3443 = vld [vmem:[%s8 + $0x8] sm:$0xff]
          %v3444 = vld [vmem:[%s8 + $0x10] sm:$0xff]
          %v3445 = vld [vmem:[%s8 + $0x18] sm:$0xff]
          %v3446 = vld [vmem:[%s9] sm:$0x1]
          %v3448 = vlaneseq
          %v3449 = vshrl.u32 %v3448, 7
          %v3450 = vsub.s32 0, %v3449
          %v3451 = vrot.slane %v3446, %v3450
          %v3454 = vsel %vm1217, %v3426, 0
          %v3457 = vsel %vm1217, %v3427, 0
          %v3460 = vsel %vm1217, %v3428, 0
          %v3463 = vsel %vm1217, %v3429, 0
          %v3466 = vsel %vm1217, %v3430, 0
          %v3469 = vsel %vm1217, %v3431, 0
          %v3472 = vsel %vm1217, %v3432, 0
          %v3475 = vsel %vm1217, %v3433, 0
          %v3478 = vsel %vm1217, %v3434, 0
          %v3481 = vsel %vm1217, %v3435, 0
          %v3484 = vsel %vm1217, %v3436, 0
          %v3487 = vsel %vm1217, %v3437, 0
          %v3490 = vsel %vm1217, %v3438, 0
          %v3493 = vsel %vm1217, %v3439, 0
          %v3496 = vsel %vm1217, %v3440, 0
          %v3499 = vsel %vm1217, %v3441, 0
          %3501 = vmatprep.subr.mxu0 0.0
          %3502 = vmatpush1.msra.mxu0 %v3442
          %3503 = vmatprep.subr.mxu0 0.0
          %3504 = vmatpush1.msra.mxu0 %v3443
          %3505 = vmatprep.subr.mxu0 0.0
          %3506 = vmatpush1.msra.mxu0 %v3444
          %3507 = vmatprep.subr.mxu0 0.0
          %3508 = vmatpush1.msra.mxu0 %v3445
          %3509 = vmatprep.subr.mxu0 0.0
          %3510 = vmatpush1.msra.mxu0 0.0
          %3511 = vmatprep.subr.mxu0 0.0
          %3512 = vmatpush1.msra.mxu0 0.0
          %3513 = vmatprep.subr.mxu0 0.0
          %3514 = vmatpush1.msra.mxu0 0.0
          %3515 = vmatprep.subr.mxu0 0.0
          %3516 = vmatpush1.msra.mxu0 0.0
          %3517 = vmatprep.subr.mxu0 0.0
          %3518 = vmatpush1.msra.mxu0 0.0
          %3519 = vmatprep.subr.mxu0 0.0
          %3520 = vmatpush1.msra.mxu0 0.0
          %3521 = vmatprep.subr.mxu0 0.0
          %3522 = vmatpush1.msra.mxu0 0.0
          %3523 = vmatprep.subr.mxu0 0.0
          %3524 = vmatpush1.msra.mxu0 0.0
          %3525 = vmatprep.subr.mxu0 0.0
          %3526 = vmatpush1.msra.mxu0 0.0
          %3527 = vmatprep.subr.mxu0 0.0
          %3528 = vmatpush1.msra.mxu0 0.0
          %3529 = vmatprep.subr.mxu0 0.0
          %3530 = vmatpush1.msra.mxu0 0.0
          %3531 = vmatprep.subr.mxu0 0.0
          %3532 = vmatpush1.msra.mxu0 0.0
          %3533 = vmatprep.subr.mxu0 0.0
          %3534 = vmatpush1.msra.mxu0 0.0
          %3535 = vmatprep.subr.mxu0 0.0
          %3536 = vmatpush1.msra.mxu0 0.0
          %3537 = vmatprep.subr.mxu0 0.0
          %3538 = vmatpush1.msra.mxu0 0.0
          %3539 = vmatprep.subr.mxu0 0.0
          %3540 = vmatpush1.msra.mxu0 0.0
          %3541 = vmatprep.subr.mxu0 0.0
          %3542 = vmatpush1.msra.mxu0 0.0
          %3543 = vmatprep.subr.mxu0 0.0
          %3544 = vmatpush1.msra.mxu0 0.0
          %3545 = vmatprep.subr.mxu0 0.0
          %3546 = vmatpush1.msra.mxu0 0.0
          %3547 = vmatprep.subr.mxu0 0.0
          %3548 = vmatpush1.msra.mxu0 0.0
          %3549 = vmatprep.subr.mxu0 0.0
          %3550 = vmatpush1.msra.mxu0 0.0
          %3551 = vmatprep.subr.mxu0 0.0
          %3552 = vmatpush1.msra.mxu0 0.0
          %3553 = vmatprep.subr.mxu0 0.0
          %3554 = vmatpush1.msra.mxu0 0.0
          %3555 = vmatprep.subr.mxu0 0.0
          %3556 = vmatpush1.msra.mxu0 0.0
          %3557 = vmatprep.subr.mxu0 0.0
          %3558 = vmatpush1.msra.mxu0 0.0
          %3559 = vmatprep.subr.mxu0 0.0
          %3560 = vmatpush1.msra.mxu0 0.0
          %3561 = vmatprep.subr.mxu0 0.0
          %3562 = vmatpush1.msra.mxu0 0.0
          %3563 = vmatprep.subr.mxu0 0.0
          %3564 = vmatpush1.msra.mxu0 0.0
          %3565 = vmatprep.mubr.f32.mxu0 0.0
          %3566 = vmatmul.mubr.f32.gmra.mrb[0].mxu0 %v3454
          %v3567 = vpop.f32.mrb[0].mxu0
          %v3568 = vadd.f32 %v3451, %v3567
          %v3569 = vpop.f32.mrb[0].mxu0
          %3570 = vmatprep.mubr.f32.mxu0 0.0
          %3571 = vmatmul.mubr.f32.gmra.mrb[0].mxu0 %v3457
          %v3572 = vpop.f32.mrb[0].mxu0
          %v3573 = vadd.f32 %v3451, %v3572
          %v3574 = vpop.f32.mrb[0].mxu0
          %3575 = vmatprep.mubr.f32.mxu0 0.0
          %3576 = vmatmul.mubr.f32.gmra.mrb[0].mxu0 %v3460
          %v3577 = vpop.f32.mrb[0].mxu0
          %v3578 = vadd.f32 %v3451, %v3577
          %v3579 = vpop.f32.mrb[0].mxu0
          %3580 = vmatprep.mubr.f32.mxu0 0.0
          %3581 = vmatmul.mubr.f32.gmra.mrb[0].mxu0 %v3463
          %v3582 = vpop.f32.mrb[0].mxu0
          %v3583 = vadd.f32 %v3451, %v3582
          %v3584 = vpop.f32.mrb[0].mxu0
          %3585 = vmatprep.mubr.f32.mxu0 0.0
          %3586 = vmatmul.mubr.f32.gmra.mrb[0].mxu0 %v3466
          %v3587 = vpop.f32.mrb[0].mxu0
          %v3588 = vadd.f32 %v3451, %v3587
          %v3589 = vpop.f32.mrb[0].mxu0
          %3590 = vmatprep.mubr.f32.mxu0 0.0
          %3591 = vmatmul.mubr.f32.gmra.mrb[0].mxu0 %v3469
          %v3592 = vpop.f32.mrb[0].mxu0
          %v3593 = vadd.f32 %v3451, %v3592
          %v3594 = vpop.f32.mrb[0].mxu0
          %3595 = vmatprep.mubr.f32.mxu0 0.0
          %3596 = vmatmul.mubr.f32.gmra.mrb[0].mxu0 %v3472
          %v3597 = vpop.f32.mrb[0].mxu0
          %v3598 = vadd.f32 %v3451, %v3597
          %v3599 = vpop.f32.mrb[0].mxu0
          %3600 = vmatprep.mubr.f32.mxu0 0.0
          %3601 = vmatmul.mubr.f32.gmra.mrb[0].mxu0 %v3475
          %v3602 = vpop.f32.mrb[0].mxu0
          %v3603 = vadd.f32 %v3451, %v3602
          %v3604 = vpop.f32.mrb[0].mxu0
          %3605 = vmatprep.mubr.f32.mxu0 0.0
          %3606 = vmatmul.mubr.f32.gmra.mrb[0].mxu0 %v3478
          %v3607 = vpop.f32.mrb[0].mxu0
          %v3608 = vadd.f32 %v3451, %v3607
          %v3609 = vpop.f32.mrb[0].mxu0
          %3610 = vmatprep.mubr.f32.mxu0 0.0
          %3611 = vmatmul.mubr.f32.gmra.mrb[0].mxu0 %v3481
          %v3612 = vpop.f32.mrb[0].mxu0
          %v3613 = vadd.f32 %v3451, %v3612
          %v3614 = vpop.f32.mrb[0].mxu0
          %3615 = vmatprep.mubr.f32.mxu0 0.0
          %3616 = vmatmul.mubr.f32.gmra.mrb[0].mxu0 %v3484
          %v3617 = vpop.f32.mrb[0].mxu0
          %v3618 = vadd.f32 %v3451, %v3617
          %v3619 = vpop.f32.mrb[0].mxu0
          %3620 = vmatprep.mubr.f32.mxu0 0.0
          %3621 = vmatmul.mubr.f32.gmra.mrb[0].mxu0 %v3487
          %v3622 = vpop.f32.mrb[0].mxu0
          %v3623 = vadd.f32 %v3451, %v3622
          %v3624 = vpop.f32.mrb[0].mxu0
          %3625 = vmatprep.mubr.f32.mxu0 0.0
          %3626 = vmatmul.mubr.f32.gmra.mrb[0].mxu0 %v3490
          %v3627 = vpop.f32.mrb[0].mxu0
          %v3628 = vadd.f32 %v3451, %v3627
          %v3629 = vpop.f32.mrb[0].mxu0
          %3630 = vmatprep.mubr.f32.mxu0 0.0
          %3631 = vmatmul.mubr.f32.gmra.mrb[0].mxu0 %v3493
          %v3632 = vpop.f32.mrb[0].mxu0
          %v3633 = vadd.f32 %v3451, %v3632
          %v3634 = vpop.f32.mrb[0].mxu0
          %3635 = vmatprep.mubr.f32.mxu0 0.0
          %3636 = vmatmul.mubr.f32.gmra.mrb[0].mxu0 %v3496
          %v3637 = vpop.f32.mrb[0].mxu0
          %v3638 = vadd.f32 %v3451, %v3637
          %v3639 = vpop.f32.mrb[0].mxu0
          %3640 = vmatprep.mubr.f32.mxu0 0.0
          %3641 = vmatmul.mubr.f32.gmra.mrb[0].mxu0 %v3499
          %v3642 = vpop.f32.mrb[0].mxu0
          %v3643 = vadd.f32 %v3451, %v3642
          %v3644 = vpop.f32.mrb[0].mxu0
          %3645 = vdwg.mxu0
          %v3646 = vmax.f32 %v3568, 0.0
          %v3647 = vmax.f32 %v3573, 0.0
          %v3648 = vmax.f32 %v3578, 0.0
          %v3649 = vmax.f32 %v3583, 0.0
          %v3650 = vmax.f32 %v3588, 0.0
          %v3651 = vmax.f32 %v3593, 0.0
          %v3652 = vmax.f32 %v3598, 0.0
          %v3653 = vmax.f32 %v3603, 0.0
          %v3654 = vmax.f32 %v3608, 0.0
          %v3655 = vmax.f32 %v3613, 0.0
          %v3656 = vmax.f32 %v3618, 0.0
          %v3657 = vmax.f32 %v3623, 0.0
          %v3658 = vmax.f32 %v3628, 0.0
          %v3659 = vmax.f32 %v3633, 0.0
          %v3660 = vmax.f32 %v3638, 0.0
          %v3661 = vmax.f32 %v3643, 0.0
          %v3662 = vld [vmem:[%s10] sm:$0x1]
          %v3663 = vld [vmem:[#allocation3] sm:$0x1]
          %3665 = vset.pattern.permute.xlu0 0
          %3666 = vperm.xlu0 %3665, %v3663
          %v3667 = vpop.permute.xlu0 %3666
          %v3669 = vlaneseq
          %v3670 = vshrl.u32 %v3669, 7
          %v3671 = vsub.s32 0, %v3670
          %v3672 = vrot.slane %v3667, %v3671
          %v3674 = vsel %vm1217, %v3662, 0
          %v3677 = vsel %vm1217, %v3646, 0
          %v3680 = vsel %vm1217, %v3647, 0
          %v3683 = vsel %vm1217, %v3648, 0
          %v3686 = vsel %vm1217, %v3649, 0
          %v3689 = vsel %vm1217, %v3650, 0
          %v3692 = vsel %vm1217, %v3651, 0
          %v3695 = vsel %vm1217, %v3652, 0
          %v3698 = vsel %vm1217, %v3653, 0
          %v3701 = vsel %vm1217, %v3654, 0
          %v3704 = vsel %vm1217, %v3655, 0
          %v3707 = vsel %vm1217, %v3656, 0
          %v3710 = vsel %vm1217, %v3657, 0
          %v3713 = vsel %vm1217, %v3658, 0
          %v3716 = vsel %vm1217, %v3659, 0
          %v3719 = vsel %vm1217, %v3660, 0
          %v3722 = vsel %vm1217, %v3661, 0
          %3724 = vmatprep.subr.mxu0 0.0
          %3725 = vmatpush1.xpose.msra.mxu0 %v3677
          %3726 = vmatprep.subr.mxu0 0.0
          %3727 = vmatpush1.xpose.msra.mxu0 %v3680
          %3728 = vmatprep.subr.mxu0 0.0
          %3729 = vmatpush1.xpose.msra.mxu0 %v3683
          %3730 = vmatprep.subr.mxu0 0.0
          %3731 = vmatpush1.xpose.msra.mxu0 %v3686
          %3732 = vmatprep.subr.mxu0 0.0
          %3733 = vmatpush1.xpose.msra.mxu0 %v3689
          %3734 = vmatprep.subr.mxu0 0.0
          %3735 = vmatpush1.xpose.msra.mxu0 %v3692
          %3736 = vmatprep.subr.mxu0 0.0
          %3737 = vmatpush1.xpose.msra.mxu0 %v3695
          %3738 = vmatprep.subr.mxu0 0.0
          %3739 = vmatpush1.xpose.msra.mxu0 %v3698
          %3740 = vmatprep.subr.mxu0 0.0
          %3741 = vmatpush1.xpose.msra.mxu0 %v3701
          %3742 = vmatprep.subr.mxu0 0.0
          %3743 = vmatpush1.xpose.msra.mxu0 %v3704
          %3744 = vmatprep.subr.mxu0 0.0
          %3745 = vmatpush1.xpose.msra.mxu0 %v3707
          %3746 = vmatprep.subr.mxu0 0.0
          %3747 = vmatpush1.xpose.msra.mxu0 %v3710
          %3748 = vmatprep.subr.mxu0 0.0
          %3749 = vmatpush1.xpose.msra.mxu0 %v3713
          %3750 = vmatprep.subr.mxu0 0.0
          %3751 = vmatpush1.xpose.msra.mxu0 %v3716
          %3752 = vmatprep.subr.mxu0 0.0
          %3753 = vmatpush1.xpose.msra.mxu0 %v3719
          %3754 = vmatprep.subr.mxu0 0.0
          %3755 = vmatpush1.xpose.msra.mxu0 %v3722
          %3756 = vmatprep.subr.mxu0 0.0
          %3757 = vmatpush1.xpose.msra.mxu0 0.0
          %3758 = vmatprep.subr.mxu0 0.0
          %3759 = vmatpush1.xpose.msra.mxu0 0.0
          %3760 = vmatprep.subr.mxu0 0.0
          %3761 = vmatpush1.xpose.msra.mxu0 0.0
          %3762 = vmatprep.subr.mxu0 0.0
          %3763 = vmatpush1.xpose.msra.mxu0 0.0
          %3764 = vmatprep.subr.mxu0 0.0
          %3765 = vmatpush1.xpose.msra.mxu0 0.0
          %3766 = vmatprep.subr.mxu0 0.0
          %3767 = vmatpush1.xpose.msra.mxu0 0.0
          %3768 = vmatprep.subr.mxu0 0.0
          %3769 = vmatpush1.xpose.msra.mxu0 0.0
          %3770 = vmatprep.subr.mxu0 0.0
          %3771 = vmatpush1.xpose.msra.mxu0 0.0
          %3772 = vmatprep.subr.mxu0 0.0
          %3773 = vmatpush1.xpose.msra.mxu0 0.0
          %3774 = vmatprep.subr.mxu0 0.0
          %3775 = vmatpush1.xpose.msra.mxu0 0.0
          %3776 = vmatprep.subr.mxu0 0.0
          %3777 = vmatpush1.xpose.msra.mxu0 0.0
          %3778 = vmatprep.subr.mxu0 0.0
          %3779 = vmatpush1.xpose.msra.mxu0 0.0
          %3780 = vmatprep.subr.mxu0 0.0
          %3781 = vmatpush1.xpose.msra.mxu0 0.0
          %3782 = vmatprep.subr.mxu0 0.0
          %3783 = vmatpush1.xpose.msra.mxu0 0.0
          %3784 = vmatprep.subr.mxu0 0.0
          %3785 = vmatpush1.xpose.msra.mxu0 0.0
          %3786 = vmatprep.subr.mxu0 0.0
          %3787 = vmatpush1.xpose.msra.mxu0 0.0
          %3788 = vmatprep.mubr.f32.mxu0 0.0
          %3789 = vmatmul.mubr.f32.gmra.mrb[0].mxu0 %v3674
          %v3790 = vpop.f32.mrb[0].mxu0
          %v3791 = vadd.f32 %v3672, %v3790
          %v3792 = vpop.f32.mrb[0].mxu0
          %3793 = vdwg.mxu0
          %3794 = vst [vmem:[%s489] sm:$0x1] %v3791
        $region76: #{tpu_custom_call.1} parent=67 // pred_fallthru
          _
        %s3795 = sand.u32 %s333, 1
        %s3796 = scalar_lea.sflag [#allocation5], %s3795
        %s3797 = sand.u32 %s333, 1
        %s3798 = scalar_lea.vmem [#allocation4], %s3797
        // Predicated region
        $region77: #{tpu_custom_call.1} parent=67 // pred_check
          %p3799 = pneg %p343
        $region78: #{tpu_custom_call.1} parent=67 // pred_check_branch
          %3801 = sbr.rel (%p3799) target = $region80
        $region79: #{tpu_custom_call.1} parent=67 // pred_region
          %s3803 = ssub.s32 16, 16
          %3804 = vsyncadd %s3796, %s3803
          %s3805 = sadd.s32 %s34, %s33
          %s3806 = smul.addr %s3805, 16
          %s3807 = scalar_lea.hbm %s12, %s3806
          %s3809 = sshll.u32 %s3798, 4
          %s3810 = int_to_ptr.vmem [resolvable:$true] %s3809
          %3812 = dma.vmem_to_hbm [thread:$0]  %s3810, 16, %s3807, %s3796
        $region80: #{tpu_custom_call.1} parent=67 // pred_fallthru
          _
      $region68: #{tpu_custom_call.1} parent=5 // pred_fallthru
        _
      %p3813 = scmp.le.s32.totalorder 2, %s23
      // Predicated region
      $region81: #{tpu_custom_call.1} parent=5 // pred_check
        %p3814 = pneg %p3813
      $region82: #{tpu_custom_call.1} parent=5 // pred_check_branch
        %3816 = sbr.rel (%p3814) target = $region84
      $region83: #{tpu_custom_call.1} parent=5 // pred_region
        %s3817 = ssub.s32 %s23, 2
        // Predicated region
        $region85: #{tpu_custom_call.1} parent=83 // pred_check
          %p3818 = pneg %p349
        $region86: #{tpu_custom_call.1} parent=83 // pred_check_branch
          %3820 = sbr.rel (%p3818) target = $region88
        $region87: #{tpu_custom_call.1} parent=83 // pred_region
          %s3821 = sand.u32 %s334, 1
          %s3822 = scalar_lea.sflag [#allocation5], %s3821
          %s3823 = sand.u32 %s334, 1
          %s3824 = scalar_lea.vmem [#allocation4], %s3823
          %3825 = dma.done %s3822, 16
        $region88: #{tpu_custom_call.1} parent=83 // pred_fallthru
          _
      $region84: #{tpu_custom_call.1} parent=5 // pred_fallthru
        _
    $region6: #{tpu_custom_call.1} parent=1 // loop_footer
      %s27 = sadd.s32 1, %s23
    $region7: #{tpu_custom_call.1} parent=1 // loop_footer_branch
      %22 = sbr.rel target = $region3
    $region8: #{tpu_custom_call.1} parent=1 // loop_exit
      _
    %3826 = vsyncpa [#allocation5], 1
    %s3827 = scalar_lea.sflag [#allocation5], 1
    %3828 = vsyncpa %s3827, 1

// kernel: tpu_custom_call.1
$region0: #{tpu_custom_call.1}
  #allocation0 [shape = 'u32[]', space=smem, size = 0x4, offset = 0x4, fixed_abs, tag = 'smem constant byte address 0x4 - core index']
  #allocation1 [shape = 'u32[144,128]{1,0:T(1,128)}', space=vmem, size = 0x12000, scoped, tag = 'internal scratch']
  #allocation2 [shape = 'f32[128,32]{1,0:T(8,128)}', space=vmem, size = 0x10000, scoped, tag = 'scratch operand']
  #allocation3 [shape = 'f32[1,1]{1,0:T(1,128)S(1)}', space=vmem, size = 0x200, scoped, tag = 'scoped memory for tpu_custom_call.1']
  %s0 = inlined_call_operand.vmem [shape: f32[2,128,2], index: 0, kind: input, shape index: {}]
  %s1 = inlined_call_operand.vmem [shape: bf16[2,16,64], index: 1, kind: input, shape index: {}]
  %s2 = inlined_call_operand.vmem [shape: f32[2,32], index: 2, kind: input, shape index: {}]
  %s3 = inlined_call_operand.vmem [shape: f32[1,32], index: 3, kind: input, shape index: {}]
  %s4 = inlined_call_operand.vmem [shape: f32[1,64], index: 4, kind: input, shape index: {}]
  %s5 = inlined_call_operand.vmem [shape: f32[32,32], index: 5, kind: input, shape index: {}]
  %s6 = inlined_call_operand.vmem [shape: bf16[64,32], index: 6, kind: input, shape index: {}]
  %s7 = inlined_call_operand.vmem [shape: f32[1,32], index: 7, kind: input, shape index: {}]
  %s8 = inlined_call_operand.vmem [shape: f32[1,32,32], index: 8, kind: input, shape index: {}]
  %s9 = inlined_call_operand.vmem [shape: f32[1,1,32], index: 9, kind: input, shape index: {}]
  %s10 = inlined_call_operand.vmem [shape: f32[1,32], index: 10, kind: input, shape index: {}]
  %s11 = inlined_call_operand.<no memory space> [shape: f32[1,1], index: 11, kind: input, shape index: {}]
  %s12 = inlined_call_operand.hbm [shape: f32[2,1,128], index: 12, kind: output, shape index: {}]
  %s13 = sld [smem:[#allocation0]]
  $region89: #{tpu_custom_call.1} parent=0
    _
  %s15 = ssub.s32 1, %s13
  %s16 = scalar_select 0, %s15, %s13
  %v17 = vstv %s11
  %18 = vst [vmem:[#allocation3] sm:$0x1] %v17
  $region1: #{tpu_custom_call.1} parent=0
    #allocation4 [shape = 'u8[1024]{0}', space=vmem, size = 0x400, scoped, tag = 'output window, operand 0']
    #allocation5 [shape = 's32[2]{0}', space=sflag, size = 0x8, scoped, tag = 'scoped memory for tpu_custom_call.1']
    %19 = vsyncpa [#allocation5], 0
    %s20 = scalar_lea.sflag [#allocation5], 1
    %21 = vsyncpa %s20, 0
    loop: start=0, step=1, limit=4
    $region2: #{tpu_custom_call.1} parent=1 // loop_pre_header
      _
    $region3: #{tpu_custom_call.1} parent=1 // loop_header
      %s23 = sphi 0, %s27
      %p24 = scmp.ge.s32.totalorder %s23, 4
      %s30 = sphi 0, %s49
      %s31 = sphi 0, %s45
      %s32 = sphi 0, %s41
      %s33 = sphi 0, %s30
      %s34 = sphi 0, %s31
      %s35 = sphi 0, %s32
      %s36 = sphi 0, %s33
      %s37 = sphi 0, %s34
      %s38 = sphi 0, %s35
      %s54 = sphi 0, %s56
      %s57 = sphi 0, %s54
      %s58 = sphi 0, %s57
      %s74 = sphi 0, %s58
      %s82 = sphi 0, %s84
      %s85 = sphi 0, %s82
      %s86 = sphi 0, %s85
      %s102 = sphi 0, %s86
      %s106 = sphi 0, %s106
      %s108 = sphi 0, %s106
      %s109 = sphi 0, %s108
      %s123 = sphi 0, %s109
      %s127 = sphi 0, %s127
      %s129 = sphi 0, %s127
      %s130 = sphi 0, %s129
      %s144 = sphi 0, %s130
      %s150 = sphi 0, %s152
      %s153 = sphi 0, %s150
      %s154 = sphi 0, %s153
      %s170 = sphi 0, %s154
      %s174 = sphi 0, %s174
      %s176 = sphi 0, %s174
      %s177 = sphi 0, %s176
      %s191 = sphi 0, %s177
      %s197 = sphi 0, %s199
      %s200 = sphi 0, %s197
      %s201 = sphi 0, %s200
      %s217 = sphi 0, %s201
      %s221 = sphi 0, %s221
      %s223 = sphi 0, %s221
      %s224 = sphi 0, %s223
      %s238 = sphi 0, %s224
      %s242 = sphi 0, %s242
      %s244 = sphi 0, %s242
      %s245 = sphi 0, %s244
      %s259 = sphi 0, %s245
      %s263 = sphi 0, %s263
      %s265 = sphi 0, %s263
      %s266 = sphi 0, %s265
      %s280 = sphi 0, %s266
      %s284 = sphi 0, %s284
      %s286 = sphi 0, %s284
      %s287 = sphi 0, %s286
      %s301 = sphi 0, %s287
      %s305 = sphi 0, %s305
      %s307 = sphi 0, %s305
      %s308 = sphi 0, %s307
      %s322 = sphi 0, %s308
      %s330 = sphi 0, %s332
      %s333 = sphi 0, %s330
      %s334 = sphi 0, %s333
      %s350 = sphi 0, %s334
    $region4: #{tpu_custom_call.1} parent=1 // loop_header_branch
      %26 = sbr.rel (%p24) target = $region8
    $region5: #{tpu_custom_call.1} parent=1 // loop_body
      %s28 = ssub.s32 %s23, 1
      %s29 = ssub.s32 %s23, 2
      %s39 = sadd.s32 1, %s32
      %p40 = scmp.ge.s32.totalorder %s39, 1
      %s41 = scalar_select %p40, 0, %s39
      %s42 = sadd.s32 1, %s31
      %s43 = scalar_select %p40, %s42, %s31
      %p44 = scmp.ge.s32.totalorder %s43, 1
      %s45 = scalar_select %p44, 0, %s43
      %s46 = sadd.s32 1, %s30
      %s47 = scalar_select %p44, %s46, %s30
      %p48 = scmp.ge.s32.totalorder %s47, 2
      %s49 = scalar_select %p48, 0, %s47
      %s50 = ssub.s32 %s30, %s49
      %s51 = ssub.s32 %s31, %s45
      %s52 = sor.u32 %s50, %s51
      %p53 = scmp.eq.s32.totalorder %s52, 0
      %s55 = sadd.s32 %s54, 1
      %s56 = scalar_select %p53, %s54, %s55
      %p59 = pneg %p53
      %p60 = scmp.eq.s32.totalorder %s23, 1
      %p61 = por %p59, %p60
      %p62 = scmp.ne.s32.totalorder %s54, %s57
      %p63 = scmp.eq.s32.totalorder %s23, 0
      %p64 = por %p62, %p63
      %p65 = scmp.ne.s32.totalorder %s54, %s57
      %p66 = scmp.eq.s32.totalorder %s28, 1
      %p67 = por %p65, %p66
      %p68 = scmp.ne.s32.totalorder %s57, %s58
      %p69 = scmp.eq.s32.totalorder %s28, 0
      %p70 = por %p68, %p69
      %p71 = scmp.ne.s32.totalorder %s57, %s58
      %p72 = scmp.eq.s32.totalorder %s29, 1
      %p73 = por %p71, %p72
      %p75 = scmp.ne.s32.totalorder %s58, %s74
      %p76 = scmp.eq.s32.totalorder %s29, 0
      %p77 = por %p75, %p76
      %s78 = ssub.s32 %s30, %s49
      %s79 = ssub.s32 %s32, %s41
      %s80 = sor.u32 %s78, %s79
      %p81 = scmp.eq.s32.totalorder %s80, 0
      %s83 = sadd.s32 %s82, 1
      %s84 = scalar_select %p81, %s82, %s83
      %p87 = pneg %p81
      %p88 = scmp.eq.s32.totalorder %s23, 1
      %p89 = por %p87, %p88
      %p90 = scmp.ne.s32.totalorder %s82, %s85
      %p91 = scmp.eq.s32.totalorder %s23, 0
      %p92 = por %p90, %p91
      %p93 = scmp.ne.s32.totalorder %s82, %s85
      %p94 = scmp.eq.s32.totalorder %s28, 1
      %p95 = por %p93, %p94
      %p96 = scmp.ne.s32.totalorder %s85, %s86
      %p97 = scmp.eq.s32.totalorder %s28, 0
      %p98 = por %p96, %p97
      %p99 = scmp.ne.s32.totalorder %s85, %s86
      %p100 = scmp.eq.s32.totalorder %s29, 1
      %p101 = por %p99, %p100
      %p103 = scmp.ne.s32.totalorder %s86, %s102
      %p104 = scmp.eq.s32.totalorder %s29, 0
      %p105 = por %p103, %p104
      %s107 = sadd.s32 %s106, 1
      %p110 = scmp.eq.s32.totalorder %s23, 1
      %p111 = scmp.ne.s32.totalorder %s106, %s108
      %p112 = scmp.eq.s32.totalorder %s23, 0
      %p113 = por %p111, %p112
      %p114 = scmp.ne.s32.totalorder %s106, %s108
      %p115 = scmp.eq.s32.totalorder %s28, 1
      %p116 = por %p114, %p115
      %p117 = scmp.ne.s32.totalorder %s108, %s109
      %p118 = scmp.eq.s32.totalorder %s28, 0
      %p119 = por %p117, %p118
      %p120 = scmp.ne.s32.totalorder %s108, %s109
      %p121 = scmp.eq.s32.totalorder %s29, 1
      %p122 = por %p120, %p121
      %p124 = scmp.ne.s32.totalorder %s109, %s123
      %p125 = scmp.eq.s32.totalorder %s29, 0
      %p126 = por %p124, %p125
      %s128 = sadd.s32 %s127, 1
      %p131 = scmp.eq.s32.totalorder %s23, 1
      %p132 = scmp.ne.s32.totalorder %s127, %s129
      %p133 = scmp.eq.s32.totalorder %s23, 0
      %p134 = por %p132, %p133
      %p135 = scmp.ne.s32.totalorder %s127, %s129
      %p136 = scmp.eq.s32.totalorder %s28, 1
      %p137 = por %p135, %p136
      %p138 = scmp.ne.s32.totalorder %s129, %s130
      %p139 = scmp.eq.s32.totalorder %s28, 0
      %p140 = por %p138, %p139
      %p141 = scmp.ne.s32.totalorder %s129, %s130
      %p142 = scmp.eq.s32.totalorder %s29, 1
      %p143 = por %p141, %p142
      %p145 = scmp.ne.s32.totalorder %s130, %s144
      %p146 = scmp.eq.s32.totalorder %s29, 0
      %p147 = por %p145, %p146
      %s148 = ssub.s32 %s32, %s41
      %p149 = scmp.eq.s32.totalorder %s148, 0
      %s151 = sadd.s32 %s150, 1
      %s152 = scalar_select %p149, %s150, %s151
      %p155 = pneg %p149
      %p156 = scmp.eq.s32.totalorder %s23, 1
      %p157 = por %p155, %p156
      %p158 = scmp.ne.s32.totalorder %s150, %s153
      %p159 = scmp.eq.s32.totalorder %s23, 0
      %p160 = por %p158, %p159
      %p161 = scmp.ne.s32.totalorder %s150, %s153
      %p162 = scmp.eq.s32.totalorder %s28, 1
      %p163 = por %p161, %p162
      %p164 = scmp.ne.s32.totalorder %s153, %s154
      %p165 = scmp.eq.s32.totalorder %s28, 0
      %p166 = por %p164, %p165
      %p167 = scmp.ne.s32.totalorder %s153, %s154
      %p168 = scmp.eq.s32.totalorder %s29, 1
      %p169 = por %p167, %p168
      %p171 = scmp.ne.s32.totalorder %s154, %s170
      %p172 = scmp.eq.s32.totalorder %s29, 0
      %p173 = por %p171, %p172
      %s175 = sadd.s32 %s174, 1
      %p178 = scmp.eq.s32.totalorder %s23, 1
      %p179 = scmp.ne.s32.totalorder %s174, %s176
      %p180 = scmp.eq.s32.totalorder %s23, 0
      %p181 = por %p179, %p180
      %p182 = scmp.ne.s32.totalorder %s174, %s176
      %p183 = scmp.eq.s32.totalorder %s28, 1
      %p184 = por %p182, %p183
      %p185 = scmp.ne.s32.totalorder %s176, %s177
      %p186 = scmp.eq.s32.totalorder %s28, 0
      %p187 = por %p185, %p186
      %p188 = scmp.ne.s32.totalorder %s176, %s177
      %p189 = scmp.eq.s32.totalorder %s29, 1
      %p190 = por %p188, %p189
      %p192 = scmp.ne.s32.totalorder %s177, %s191
      %p193 = scmp.eq.s32.totalorder %s29, 0
      %p194 = por %p192, %p193
      %s195 = ssub.s32 %s32, %s41
      %p196 = scmp.eq.s32.totalorder %s195, 0
      %s198 = sadd.s32 %s197, 1
      %s199 = scalar_select %p196, %s197, %s198
      %p202 = pneg %p196
      %p203 = scmp.eq.s32.totalorder %s23, 1
      %p204 = por %p202, %p203
      %p205 = scmp.ne.s32.totalorder %s197, %s200
      %p206 = scmp.eq.s32.totalorder %s23, 0
      %p207 = por %p205, %p206
      %p208 = scmp.ne.s32.totalorder %s197, %s200
      %p209 = scmp.eq.s32.totalorder %s28, 1
      %p210 = por %p208, %p209
      %p211 = scmp.ne.s32.totalorder %s200, %s201
      %p212 = scmp.eq.s32.totalorder %s28, 0
      %p213 = por %p211, %p212
      %p214 = scmp.ne.s32.totalorder %s200, %s201
      %p215 = scmp.eq.s32.totalorder %s29, 1
      %p216 = por %p214, %p215
      %p218 = scmp.ne.s32.totalorder %s201, %s217
      %p219 = scmp.eq.s32.totalorder %s29, 0
      %p220 = por %p218, %p219
      %s222 = sadd.s32 %s221, 1
      %p225 = scmp.eq.s32.totalorder %s23, 1
      %p226 = scmp.ne.s32.totalorder %s221, %s223
      %p227 = scmp.eq.s32.totalorder %s23, 0
      %p228 = por %p226, %p227
      %p229 = scmp.ne.s32.totalorder %s221, %s223
      %p230 = scmp.eq.s32.totalorder %s28, 1
      %p231 = por %p229, %p230
      %p232 = scmp.ne.s32.totalorder %s223, %s224
      %p233 = scmp.eq.s32.totalorder %s28, 0
      %p234 = por %p232, %p233
      %p235 = scmp.ne.s32.totalorder %s223, %s224
      %p236 = scmp.eq.s32.totalorder %s29, 1
      %p237 = por %p235, %p236
      %p239 = scmp.ne.s32.totalorder %s224, %s238
      %p240 = scmp.eq.s32.totalorder %s29, 0
      %p241 = por %p239, %p240
      %s243 = sadd.s32 %s242, 1
      %p246 = scmp.eq.s32.totalorder %s23, 1
      %p247 = scmp.ne.s32.totalorder %s242, %s244
      %p248 = scmp.eq.s32.totalorder %s23, 0
      %p249 = por %p247, %p248
      %p250 = scmp.ne.s32.totalorder %s242, %s244
      %p251 = scmp.eq.s32.totalorder %s28, 1
      %p252 = por %p250, %p251
      %p253 = scmp.ne.s32.totalorder %s244, %s245
      %p254 = scmp.eq.s32.totalorder %s28, 0
      %p255 = por %p253, %p254
      %p256 = scmp.ne.s32.totalorder %s244, %s245
      %p257 = scmp.eq.s32.totalorder %s29, 1
      %p258 = por %p256, %p257
      %p260 = scmp.ne.s32.totalorder %s245, %s259
      %p261 = scmp.eq.s32.totalorder %s29, 0
      %p262 = por %p260, %p261
      %s264 = sadd.s32 %s263, 1
      %p267 = scmp.eq.s32.totalorder %s23, 1
      %p268 = scmp.ne.s32.totalorder %s263, %s265
      %p269 = scmp.eq.s32.totalorder %s23, 0
      %p270 = por %p268, %p269
      %p271 = scmp.ne.s32.totalorder %s263, %s265
      %p272 = scmp.eq.s32.totalorder %s28, 1
      %p273 = por %p271, %p272
      %p274 = scmp.ne.s32.totalorder %s265, %s266
      %p275 = scmp.eq.s32.totalorder %s28, 0
      %p276 = por %p274, %p275
      %p277 = scmp.ne.s32.totalorder %s265, %s266
      %p278 = scmp.eq.s32.totalorder %s29, 1
      %p279 = por %p277, %p278
      %p281 = scmp.ne.s32.totalorder %s266, %s280
      %p282 = scmp.eq.s32.totalorder %s29, 0
      %p283 = por %p281, %p282
      %s285 = sadd.s32 %s284, 1
      %p288 = scmp.eq.s32.totalorder %s23, 1
      %p289 = scmp.ne.s32.totalorder %s284, %s286
      %p290 = scmp.eq.s32.totalorder %s23, 0
      %p291 = por %p289, %p290
      %p292 = scmp.ne.s32.totalorder %s284, %s286
      %p293 = scmp.eq.s32.totalorder %s28, 1
      %p294 = por %p292, %p293
      %p295 = scmp.ne.s32.totalorder %s286, %s287
      %p296 = scmp.eq.s32.totalorder %s28, 0
      %p297 = por %p295, %p296
      %p298 = scmp.ne.s32.totalorder %s286, %s287
      %p299 = scmp.eq.s32.totalorder %s29, 1
      %p300 = por %p298, %p299
      %p302 = scmp.ne.s32.totalorder %s287, %s301
      %p303 = scmp.eq.s32.totalorder %s29, 0
      %p304 = por %p302, %p303
      %s306 = sadd.s32 %s305, 1
      %p309 = scmp.eq.s32.totalorder %s23, 1
      %p310 = scmp.ne.s32.totalorder %s305, %s307
      %p311 = scmp.eq.s32.totalorder %s23, 0
      %p312 = por %p310, %p311
      %p313 = scmp.ne.s32.totalorder %s305, %s307
      %p314 = scmp.eq.s32.totalorder %s28, 1
      %p315 = por %p313, %p314
      %p316 = scmp.ne.s32.totalorder %s307, %s308
      %p317 = scmp.eq.s32.totalorder %s28, 0
      %p318 = por %p316, %p317
      %p319 = scmp.ne.s32.totalorder %s307, %s308
      %p320 = scmp.eq.s32.totalorder %s29, 1
      %p321 = por %p319, %p320
      %p323 = scmp.ne.s32.totalorder %s308, %s322
      %p324 = scmp.eq.s32.totalorder %s29, 0
      %p325 = por %p323, %p324
      %s326 = ssub.s32 %s30, %s49
      %s327 = ssub.s32 %s31, %s45
      %s328 = sor.u32 %s326, %s327
      %p329 = scmp.eq.s32.totalorder %s328, 0
      %s331 = sadd.s32 %s330, 1
      %s332 = scalar_select %p329, %s330, %s331
      %p335 = pneg %p329
      %p336 = scmp.eq.s32.totalorder %s23, 1
      %p337 = por %p335, %p336
      %p338 = scmp.ne.s32.totalorder %s330, %s333
      %p339 = scmp.eq.s32.totalorder %s23, 0
      %p340 = por %p338, %p339
      %p341 = scmp.ne.s32.totalorder %s330, %s333
      %p342 = scmp.eq.s32.totalorder %s28, 1
      %p343 = por %p341, %p342
      %p344 = scmp.ne.s32.totalorder %s333, %s334
      %p345 = scmp.eq.s32.totalorder %s28, 0
      %p346 = por %p344, %p345
      %p347 = scmp.ne.s32.totalorder %s333, %s334
      %p348 = scmp.eq.s32.totalorder %s29, 1
      %p349 = por %p347, %p348
      %p351 = scmp.ne.s32.totalorder %s334, %s350
      %p352 = scmp.eq.s32.totalorder %s29, 0
      %p353 = por %p351, %p352
      %p354 = scmp.le.s32.totalorder 1, %s23
      %p355 = scmp.lt.s32.totalorder %s23, 3
      %p356 = pnand %p354, %p355
      %p357 = pneg %p356
      // Predicated region
      $region9: #{tpu_custom_call.1} parent=5 // pred_check
        _
      $region10: #{tpu_custom_call.1} parent=5 // pred_check_branch
        %359 = sbr.rel (%p356) target = $region12
      $region11: #{tpu_custom_call.1} parent=5 // pred_region
        %s360 = ssub.s32 %s23, 1
        // Predicated region
        $region13: #{tpu_custom_call.1} parent=11 // pred_check
          %p361 = pneg %p119
        $region14: #{tpu_custom_call.1} parent=11 // pred_check_branch
          %363 = sbr.rel (%p361) target = $region16
        $region15: #{tpu_custom_call.1} parent=11 // pred_region
          _
        $region16: #{tpu_custom_call.1} parent=11 // pred_fallthru
          _
        // Predicated region
        $region17: #{tpu_custom_call.1} parent=11 // pred_check
          %p364 = pneg %p140
        $region18: #{tpu_custom_call.1} parent=11 // pred_check_branch
          %366 = sbr.rel (%p364) target = $region20
        $region19: #{tpu_custom_call.1} parent=11 // pred_region
          _
        $region20: #{tpu_custom_call.1} parent=11 // pred_fallthru
          _
        // Predicated region
        $region21: #{tpu_custom_call.1} parent=11 // pred_check
          %p367 = pneg %p166
        $region22: #{tpu_custom_call.1} parent=11 // pred_check_branch
          %369 = sbr.rel (%p367) target = $region24
        $region23: #{tpu_custom_call.1} parent=11 // pred_region
          %p370 = scmp.lt.s32.totalorder %s35, 0
          %s371 = scalar_select %p370, %s35, 0
          %s372 = scalar_lea.vmem %s4, %s371
        $region24: #{tpu_custom_call.1} parent=11 // pred_fallthru
          _
        // Predicated region
        $region25: #{tpu_custom_call.1} parent=11 // pred_check
          %p373 = pneg %p187
        $region26: #{tpu_custom_call.1} parent=11 // pred_check_branch
          %375 = sbr.rel (%p373) target = $region28
        $region27: #{tpu_custom_call.1} parent=11 // pred_region
          _
        $region28: #{tpu_custom_call.1} parent=11 // pred_fallthru
          _
        // Predicated region
        $region29: #{tpu_custom_call.1} parent=11 // pred_check
          %p376 = pneg %p213
        $region30: #{tpu_custom_call.1} parent=11 // pred_check_branch
          %378 = sbr.rel (%p376) target = $region32
        $region31: #{tpu_custom_call.1} parent=11 // pred_region
          %s379 = smul.u32 8, %s35
          %p380 = scmp.lt.s32.totalorder %s379, 7
          %s381 = scalar_select %p380, %s379, 7
          %s382 = smul.addr %s381, 4
          %s383 = scalar_lea.vmem %s6, %s382
          %s384 = smul.u32 8, %s35
        $region32: #{tpu_custom_call.1} parent=11 // pred_fallthru
          _
        // Predicated region
        $region33: #{tpu_custom_call.1} parent=11 // pred_check
          %p385 = pneg %p234
        $region34: #{tpu_custom_call.1} parent=11 // pred_check_branch
          %387 = sbr.rel (%p385) target = $region36
        $region35: #{tpu_custom_call.1} parent=11 // pred_region
          _
        $region36: #{tpu_custom_call.1} parent=11 // pred_fallthru
          _
        // Predicated region
        $region37: #{tpu_custom_call.1} parent=11 // pred_check
          %p388 = pneg %p255
        $region38: #{tpu_custom_call.1} parent=11 // pred_check_branch
          %390 = sbr.rel (%p388) target = $region40
        $region39: #{tpu_custom_call.1} parent=11 // pred_region
          _
        $region40: #{tpu_custom_call.1} parent=11 // pred_fallthru
          _
        // Predicated region
        $region41: #{tpu_custom_call.1} parent=11 // pred_check
          %p391 = pneg %p276
        $region42: #{tpu_custom_call.1} parent=11 // pred_check_branch
          %393 = sbr.rel (%p391) target = $region44
        $region43: #{tpu_custom_call.1} parent=11 // pred_region
          _
        $region44: #{tpu_custom_call.1} parent=11 // pred_fallthru
          _
        // Predicated region
        $region45: #{tpu_custom_call.1} parent=11 // pred_check
          %p394 = pneg %p297
        $region46: #{tpu_custom_call.1} parent=11 // pred_check_branch
          %396 = sbr.rel (%p394) target = $region48
        $region47: #{tpu_custom_call.1} parent=11 // pred_region
          _
        $region48: #{tpu_custom_call.1} parent=11 // pred_fallthru
          _
        // Predicated region
        $region49: #{tpu_custom_call.1} parent=11 // pred_check
          %p397 = pneg %p318
        $region50: #{tpu_custom_call.1} parent=11 // pred_check_branch
          %399 = sbr.rel (%p397) target = $region52
        $region51: #{tpu_custom_call.1} parent=11 // pred_region
          _
        $region52: #{tpu_custom_call.1} parent=11 // pred_fallthru
          _
      $region12: #{tpu_custom_call.1} parent=5 // pred_fallthru
        _
      %p400 = scmp.lt.s32.totalorder %s23, 2
      // Predicated region
      $region53: #{tpu_custom_call.1} parent=5 // pred_check
        %p401 = pneg %p400
      $region54: #{tpu_custom_call.1} parent=5 // pred_check_branch
        %403 = sbr.rel (%p401) target = $region56
      $region55: #{tpu_custom_call.1} parent=5 // pred_region
        // Predicated region
        $region57: #{tpu_custom_call.1} parent=55 // pred_check
          %p404 = pneg %p64
        $region58: #{tpu_custom_call.1} parent=55 // pred_check_branch
          %406 = sbr.rel (%p404) target = $region60
        $region59: #{tpu_custom_call.1} parent=55 // pred_region
          %s407 = smul.u32 16, %s31
          %p408 = scmp.lt.s32.totalorder %s30, 1
          %s409 = scalar_select %p408, %s30, 1
          %p410 = scmp.lt.s32.totalorder %s407, 15
          %s411 = scalar_select %p410, %s407, 15
          %s412 = smul.addr %s409, 16
          %s413 = sadd.s32 %s411, %s412
          %s414 = smul.addr %s413, 8
          %s415 = scalar_lea.vmem %s0, %s414
          %s416 = smul.u32 16, %s31
        $region60: #{tpu_custom_call.1} parent=55 // pred_fallthru
          _
        // Predicated region
        $region61: #{tpu_custom_call.1} parent=55 // pred_check
          %p417 = pneg %p92
        $region62: #{tpu_custom_call.1} parent=55 // pred_check_branch
          %419 = sbr.rel (%p417) target = $region64
        $region63: #{tpu_custom_call.1} parent=55 // pred_region
          %p420 = scmp.lt.s32.totalorder %s30, 1
          %s421 = scalar_select %p420, %s30, 1
          %p422 = scmp.lt.s32.totalorder %s32, 0
          %s423 = scalar_select %p422, %s32, 0
          %s424 = smul.addr %s421, 2
          %s425 = sadd.s32 %s423, %s424
          %s426 = smul.addr %s425, 4
          %s427 = scalar_lea.vmem %s1, %s426
        $region64: #{tpu_custom_call.1} parent=55 // pred_fallthru
          _
      $region56: #{tpu_custom_call.1} parent=5 // pred_fallthru
        _
      %p428 = scmp.le.s32.totalorder 1, %s23
      %p429 = scmp.lt.s32.totalorder %s23, 3
      %p430 = pnand %p428, %p429
      %p431 = pneg %p430
      // Predicated region
      $region65: #{tpu_custom_call.1} parent=5 // pred_check
        _
      $region66: #{tpu_custom_call.1} parent=5 // pred_check_branch
        %433 = sbr.rel (%p430) target = $region68
      $region67: #{tpu_custom_call.1} parent=5 // pred_region
        %s434 = ssub.s32 %s23, 1
        %s435 = smul.u32 16, %s34
        %p436 = scmp.lt.s32.totalorder %s33, 1
        %s437 = scalar_select %p436, %s33, 1
        %p438 = scmp.lt.s32.totalorder %s435, 15
        %s439 = scalar_select %p438, %s435, 15
        %s440 = smul.addr %s437, 16
        %s441 = sadd.s32 %s439, %s440
        %s442 = smul.addr %s441, 8
        %s443 = scalar_lea.vmem %s0, %s442
        %p444 = pneg %p70
        %p445 = pneg %p67
        %p446 = scmp.lt.s32.totalorder %s33, 1
        %s447 = scalar_select %p446, %s33, 1
        %p448 = scmp.lt.s32.totalorder %s35, 0
        %s449 = scalar_select %p448, %s35, 0
        %s450 = smul.addr %s447, 2
        %s451 = sadd.s32 %s449, %s450
        %s452 = smul.addr %s451, 4
        %s453 = scalar_lea.vmem %s1, %s452
        %p454 = pneg %p98
        %p455 = pneg %p95
        %p456 = pneg %p119
        %p457 = pneg %p116
        %p458 = pneg %p140
        %p459 = pneg %p137
        %p460 = scmp.lt.s32.totalorder %s35, 0
        %s461 = scalar_select %p460, %s35, 0
        %s462 = scalar_lea.vmem %s4, %s461
        %p463 = pneg %p166
        %p464 = pneg %p163
        %p465 = pneg %p187
        %p466 = pneg %p184
        %s467 = smul.u32 8, %s35
        %p468 = scmp.lt.s32.totalorder %s467, 7
        %s469 = scalar_select %p468, %s467, 7
        %s470 = smul.addr %s469, 4
        %s471 = scalar_lea.vmem %s6, %s470
        %p472 = pneg %p213
        %p473 = pneg %p210
        %p474 = pneg %p234
        %p475 = pneg %p231
        %p476 = pneg %p255
        %p477 = pneg %p252
        %p478 = pneg %p276
        %p479 = pneg %p273
        %p480 = pneg %p297
        %p481 = pneg %p294
        %p482 = pneg %p318
        %p483 = pneg %p315
        %p484 = pneg %p346
        %p485 = pneg %p343
        %s486 = sand.u32 %s333, 1
        %s487 = scalar_lea.sflag [#allocation5], %s486
        %s488 = sand.u32 %s333, 1
        %s489 = scalar_lea.vmem [#allocation4], %s488
        %s490 = smul.u32 16, %s34
        %p491 = scmp.lt.s32.totalorder %s33, 1
        %s492 = scalar_select %p491, %s33, 1
        %p493 = scmp.lt.s32.totalorder %s490, 15
        %s494 = scalar_select %p493, %s490, 15
        %s495 = smul.addr %s492, 16
        %s496 = sadd.s32 %s494, %s495
        %s497 = smul.addr %s496, 8
        %s498 = scalar_lea.vmem %s0, %s497
        %s499 = smul.u32 16, %s34
        %p500 = scmp.lt.s32.totalorder %s33, 1
        %s501 = scalar_select %p500, %s33, 1
        %p502 = scmp.lt.s32.totalorder %s35, 0
        %s503 = scalar_select %p502, %s35, 0
        %s504 = smul.addr %s501, 2
        %s505 = sadd.s32 %s503, %s504
        %s506 = smul.addr %s505, 4
        %s507 = scalar_lea.vmem %s1, %s506
        %p508 = scmp.lt.s32.totalorder %s35, 0
        %s509 = scalar_select %p508, %s35, 0
        %s510 = scalar_lea.vmem %s4, %s509
        %s511 = smul.u32 8, %s35
        %p512 = scmp.lt.s32.totalorder %s511, 7
        %s513 = scalar_select %p512, %s511, 7
        %s514 = smul.addr %s513, 4
        %s515 = scalar_lea.vmem %s6, %s514
        %s516 = smul.u32 8, %s35
        %v518 = vld [vmem:[%s498] sm:$0xff]
        %v519 = vld [vmem:[%s498 + $0x8] sm:$0xff]
        %v520 = vld [vmem:[%s498 + $0x10] sm:$0xff]
        %v521 = vld [vmem:[%s498 + $0x18] sm:$0xff]
        %v522 = vld [vmem:[%s498 + $0x20] sm:$0xff]
        %v523 = vld [vmem:[%s498 + $0x28] sm:$0xff]
        %v524 = vld [vmem:[%s498 + $0x30] sm:$0xff]
        %v525 = vld [vmem:[%s498 + $0x38] sm:$0xff]
        %v526 = vld [vmem:[%s498 + $0x40] sm:$0xff]
        %v527 = vld [vmem:[%s498 + $0x48] sm:$0xff]
        %v528 = vld [vmem:[%s498 + $0x50] sm:$0xff]
        %v529 = vld [vmem:[%s498 + $0x58] sm:$0xff]
        %v530 = vld [vmem:[%s498 + $0x60] sm:$0xff]
        %v531 = vld [vmem:[%s498 + $0x68] sm:$0xff]
        %v532 = vld [vmem:[%s498 + $0x70] sm:$0xff]
        %v533 = vld [vmem:[%s498 + $0x78] sm:$0xff]
        %p534 = scmp.eq.s32.totalorder %s35, 0
        // Predicated region
        $region69: #{tpu_custom_call.1} parent=67 // pred_check
          %p535 = pneg %p534
        $region70: #{tpu_custom_call.1} parent=67 // pred_check_branch
          %537 = sbr.rel (%p535) target = $region72
        $region71: #{tpu_custom_call.1} parent=67 // pred_region
          %vm538 = vcmask 261120
          %539 = vst.msk [vmem:[#allocation2] sm:$0xff] %vm538, 0.0
          %540 = vst.msk [vmem:[#allocation2 + $0x8] sm:$0xff] %vm538, 0.0
          %541 = vst.msk [vmem:[#allocation2 + $0x10] sm:$0xff] %vm538, 0.0
          %542 = vst.msk [vmem:[#allocation2 + $0x18] sm:$0xff] %vm538, 0.0
          %543 = vst.msk [vmem:[#allocation2 + $0x20] sm:$0xff] %vm538, 0.0
          %544 = vst.msk [vmem:[#allocation2 + $0x28] sm:$0xff] %vm538, 0.0
          %545 = vst.msk [vmem:[#allocation2 + $0x30] sm:$0xff] %vm538, 0.0
          %546 = vst.msk [vmem:[#allocation2 + $0x38] sm:$0xff] %vm538, 0.0
          %547 = vst.msk [vmem:[#allocation2 + $0x40] sm:$0xff] %vm538, 0.0
          %548 = vst.msk [vmem:[#allocation2 + $0x48] sm:$0xff] %vm538, 0.0
          %549 = vst.msk [vmem:[#allocation2 + $0x50] sm:$0xff] %vm538, 0.0
          %550 = vst.msk [vmem:[#allocation2 + $0x58] sm:$0xff] %vm538, 0.0
          %551 = vst.msk [vmem:[#allocation2 + $0x60] sm:$0xff] %vm538, 0.0
          %552 = vst.msk [vmem:[#allocation2 + $0x68] sm:$0xff] %vm538, 0.0
          %553 = vst.msk [vmem:[#allocation2 + $0x70] sm:$0xff] %vm538, 0.0
          %554 = vst.msk [vmem:[#allocation2 + $0x78] sm:$0xff] %vm538, 0.0
        $region72: #{tpu_custom_call.1} parent=67 // pred_fallthru
          _
        %v555 = vmul.f32 %v518, 14.933333
        %v556 = vmul.f32 %v519, 14.933333
        %v557 = vmul.f32 %v520, 14.933333
        %v558 = vmul.f32 %v521, 14.933333
        %v559 = vmul.f32 %v522, 14.933333
        %v560 = vmul.f32 %v523, 14.933333
        %v561 = vmul.f32 %v524, 14.933333
        %v562 = vmul.f32 %v525, 14.933333
        %v563 = vmul.f32 %v526, 14.933333
        %v564 = vmul.f32 %v527, 14.933333
        %v565 = vmul.f32 %v528, 14.933333
        %v566 = vmul.f32 %v529, 14.933333
        %v567 = vmul.f32 %v530, 14.933333
        %v568 = vmul.f32 %v531, 14.933333
        %v569 = vmul.f32 %v532, 14.933333
        %v570 = vmul.f32 %v533, 14.933333
        %v571 = vsub.f32 %v555, 0.5
        %v572 = vsub.f32 %v556, 0.5
        %v573 = vsub.f32 %v557, 0.5
        %v574 = vsub.f32 %v558, 0.5
        %v575 = vsub.f32 %v559, 0.5
        %v576 = vsub.f32 %v560, 0.5
        %v577 = vsub.f32 %v561, 0.5
        %v578 = vsub.f32 %v562, 0.5
        %v579 = vsub.f32 %v563, 0.5
        %v580 = vsub.f32 %v564, 0.5
        %v581 = vsub.f32 %v565, 0.5
        %v582 = vsub.f32 %v566, 0.5
        %v583 = vsub.f32 %v567, 0.5
        %v584 = vsub.f32 %v568, 0.5
        %v585 = vsub.f32 %v569, 0.5
        %v586 = vsub.f32 %v570, 0.5
        %v587 = vlaneseq
        %v588 = vand.u32 %v587, 127
        %v589 = vcvt.s32.f32 %v588
        %591 = vset.pattern.permute.xlu0 1
        %592 = vperm.xlu0 %591, %v571
        %v593 = vpop.permute.xlu0 %592
        %596 = vset.pattern.permute.xlu0 1
        %597 = vperm.xlu0 %596, %v572
        %v598 = vpop.permute.xlu0 %597
        %601 = vset.pattern.permute.xlu0 1
        %602 = vperm.xlu0 %601, %v573
        %v603 = vpop.permute.xlu0 %602
        %606 = vset.pattern.permute.xlu0 1
        %607 = vperm.xlu0 %606, %v574
        %v608 = vpop.permute.xlu0 %607
        %611 = vset.pattern.permute.xlu0 1
        %612 = vperm.xlu0 %611, %v575
        %v613 = vpop.permute.xlu0 %612
        %616 = vset.pattern.permute.xlu0 1
        %617 = vperm.xlu0 %616, %v576
        %v618 = vpop.permute.xlu0 %617
        %621 = vset.pattern.permute.xlu0 1
        %622 = vperm.xlu0 %621, %v577
        %v623 = vpop.permute.xlu0 %622
        %626 = vset.pattern.permute.xlu0 1
        %627 = vperm.xlu0 %626, %v578
        %v628 = vpop.permute.xlu0 %627
        %631 = vset.pattern.permute.xlu0 1
        %632 = vperm.xlu0 %631, %v579
        %v633 = vpop.permute.xlu0 %632
        %636 = vset.pattern.permute.xlu0 1
        %637 = vperm.xlu0 %636, %v580
        %v638 = vpop.permute.xlu0 %637
        %641 = vset.pattern.permute.xlu0 1
        %642 = vperm.xlu0 %641, %v581
        %v643 = vpop.permute.xlu0 %642
        %646 = vset.pattern.permute.xlu0 1
        %647 = vperm.xlu0 %646, %v582
        %v648 = vpop.permute.xlu0 %647
        %651 = vset.pattern.permute.xlu0 1
        %652 = vperm.xlu0 %651, %v583
        %v653 = vpop.permute.xlu0 %652
        %656 = vset.pattern.permute.xlu0 1
        %657 = vperm.xlu0 %656, %v584
        %v658 = vpop.permute.xlu0 %657
        %661 = vset.pattern.permute.xlu0 1
        %662 = vperm.xlu0 %661, %v585
        %v663 = vpop.permute.xlu0 %662
        %666 = vset.pattern.permute.xlu0 1
        %667 = vperm.xlu0 %666, %v586
        %v668 = vpop.permute.xlu0 %667
        %v670 = vsub.f32 %v589, %v593
        %v671 = vsub.f32 %v589, %v598
        %v672 = vsub.f32 %v589, %v603
        %v673 = vsub.f32 %v589, %v608
        %v674 = vsub.f32 %v589, %v613
        %v675 = vsub.f32 %v589, %v618
        %v676 = vsub.f32 %v589, %v623
        %v677 = vsub.f32 %v589, %v628
        %v678 = vsub.f32 %v589, %v633
        %v679 = vsub.f32 %v589, %v638
        %v680 = vsub.f32 %v589, %v643
        %v681 = vsub.f32 %v589, %v648
        %v682 = vsub.f32 %v589, %v653
        %v683 = vsub.f32 %v589, %v658
        %v684 = vsub.f32 %v589, %v663
        %v685 = vsub.f32 %v589, %v668
        %v686 = vand.u32 2147483647, %v670
        %v687 = vand.u32 2147483647, %v671
        %v688 = vand.u32 2147483647, %v672
        %v689 = vand.u32 2147483647, %v673
        %v690 = vand.u32 2147483647, %v674
        %v691 = vand.u32 2147483647, %v675
        %v692 = vand.u32 2147483647, %v676
        %v693 = vand.u32 2147483647, %v677
        %v694 = vand.u32 2147483647, %v678
        %v695 = vand.u32 2147483647, %v679
        %v696 = vand.u32 2147483647, %v680
        %v697 = vand.u32 2147483647, %v681
        %v698 = vand.u32 2147483647, %v682
        %v699 = vand.u32 2147483647, %v683
        %v700 = vand.u32 2147483647, %v684
        %v701 = vand.u32 2147483647, %v685
        %v702 = vsub.f32 1.0, %v686
        %v703 = vsub.f32 1.0, %v687
        %v704 = vsub.f32 1.0, %v688
        %v705 = vsub.f32 1.0, %v689
        %v706 = vsub.f32 1.0, %v690
        %v707 = vsub.f32 1.0, %v691
        %v708 = vsub.f32 1.0, %v692
        %v709 = vsub.f32 1.0, %v693
        %v710 = vsub.f32 1.0, %v694
        %v711 = vsub.f32 1.0, %v695
        %v712 = vsub.f32 1.0, %v696
        %v713 = vsub.f32 1.0, %v697
        %v714 = vsub.f32 1.0, %v698
        %v715 = vsub.f32 1.0, %v699
        %v716 = vsub.f32 1.0, %v700
        %v717 = vsub.f32 1.0, %v701
        %v718 = vmax.f32 %v702, 0.0
        %v719 = vmax.f32 %v703, 0.0
        %v720 = vmax.f32 %v704, 0.0
        %v721 = vmax.f32 %v705, 0.0
        %v722 = vmax.f32 %v706, 0.0
        %v723 = vmax.f32 %v707, 0.0
        %v724 = vmax.f32 %v708, 0.0
        %v725 = vmax.f32 %v709, 0.0
        %v726 = vmax.f32 %v710, 0.0
        %v727 = vmax.f32 %v711, 0.0
        %v728 = vmax.f32 %v712, 0.0
        %v729 = vmax.f32 %v713, 0.0
        %v730 = vmax.f32 %v714, 0.0
        %v731 = vmax.f32 %v715, 0.0
        %v732 = vmax.f32 %v716, 0.0
        %v733 = vmax.f32 %v717, 0.0
        %v734 = vpack.c.bf16 %v719, %v718
        %v735 = vpack.c.bf16 %v721, %v720
        %v736 = vpack.c.bf16 %v723, %v722
        %v737 = vpack.c.bf16 %v725, %v724
        %v738 = vpack.c.bf16 %v727, %v726
        %v739 = vpack.c.bf16 %v729, %v728
        %v740 = vpack.c.bf16 %v731, %v730
        %v741 = vpack.c.bf16 %v733, %v732
        %v742 = vld [vmem:[%s507] sm:$0xf]
        %v743 = vld [vmem:[%s507 + $0x4] sm:$0xf]
        %v746 = vunpack.c.l.b16 %v742
        %v747 = vunpack.c.l.b16 %v743
        %v748 = vpack.c.b16 %v747, %v746
        %vm750 = vcmask 130048
        %v752 = vsel %vm750, %v734, 0
        %v755 = vsel %vm750, %v735, 0
        %v758 = vsel %vm750, %v736, 0
        %v761 = vsel %vm750, %v737, 0
        %v764 = vsel %vm750, %v738, 0
        %v767 = vsel %vm750, %v739, 0
        %v770 = vsel %vm750, %v740, 0
        %v773 = vsel %vm750, %v741, 0
        %775 = vmatprep.subr.bf16.mxu0 0
        %776 = vmatpush1.bf16.msra.mxu0 %v748
        %777 = vmatprep.subr.bf16.mxu0 0
        %778 = vmatpush1.bf16.msra.mxu0 0
        %779 = vmatprep.subr.bf16.mxu0 0
        %780 = vmatpush1.bf16.msra.mxu0 0
        %781 = vmatprep.subr.bf16.mxu0 0
        %782 = vmatpush1.bf16.msra.mxu0 0
        %783 = vmatprep.subr.bf16.mxu0 0
        %784 = vmatpush1.bf16.msra.mxu0 0
        %785 = vmatprep.subr.bf16.mxu0 0
        %786 = vmatpush1.bf16.msra.mxu0 0
        %787 = vmatprep.subr.bf16.mxu0 0
        %788 = vmatpush1.bf16.msra.mxu0 0
        %789 = vmatprep.subr.bf16.mxu0 0
        %790 = vmatpush1.bf16.msra.mxu0 0
        %791 = vmatprep.subr.bf16.mxu0 0
        %792 = vmatpush1.bf16.msra.mxu0 0
        %793 = vmatprep.subr.bf16.mxu0 0
        %794 = vmatpush1.bf16.msra.mxu0 0
        %795 = vmatprep.subr.bf16.mxu0 0
        %796 = vmatpush1.bf16.msra.mxu0 0
        %797 = vmatprep.subr.bf16.mxu0 0
        %798 = vmatpush1.bf16.msra.mxu0 0
        %799 = vmatprep.subr.bf16.mxu0 0
        %800 = vmatpush1.bf16.msra.mxu0 0
        %801 = vmatprep.subr.bf16.mxu0 0
        %802 = vmatpush1.bf16.msra.mxu0 0
        %803 = vmatprep.subr.bf16.mxu0 0
        %804 = vmatpush1.bf16.msra.mxu0 0
        %805 = vmatprep.subr.bf16.mxu0 0
        %806 = vmatpush1.bf16.msra.mxu0 0
        %807 = vmatprep.mubr.bf16.mxu0 0
        %808 = vmatmul.mubr.bf16.gmra.mrb[0].mxu0 %v752
        %v809 = vpop.f32.mrb[0].mxu0
        %v810 = vadd.f32 0.0, %v809
        %v811 = vpop.f32.mrb[0].mxu0
        %v812 = vpop.f32.mrb[0].mxu0
        %v813 = vadd.f32 0.0, %v812
        %v814 = vpop.f32.mrb[0].mxu0
        %815 = vmatprep.mubr.bf16.mxu0 0
        %816 = vmatmul.mubr.bf16.gmra.mrb[0].mxu0 %v755
        %v817 = vpop.f32.mrb[0].mxu0
        %v818 = vadd.f32 0.0, %v817
        %v819 = vpop.f32.mrb[0].mxu0
        %v820 = vpop.f32.mrb[0].mxu0
        %v821 = vadd.f32 0.0, %v820
        %v822 = vpop.f32.mrb[0].mxu0
        %823 = vmatprep.mubr.bf16.mxu0 0
        %824 = vmatmul.mubr.bf16.gmra.mrb[0].mxu0 %v758
        %v825 = vpop.f32.mrb[0].mxu0
        %v826 = vadd.f32 0.0, %v825
        %v827 = vpop.f32.mrb[0].mxu0
        %v828 = vpop.f32.mrb[0].mxu0
        %v829 = vadd.f32 0.0, %v828
        %v830 = vpop.f32.mrb[0].mxu0
        %831 = vmatprep.mubr.bf16.mxu0 0
        %832 = vmatmul.mubr.bf16.gmra.mrb[0].mxu0 %v761
        %v833 = vpop.f32.mrb[0].mxu0
        %v834 = vadd.f32 0.0, %v833
        %v835 = vpop.f32.mrb[0].mxu0
        %v836 = vpop.f32.mrb[0].mxu0
        %v837 = vadd.f32 0.0, %v836
        %v838 = vpop.f32.mrb[0].mxu0
        %839 = vmatprep.mubr.bf16.mxu0 0
        %840 = vmatmul.mubr.bf16.gmra.mrb[0].mxu0 %v764
        %v841 = vpop.f32.mrb[0].mxu0
        %v842 = vadd.f32 0.0, %v841
        %v843 = vpop.f32.mrb[0].mxu0
        %v844 = vpop.f32.mrb[0].mxu0
        %v845 = vadd.f32 0.0, %v844
        %v846 = vpop.f32.mrb[0].mxu0
        %847 = vmatprep.mubr.bf16.mxu0 0
        %848 = vmatmul.mubr.bf16.gmra.mrb[0].mxu0 %v767
        %v849 = vpop.f32.mrb[0].mxu0
        %v850 = vadd.f32 0.0, %v849
        %v851 = vpop.f32.mrb[0].mxu0
        %v852 = vpop.f32.mrb[0].mxu0
        %v853 = vadd.f32 0.0, %v852
        %v854 = vpop.f32.mrb[0].mxu0
        %855 = vmatprep.mubr.bf16.mxu0 0
        %856 = vmatmul.mubr.bf16.gmra.mrb[0].mxu0 %v770
        %v857 = vpop.f32.mrb[0].mxu0
        %v858 = vadd.f32 0.0, %v857
        %v859 = vpop.f32.mrb[0].mxu0
        %v860 = vpop.f32.mrb[0].mxu0
        %v861 = vadd.f32 0.0, %v860
        %v862 = vpop.f32.mrb[0].mxu0
        %863 = vmatprep.mubr.bf16.mxu0 0
        %864 = vmatmul.mubr.bf16.gmra.mrb[0].mxu0 %v773
        %v865 = vpop.f32.mrb[0].mxu0
        %v866 = vadd.f32 0.0, %v865
        %v867 = vpop.f32.mrb[0].mxu0
        %v868 = vpop.f32.mrb[0].mxu0
        %v869 = vadd.f32 0.0, %v868
        %v870 = vpop.f32.mrb[0].mxu0
        %871 = vdwg.mxu0
        %v872 = vld [vmem:[%s510] sm:$0x1]
        %v874 = vlaneseq
        %v875 = vshrl.u32 %v874, 7
        %v876 = vsub.s32 0, %v875
        %v877 = vrot.slane %v872, %v876
        %879 = vset.pattern.permute.xlu0 0
        %880 = vperm.xlu0 %879, %v571
        %v881 = vpop.permute.xlu0 %880
        %883 = vset.pattern.permute.xlu0 0
        %884 = vperm.xlu0 %883, %v572
        %v885 = vpop.permute.xlu0 %884
        %887 = vset.pattern.permute.xlu0 0
        %888 = vperm.xlu0 %887, %v573
        %v889 = vpop.permute.xlu0 %888
        %891 = vset.pattern.permute.xlu0 0
        %892 = vperm.xlu0 %891, %v574
        %v893 = vpop.permute.xlu0 %892
        %895 = vset.pattern.permute.xlu0 0
        %896 = vperm.xlu0 %895, %v575
        %v897 = vpop.permute.xlu0 %896
        %899 = vset.pattern.permute.xlu0 0
        %900 = vperm.xlu0 %899, %v576
        %v901 = vpop.permute.xlu0 %900
        %903 = vset.pattern.permute.xlu0 0
        %904 = vperm.xlu0 %903, %v577
        %v905 = vpop.permute.xlu0 %904
        %907 = vset.pattern.permute.xlu0 0
        %908 = vperm.xlu0 %907, %v578
        %v909 = vpop.permute.xlu0 %908
        %911 = vset.pattern.permute.xlu0 0
        %912 = vperm.xlu0 %911, %v579
        %v913 = vpop.permute.xlu0 %912
        %915 = vset.pattern.permute.xlu0 0
        %916 = vperm.xlu0 %915, %v580
        %v917 = vpop.permute.xlu0 %916
        %919 = vset.pattern.permute.xlu0 0
        %920 = vperm.xlu0 %919, %v581
        %v921 = vpop.permute.xlu0 %920
        %923 = vset.pattern.permute.xlu0 0
        %924 = vperm.xlu0 %923, %v582
        %v925 = vpop.permute.xlu0 %924
        %927 = vset.pattern.permute.xlu0 0
        %928 = vperm.xlu0 %927, %v583
        %v929 = vpop.permute.xlu0 %928
        %931 = vset.pattern.permute.xlu0 0
        %932 = vperm.xlu0 %931, %v584
        %v933 = vpop.permute.xlu0 %932
        %935 = vset.pattern.permute.xlu0 0
        %936 = vperm.xlu0 %935, %v585
        %v937 = vpop.permute.xlu0 %936
        %939 = vset.pattern.permute.xlu0 0
        %940 = vperm.xlu0 %939, %v586
        %v941 = vpop.permute.xlu0 %940
        %v943 = vsub.f32 %v877, %v881
        %v944 = vsub.f32 %v877, %v885
        %v945 = vsub.f32 %v877, %v889
        %v946 = vsub.f32 %v877, %v893
        %v947 = vsub.f32 %v877, %v897
        %v948 = vsub.f32 %v877, %v901
        %v949 = vsub.f32 %v877, %v905
        %v950 = vsub.f32 %v877, %v909
        %v951 = vsub.f32 %v877, %v913
        %v952 = vsub.f32 %v877, %v917
        %v953 = vsub.f32 %v877, %v921
        %v954 = vsub.f32 %v877, %v925
        %v955 = vsub.f32 %v877, %v929
        %v956 = vsub.f32 %v877, %v933
        %v957 = vsub.f32 %v877, %v937
        %v958 = vsub.f32 %v877, %v941
        %v959 = vand.u32 2147483647, %v943
        %v960 = vand.u32 2147483647, %v944
        %v961 = vand.u32 2147483647, %v945
        %v962 = vand.u32 2147483647, %v946
        %v963 = vand.u32 2147483647, %v947
        %v964 = vand.u32 2147483647, %v948
        %v965 = vand.u32 2147483647, %v949
        %v966 = vand.u32 2147483647, %v950
        %v967 = vand.u32 2147483647, %v951
        %v968 = vand.u32 2147483647, %v952
        %v969 = vand.u32 2147483647, %v953
        %v970 = vand.u32 2147483647, %v954
        %v971 = vand.u32 2147483647, %v955
        %v972 = vand.u32 2147483647, %v956
        %v973 = vand.u32 2147483647, %v957
        %v974 = vand.u32 2147483647, %v958
        %v975 = vsub.f32 1.0, %v959
        %v976 = vsub.f32 1.0, %v960
        %v977 = vsub.f32 1.0, %v961
        %v978 = vsub.f32 1.0, %v962
        %v979 = vsub.f32 1.0, %v963
        %v980 = vsub.f32 1.0, %v964
        %v981 = vsub.f32 1.0, %v965
        %v982 = vsub.f32 1.0, %v966
        %v983 = vsub.f32 1.0, %v967
        %v984 = vsub.f32 1.0, %v968
        %v985 = vsub.f32 1.0, %v969
        %v986 = vsub.f32 1.0, %v970
        %v987 = vsub.f32 1.0, %v971
        %v988 = vsub.f32 1.0, %v972
        %v989 = vsub.f32 1.0, %v973
        %v990 = vsub.f32 1.0, %v974
        %v991 = vmax.f32 %v975, 0.0
        %v992 = vmax.f32 %v976, 0.0
        %v993 = vmax.f32 %v977, 0.0
        %v994 = vmax.f32 %v978, 0.0
        %v995 = vmax.f32 %v979, 0.0
        %v996 = vmax.f32 %v980, 0.0
        %v997 = vmax.f32 %v981, 0.0
        %v998 = vmax.f32 %v982, 0.0
        %v999 = vmax.f32 %v983, 0.0
        %v1000 = vmax.f32 %v984, 0.0
        %v1001 = vmax.f32 %v985, 0.0
        %v1002 = vmax.f32 %v986, 0.0
        %v1003 = vmax.f32 %v987, 0.0
        %v1004 = vmax.f32 %v988, 0.0
        %v1005 = vmax.f32 %v989, 0.0
        %v1006 = vmax.f32 %v990, 0.0
        %v1007 = vmul.f32 %v810, %v991
        %v1008 = vmul.f32 %v813, %v992
        %v1009 = vmul.f32 %v818, %v993
        %v1010 = vmul.f32 %v821, %v994
        %v1011 = vmul.f32 %v826, %v995
        %v1012 = vmul.f32 %v829, %v996
        %v1013 = vmul.f32 %v834, %v997
        %v1014 = vmul.f32 %v837, %v998
        %v1015 = vmul.f32 %v842, %v999
        %v1016 = vmul.f32 %v845, %v1000
        %v1017 = vmul.f32 %v850, %v1001
        %v1018 = vmul.f32 %v853, %v1002
        %v1019 = vmul.f32 %v858, %v1003
        %v1020 = vmul.f32 %v861, %v1004
        %v1021 = vmul.f32 %v866, %v1005
        %v1022 = vmul.f32 %v869, %v1006
        %v1023 = vpack.c.bf16 %v1008, %v1007
        %v1024 = vpack.c.bf16 %v1010, %v1009
        %v1025 = vpack.c.bf16 %v1012, %v1011
        %v1026 = vpack.c.bf16 %v1014, %v1013
        %v1027 = vpack.c.bf16 %v1016, %v1015
        %v1028 = vpack.c.bf16 %v1018, %v1017
        %v1029 = vpack.c.bf16 %v1020, %v1019
        %v1030 = vpack.c.bf16 %v1022, %v1021
        %v1031 = vld [vmem:[#allocation2] sm:$0xff]
        %v1032 = vld [vmem:[#allocation2 + $0x8] sm:$0xff]
        %v1033 = vld [vmem:[#allocation2 + $0x10] sm:$0xff]
        %v1034 = vld [vmem:[#allocation2 + $0x18] sm:$0xff]
        %v1035 = vld [vmem:[#allocation2 + $0x20] sm:$0xff]
        %v1036 = vld [vmem:[#allocation2 + $0x28] sm:$0xff]
        %v1037 = vld [vmem:[#allocation2 + $0x30] sm:$0xff]
        %v1038 = vld [vmem:[#allocation2 + $0x38] sm:$0xff]
        %v1039 = vld [vmem:[#allocation2 + $0x40] sm:$0xff]
        %v1040 = vld [vmem:[#allocation2 + $0x48] sm:$0xff]
        %v1041 = vld [vmem:[#allocation2 + $0x50] sm:$0xff]
        %v1042 = vld [vmem:[#allocation2 + $0x58] sm:$0xff]
        %v1043 = vld [vmem:[#allocation2 + $0x60] sm:$0xff]
        %v1044 = vld [vmem:[#allocation2 + $0x68] sm:$0xff]
        %v1045 = vld [vmem:[#allocation2 + $0x70] sm:$0xff]
        %v1046 = vld [vmem:[#allocation2 + $0x78] sm:$0xff]
        %v1047 = vld [vmem:[%s515] sm:$0xf]
        %v1048 = vld [vmem:[%s515 + $0x4] sm:$0xf]
        %v1049 = vld [vmem:[%s515 + $0x8] sm:$0xf]
        %v1050 = vld [vmem:[%s515 + $0xc] sm:$0xf]
        %v1051 = vld [vmem:[%s515 + $0x10] sm:$0xf]
        %v1052 = vld [vmem:[%s515 + $0x14] sm:$0xf]
        %v1053 = vld [vmem:[%s515 + $0x18] sm:$0xf]
        %v1054 = vld [vmem:[%s515 + $0x1c] sm:$0xf]
        %v1063 = vunpack.c.l.b16 %v1047
        %v1064 = vunpack.c.l.b16 %v1048
        %v1065 = vunpack.c.l.b16 %v1049
        %v1066 = vunpack.c.l.b16 %v1050
        %v1067 = vunpack.c.l.b16 %v1051
        %v1068 = vunpack.c.l.b16 %v1052
        %v1069 = vunpack.c.l.b16 %v1053
        %v1070 = vunpack.c.l.b16 %v1054
        %v1071 = vpack.c.b16 %v1064, %v1063
        %v1072 = vpack.c.b16 %v1066, %v1065
        %v1073 = vpack.c.b16 %v1068, %v1067
        %v1074 = vpack.c.b16 %v1070, %v1069
        %vm1079 = vcmask 523264
        %v1081 = vsel %vm1079, %v1023, 0
        %v1084 = vsel %vm1079, %v1024, 0
        %v1087 = vsel %vm1079, %v1025, 0
        %v1090 = vsel %vm1079, %v1026, 0
        %v1093 = vsel %vm1079, %v1027, 0
        %v1096 = vsel %vm1079, %v1028, 0
        %v1099 = vsel %vm1079, %v1029, 0
        %v1102 = vsel %vm1079, %v1030, 0
        %1104 = vmatprep.subr.bf16.mxu0 0
        %1105 = vmatpush1.bf16.msra.mxu0 %v1071
        %1106 = vmatprep.subr.bf16.mxu0 0
        %1107 = vmatpush1.bf16.msra.mxu0 %v1072
        %1108 = vmatprep.subr.bf16.mxu0 0
        %1109 = vmatpush1.bf16.msra.mxu0 %v1073
        %1110 = vmatprep.subr.bf16.mxu0 0
        %1111 = vmatpush1.bf16.msra.mxu0 %v1074
        %1112 = vmatprep.subr.bf16.mxu0 0
        %1113 = vmatpush1.bf16.msra.mxu0 0
        %1114 = vmatprep.subr.bf16.mxu0 0
        %1115 = vmatpush1.bf16.msra.mxu0 0
        %1116 = vmatprep.subr.bf16.mxu0 0
        %1117 = vmatpush1.bf16.msra.mxu0 0
        %1118 = vmatprep.subr.bf16.mxu0 0
        %1119 = vmatpush1.bf16.msra.mxu0 0
        %1120 = vmatprep.subr.bf16.mxu0 0
        %1121 = vmatpush1.bf16.msra.mxu0 0
        %1122 = vmatprep.subr.bf16.mxu0 0
        %1123 = vmatpush1.bf16.msra.mxu0 0
        %1124 = vmatprep.subr.bf16.mxu0 0
        %1125 = vmatpush1.bf16.msra.mxu0 0
        %1126 = vmatprep.subr.bf16.mxu0 0
        %1127 = vmatpush1.bf16.msra.mxu0 0
        %1128 = vmatprep.subr.bf16.mxu0 0
        %1129 = vmatpush1.bf16.msra.mxu0 0
        %1130 = vmatprep.subr.bf16.mxu0 0
        %1131 = vmatpush1.bf16.msra.mxu0 0
        %1132 = vmatprep.subr.bf16.mxu0 0
        %1133 = vmatpush1.bf16.msra.mxu0 0
        %1134 = vmatprep.subr.bf16.mxu0 0
        %1135 = vmatpush1.bf16.msra.mxu0 0
        %1136 = vmatprep.mubr.bf16.mxu0 0
        %1137 = vmatmul.mubr.bf16.gmra.mrb[0].mxu0 %v1081
        %v1138 = vpop.f32.mrb[0].mxu0
        %v1139 = vadd.f32 0.0, %v1138
        %v1140 = vpop.f32.mrb[0].mxu0
        %v1141 = vpop.f32.mrb[0].mxu0
        %v1142 = vadd.f32 0.0, %v1141
        %v1143 = vpop.f32.mrb[0].mxu0
        %1144 = vmatprep.mubr.bf16.mxu0 0
        %1145 = vmatmul.mubr.bf16.gmra.mrb[0].mxu0 %v1084
        %v1146 = vpop.f32.mrb[0].mxu0
        %v1147 = vadd.f32 0.0, %v1146
        %v1148 = vpop.f32.mrb[0].mxu0
        %v1149 = vpop.f32.mrb[0].mxu0
        %v1150 = vadd.f32 0.0, %v1149
        %v1151 = vpop.f32.mrb[0].mxu0
        %1152 = vmatprep.mubr.bf16.mxu0 0
        %1153 = vmatmul.mubr.bf16.gmra.mrb[0].mxu0 %v1087
        %v1154 = vpop.f32.mrb[0].mxu0
        %v1155 = vadd.f32 0.0, %v1154
        %v1156 = vpop.f32.mrb[0].mxu0
        %v1157 = vpop.f32.mrb[0].mxu0
        %v1158 = vadd.f32 0.0, %v1157
        %v1159 = vpop.f32.mrb[0].mxu0
        %1160 = vmatprep.mubr.bf16.mxu0 0
        %1161 = vmatmul.mubr.bf16.gmra.mrb[0].mxu0 %v1090
        %v1162 = vpop.f32.mrb[0].mxu0
        %v1163 = vadd.f32 0.0, %v1162
        %v1164 = vpop.f32.mrb[0].mxu0
        %v1165 = vpop.f32.mrb[0].mxu0
        %v1166 = vadd.f32 0.0, %v1165
        %v1167 = vpop.f32.mrb[0].mxu0
        %1168 = vmatprep.mubr.bf16.mxu0 0
        %1169 = vmatmul.mubr.bf16.gmra.mrb[0].mxu0 %v1093
        %v1170 = vpop.f32.mrb[0].mxu0
        %v1171 = vadd.f32 0.0, %v1170
        %v1172 = vpop.f32.mrb[0].mxu0
        %v1173 = vpop.f32.mrb[0].mxu0
        %v1174 = vadd.f32 0.0, %v1173
        %v1175 = vpop.f32.mrb[0].mxu0
        %1176 = vmatprep.mubr.bf16.mxu0 0
        %1177 = vmatmul.mubr.bf16.gmra.mrb[0].mxu0 %v1096
        %v1178 = vpop.f32.mrb[0].mxu0
        %v1179 = vadd.f32 0.0, %v1178
        %v1180 = vpop.f32.mrb[0].mxu0
        %v1181 = vpop.f32.mrb[0].mxu0
        %v1182 = vadd.f32 0.0, %v1181
        %v1183 = vpop.f32.mrb[0].mxu0
        %1184 = vmatprep.mubr.bf16.mxu0 0
        %1185 = vmatmul.mubr.bf16.gmra.mrb[0].mxu0 %v1099
        %v1186 = vpop.f32.mrb[0].mxu0
        %v1187 = vadd.f32 0.0, %v1186
        %v1188 = vpop.f32.mrb[0].mxu0
        %v1189 = vpop.f32.mrb[0].mxu0
        %v1190 = vadd.f32 0.0, %v1189
        %v1191 = vpop.f32.mrb[0].mxu0
        %1192 = vmatprep.mubr.bf16.mxu0 0
        %1193 = vmatmul.mubr.bf16.gmra.mrb[0].mxu0 %v1102
        %v1194 = vpop.f32.mrb[0].mxu0
        %v1195 = vadd.f32 0.0, %v1194
        %v1196 = vpop.f32.mrb[0].mxu0
        %v1197 = vpop.f32.mrb[0].mxu0
        %v1198 = vadd.f32 0.0, %v1197
        %v1199 = vpop.f32.mrb[0].mxu0
        %1200 = vdwg.mxu0
        %v1201 = vadd.f32 %v1031, %v1139
        %v1202 = vadd.f32 %v1032, %v1142
        %v1203 = vadd.f32 %v1033, %v1147
        %v1204 = vadd.f32 %v1034, %v1150
        %v1205 = vadd.f32 %v1035, %v1155
        %v1206 = vadd.f32 %v1036, %v1158
        %v1207 = vadd.f32 %v1037, %v1163
        %v1208 = vadd.f32 %v1038, %v1166
        %v1209 = vadd.f32 %v1039, %v1171
        %v1210 = vadd.f32 %v1040, %v1174
        %v1211 = vadd.f32 %v1041, %v1179
        %v1212 = vadd.f32 %v1042, %v1182
        %v1213 = vadd.f32 %v1043, %v1187
        %v1214 = vadd.f32 %v1044, %v1190
        %v1215 = vadd.f32 %v1045, %v1195
        %v1216 = vadd.f32 %v1046, %v1198
        %vm1217 = vcmask 261120
        %1218 = vst.msk [vmem:[#allocation2] sm:$0xff] %vm1217, %v1201
        %1219 = vst.msk [vmem:[#allocation2 + $0x8] sm:$0xff] %vm1217, %v1202
        %1220 = vst.msk [vmem:[#allocation2 + $0x10] sm:$0xff] %vm1217, %v1203
        %1221 = vst.msk [vmem:[#allocation2 + $0x18] sm:$0xff] %vm1217, %v1204
        %1222 = vst.msk [vmem:[#allocation2 + $0x20] sm:$0xff] %vm1217, %v1205
        %1223 = vst.msk [vmem:[#allocation2 + $0x28] sm:$0xff] %vm1217, %v1206
        %1224 = vst.msk [vmem:[#allocation2 + $0x30] sm:$0xff] %vm1217, %v1207
        %1225 = vst.msk [vmem:[#allocation2 + $0x38] sm:$0xff] %vm1217, %v1208
        %1226 = vst.msk [vmem:[#allocation2 + $0x40] sm:$0xff] %vm1217, %v1209
        %1227 = vst.msk [vmem:[#allocation2 + $0x48] sm:$0xff] %vm1217, %v1210
        %1228 = vst.msk [vmem:[#allocation2 + $0x50] sm:$0xff] %vm1217, %v1211
        %1229 = vst.msk [vmem:[#allocation2 + $0x58] sm:$0xff] %vm1217, %v1212
        %1230 = vst.msk [vmem:[#allocation2 + $0x60] sm:$0xff] %vm1217, %v1213
        %1231 = vst.msk [vmem:[#allocation2 + $0x68] sm:$0xff] %vm1217, %v1214
        %1232 = vst.msk [vmem:[#allocation2 + $0x70] sm:$0xff] %vm1217, %v1215
        %1233 = vst.msk [vmem:[#allocation2 + $0x78] sm:$0xff] %vm1217, %v1216
        // Predicated region
        $region73: #{tpu_custom_call.1} parent=67 // pred_check
          %p1234 = pneg %p534
        $region74: #{tpu_custom_call.1} parent=67 // pred_check_branch
          %1236 = sbr.rel (%p1234) target = $region76
        $region75: #{tpu_custom_call.1} parent=67 // pred_region
          %v1237 = vmul.f32 %v518, 2.0
          %v1238 = vmul.f32 %v519, 2.0
          %v1239 = vmul.f32 %v520, 2.0
          %v1240 = vmul.f32 %v521, 2.0
          %v1241 = vmul.f32 %v522, 2.0
          %v1242 = vmul.f32 %v523, 2.0
          %v1243 = vmul.f32 %v524, 2.0
          %v1244 = vmul.f32 %v525, 2.0
          %v1245 = vmul.f32 %v526, 2.0
          %v1246 = vmul.f32 %v527, 2.0
          %v1247 = vmul.f32 %v528, 2.0
          %v1248 = vmul.f32 %v529, 2.0
          %v1249 = vmul.f32 %v530, 2.0
          %v1250 = vmul.f32 %v531, 2.0
          %v1251 = vmul.f32 %v532, 2.0
          %v1252 = vmul.f32 %v533, 2.0
          %v1253 = vsub.f32 %v1237, 1.0
          %v1254 = vsub.f32 %v1238, 1.0
          %v1255 = vsub.f32 %v1239, 1.0
          %v1256 = vsub.f32 %v1240, 1.0
          %v1257 = vsub.f32 %v1241, 1.0
          %v1258 = vsub.f32 %v1242, 1.0
          %v1259 = vsub.f32 %v1243, 1.0
          %v1260 = vsub.f32 %v1244, 1.0
          %v1261 = vsub.f32 %v1245, 1.0
          %v1262 = vsub.f32 %v1246, 1.0
          %v1263 = vsub.f32 %v1247, 1.0
          %v1264 = vsub.f32 %v1248, 1.0
          %v1265 = vsub.f32 %v1249, 1.0
          %v1266 = vsub.f32 %v1250, 1.0
          %v1267 = vsub.f32 %v1251, 1.0
          %v1268 = vsub.f32 %v1252, 1.0
          %v1269 = vld [vmem:[%s2] sm:$0x1]
          %1271 = vset.pattern.permute.xlu0 0
          %1272 = vperm.xlu0 %1271, %v1253
          %v1273 = vpop.permute.xlu0 %1272
          %1276 = vset.pattern.permute.xlu0 0
          %1277 = vperm.xlu0 %1276, %v1254
          %v1278 = vpop.permute.xlu0 %1277
          %1281 = vset.pattern.permute.xlu0 0
          %1282 = vperm.xlu0 %1281, %v1255
          %v1283 = vpop.permute.xlu0 %1282
          %1286 = vset.pattern.permute.xlu0 0
          %1287 = vperm.xlu0 %1286, %v1256
          %v1288 = vpop.permute.xlu0 %1287
          %1291 = vset.pattern.permute.xlu0 0
          %1292 = vperm.xlu0 %1291, %v1257
          %v1293 = vpop.permute.xlu0 %1292
          %1296 = vset.pattern.permute.xlu0 0
          %1297 = vperm.xlu0 %1296, %v1258
          %v1298 = vpop.permute.xlu0 %1297
          %1301 = vset.pattern.permute.xlu0 0
          %1302 = vperm.xlu0 %1301, %v1259
          %v1303 = vpop.permute.xlu0 %1302
          %1306 = vset.pattern.permute.xlu0 0
          %1307 = vperm.xlu0 %1306, %v1260
          %v1308 = vpop.permute.xlu0 %1307
          %1311 = vset.pattern.permute.xlu0 0
          %1312 = vperm.xlu0 %1311, %v1261
          %v1313 = vpop.permute.xlu0 %1312
          %1316 = vset.pattern.permute.xlu0 0
          %1317 = vperm.xlu0 %1316, %v1262
          %v1318 = vpop.permute.xlu0 %1317
          %1321 = vset.pattern.permute.xlu0 0
          %1322 = vperm.xlu0 %1321, %v1263
          %v1323 = vpop.permute.xlu0 %1322
          %1326 = vset.pattern.permute.xlu0 0
          %1327 = vperm.xlu0 %1326, %v1264
          %v1328 = vpop.permute.xlu0 %1327
          %1331 = vset.pattern.permute.xlu0 0
          %1332 = vperm.xlu0 %1331, %v1265
          %v1333 = vpop.permute.xlu0 %1332
          %1336 = vset.pattern.permute.xlu0 0
          %1337 = vperm.xlu0 %1336, %v1266
          %v1338 = vpop.permute.xlu0 %1337
          %1341 = vset.pattern.permute.xlu0 0
          %1342 = vperm.xlu0 %1341, %v1267
          %v1343 = vpop.permute.xlu0 %1342
          %1346 = vset.pattern.permute.xlu0 0
          %1347 = vperm.xlu0 %1346, %v1268
          %v1348 = vpop.permute.xlu0 %1347
          %v1350 = vlaneseq
          %v1351 = vshrl.u32 %v1350, 7
          %v1352 = vsub.s32 0, %v1351
          %v1353 = vrot.slane %v1269, %v1352
          %v1354 = vmul.f32 %v1273, %v1353
          %v1355 = vmul.f32 %v1278, %v1353
          %v1356 = vmul.f32 %v1283, %v1353
          %v1357 = vmul.f32 %v1288, %v1353
          %v1358 = vmul.f32 %v1293, %v1353
          %v1359 = vmul.f32 %v1298, %v1353
          %v1360 = vmul.f32 %v1303, %v1353
          %v1361 = vmul.f32 %v1308, %v1353
          %v1362 = vmul.f32 %v1313, %v1353
          %v1363 = vmul.f32 %v1318, %v1353
          %v1364 = vmul.f32 %v1323, %v1353
          %v1365 = vmul.f32 %v1328, %v1353
          %v1366 = vmul.f32 %v1333, %v1353
          %v1367 = vmul.f32 %v1338, %v1353
          %v1368 = vmul.f32 %v1343, %v1353
          %v1369 = vmul.f32 %v1348, %v1353
          %v1370 = vld [vmem:[%s2 + $0x1] sm:$0x1]
          %1371 = vset.pattern.permute.xlu0 1
          %1372 = vperm.xlu0 %1371, %v1253
          %v1373 = vpop.permute.xlu0 %1372
          %1375 = vset.pattern.permute.xlu0 1
          %1376 = vperm.xlu0 %1375, %v1254
          %v1377 = vpop.permute.xlu0 %1376
          %1379 = vset.pattern.permute.xlu0 1
          %1380 = vperm.xlu0 %1379, %v1255
          %v1381 = vpop.permute.xlu0 %1380
          %1383 = vset.pattern.permute.xlu0 1
          %1384 = vperm.xlu0 %1383, %v1256
          %v1385 = vpop.permute.xlu0 %1384
          %1387 = vset.pattern.permute.xlu0 1
          %1388 = vperm.xlu0 %1387, %v1257
          %v1389 = vpop.permute.xlu0 %1388
          %1391 = vset.pattern.permute.xlu0 1
          %1392 = vperm.xlu0 %1391, %v1258
          %v1393 = vpop.permute.xlu0 %1392
          %1395 = vset.pattern.permute.xlu0 1
          %1396 = vperm.xlu0 %1395, %v1259
          %v1397 = vpop.permute.xlu0 %1396
          %1399 = vset.pattern.permute.xlu0 1
          %1400 = vperm.xlu0 %1399, %v1260
          %v1401 = vpop.permute.xlu0 %1400
          %1403 = vset.pattern.permute.xlu0 1
          %1404 = vperm.xlu0 %1403, %v1261
          %v1405 = vpop.permute.xlu0 %1404
          %1407 = vset.pattern.permute.xlu0 1
          %1408 = vperm.xlu0 %1407, %v1262
          %v1409 = vpop.permute.xlu0 %1408
          %1411 = vset.pattern.permute.xlu0 1
          %1412 = vperm.xlu0 %1411, %v1263
          %v1413 = vpop.permute.xlu0 %1412
          %1415 = vset.pattern.permute.xlu0 1
          %1416 = vperm.xlu0 %1415, %v1264
          %v1417 = vpop.permute.xlu0 %1416
          %1419 = vset.pattern.permute.xlu0 1
          %1420 = vperm.xlu0 %1419, %v1265
          %v1421 = vpop.permute.xlu0 %1420
          %1423 = vset.pattern.permute.xlu0 1
          %1424 = vperm.xlu0 %1423, %v1266
          %v1425 = vpop.permute.xlu0 %1424
          %1427 = vset.pattern.permute.xlu0 1
          %1428 = vperm.xlu0 %1427, %v1267
          %v1429 = vpop.permute.xlu0 %1428
          %1431 = vset.pattern.permute.xlu0 1
          %1432 = vperm.xlu0 %1431, %v1268
          %v1433 = vpop.permute.xlu0 %1432
          %v1435 = vlaneseq
          %v1436 = vshrl.u32 %v1435, 7
          %v1437 = vsub.s32 0, %v1436
          %v1438 = vrot.slane %v1370, %v1437
          %v1439 = vmul.f32 %v1373, %v1438
          %v1440 = vmul.f32 %v1377, %v1438
          %v1441 = vmul.f32 %v1381, %v1438
          %v1442 = vmul.f32 %v1385, %v1438
          %v1443 = vmul.f32 %v1389, %v1438
          %v1444 = vmul.f32 %v1393, %v1438
          %v1445 = vmul.f32 %v1397, %v1438
          %v1446 = vmul.f32 %v1401, %v1438
          %v1447 = vmul.f32 %v1405, %v1438
          %v1448 = vmul.f32 %v1409, %v1438
          %v1449 = vmul.f32 %v1413, %v1438
          %v1450 = vmul.f32 %v1417, %v1438
          %v1451 = vmul.f32 %v1421, %v1438
          %v1452 = vmul.f32 %v1425, %v1438
          %v1453 = vmul.f32 %v1429, %v1438
          %v1454 = vmul.f32 %v1433, %v1438
          %v1455 = vadd.f32 %v1354, %v1439
          %v1456 = vadd.f32 %v1355, %v1440
          %v1457 = vadd.f32 %v1356, %v1441
          %v1458 = vadd.f32 %v1357, %v1442
          %v1459 = vadd.f32 %v1358, %v1443
          %v1460 = vadd.f32 %v1359, %v1444
          %v1461 = vadd.f32 %v1360, %v1445
          %v1462 = vadd.f32 %v1361, %v1446
          %v1463 = vadd.f32 %v1362, %v1447
          %v1464 = vadd.f32 %v1363, %v1448
          %v1465 = vadd.f32 %v1364, %v1449
          %v1466 = vadd.f32 %v1365, %v1450
          %v1467 = vadd.f32 %v1366, %v1451
          %v1468 = vadd.f32 %v1367, %v1452
          %v1469 = vadd.f32 %v1368, %v1453
          %v1470 = vadd.f32 %v1369, %v1454
          %v1471 = vmul.f32 %v1455, 6.2831855
          %v1472 = vmul.f32 %v1456, 6.2831855
          %v1473 = vmul.f32 %v1457, 6.2831855
          %v1474 = vmul.f32 %v1458, 6.2831855
          %v1475 = vmul.f32 %v1459, 6.2831855
          %v1476 = vmul.f32 %v1460, 6.2831855
          %v1477 = vmul.f32 %v1461, 6.2831855
          %v1478 = vmul.f32 %v1462, 6.2831855
          %v1479 = vmul.f32 %v1463, 6.2831855
          %v1480 = vmul.f32 %v1464, 6.2831855
          %v1481 = vmul.f32 %v1465, 6.2831855
          %v1482 = vmul.f32 %v1466, 6.2831855
          %v1483 = vmul.f32 %v1467, 6.2831855
          %v1484 = vmul.f32 %v1468, 6.2831855
          %v1485 = vmul.f32 %v1469, 6.2831855
          %v1486 = vmul.f32 %v1470, 6.2831855
          %v1487 = vld [vmem:[%s3] sm:$0x1]
          %v1489 = vlaneseq
          %v1490 = vshrl.u32 %v1489, 7
          %v1491 = vsub.s32 0, %v1490
          %v1492 = vrot.slane %v1487, %v1491
          %v1494 = vadd.f32 %v1471, %v1492
          %v1495 = vadd.f32 %v1472, %v1492
          %v1496 = vadd.f32 %v1473, %v1492
          %v1497 = vadd.f32 %v1474, %v1492
          %v1498 = vadd.f32 %v1475, %v1492
          %v1499 = vadd.f32 %v1476, %v1492
          %v1500 = vadd.f32 %v1477, %v1492
          %v1501 = vadd.f32 %v1478, %v1492
          %v1502 = vadd.f32 %v1479, %v1492
          %v1503 = vadd.f32 %v1480, %v1492
          %v1504 = vadd.f32 %v1481, %v1492
          %v1505 = vadd.f32 %v1482, %v1492
          %v1506 = vadd.f32 %v1483, %v1492
          %v1507 = vadd.f32 %v1484, %v1492
          %v1508 = vadd.f32 %v1485, %v1492
          %v1509 = vadd.f32 %v1486, %v1492
          %v1510 = vand.u32 2147483647, %v1494
          %vm1511 = vcmp.le.f32.partialorder %v1510, 0.7853982
          %vm1512 = vcmp.lt.s32.totalorder %v1494, 0
          %v1513 = vand.u32 %v1494, 2139095040
          %v1514 = vshrl.u32 %v1513, 23
          %v1515 = vsub.s32 %v1514, 127
          %v1516 = vand.u32 2147483647, %v1494
          %v1517 = vand.u32 %v1516, 8388607
          %v1518 = vor.u32 %v1517, 8388608
          %v1519 = vsub.s32 0, %v1518
          %v1520 = vadd.s32 %v1515, 1
          %vm1521 = vcmp.gt.s32.totalorder %v1520, 0
          %v1522 = vsel %vm1521, %v1520, 0
          %v1523 = vshrl.u32 %v1522, 5
          %v1524 = vand.u32 %v1522, 31
          %v1525 = vsub.s32 32, %v1524
          %v1526 = vshrl.u32 683565275, %v1525
          %v1527 = vshll.u32 683565275, %v1524
          %v1528 = vshrl.u32 2475754826, %v1525
          %v1529 = vor.u32 %v1527, %v1528
          %v1530 = vshll.u32 2475754826, %v1524
          %v1531 = vshrl.u32 2131351028, %v1525
          %v1532 = vor.u32 %v1530, %v1531
          %v1533 = vshll.u32 2131351028, %v1524
          %v1534 = vshrl.u32 2102212464, %v1525
          %v1535 = vor.u32 %v1533, %v1534
          %v1536 = vshll.u32 2102212464, %v1524
          %v1537 = vshrl.u32 920167782, %v1525
          %v1538 = vor.u32 %v1536, %v1537
          %v1539 = vshll.u32 920167782, %v1524
          %v1540 = vshrl.u32 1326507024, %v1525
          %v1541 = vor.u32 %v1539, %v1540
          %vm1542 = vcmp.lt.s32.totalorder %v1523, 1
          %vm1543 = vcmp.lt.s32.totalorder %v1523, 2
          %vm1544 = vcmp.lt.s32.totalorder %v1523, 3
          %vm1545 = vcmp.lt.s32.totalorder %v1523, 4
          %v1546 = vsel %vm1542, %v1526, %v1529
          %v1547 = vsel %vm1545, %v1535, 2102212464
          %v1548 = vsel %vm1544, %v1532, %v1547
          %v1549 = vsel %vm1543, %v1546, %v1548
          %v1550 = vsel %vm1542, %v1529, %v1532
          %v1551 = vsel %vm1545, %v1538, 920167782
          %v1552 = vsel %vm1544, %v1535, %v1551
          %v1553 = vsel %vm1543, %v1550, %v1552
          %v1554 = vsel %vm1542, %v1532, %v1535
          %v1555 = vsel %vm1545, %v1541, 1326507024
          %v1556 = vsel %vm1544, %v1538, %v1555
          %v1557 = vsel %vm1543, %v1554, %v1556
          %v1558 = vshll.u32 %v1518, 8
          %v1559 = vmul.u32.u64.compose %v1558, %v1557
          %v1560 = vextract.low.u32 %v1559
          %v1561 = vextract.high.u32 %v1559
          %v1562 = vmul.u32.u64.compose %v1558, %v1553
          %v1563 = vextract.low.u32 %v1562
          %v1564 = vextract.high.u32 %v1562
          %v1565 = vmul.u32 %v1558, %v1549
          %v1566 = vadd.s32 %v1561, %v1563
          %vm1567 = vc.u32 %v1561, %v1563
          %v1568 = vadd.s32 %v1564, 1
          %v1569 = vsel %vm1567, %v1568, %v1564
          %v1570 = vadd.s32 %v1565, %v1569
          %v1571 = vadd.s32 %v1570, 536870912
          %v1572 = vshrl.u32 %v1571, 30
          %v1573 = vshll.u32 %v1572, 30
          %v1574 = vsub.s32 %v1570, %v1573
          %vm1575 = vcmp.lt.s32.totalorder %v1574, 0
          %v1576 = vsub.s32 0, %v1574
          %v1577 = vsel %vm1575, %v1576, %v1574
          %v1578 = vclz %v1577
          %v1579 = vsub.s32 %v1578, 2
          %vm1580 = vcmp.gt.s32.totalorder 0, %v1579
          %v1581 = vsel %vm1580, 0, %v1579
          %v1582 = vsub.s32 32, %v1581
          %v1583 = vshll.u32 %v1574, %v1581
          %v1584 = vshrl.u32 %v1566, %v1582
          %v1585 = vor.u32 %v1583, %v1584
          %v1586 = vsub.s32 4294967266, %v1581
          %v1587 = vadd.s32 %v1586, 127
          %v1588 = vshll.u32 %v1587, 23
          %v1589 = vor.u32 4788187, %v1588
          %v1590 = vand.u32 2147483647, %v1589
          %v1592 = vcvt.s32.f32 %v1585
          %v1593 = vmul.f32 %v1592, %v1590
          %v1594 = vxor.u32 %v1593, 2147483648
          %v1595 = vsel %vm1512, %v1594, %v1593
          %v1596 = vsub.s32 4, %v1572
          %v1597 = vsel %vm1512, %v1596, %v1572
          %v1598 = vsel %vm1511, %v1494, %v1595
          %v1599 = vsel %vm1511, 0, %v1597
          %v1600 = vcosq.f32.pop %v1598
          %v1601 = vsinq.f32.pop %v1598
          %vm1602 = vweird.f32 %v1494
          %v1603 = vadd.s32 %v1599, 3
          %v1604 = vand.u32 %v1603, 3
          %vm1605 = vcmp.lt.s32.totalorder %v1604, 2
          %vm1606 = vcmp.eq.s32.totalorder %v1604, 0
          %v1607 = vxor.u32 %v1601, 2147483648
          %v1608 = vsel %vm1606, %v1600, %v1607
          %vm1609 = vcmp.eq.s32.totalorder %v1604, 2
          %v1610 = vxor.u32 %v1600, 2147483648
          %v1611 = vsel %vm1609, %v1610, %v1601
          %v1612 = vsel %vm1605, %v1608, %v1611
          %v1613 = vsel %vm1602, nan, %v1612
          %v1614 = vand.u32 2147483647, %v1495
          %vm1615 = vcmp.le.f32.partialorder %v1614, 0.7853982
          %vm1616 = vcmp.lt.s32.totalorder %v1495, 0
          %v1617 = vand.u32 %v1495, 2139095040
          %v1618 = vshrl.u32 %v1617, 23
          %v1619 = vsub.s32 %v1618, 127
          %v1620 = vand.u32 2147483647, %v1495
          %v1621 = vand.u32 %v1620, 8388607
          %v1622 = vor.u32 %v1621, 8388608
          %v1623 = vsub.s32 0, %v1622
          %v1624 = vadd.s32 %v1619, 1
          %vm1625 = vcmp.gt.s32.totalorder %v1624, 0
          %v1626 = vsel %vm1625, %v1624, 0
          %v1627 = vshrl.u32 %v1626, 5
          %v1628 = vand.u32 %v1626, 31
          %v1629 = vsub.s32 32, %v1628
          %v1630 = vshrl.u32 683565275, %v1629
          %v1631 = vshll.u32 683565275, %v1628
          %v1632 = vshrl.u32 2475754826, %v1629
          %v1633 = vor.u32 %v1631, %v1632
          %v1634 = vshll.u32 2475754826, %v1628
          %v1635 = vshrl.u32 2131351028, %v1629
          %v1636 = vor.u32 %v1634, %v1635
          %v1637 = vshll.u32 2131351028, %v1628
          %v1638 = vshrl.u32 2102212464, %v1629
          %v1639 = vor.u32 %v1637, %v1638
          %v1640 = vshll.u32 2102212464, %v1628
          %v1641 = vshrl.u32 920167782, %v1629
          %v1642 = vor.u32 %v1640, %v1641
          %v1643 = vshll.u32 920167782, %v1628
          %v1644 = vshrl.u32 1326507024, %v1629
          %v1645 = vor.u32 %v1643, %v1644
          %vm1646 = vcmp.lt.s32.totalorder %v1627, 1
          %vm1647 = vcmp.lt.s32.totalorder %v1627, 2
          %vm1648 = vcmp.lt.s32.totalorder %v1627, 3
          %vm1649 = vcmp.lt.s32.totalorder %v1627, 4
          %v1650 = vsel %vm1646, %v1630, %v1633
          %v1651 = vsel %vm1649, %v1639, 2102212464
          %v1652 = vsel %vm1648, %v1636, %v1651
          %v1653 = vsel %vm1647, %v1650, %v1652
          %v1654 = vsel %vm1646, %v1633, %v1636
          %v1655 = vsel %vm1649, %v1642, 920167782
          %v1656 = vsel %vm1648, %v1639, %v1655
          %v1657 = vsel %vm1647, %v1654, %v1656
          %v1658 = vsel %vm1646, %v1636, %v1639
          %v1659 = vsel %vm1649, %v1645, 1326507024
          %v1660 = vsel %vm1648, %v1642, %v1659
          %v1661 = vsel %vm1647, %v1658, %v1660
          %v1662 = vshll.u32 %v1622, 8
          %v1663 = vmul.u32.u64.compose %v1662, %v1661
          %v1664 = vextract.low.u32 %v1663
          %v1665 = vextract.high.u32 %v1663
          %v1666 = vmul.u32.u64.compose %v1662, %v1657
          %v1667 = vextract.low.u32 %v1666
          %v1668 = vextract.high.u32 %v1666
          %v1669 = vmul.u32 %v1662, %v1653
          %v1670 = vadd.s32 %v1665, %v1667
          %vm1671 = vc.u32 %v1665, %v1667
          %v1672 = vadd.s32 %v1668, 1
          %v1673 = vsel %vm1671, %v1672, %v1668
          %v1674 = vadd.s32 %v1669, %v1673
          %v1675 = vadd.s32 %v1674, 536870912
          %v1676 = vshrl.u32 %v1675, 30
          %v1677 = vshll.u32 %v1676, 30
          %v1678 = vsub.s32 %v1674, %v1677
          %vm1679 = vcmp.lt.s32.totalorder %v1678, 0
          %v1680 = vsub.s32 0, %v1678
          %v1681 = vsel %vm1679, %v1680, %v1678
          %v1682 = vclz %v1681
          %v1683 = vsub.s32 %v1682, 2
          %vm1684 = vcmp.gt.s32.totalorder 0, %v1683
          %v1685 = vsel %vm1684, 0, %v1683
          %v1686 = vsub.s32 32, %v1685
          %v1687 = vshll.u32 %v1678, %v1685
          %v1688 = vshrl.u32 %v1670, %v1686
          %v1689 = vor.u32 %v1687, %v1688
          %v1690 = vsub.s32 4294967266, %v1685
          %v1691 = vadd.s32 %v1690, 127
          %v1692 = vshll.u32 %v1691, 23
          %v1693 = vor.u32 4788187, %v1692
          %v1694 = vand.u32 2147483647, %v1693
          %v1696 = vcvt.s32.f32 %v1689
          %v1697 = vmul.f32 %v1696, %v1694
          %v1698 = vxor.u32 %v1697, 2147483648
          %v1699 = vsel %vm1616, %v1698, %v1697
          %v1700 = vsub.s32 4, %v1676
          %v1701 = vsel %vm1616, %v1700, %v1676
          %v1702 = vsel %vm1615, %v1495, %v1699
          %v1703 = vsel %vm1615, 0, %v1701
          %v1704 = vcosq.f32.pop %v1702
          %v1705 = vsinq.f32.pop %v1702
          %vm1706 = vweird.f32 %v1495
          %v1707 = vadd.s32 %v1703, 3
          %v1708 = vand.u32 %v1707, 3
          %vm1709 = vcmp.lt.s32.totalorder %v1708, 2
          %vm1710 = vcmp.eq.s32.totalorder %v1708, 0
          %v1711 = vxor.u32 %v1705, 2147483648
          %v1712 = vsel %vm1710, %v1704, %v1711
          %vm1713 = vcmp.eq.s32.totalorder %v1708, 2
          %v1714 = vxor.u32 %v1704, 2147483648
          %v1715 = vsel %vm1713, %v1714, %v1705
          %v1716 = vsel %vm1709, %v1712, %v1715
          %v1717 = vsel %vm1706, nan, %v1716
          %v1718 = vand.u32 2147483647, %v1496
          %vm1719 = vcmp.le.f32.partialorder %v1718, 0.7853982
          %vm1720 = vcmp.lt.s32.totalorder %v1496, 0
          %v1721 = vand.u32 %v1496, 2139095040
          %v1722 = vshrl.u32 %v1721, 23
          %v1723 = vsub.s32 %v1722, 127
          %v1724 = vand.u32 2147483647, %v1496
          %v1725 = vand.u32 %v1724, 8388607
          %v1726 = vor.u32 %v1725, 8388608
          %v1727 = vsub.s32 0, %v1726
          %v1728 = vadd.s32 %v1723, 1
          %vm1729 = vcmp.gt.s32.totalorder %v1728, 0
          %v1730 = vsel %vm1729, %v1728, 0
          %v1731 = vshrl.u32 %v1730, 5
          %v1732 = vand.u32 %v1730, 31
          %v1733 = vsub.s32 32, %v1732
          %v1734 = vshrl.u32 683565275, %v1733
          %v1735 = vshll.u32 683565275, %v1732
          %v1736 = vshrl.u32 2475754826, %v1733
          %v1737 = vor.u32 %v1735, %v1736
          %v1738 = vshll.u32 2475754826, %v1732
          %v1739 = vshrl.u32 2131351028, %v1733
          %v1740 = vor.u32 %v1738, %v1739
          %v1741 = vshll.u32 2131351028, %v1732
          %v1742 = vshrl.u32 2102212464, %v1733
          %v1743 = vor.u32 %v1741, %v1742
          %v1744 = vshll.u32 2102212464, %v1732
          %v1745 = vshrl.u32 920167782, %v1733
          %v1746 = vor.u32 %v1744, %v1745
          %v1747 = vshll.u32 920167782, %v1732
          %v1748 = vshrl.u32 1326507024, %v1733
          %v1749 = vor.u32 %v1747, %v1748
          %vm1750 = vcmp.lt.s32.totalorder %v1731, 1
          %vm1751 = vcmp.lt.s32.totalorder %v1731, 2
          %vm1752 = vcmp.lt.s32.totalorder %v1731, 3
          %vm1753 = vcmp.lt.s32.totalorder %v1731, 4
          %v1754 = vsel %vm1750, %v1734, %v1737
          %v1755 = vsel %vm1753, %v1743, 2102212464
          %v1756 = vsel %vm1752, %v1740, %v1755
          %v1757 = vsel %vm1751, %v1754, %v1756
          %v1758 = vsel %vm1750, %v1737, %v1740
          %v1759 = vsel %vm1753, %v1746, 920167782
          %v1760 = vsel %vm1752, %v1743, %v1759
          %v1761 = vsel %vm1751, %v1758, %v1760
          %v1762 = vsel %vm1750, %v1740, %v1743
          %v1763 = vsel %vm1753, %v1749, 1326507024
          %v1764 = vsel %vm1752, %v1746, %v1763
          %v1765 = vsel %vm1751, %v1762, %v1764
          %v1766 = vshll.u32 %v1726, 8
          %v1767 = vmul.u32.u64.compose %v1766, %v1765
          %v1768 = vextract.low.u32 %v1767
          %v1769 = vextract.high.u32 %v1767
          %v1770 = vmul.u32.u64.compose %v1766, %v1761
          %v1771 = vextract.low.u32 %v1770
          %v1772 = vextract.high.u32 %v1770
          %v1773 = vmul.u32 %v1766, %v1757
          %v1774 = vadd.s32 %v1769, %v1771
          %vm1775 = vc.u32 %v1769, %v1771
          %v1776 = vadd.s32 %v1772, 1
          %v1777 = vsel %vm1775, %v1776, %v1772
          %v1778 = vadd.s32 %v1773, %v1777
          %v1779 = vadd.s32 %v1778, 536870912
          %v1780 = vshrl.u32 %v1779, 30
          %v1781 = vshll.u32 %v1780, 30
          %v1782 = vsub.s32 %v1778, %v1781
          %vm1783 = vcmp.lt.s32.totalorder %v1782, 0
          %v1784 = vsub.s32 0, %v1782
          %v1785 = vsel %vm1783, %v1784, %v1782
          %v1786 = vclz %v1785
          %v1787 = vsub.s32 %v1786, 2
          %vm1788 = vcmp.gt.s32.totalorder 0, %v1787
          %v1789 = vsel %vm1788, 0, %v1787
          %v1790 = vsub.s32 32, %v1789
          %v1791 = vshll.u32 %v1782, %v1789
          %v1792 = vshrl.u32 %v1774, %v1790
          %v1793 = vor.u32 %v1791, %v1792
          %v1794 = vsub.s32 4294967266, %v1789
          %v1795 = vadd.s32 %v1794, 127
          %v1796 = vshll.u32 %v1795, 23
          %v1797 = vor.u32 4788187, %v1796
          %v1798 = vand.u32 2147483647, %v1797
          %v1800 = vcvt.s32.f32 %v1793
          %v1801 = vmul.f32 %v1800, %v1798
          %v1802 = vxor.u32 %v1801, 2147483648
          %v1803 = vsel %vm1720, %v1802, %v1801
          %v1804 = vsub.s32 4, %v1780
          %v1805 = vsel %vm1720, %v1804, %v1780
          %v1806 = vsel %vm1719, %v1496, %v1803
          %v1807 = vsel %vm1719, 0, %v1805
          %v1808 = vcosq.f32.pop %v1806
          %v1809 = vsinq.f32.pop %v1806
          %vm1810 = vweird.f32 %v1496
          %v1811 = vadd.s32 %v1807, 3
          %v1812 = vand.u32 %v1811, 3
          %vm1813 = vcmp.lt.s32.totalorder %v1812, 2
          %vm1814 = vcmp.eq.s32.totalorder %v1812, 0
          %v1815 = vxor.u32 %v1809, 2147483648
          %v1816 = vsel %vm1814, %v1808, %v1815
          %vm1817 = vcmp.eq.s32.totalorder %v1812, 2
          %v1818 = vxor.u32 %v1808, 2147483648
          %v1819 = vsel %vm1817, %v1818, %v1809
          %v1820 = vsel %vm1813, %v1816, %v1819
          %v1821 = vsel %vm1810, nan, %v1820
          %v1822 = vand.u32 2147483647, %v1497
          %vm1823 = vcmp.le.f32.partialorder %v1822, 0.7853982
          %vm1824 = vcmp.lt.s32.totalorder %v1497, 0
          %v1825 = vand.u32 %v1497, 2139095040
          %v1826 = vshrl.u32 %v1825, 23
          %v1827 = vsub.s32 %v1826, 127
          %v1828 = vand.u32 2147483647, %v1497
          %v1829 = vand.u32 %v1828, 8388607
          %v1830 = vor.u32 %v1829, 8388608
          %v1831 = vsub.s32 0, %v1830
          %v1832 = vadd.s32 %v1827, 1
          %vm1833 = vcmp.gt.s32.totalorder %v1832, 0
          %v1834 = vsel %vm1833, %v1832, 0
          %v1835 = vshrl.u32 %v1834, 5
          %v1836 = vand.u32 %v1834, 31
          %v1837 = vsub.s32 32, %v1836
          %v1838 = vshrl.u32 683565275, %v1837
          %v1839 = vshll.u32 683565275, %v1836
          %v1840 = vshrl.u32 2475754826, %v1837
          %v1841 = vor.u32 %v1839, %v1840
          %v1842 = vshll.u32 2475754826, %v1836
          %v1843 = vshrl.u32 2131351028, %v1837
          %v1844 = vor.u32 %v1842, %v1843
          %v1845 = vshll.u32 2131351028, %v1836
          %v1846 = vshrl.u32 2102212464, %v1837
          %v1847 = vor.u32 %v1845, %v1846
          %v1848 = vshll.u32 2102212464, %v1836
          %v1849 = vshrl.u32 920167782, %v1837
          %v1850 = vor.u32 %v1848, %v1849
          %v1851 = vshll.u32 920167782, %v1836
          %v1852 = vshrl.u32 1326507024, %v1837
          %v1853 = vor.u32 %v1851, %v1852
          %vm1854 = vcmp.lt.s32.totalorder %v1835, 1
          %vm1855 = vcmp.lt.s32.totalorder %v1835, 2
          %vm1856 = vcmp.lt.s32.totalorder %v1835, 3
          %vm1857 = vcmp.lt.s32.totalorder %v1835, 4
          %v1858 = vsel %vm1854, %v1838, %v1841
          %v1859 = vsel %vm1857, %v1847, 2102212464
          %v1860 = vsel %vm1856, %v1844, %v1859
          %v1861 = vsel %vm1855, %v1858, %v1860
          %v1862 = vsel %vm1854, %v1841, %v1844
          %v1863 = vsel %vm1857, %v1850, 920167782
          %v1864 = vsel %vm1856, %v1847, %v1863
          %v1865 = vsel %vm1855, %v1862, %v1864
          %v1866 = vsel %vm1854, %v1844, %v1847
          %v1867 = vsel %vm1857, %v1853, 1326507024
          %v1868 = vsel %vm1856, %v1850, %v1867
          %v1869 = vsel %vm1855, %v1866, %v1868
          %v1870 = vshll.u32 %v1830, 8
          %v1871 = vmul.u32.u64.compose %v1870, %v1869
          %v1872 = vextract.low.u32 %v1871
          %v1873 = vextract.high.u32 %v1871
          %v1874 = vmul.u32.u64.compose %v1870, %v1865
          %v1875 = vextract.low.u32 %v1874
          %v1876 = vextract.high.u32 %v1874
          %v1877 = vmul.u32 %v1870, %v1861
          %v1878 = vadd.s32 %v1873, %v1875
          %vm1879 = vc.u32 %v1873, %v1875
          %v1880 = vadd.s32 %v1876, 1
          %v1881 = vsel %vm1879, %v1880, %v1876
          %v1882 = vadd.s32 %v1877, %v1881
          %v1883 = vadd.s32 %v1882, 536870912
          %v1884 = vshrl.u32 %v1883, 30
          %v1885 = vshll.u32 %v1884, 30
          %v1886 = vsub.s32 %v1882, %v1885
          %vm1887 = vcmp.lt.s32.totalorder %v1886, 0
          %v1888 = vsub.s32 0, %v1886
          %v1889 = vsel %vm1887, %v1888, %v1886
          %v1890 = vclz %v1889
          %v1891 = vsub.s32 %v1890, 2
          %vm1892 = vcmp.gt.s32.totalorder 0, %v1891
          %v1893 = vsel %vm1892, 0, %v1891
          %v1894 = vsub.s32 32, %v1893
          %v1895 = vshll.u32 %v1886, %v1893
          %v1896 = vshrl.u32 %v1878, %v1894
          %v1897 = vor.u32 %v1895, %v1896
          %v1898 = vsub.s32 4294967266, %v1893
          %v1899 = vadd.s32 %v1898, 127
          %v1900 = vshll.u32 %v1899, 23
          %v1901 = vor.u32 4788187, %v1900
          %v1902 = vand.u32 2147483647, %v1901
          %v1904 = vcvt.s32.f32 %v1897
          %v1905 = vmul.f32 %v1904, %v1902
          %v1906 = vxor.u32 %v1905, 2147483648
          %v1907 = vsel %vm1824, %v1906, %v1905
          %v1908 = vsub.s32 4, %v1884
          %v1909 = vsel %vm1824, %v1908, %v1884
          %v1910 = vsel %vm1823, %v1497, %v1907
          %v1911 = vsel %vm1823, 0, %v1909
          %v1912 = vcosq.f32.pop %v1910
          %v1913 = vsinq.f32.pop %v1910
          %vm1914 = vweird.f32 %v1497
          %v1915 = vadd.s32 %v1911, 3
          %v1916 = vand.u32 %v1915, 3
          %vm1917 = vcmp.lt.s32.totalorder %v1916, 2
          %vm1918 = vcmp.eq.s32.totalorder %v1916, 0
          %v1919 = vxor.u32 %v1913, 2147483648
          %v1920 = vsel %vm1918, %v1912, %v1919
          %vm1921 = vcmp.eq.s32.totalorder %v1916, 2
          %v1922 = vxor.u32 %v1912, 2147483648
          %v1923 = vsel %vm1921, %v1922, %v1913
          %v1924 = vsel %vm1917, %v1920, %v1923
          %v1925 = vsel %vm1914, nan, %v1924
          %v1926 = vand.u32 2147483647, %v1498
          %vm1927 = vcmp.le.f32.partialorder %v1926, 0.7853982
          %vm1928 = vcmp.lt.s32.totalorder %v1498, 0
          %v1929 = vand.u32 %v1498, 2139095040
          %v1930 = vshrl.u32 %v1929, 23
          %v1931 = vsub.s32 %v1930, 127
          %v1932 = vand.u32 2147483647, %v1498
          %v1933 = vand.u32 %v1932, 8388607
          %v1934 = vor.u32 %v1933, 8388608
          %v1935 = vsub.s32 0, %v1934
          %v1936 = vadd.s32 %v1931, 1
          %vm1937 = vcmp.gt.s32.totalorder %v1936, 0
          %v1938 = vsel %vm1937, %v1936, 0
          %v1939 = vshrl.u32 %v1938, 5
          %v1940 = vand.u32 %v1938, 31
          %v1941 = vsub.s32 32, %v1940
          %v1942 = vshrl.u32 683565275, %v1941
          %v1943 = vshll.u32 683565275, %v1940
          %v1944 = vshrl.u32 2475754826, %v1941
          %v1945 = vor.u32 %v1943, %v1944
          %v1946 = vshll.u32 2475754826, %v1940
          %v1947 = vshrl.u32 2131351028, %v1941
          %v1948 = vor.u32 %v1946, %v1947
          %v1949 = vshll.u32 2131351028, %v1940
          %v1950 = vshrl.u32 2102212464, %v1941
          %v1951 = vor.u32 %v1949, %v1950
          %v1952 = vshll.u32 2102212464, %v1940
          %v1953 = vshrl.u32 920167782, %v1941
          %v1954 = vor.u32 %v1952, %v1953
          %v1955 = vshll.u32 920167782, %v1940
          %v1956 = vshrl.u32 1326507024, %v1941
          %v1957 = vor.u32 %v1955, %v1956
          %vm1958 = vcmp.lt.s32.totalorder %v1939, 1
          %vm1959 = vcmp.lt.s32.totalorder %v1939, 2
          %vm1960 = vcmp.lt.s32.totalorder %v1939, 3
          %vm1961 = vcmp.lt.s32.totalorder %v1939, 4
          %v1962 = vsel %vm1958, %v1942, %v1945
          %v1963 = vsel %vm1961, %v1951, 2102212464
          %v1964 = vsel %vm1960, %v1948, %v1963
          %v1965 = vsel %vm1959, %v1962, %v1964
          %v1966 = vsel %vm1958, %v1945, %v1948
          %v1967 = vsel %vm1961, %v1954, 920167782
          %v1968 = vsel %vm1960, %v1951, %v1967
          %v1969 = vsel %vm1959, %v1966, %v1968
          %v1970 = vsel %vm1958, %v1948, %v1951
          %v1971 = vsel %vm1961, %v1957, 1326507024
          %v1972 = vsel %vm1960, %v1954, %v1971
          %v1973 = vsel %vm1959, %v1970, %v1972
          %v1974 = vshll.u32 %v1934, 8
          %v1975 = vmul.u32.u64.compose %v1974, %v1973
          %v1976 = vextract.low.u32 %v1975
          %v1977 = vextract.high.u32 %v1975
          %v1978 = vmul.u32.u64.compose %v1974, %v1969
          %v1979 = vextract.low.u32 %v1978
          %v1980 = vextract.high.u32 %v1978
          %v1981 = vmul.u32 %v1974, %v1965
          %v1982 = vadd.s32 %v1977, %v1979
          %vm1983 = vc.u32 %v1977, %v1979
          %v1984 = vadd.s32 %v1980, 1
          %v1985 = vsel %vm1983, %v1984, %v1980
          %v1986 = vadd.s32 %v1981, %v1985
          %v1987 = vadd.s32 %v1986, 536870912
          %v1988 = vshrl.u32 %v1987, 30
          %v1989 = vshll.u32 %v1988, 30
          %v1990 = vsub.s32 %v1986, %v1989
          %vm1991 = vcmp.lt.s32.totalorder %v1990, 0
          %v1992 = vsub.s32 0, %v1990
          %v1993 = vsel %vm1991, %v1992, %v1990
          %v1994 = vclz %v1993
          %v1995 = vsub.s32 %v1994, 2
          %vm1996 = vcmp.gt.s32.totalorder 0, %v1995
          %v1997 = vsel %vm1996, 0, %v1995
          %v1998 = vsub.s32 32, %v1997
          %v1999 = vshll.u32 %v1990, %v1997
          %v2000 = vshrl.u32 %v1982, %v1998
          %v2001 = vor.u32 %v1999, %v2000
          %v2002 = vsub.s32 4294967266, %v1997
          %v2003 = vadd.s32 %v2002, 127
          %v2004 = vshll.u32 %v2003, 23
          %v2005 = vor.u32 4788187, %v2004
          %v2006 = vand.u32 2147483647, %v2005
          %v2008 = vcvt.s32.f32 %v2001
          %v2009 = vmul.f32 %v2008, %v2006
          %v2010 = vxor.u32 %v2009, 2147483648
          %v2011 = vsel %vm1928, %v2010, %v2009
          %v2012 = vsub.s32 4, %v1988
          %v2013 = vsel %vm1928, %v2012, %v1988
          %v2014 = vsel %vm1927, %v1498, %v2011
          %v2015 = vsel %vm1927, 0, %v2013
          %v2016 = vcosq.f32.pop %v2014
          %v2017 = vsinq.f32.pop %v2014
          %vm2018 = vweird.f32 %v1498
          %v2019 = vadd.s32 %v2015, 3
          %v2020 = vand.u32 %v2019, 3
          %vm2021 = vcmp.lt.s32.totalorder %v2020, 2
          %vm2022 = vcmp.eq.s32.totalorder %v2020, 0
          %v2023 = vxor.u32 %v2017, 2147483648
          %v2024 = vsel %vm2022, %v2016, %v2023
          %vm2025 = vcmp.eq.s32.totalorder %v2020, 2
          %v2026 = vxor.u32 %v2016, 2147483648
          %v2027 = vsel %vm2025, %v2026, %v2017
          %v2028 = vsel %vm2021, %v2024, %v2027
          %v2029 = vsel %vm2018, nan, %v2028
          %v2030 = vand.u32 2147483647, %v1499
          %vm2031 = vcmp.le.f32.partialorder %v2030, 0.7853982
          %vm2032 = vcmp.lt.s32.totalorder %v1499, 0
          %v2033 = vand.u32 %v1499, 2139095040
          %v2034 = vshrl.u32 %v2033, 23
          %v2035 = vsub.s32 %v2034, 127
          %v2036 = vand.u32 2147483647, %v1499
          %v2037 = vand.u32 %v2036, 8388607
          %v2038 = vor.u32 %v2037, 8388608
          %v2039 = vsub.s32 0, %v2038
          %v2040 = vadd.s32 %v2035, 1
          %vm2041 = vcmp.gt.s32.totalorder %v2040, 0
          %v2042 = vsel %vm2041, %v2040, 0
          %v2043 = vshrl.u32 %v2042, 5
          %v2044 = vand.u32 %v2042, 31
          %v2045 = vsub.s32 32, %v2044
          %v2046 = vshrl.u32 683565275, %v2045
          %v2047 = vshll.u32 683565275, %v2044
          %v2048 = vshrl.u32 2475754826, %v2045
          %v2049 = vor.u32 %v2047, %v2048
          %v2050 = vshll.u32 2475754826, %v2044
          %v2051 = vshrl.u32 2131351028, %v2045
          %v2052 = vor.u32 %v2050, %v2051
          %v2053 = vshll.u32 2131351028, %v2044
          %v2054 = vshrl.u32 2102212464, %v2045
          %v2055 = vor.u32 %v2053, %v2054
          %v2056 = vshll.u32 2102212464, %v2044
          %v2057 = vshrl.u32 920167782, %v2045
          %v2058 = vor.u32 %v2056, %v2057
          %v2059 = vshll.u32 920167782, %v2044
          %v2060 = vshrl.u32 1326507024, %v2045
          %v2061 = vor.u32 %v2059, %v2060
          %vm2062 = vcmp.lt.s32.totalorder %v2043, 1
          %vm2063 = vcmp.lt.s32.totalorder %v2043, 2
          %vm2064 = vcmp.lt.s32.totalorder %v2043, 3
          %vm2065 = vcmp.lt.s32.totalorder %v2043, 4
          %v2066 = vsel %vm2062, %v2046, %v2049
          %v2067 = vsel %vm2065, %v2055, 2102212464
          %v2068 = vsel %vm2064, %v2052, %v2067
          %v2069 = vsel %vm2063, %v2066, %v2068
          %v2070 = vsel %vm2062, %v2049, %v2052
          %v2071 = vsel %vm2065, %v2058, 920167782
          %v2072 = vsel %vm2064, %v2055, %v2071
          %v2073 = vsel %vm2063, %v2070, %v2072
          %v2074 = vsel %vm2062, %v2052, %v2055
          %v2075 = vsel %vm2065, %v2061, 1326507024
          %v2076 = vsel %vm2064, %v2058, %v2075
          %v2077 = vsel %vm2063, %v2074, %v2076
          %v2078 = vshll.u32 %v2038, 8
          %v2079 = vmul.u32.u64.compose %v2078, %v2077
          %v2080 = vextract.low.u32 %v2079
          %v2081 = vextract.high.u32 %v2079
          %v2082 = vmul.u32.u64.compose %v2078, %v2073
          %v2083 = vextract.low.u32 %v2082
          %v2084 = vextract.high.u32 %v2082
          %v2085 = vmul.u32 %v2078, %v2069
          %v2086 = vadd.s32 %v2081, %v2083
          %vm2087 = vc.u32 %v2081, %v2083
          %v2088 = vadd.s32 %v2084, 1
          %v2089 = vsel %vm2087, %v2088, %v2084
          %v2090 = vadd.s32 %v2085, %v2089
          %v2091 = vadd.s32 %v2090, 536870912
          %v2092 = vshrl.u32 %v2091, 30
          %v2093 = vshll.u32 %v2092, 30
          %v2094 = vsub.s32 %v2090, %v2093
          %vm2095 = vcmp.lt.s32.totalorder %v2094, 0
          %v2096 = vsub.s32 0, %v2094
          %v2097 = vsel %vm2095, %v2096, %v2094
          %v2098 = vclz %v2097
          %v2099 = vsub.s32 %v2098, 2
          %vm2100 = vcmp.gt.s32.totalorder 0, %v2099
          %v2101 = vsel %vm2100, 0, %v2099
          %v2102 = vsub.s32 32, %v2101
          %v2103 = vshll.u32 %v2094, %v2101
          %v2104 = vshrl.u32 %v2086, %v2102
          %v2105 = vor.u32 %v2103, %v2104
          %v2106 = vsub.s32 4294967266, %v2101
          %v2107 = vadd.s32 %v2106, 127
          %v2108 = vshll.u32 %v2107, 23
          %v2109 = vor.u32 4788187, %v2108
          %v2110 = vand.u32 2147483647, %v2109
          %v2112 = vcvt.s32.f32 %v2105
          %v2113 = vmul.f32 %v2112, %v2110
          %v2114 = vxor.u32 %v2113, 2147483648
          %v2115 = vsel %vm2032, %v2114, %v2113
          %v2116 = vsub.s32 4, %v2092
          %v2117 = vsel %vm2032, %v2116, %v2092
          %v2118 = vsel %vm2031, %v1499, %v2115
          %v2119 = vsel %vm2031, 0, %v2117
          %v2120 = vcosq.f32.pop %v2118
          %v2121 = vsinq.f32.pop %v2118
          %vm2122 = vweird.f32 %v1499
          %v2123 = vadd.s32 %v2119, 3
          %v2124 = vand.u32 %v2123, 3
          %vm2125 = vcmp.lt.s32.totalorder %v2124, 2
          %vm2126 = vcmp.eq.s32.totalorder %v2124, 0
          %v2127 = vxor.u32 %v2121, 2147483648
          %v2128 = vsel %vm2126, %v2120, %v2127
          %vm2129 = vcmp.eq.s32.totalorder %v2124, 2
          %v2130 = vxor.u32 %v2120, 2147483648
          %v2131 = vsel %vm2129, %v2130, %v2121
          %v2132 = vsel %vm2125, %v2128, %v2131
          %v2133 = vsel %vm2122, nan, %v2132
          %v2134 = vand.u32 2147483647, %v1500
          %vm2135 = vcmp.le.f32.partialorder %v2134, 0.7853982
          %vm2136 = vcmp.lt.s32.totalorder %v1500, 0
          %v2137 = vand.u32 %v1500, 2139095040
          %v2138 = vshrl.u32 %v2137, 23
          %v2139 = vsub.s32 %v2138, 127
          %v2140 = vand.u32 2147483647, %v1500
          %v2141 = vand.u32 %v2140, 8388607
          %v2142 = vor.u32 %v2141, 8388608
          %v2143 = vsub.s32 0, %v2142
          %v2144 = vadd.s32 %v2139, 1
          %vm2145 = vcmp.gt.s32.totalorder %v2144, 0
          %v2146 = vsel %vm2145, %v2144, 0
          %v2147 = vshrl.u32 %v2146, 5
          %v2148 = vand.u32 %v2146, 31
          %v2149 = vsub.s32 32, %v2148
          %v2150 = vshrl.u32 683565275, %v2149
          %v2151 = vshll.u32 683565275, %v2148
          %v2152 = vshrl.u32 2475754826, %v2149
          %v2153 = vor.u32 %v2151, %v2152
          %v2154 = vshll.u32 2475754826, %v2148
          %v2155 = vshrl.u32 2131351028, %v2149
          %v2156 = vor.u32 %v2154, %v2155
          %v2157 = vshll.u32 2131351028, %v2148
          %v2158 = vshrl.u32 2102212464, %v2149
          %v2159 = vor.u32 %v2157, %v2158
          %v2160 = vshll.u32 2102212464, %v2148
          %v2161 = vshrl.u32 920167782, %v2149
          %v2162 = vor.u32 %v2160, %v2161
          %v2163 = vshll.u32 920167782, %v2148
          %v2164 = vshrl.u32 1326507024, %v2149
          %v2165 = vor.u32 %v2163, %v2164
          %vm2166 = vcmp.lt.s32.totalorder %v2147, 1
          %vm2167 = vcmp.lt.s32.totalorder %v2147, 2
          %vm2168 = vcmp.lt.s32.totalorder %v2147, 3
          %vm2169 = vcmp.lt.s32.totalorder %v2147, 4
          %v2170 = vsel %vm2166, %v2150, %v2153
          %v2171 = vsel %vm2169, %v2159, 2102212464
          %v2172 = vsel %vm2168, %v2156, %v2171
          %v2173 = vsel %vm2167, %v2170, %v2172
          %v2174 = vsel %vm2166, %v2153, %v2156
          %v2175 = vsel %vm2169, %v2162, 920167782
          %v2176 = vsel %vm2168, %v2159, %v2175
          %v2177 = vsel %vm2167, %v2174, %v2176
          %v2178 = vsel %vm2166, %v2156, %v2159
          %v2179 = vsel %vm2169, %v2165, 1326507024
          %v2180 = vsel %vm2168, %v2162, %v2179
          %v2181 = vsel %vm2167, %v2178, %v2180
          %v2182 = vshll.u32 %v2142, 8
          %v2183 = vmul.u32.u64.compose %v2182, %v2181
          %v2184 = vextract.low.u32 %v2183
          %v2185 = vextract.high.u32 %v2183
          %v2186 = vmul.u32.u64.compose %v2182, %v2177
          %v2187 = vextract.low.u32 %v2186
          %v2188 = vextract.high.u32 %v2186
          %v2189 = vmul.u32 %v2182, %v2173
          %v2190 = vadd.s32 %v2185, %v2187
          %vm2191 = vc.u32 %v2185, %v2187
          %v2192 = vadd.s32 %v2188, 1
          %v2193 = vsel %vm2191, %v2192, %v2188
          %v2194 = vadd.s32 %v2189, %v2193
          %v2195 = vadd.s32 %v2194, 536870912
          %v2196 = vshrl.u32 %v2195, 30
          %v2197 = vshll.u32 %v2196, 30
          %v2198 = vsub.s32 %v2194, %v2197
          %vm2199 = vcmp.lt.s32.totalorder %v2198, 0
          %v2200 = vsub.s32 0, %v2198
          %v2201 = vsel %vm2199, %v2200, %v2198
          %v2202 = vclz %v2201
          %v2203 = vsub.s32 %v2202, 2
          %vm2204 = vcmp.gt.s32.totalorder 0, %v2203
          %v2205 = vsel %vm2204, 0, %v2203
          %v2206 = vsub.s32 32, %v2205
          %v2207 = vshll.u32 %v2198, %v2205
          %v2208 = vshrl.u32 %v2190, %v2206
          %v2209 = vor.u32 %v2207, %v2208
          %v2210 = vsub.s32 4294967266, %v2205
          %v2211 = vadd.s32 %v2210, 127
          %v2212 = vshll.u32 %v2211, 23
          %v2213 = vor.u32 4788187, %v2212
          %v2214 = vand.u32 2147483647, %v2213
          %v2216 = vcvt.s32.f32 %v2209
          %v2217 = vmul.f32 %v2216, %v2214
          %v2218 = vxor.u32 %v2217, 2147483648
          %v2219 = vsel %vm2136, %v2218, %v2217
          %v2220 = vsub.s32 4, %v2196
          %v2221 = vsel %vm2136, %v2220, %v2196
          %v2222 = vsel %vm2135, %v1500, %v2219
          %v2223 = vsel %vm2135, 0, %v2221
          %v2224 = vcosq.f32.pop %v2222
          %v2225 = vsinq.f32.pop %v2222
          %vm2226 = vweird.f32 %v1500
          %v2227 = vadd.s32 %v2223, 3
          %v2228 = vand.u32 %v2227, 3
          %vm2229 = vcmp.lt.s32.totalorder %v2228, 2
          %vm2230 = vcmp.eq.s32.totalorder %v2228, 0
          %v2231 = vxor.u32 %v2225, 2147483648
          %v2232 = vsel %vm2230, %v2224, %v2231
          %vm2233 = vcmp.eq.s32.totalorder %v2228, 2
          %v2234 = vxor.u32 %v2224, 2147483648
          %v2235 = vsel %vm2233, %v2234, %v2225
          %v2236 = vsel %vm2229, %v2232, %v2235
          %v2237 = vsel %vm2226, nan, %v2236
          %v2238 = vand.u32 2147483647, %v1501
          %vm2239 = vcmp.le.f32.partialorder %v2238, 0.7853982
          %vm2240 = vcmp.lt.s32.totalorder %v1501, 0
          %v2241 = vand.u32 %v1501, 2139095040
          %v2242 = vshrl.u32 %v2241, 23
          %v2243 = vsub.s32 %v2242, 127
          %v2244 = vand.u32 2147483647, %v1501
          %v2245 = vand.u32 %v2244, 8388607
          %v2246 = vor.u32 %v2245, 8388608
          %v2247 = vsub.s32 0, %v2246
          %v2248 = vadd.s32 %v2243, 1
          %vm2249 = vcmp.gt.s32.totalorder %v2248, 0
          %v2250 = vsel %vm2249, %v2248, 0
          %v2251 = vshrl.u32 %v2250, 5
          %v2252 = vand.u32 %v2250, 31
          %v2253 = vsub.s32 32, %v2252
          %v2254 = vshrl.u32 683565275, %v2253
          %v2255 = vshll.u32 683565275, %v2252
          %v2256 = vshrl.u32 2475754826, %v2253
          %v2257 = vor.u32 %v2255, %v2256
          %v2258 = vshll.u32 2475754826, %v2252
          %v2259 = vshrl.u32 2131351028, %v2253
          %v2260 = vor.u32 %v2258, %v2259
          %v2261 = vshll.u32 2131351028, %v2252
          %v2262 = vshrl.u32 2102212464, %v2253
          %v2263 = vor.u32 %v2261, %v2262
          %v2264 = vshll.u32 2102212464, %v2252
          %v2265 = vshrl.u32 920167782, %v2253
          %v2266 = vor.u32 %v2264, %v2265
          %v2267 = vshll.u32 920167782, %v2252
          %v2268 = vshrl.u32 1326507024, %v2253
          %v2269 = vor.u32 %v2267, %v2268
          %vm2270 = vcmp.lt.s32.totalorder %v2251, 1
          %vm2271 = vcmp.lt.s32.totalorder %v2251, 2
          %vm2272 = vcmp.lt.s32.totalorder %v2251, 3
          %vm2273 = vcmp.lt.s32.totalorder %v2251, 4
          %v2274 = vsel %vm2270, %v2254, %v2257
          %v2275 = vsel %vm2273, %v2263, 2102212464
          %v2276 = vsel %vm2272, %v2260, %v2275
          %v2277 = vsel %vm2271, %v2274, %v2276
          %v2278 = vsel %vm2270, %v2257, %v2260
          %v2279 = vsel %vm2273, %v2266, 920167782
          %v2280 = vsel %vm2272, %v2263, %v2279
          %v2281 = vsel %vm2271, %v2278, %v2280
          %v2282 = vsel %vm2270, %v2260, %v2263
          %v2283 = vsel %vm2273, %v2269, 1326507024
          %v2284 = vsel %vm2272, %v2266, %v2283
          %v2285 = vsel %vm2271, %v2282, %v2284
          %v2286 = vshll.u32 %v2246, 8
          %v2287 = vmul.u32.u64.compose %v2286, %v2285
          %v2288 = vextract.low.u32 %v2287
          %v2289 = vextract.high.u32 %v2287
          %v2290 = vmul.u32.u64.compose %v2286, %v2281
          %v2291 = vextract.low.u32 %v2290
          %v2292 = vextract.high.u32 %v2290
          %v2293 = vmul.u32 %v2286, %v2277
          %v2294 = vadd.s32 %v2289, %v2291
          %vm2295 = vc.u32 %v2289, %v2291
          %v2296 = vadd.s32 %v2292, 1
          %v2297 = vsel %vm2295, %v2296, %v2292
          %v2298 = vadd.s32 %v2293, %v2297
          %v2299 = vadd.s32 %v2298, 536870912
          %v2300 = vshrl.u32 %v2299, 30
          %v2301 = vshll.u32 %v2300, 30
          %v2302 = vsub.s32 %v2298, %v2301
          %vm2303 = vcmp.lt.s32.totalorder %v2302, 0
          %v2304 = vsub.s32 0, %v2302
          %v2305 = vsel %vm2303, %v2304, %v2302
          %v2306 = vclz %v2305
          %v2307 = vsub.s32 %v2306, 2
          %vm2308 = vcmp.gt.s32.totalorder 0, %v2307
          %v2309 = vsel %vm2308, 0, %v2307
          %v2310 = vsub.s32 32, %v2309
          %v2311 = vshll.u32 %v2302, %v2309
          %v2312 = vshrl.u32 %v2294, %v2310
          %v2313 = vor.u32 %v2311, %v2312
          %v2314 = vsub.s32 4294967266, %v2309
          %v2315 = vadd.s32 %v2314, 127
          %v2316 = vshll.u32 %v2315, 23
          %v2317 = vor.u32 4788187, %v2316
          %v2318 = vand.u32 2147483647, %v2317
          %v2320 = vcvt.s32.f32 %v2313
          %v2321 = vmul.f32 %v2320, %v2318
          %v2322 = vxor.u32 %v2321, 2147483648
          %v2323 = vsel %vm2240, %v2322, %v2321
          %v2324 = vsub.s32 4, %v2300
          %v2325 = vsel %vm2240, %v2324, %v2300
          %v2326 = vsel %vm2239, %v1501, %v2323
          %v2327 = vsel %vm2239, 0, %v2325
          %v2328 = vcosq.f32.pop %v2326
          %v2329 = vsinq.f32.pop %v2326
          %vm2330 = vweird.f32 %v1501
          %v2331 = vadd.s32 %v2327, 3
          %v2332 = vand.u32 %v2331, 3
          %vm2333 = vcmp.lt.s32.totalorder %v2332, 2
          %vm2334 = vcmp.eq.s32.totalorder %v2332, 0
          %v2335 = vxor.u32 %v2329, 2147483648
          %v2336 = vsel %vm2334, %v2328, %v2335
          %vm2337 = vcmp.eq.s32.totalorder %v2332, 2
          %v2338 = vxor.u32 %v2328, 2147483648
          %v2339 = vsel %vm2337, %v2338, %v2329
          %v2340 = vsel %vm2333, %v2336, %v2339
          %v2341 = vsel %vm2330, nan, %v2340
          %v2342 = vand.u32 2147483647, %v1502
          %vm2343 = vcmp.le.f32.partialorder %v2342, 0.7853982
          %vm2344 = vcmp.lt.s32.totalorder %v1502, 0
          %v2345 = vand.u32 %v1502, 2139095040
          %v2346 = vshrl.u32 %v2345, 23
          %v2347 = vsub.s32 %v2346, 127
          %v2348 = vand.u32 2147483647, %v1502
          %v2349 = vand.u32 %v2348, 8388607
          %v2350 = vor.u32 %v2349, 8388608
          %v2351 = vsub.s32 0, %v2350
          %v2352 = vadd.s32 %v2347, 1
          %vm2353 = vcmp.gt.s32.totalorder %v2352, 0
          %v2354 = vsel %vm2353, %v2352, 0
          %v2355 = vshrl.u32 %v2354, 5
          %v2356 = vand.u32 %v2354, 31
          %v2357 = vsub.s32 32, %v2356
          %v2358 = vshrl.u32 683565275, %v2357
          %v2359 = vshll.u32 683565275, %v2356
          %v2360 = vshrl.u32 2475754826, %v2357
          %v2361 = vor.u32 %v2359, %v2360
          %v2362 = vshll.u32 2475754826, %v2356
          %v2363 = vshrl.u32 2131351028, %v2357
          %v2364 = vor.u32 %v2362, %v2363
          %v2365 = vshll.u32 2131351028, %v2356
          %v2366 = vshrl.u32 2102212464, %v2357
          %v2367 = vor.u32 %v2365, %v2366
          %v2368 = vshll.u32 2102212464, %v2356
          %v2369 = vshrl.u32 920167782, %v2357
          %v2370 = vor.u32 %v2368, %v2369
          %v2371 = vshll.u32 920167782, %v2356
          %v2372 = vshrl.u32 1326507024, %v2357
          %v2373 = vor.u32 %v2371, %v2372
          %vm2374 = vcmp.lt.s32.totalorder %v2355, 1
          %vm2375 = vcmp.lt.s32.totalorder %v2355, 2
          %vm2376 = vcmp.lt.s32.totalorder %v2355, 3
          %vm2377 = vcmp.lt.s32.totalorder %v2355, 4
          %v2378 = vsel %vm2374, %v2358, %v2361
          %v2379 = vsel %vm2377, %v2367, 2102212464
          %v2380 = vsel %vm2376, %v2364, %v2379
          %v2381 = vsel %vm2375, %v2378, %v2380
          %v2382 = vsel %vm2374, %v2361, %v2364
          %v2383 = vsel %vm2377, %v2370, 920167782
          %v2384 = vsel %vm2376, %v2367, %v2383
          %v2385 = vsel %vm2375, %v2382, %v2384
          %v2386 = vsel %vm2374, %v2364, %v2367
          %v2387 = vsel %vm2377, %v2373, 1326507024
          %v2388 = vsel %vm2376, %v2370, %v2387
          %v2389 = vsel %vm2375, %v2386, %v2388
          %v2390 = vshll.u32 %v2350, 8
          %v2391 = vmul.u32.u64.compose %v2390, %v2389
          %v2392 = vextract.low.u32 %v2391
          %v2393 = vextract.high.u32 %v2391
          %v2394 = vmul.u32.u64.compose %v2390, %v2385
          %v2395 = vextract.low.u32 %v2394
          %v2396 = vextract.high.u32 %v2394
          %v2397 = vmul.u32 %v2390, %v2381
          %v2398 = vadd.s32 %v2393, %v2395
          %vm2399 = vc.u32 %v2393, %v2395
          %v2400 = vadd.s32 %v2396, 1
          %v2401 = vsel %vm2399, %v2400, %v2396
          %v2402 = vadd.s32 %v2397, %v2401
          %v2403 = vadd.s32 %v2402, 536870912
          %v2404 = vshrl.u32 %v2403, 30
          %v2405 = vshll.u32 %v2404, 30
          %v2406 = vsub.s32 %v2402, %v2405
          %vm2407 = vcmp.lt.s32.totalorder %v2406, 0
          %v2408 = vsub.s32 0, %v2406
          %v2409 = vsel %vm2407, %v2408, %v2406
          %v2410 = vclz %v2409
          %v2411 = vsub.s32 %v2410, 2
          %vm2412 = vcmp.gt.s32.totalorder 0, %v2411
          %v2413 = vsel %vm2412, 0, %v2411
          %v2414 = vsub.s32 32, %v2413
          %v2415 = vshll.u32 %v2406, %v2413
          %v2416 = vshrl.u32 %v2398, %v2414
          %v2417 = vor.u32 %v2415, %v2416
          %v2418 = vsub.s32 4294967266, %v2413
          %v2419 = vadd.s32 %v2418, 127
          %v2420 = vshll.u32 %v2419, 23
          %v2421 = vor.u32 4788187, %v2420
          %v2422 = vand.u32 2147483647, %v2421
          %v2424 = vcvt.s32.f32 %v2417
          %v2425 = vmul.f32 %v2424, %v2422
          %v2426 = vxor.u32 %v2425, 2147483648
          %v2427 = vsel %vm2344, %v2426, %v2425
          %v2428 = vsub.s32 4, %v2404
          %v2429 = vsel %vm2344, %v2428, %v2404
          %v2430 = vsel %vm2343, %v1502, %v2427
          %v2431 = vsel %vm2343, 0, %v2429
          %v2432 = vcosq.f32.pop %v2430
          %v2433 = vsinq.f32.pop %v2430
          %vm2434 = vweird.f32 %v1502
          %v2435 = vadd.s32 %v2431, 3
          %v2436 = vand.u32 %v2435, 3
          %vm2437 = vcmp.lt.s32.totalorder %v2436, 2
          %vm2438 = vcmp.eq.s32.totalorder %v2436, 0
          %v2439 = vxor.u32 %v2433, 2147483648
          %v2440 = vsel %vm2438, %v2432, %v2439
          %vm2441 = vcmp.eq.s32.totalorder %v2436, 2
          %v2442 = vxor.u32 %v2432, 2147483648
          %v2443 = vsel %vm2441, %v2442, %v2433
          %v2444 = vsel %vm2437, %v2440, %v2443
          %v2445 = vsel %vm2434, nan, %v2444
          %v2446 = vand.u32 2147483647, %v1503
          %vm2447 = vcmp.le.f32.partialorder %v2446, 0.7853982
          %vm2448 = vcmp.lt.s32.totalorder %v1503, 0
          %v2449 = vand.u32 %v1503, 2139095040
          %v2450 = vshrl.u32 %v2449, 23
          %v2451 = vsub.s32 %v2450, 127
          %v2452 = vand.u32 2147483647, %v1503
          %v2453 = vand.u32 %v2452, 8388607
          %v2454 = vor.u32 %v2453, 8388608
          %v2455 = vsub.s32 0, %v2454
          %v2456 = vadd.s32 %v2451, 1
          %vm2457 = vcmp.gt.s32.totalorder %v2456, 0
          %v2458 = vsel %vm2457, %v2456, 0
          %v2459 = vshrl.u32 %v2458, 5
          %v2460 = vand.u32 %v2458, 31
          %v2461 = vsub.s32 32, %v2460
          %v2462 = vshrl.u32 683565275, %v2461
          %v2463 = vshll.u32 683565275, %v2460
          %v2464 = vshrl.u32 2475754826, %v2461
          %v2465 = vor.u32 %v2463, %v2464
          %v2466 = vshll.u32 2475754826, %v2460
          %v2467 = vshrl.u32 2131351028, %v2461
          %v2468 = vor.u32 %v2466, %v2467
          %v2469 = vshll.u32 2131351028, %v2460
          %v2470 = vshrl.u32 2102212464, %v2461
          %v2471 = vor.u32 %v2469, %v2470
          %v2472 = vshll.u32 2102212464, %v2460
          %v2473 = vshrl.u32 920167782, %v2461
          %v2474 = vor.u32 %v2472, %v2473
          %v2475 = vshll.u32 920167782, %v2460
          %v2476 = vshrl.u32 1326507024, %v2461
          %v2477 = vor.u32 %v2475, %v2476
          %vm2478 = vcmp.lt.s32.totalorder %v2459, 1
          %vm2479 = vcmp.lt.s32.totalorder %v2459, 2
          %vm2480 = vcmp.lt.s32.totalorder %v2459, 3
          %vm2481 = vcmp.lt.s32.totalorder %v2459, 4
          %v2482 = vsel %vm2478, %v2462, %v2465
          %v2483 = vsel %vm2481, %v2471, 2102212464
          %v2484 = vsel %vm2480, %v2468, %v2483
          %v2485 = vsel %vm2479, %v2482, %v2484
          %v2486 = vsel %vm2478, %v2465, %v2468
          %v2487 = vsel %vm2481, %v2474, 920167782
          %v2488 = vsel %vm2480, %v2471, %v2487
          %v2489 = vsel %vm2479, %v2486, %v2488
          %v2490 = vsel %vm2478, %v2468, %v2471
          %v2491 = vsel %vm2481, %v2477, 1326507024
          %v2492 = vsel %vm2480, %v2474, %v2491
          %v2493 = vsel %vm2479, %v2490, %v2492
          %v2494 = vshll.u32 %v2454, 8
          %v2495 = vmul.u32.u64.compose %v2494, %v2493
          %v2496 = vextract.low.u32 %v2495
          %v2497 = vextract.high.u32 %v2495
          %v2498 = vmul.u32.u64.compose %v2494, %v2489
          %v2499 = vextract.low.u32 %v2498
          %v2500 = vextract.high.u32 %v2498
          %v2501 = vmul.u32 %v2494, %v2485
          %v2502 = vadd.s32 %v2497, %v2499
          %vm2503 = vc.u32 %v2497, %v2499
          %v2504 = vadd.s32 %v2500, 1
          %v2505 = vsel %vm2503, %v2504, %v2500
          %v2506 = vadd.s32 %v2501, %v2505
          %v2507 = vadd.s32 %v2506, 536870912
          %v2508 = vshrl.u32 %v2507, 30
          %v2509 = vshll.u32 %v2508, 30
          %v2510 = vsub.s32 %v2506, %v2509
          %vm2511 = vcmp.lt.s32.totalorder %v2510, 0
          %v2512 = vsub.s32 0, %v2510
          %v2513 = vsel %vm2511, %v2512, %v2510
          %v2514 = vclz %v2513
          %v2515 = vsub.s32 %v2514, 2
          %vm2516 = vcmp.gt.s32.totalorder 0, %v2515
          %v2517 = vsel %vm2516, 0, %v2515
          %v2518 = vsub.s32 32, %v2517
          %v2519 = vshll.u32 %v2510, %v2517
          %v2520 = vshrl.u32 %v2502, %v2518
          %v2521 = vor.u32 %v2519, %v2520
          %v2522 = vsub.s32 4294967266, %v2517
          %v2523 = vadd.s32 %v2522, 127
          %v2524 = vshll.u32 %v2523, 23
          %v2525 = vor.u32 4788187, %v2524
          %v2526 = vand.u32 2147483647, %v2525
          %v2528 = vcvt.s32.f32 %v2521
          %v2529 = vmul.f32 %v2528, %v2526
          %v2530 = vxor.u32 %v2529, 2147483648
          %v2531 = vsel %vm2448, %v2530, %v2529
          %v2532 = vsub.s32 4, %v2508
          %v2533 = vsel %vm2448, %v2532, %v2508
          %v2534 = vsel %vm2447, %v1503, %v2531
          %v2535 = vsel %vm2447, 0, %v2533
          %v2536 = vcosq.f32.pop %v2534
          %v2537 = vsinq.f32.pop %v2534
          %vm2538 = vweird.f32 %v1503
          %v2539 = vadd.s32 %v2535, 3
          %v2540 = vand.u32 %v2539, 3
          %vm2541 = vcmp.lt.s32.totalorder %v2540, 2
          %vm2542 = vcmp.eq.s32.totalorder %v2540, 0
          %v2543 = vxor.u32 %v2537, 2147483648
          %v2544 = vsel %vm2542, %v2536, %v2543
          %vm2545 = vcmp.eq.s32.totalorder %v2540, 2
          %v2546 = vxor.u32 %v2536, 2147483648
          %v2547 = vsel %vm2545, %v2546, %v2537
          %v2548 = vsel %vm2541, %v2544, %v2547
          %v2549 = vsel %vm2538, nan, %v2548
          %v2550 = vand.u32 2147483647, %v1504
          %vm2551 = vcmp.le.f32.partialorder %v2550, 0.7853982
          %vm2552 = vcmp.lt.s32.totalorder %v1504, 0
          %v2553 = vand.u32 %v1504, 2139095040
          %v2554 = vshrl.u32 %v2553, 23
          %v2555 = vsub.s32 %v2554, 127
          %v2556 = vand.u32 2147483647, %v1504
          %v2557 = vand.u32 %v2556, 8388607
          %v2558 = vor.u32 %v2557, 8388608
          %v2559 = vsub.s32 0, %v2558
          %v2560 = vadd.s32 %v2555, 1
          %vm2561 = vcmp.gt.s32.totalorder %v2560, 0
          %v2562 = vsel %vm2561, %v2560, 0
          %v2563 = vshrl.u32 %v2562, 5
          %v2564 = vand.u32 %v2562, 31
          %v2565 = vsub.s32 32, %v2564
          %v2566 = vshrl.u32 683565275, %v2565
          %v2567 = vshll.u32 683565275, %v2564
          %v2568 = vshrl.u32 2475754826, %v2565
          %v2569 = vor.u32 %v2567, %v2568
          %v2570 = vshll.u32 2475754826, %v2564
          %v2571 = vshrl.u32 2131351028, %v2565
          %v2572 = vor.u32 %v2570, %v2571
          %v2573 = vshll.u32 2131351028, %v2564
          %v2574 = vshrl.u32 2102212464, %v2565
          %v2575 = vor.u32 %v2573, %v2574
          %v2576 = vshll.u32 2102212464, %v2564
          %v2577 = vshrl.u32 920167782, %v2565
          %v2578 = vor.u32 %v2576, %v2577
          %v2579 = vshll.u32 920167782, %v2564
          %v2580 = vshrl.u32 1326507024, %v2565
          %v2581 = vor.u32 %v2579, %v2580
          %vm2582 = vcmp.lt.s32.totalorder %v2563, 1
          %vm2583 = vcmp.lt.s32.totalorder %v2563, 2
          %vm2584 = vcmp.lt.s32.totalorder %v2563, 3
          %vm2585 = vcmp.lt.s32.totalorder %v2563, 4
          %v2586 = vsel %vm2582, %v2566, %v2569
          %v2587 = vsel %vm2585, %v2575, 2102212464
          %v2588 = vsel %vm2584, %v2572, %v2587
          %v2589 = vsel %vm2583, %v2586, %v2588
          %v2590 = vsel %vm2582, %v2569, %v2572
          %v2591 = vsel %vm2585, %v2578, 920167782
          %v2592 = vsel %vm2584, %v2575, %v2591
          %v2593 = vsel %vm2583, %v2590, %v2592
          %v2594 = vsel %vm2582, %v2572, %v2575
          %v2595 = vsel %vm2585, %v2581, 1326507024
          %v2596 = vsel %vm2584, %v2578, %v2595
          %v2597 = vsel %vm2583, %v2594, %v2596
          %v2598 = vshll.u32 %v2558, 8
          %v2599 = vmul.u32.u64.compose %v2598, %v2597
          %v2600 = vextract.low.u32 %v2599
          %v2601 = vextract.high.u32 %v2599
          %v2602 = vmul.u32.u64.compose %v2598, %v2593
          %v2603 = vextract.low.u32 %v2602
          %v2604 = vextract.high.u32 %v2602
          %v2605 = vmul.u32 %v2598, %v2589
          %v2606 = vadd.s32 %v2601, %v2603
          %vm2607 = vc.u32 %v2601, %v2603
          %v2608 = vadd.s32 %v2604, 1
          %v2609 = vsel %vm2607, %v2608, %v2604
          %v2610 = vadd.s32 %v2605, %v2609
          %v2611 = vadd.s32 %v2610, 536870912
          %v2612 = vshrl.u32 %v2611, 30
          %v2613 = vshll.u32 %v2612, 30
          %v2614 = vsub.s32 %v2610, %v2613
          %vm2615 = vcmp.lt.s32.totalorder %v2614, 0
          %v2616 = vsub.s32 0, %v2614
          %v2617 = vsel %vm2615, %v2616, %v2614
          %v2618 = vclz %v2617
          %v2619 = vsub.s32 %v2618, 2
          %vm2620 = vcmp.gt.s32.totalorder 0, %v2619
          %v2621 = vsel %vm2620, 0, %v2619
          %v2622 = vsub.s32 32, %v2621
          %v2623 = vshll.u32 %v2614, %v2621
          %v2624 = vshrl.u32 %v2606, %v2622
          %v2625 = vor.u32 %v2623, %v2624
          %v2626 = vsub.s32 4294967266, %v2621
          %v2627 = vadd.s32 %v2626, 127
          %v2628 = vshll.u32 %v2627, 23
          %v2629 = vor.u32 4788187, %v2628
          %v2630 = vand.u32 2147483647, %v2629
          %v2632 = vcvt.s32.f32 %v2625
          %v2633 = vmul.f32 %v2632, %v2630
          %v2634 = vxor.u32 %v2633, 2147483648
          %v2635 = vsel %vm2552, %v2634, %v2633
          %v2636 = vsub.s32 4, %v2612
          %v2637 = vsel %vm2552, %v2636, %v2612
          %v2638 = vsel %vm2551, %v1504, %v2635
          %v2639 = vsel %vm2551, 0, %v2637
          %v2640 = vcosq.f32.pop %v2638
          %v2641 = vsinq.f32.pop %v2638
          %vm2642 = vweird.f32 %v1504
          %v2643 = vadd.s32 %v2639, 3
          %v2644 = vand.u32 %v2643, 3
          %vm2645 = vcmp.lt.s32.totalorder %v2644, 2
          %vm2646 = vcmp.eq.s32.totalorder %v2644, 0
          %v2647 = vxor.u32 %v2641, 2147483648
          %v2648 = vsel %vm2646, %v2640, %v2647
          %vm2649 = vcmp.eq.s32.totalorder %v2644, 2
          %v2650 = vxor.u32 %v2640, 2147483648
          %v2651 = vsel %vm2649, %v2650, %v2641
          %v2652 = vsel %vm2645, %v2648, %v2651
          %v2653 = vsel %vm2642, nan, %v2652
          %v2654 = vand.u32 2147483647, %v1505
          %vm2655 = vcmp.le.f32.partialorder %v2654, 0.7853982
          %vm2656 = vcmp.lt.s32.totalorder %v1505, 0
          %v2657 = vand.u32 %v1505, 2139095040
          %v2658 = vshrl.u32 %v2657, 23
          %v2659 = vsub.s32 %v2658, 127
          %v2660 = vand.u32 2147483647, %v1505
          %v2661 = vand.u32 %v2660, 8388607
          %v2662 = vor.u32 %v2661, 8388608
          %v2663 = vsub.s32 0, %v2662
          %v2664 = vadd.s32 %v2659, 1
          %vm2665 = vcmp.gt.s32.totalorder %v2664, 0
          %v2666 = vsel %vm2665, %v2664, 0
          %v2667 = vshrl.u32 %v2666, 5
          %v2668 = vand.u32 %v2666, 31
          %v2669 = vsub.s32 32, %v2668
          %v2670 = vshrl.u32 683565275, %v2669
          %v2671 = vshll.u32 683565275, %v2668
          %v2672 = vshrl.u32 2475754826, %v2669
          %v2673 = vor.u32 %v2671, %v2672
          %v2674 = vshll.u32 2475754826, %v2668
          %v2675 = vshrl.u32 2131351028, %v2669
          %v2676 = vor.u32 %v2674, %v2675
          %v2677 = vshll.u32 2131351028, %v2668
          %v2678 = vshrl.u32 2102212464, %v2669
          %v2679 = vor.u32 %v2677, %v2678
          %v2680 = vshll.u32 2102212464, %v2668
          %v2681 = vshrl.u32 920167782, %v2669
          %v2682 = vor.u32 %v2680, %v2681
          %v2683 = vshll.u32 920167782, %v2668
          %v2684 = vshrl.u32 1326507024, %v2669
          %v2685 = vor.u32 %v2683, %v2684
          %vm2686 = vcmp.lt.s32.totalorder %v2667, 1
          %vm2687 = vcmp.lt.s32.totalorder %v2667, 2
          %vm2688 = vcmp.lt.s32.totalorder %v2667, 3
          %vm2689 = vcmp.lt.s32.totalorder %v2667, 4
          %v2690 = vsel %vm2686, %v2670, %v2673
          %v2691 = vsel %vm2689, %v2679, 2102212464
          %v2692 = vsel %vm2688, %v2676, %v2691
          %v2693 = vsel %vm2687, %v2690, %v2692
          %v2694 = vsel %vm2686, %v2673, %v2676
          %v2695 = vsel %vm2689, %v2682, 920167782
          %v2696 = vsel %vm2688, %v2679, %v2695
          %v2697 = vsel %vm2687, %v2694, %v2696
          %v2698 = vsel %vm2686, %v2676, %v2679
          %v2699 = vsel %vm2689, %v2685, 1326507024
          %v2700 = vsel %vm2688, %v2682, %v2699
          %v2701 = vsel %vm2687, %v2698, %v2700
          %v2702 = vshll.u32 %v2662, 8
          %v2703 = vmul.u32.u64.compose %v2702, %v2701
          %v2704 = vextract.low.u32 %v2703
          %v2705 = vextract.high.u32 %v2703
          %v2706 = vmul.u32.u64.compose %v2702, %v2697
          %v2707 = vextract.low.u32 %v2706
          %v2708 = vextract.high.u32 %v2706
          %v2709 = vmul.u32 %v2702, %v2693
          %v2710 = vadd.s32 %v2705, %v2707
          %vm2711 = vc.u32 %v2705, %v2707
          %v2712 = vadd.s32 %v2708, 1
          %v2713 = vsel %vm2711, %v2712, %v2708
          %v2714 = vadd.s32 %v2709, %v2713
          %v2715 = vadd.s32 %v2714, 536870912
          %v2716 = vshrl.u32 %v2715, 30
          %v2717 = vshll.u32 %v2716, 30
          %v2718 = vsub.s32 %v2714, %v2717
          %vm2719 = vcmp.lt.s32.totalorder %v2718, 0
          %v2720 = vsub.s32 0, %v2718
          %v2721 = vsel %vm2719, %v2720, %v2718
          %v2722 = vclz %v2721
          %v2723 = vsub.s32 %v2722, 2
          %vm2724 = vcmp.gt.s32.totalorder 0, %v2723
          %v2725 = vsel %vm2724, 0, %v2723
          %v2726 = vsub.s32 32, %v2725
          %v2727 = vshll.u32 %v2718, %v2725
          %v2728 = vshrl.u32 %v2710, %v2726
          %v2729 = vor.u32 %v2727, %v2728
          %v2730 = vsub.s32 4294967266, %v2725
          %v2731 = vadd.s32 %v2730, 127
          %v2732 = vshll.u32 %v2731, 23
          %v2733 = vor.u32 4788187, %v2732
          %v2734 = vand.u32 2147483647, %v2733
          %v2736 = vcvt.s32.f32 %v2729
          %v2737 = vmul.f32 %v2736, %v2734
          %v2738 = vxor.u32 %v2737, 2147483648
          %v2739 = vsel %vm2656, %v2738, %v2737
          %v2740 = vsub.s32 4, %v2716
          %v2741 = vsel %vm2656, %v2740, %v2716
          %v2742 = vsel %vm2655, %v1505, %v2739
          %v2743 = vsel %vm2655, 0, %v2741
          %v2744 = vcosq.f32.pop %v2742
          %v2745 = vsinq.f32.pop %v2742
          %vm2746 = vweird.f32 %v1505
          %v2747 = vadd.s32 %v2743, 3
          %v2748 = vand.u32 %v2747, 3
          %vm2749 = vcmp.lt.s32.totalorder %v2748, 2
          %vm2750 = vcmp.eq.s32.totalorder %v2748, 0
          %v2751 = vxor.u32 %v2745, 2147483648
          %v2752 = vsel %vm2750, %v2744, %v2751
          %vm2753 = vcmp.eq.s32.totalorder %v2748, 2
          %v2754 = vxor.u32 %v2744, 2147483648
          %v2755 = vsel %vm2753, %v2754, %v2745
          %v2756 = vsel %vm2749, %v2752, %v2755
          %v2757 = vsel %vm2746, nan, %v2756
          %v2758 = vand.u32 2147483647, %v1506
          %vm2759 = vcmp.le.f32.partialorder %v2758, 0.7853982
          %vm2760 = vcmp.lt.s32.totalorder %v1506, 0
          %v2761 = vand.u32 %v1506, 2139095040
          %v2762 = vshrl.u32 %v2761, 23
          %v2763 = vsub.s32 %v2762, 127
          %v2764 = vand.u32 2147483647, %v1506
          %v2765 = vand.u32 %v2764, 8388607
          %v2766 = vor.u32 %v2765, 8388608
          %v2767 = vsub.s32 0, %v2766
          %v2768 = vadd.s32 %v2763, 1
          %vm2769 = vcmp.gt.s32.totalorder %v2768, 0
          %v2770 = vsel %vm2769, %v2768, 0
          %v2771 = vshrl.u32 %v2770, 5
          %v2772 = vand.u32 %v2770, 31
          %v2773 = vsub.s32 32, %v2772
          %v2774 = vshrl.u32 683565275, %v2773
          %v2775 = vshll.u32 683565275, %v2772
          %v2776 = vshrl.u32 2475754826, %v2773
          %v2777 = vor.u32 %v2775, %v2776
          %v2778 = vshll.u32 2475754826, %v2772
          %v2779 = vshrl.u32 2131351028, %v2773
          %v2780 = vor.u32 %v2778, %v2779
          %v2781 = vshll.u32 2131351028, %v2772
          %v2782 = vshrl.u32 2102212464, %v2773
          %v2783 = vor.u32 %v2781, %v2782
          %v2784 = vshll.u32 2102212464, %v2772
          %v2785 = vshrl.u32 920167782, %v2773
          %v2786 = vor.u32 %v2784, %v2785
          %v2787 = vshll.u32 920167782, %v2772
          %v2788 = vshrl.u32 1326507024, %v2773
          %v2789 = vor.u32 %v2787, %v2788
          %vm2790 = vcmp.lt.s32.totalorder %v2771, 1
          %vm2791 = vcmp.lt.s32.totalorder %v2771, 2
          %vm2792 = vcmp.lt.s32.totalorder %v2771, 3
          %vm2793 = vcmp.lt.s32.totalorder %v2771, 4
          %v2794 = vsel %vm2790, %v2774, %v2777
          %v2795 = vsel %vm2793, %v2783, 2102212464
          %v2796 = vsel %vm2792, %v2780, %v2795
          %v2797 = vsel %vm2791, %v2794, %v2796
          %v2798 = vsel %vm2790, %v2777, %v2780
          %v2799 = vsel %vm2793, %v2786, 920167782
          %v2800 = vsel %vm2792, %v2783, %v2799
          %v2801 = vsel %vm2791, %v2798, %v2800
          %v2802 = vsel %vm2790, %v2780, %v2783
          %v2803 = vsel %vm2793, %v2789, 1326507024
          %v2804 = vsel %vm2792, %v2786, %v2803
          %v2805 = vsel %vm2791, %v2802, %v2804
          %v2806 = vshll.u32 %v2766, 8
          %v2807 = vmul.u32.u64.compose %v2806, %v2805
          %v2808 = vextract.low.u32 %v2807
          %v2809 = vextract.high.u32 %v2807
          %v2810 = vmul.u32.u64.compose %v2806, %v2801
          %v2811 = vextract.low.u32 %v2810
          %v2812 = vextract.high.u32 %v2810
          %v2813 = vmul.u32 %v2806, %v2797
          %v2814 = vadd.s32 %v2809, %v2811
          %vm2815 = vc.u32 %v2809, %v2811
          %v2816 = vadd.s32 %v2812, 1
          %v2817 = vsel %vm2815, %v2816, %v2812
          %v2818 = vadd.s32 %v2813, %v2817
          %v2819 = vadd.s32 %v2818, 536870912
          %v2820 = vshrl.u32 %v2819, 30
          %v2821 = vshll.u32 %v2820, 30
          %v2822 = vsub.s32 %v2818, %v2821
          %vm2823 = vcmp.lt.s32.totalorder %v2822, 0
          %v2824 = vsub.s32 0, %v2822
          %v2825 = vsel %vm2823, %v2824, %v2822
          %v2826 = vclz %v2825
          %v2827 = vsub.s32 %v2826, 2
          %vm2828 = vcmp.gt.s32.totalorder 0, %v2827
          %v2829 = vsel %vm2828, 0, %v2827
          %v2830 = vsub.s32 32, %v2829
          %v2831 = vshll.u32 %v2822, %v2829
          %v2832 = vshrl.u32 %v2814, %v2830
          %v2833 = vor.u32 %v2831, %v2832
          %v2834 = vsub.s32 4294967266, %v2829
          %v2835 = vadd.s32 %v2834, 127
          %v2836 = vshll.u32 %v2835, 23
          %v2837 = vor.u32 4788187, %v2836
          %v2838 = vand.u32 2147483647, %v2837
          %v2840 = vcvt.s32.f32 %v2833
          %v2841 = vmul.f32 %v2840, %v2838
          %v2842 = vxor.u32 %v2841, 2147483648
          %v2843 = vsel %vm2760, %v2842, %v2841
          %v2844 = vsub.s32 4, %v2820
          %v2845 = vsel %vm2760, %v2844, %v2820
          %v2846 = vsel %vm2759, %v1506, %v2843
          %v2847 = vsel %vm2759, 0, %v2845
          %v2848 = vcosq.f32.pop %v2846
          %v2849 = vsinq.f32.pop %v2846
          %vm2850 = vweird.f32 %v1506
          %v2851 = vadd.s32 %v2847, 3
          %v2852 = vand.u32 %v2851, 3
          %vm2853 = vcmp.lt.s32.totalorder %v2852, 2
          %vm2854 = vcmp.eq.s32.totalorder %v2852, 0
          %v2855 = vxor.u32 %v2849, 2147483648
          %v2856 = vsel %vm2854, %v2848, %v2855
          %vm2857 = vcmp.eq.s32.totalorder %v2852, 2
          %v2858 = vxor.u32 %v2848, 2147483648
          %v2859 = vsel %vm2857, %v2858, %v2849
          %v2860 = vsel %vm2853, %v2856, %v2859
          %v2861 = vsel %vm2850, nan, %v2860
          %v2862 = vand.u32 2147483647, %v1507
          %vm2863 = vcmp.le.f32.partialorder %v2862, 0.7853982
          %vm2864 = vcmp.lt.s32.totalorder %v1507, 0
          %v2865 = vand.u32 %v1507, 2139095040
          %v2866 = vshrl.u32 %v2865, 23
          %v2867 = vsub.s32 %v2866, 127
          %v2868 = vand.u32 2147483647, %v1507
          %v2869 = vand.u32 %v2868, 8388607
          %v2870 = vor.u32 %v2869, 8388608
          %v2871 = vsub.s32 0, %v2870
          %v2872 = vadd.s32 %v2867, 1
          %vm2873 = vcmp.gt.s32.totalorder %v2872, 0
          %v2874 = vsel %vm2873, %v2872, 0
          %v2875 = vshrl.u32 %v2874, 5
          %v2876 = vand.u32 %v2874, 31
          %v2877 = vsub.s32 32, %v2876
          %v2878 = vshrl.u32 683565275, %v2877
          %v2879 = vshll.u32 683565275, %v2876
          %v2880 = vshrl.u32 2475754826, %v2877
          %v2881 = vor.u32 %v2879, %v2880
          %v2882 = vshll.u32 2475754826, %v2876
          %v2883 = vshrl.u32 2131351028, %v2877
          %v2884 = vor.u32 %v2882, %v2883
          %v2885 = vshll.u32 2131351028, %v2876
          %v2886 = vshrl.u32 2102212464, %v2877
          %v2887 = vor.u32 %v2885, %v2886
          %v2888 = vshll.u32 2102212464, %v2876
          %v2889 = vshrl.u32 920167782, %v2877
          %v2890 = vor.u32 %v2888, %v2889
          %v2891 = vshll.u32 920167782, %v2876
          %v2892 = vshrl.u32 1326507024, %v2877
          %v2893 = vor.u32 %v2891, %v2892
          %vm2894 = vcmp.lt.s32.totalorder %v2875, 1
          %vm2895 = vcmp.lt.s32.totalorder %v2875, 2
          %vm2896 = vcmp.lt.s32.totalorder %v2875, 3
          %vm2897 = vcmp.lt.s32.totalorder %v2875, 4
          %v2898 = vsel %vm2894, %v2878, %v2881
          %v2899 = vsel %vm2897, %v2887, 2102212464
          %v2900 = vsel %vm2896, %v2884, %v2899
          %v2901 = vsel %vm2895, %v2898, %v2900
          %v2902 = vsel %vm2894, %v2881, %v2884
          %v2903 = vsel %vm2897, %v2890, 920167782
          %v2904 = vsel %vm2896, %v2887, %v2903
          %v2905 = vsel %vm2895, %v2902, %v2904
          %v2906 = vsel %vm2894, %v2884, %v2887
          %v2907 = vsel %vm2897, %v2893, 1326507024
          %v2908 = vsel %vm2896, %v2890, %v2907
          %v2909 = vsel %vm2895, %v2906, %v2908
          %v2910 = vshll.u32 %v2870, 8
          %v2911 = vmul.u32.u64.compose %v2910, %v2909
          %v2912 = vextract.low.u32 %v2911
          %v2913 = vextract.high.u32 %v2911
          %v2914 = vmul.u32.u64.compose %v2910, %v2905
          %v2915 = vextract.low.u32 %v2914
          %v2916 = vextract.high.u32 %v2914
          %v2917 = vmul.u32 %v2910, %v2901
          %v2918 = vadd.s32 %v2913, %v2915
          %vm2919 = vc.u32 %v2913, %v2915
          %v2920 = vadd.s32 %v2916, 1
          %v2921 = vsel %vm2919, %v2920, %v2916
          %v2922 = vadd.s32 %v2917, %v2921
          %v2923 = vadd.s32 %v2922, 536870912
          %v2924 = vshrl.u32 %v2923, 30
          %v2925 = vshll.u32 %v2924, 30
          %v2926 = vsub.s32 %v2922, %v2925
          %vm2927 = vcmp.lt.s32.totalorder %v2926, 0
          %v2928 = vsub.s32 0, %v2926
          %v2929 = vsel %vm2927, %v2928, %v2926
          %v2930 = vclz %v2929
          %v2931 = vsub.s32 %v2930, 2
          %vm2932 = vcmp.gt.s32.totalorder 0, %v2931
          %v2933 = vsel %vm2932, 0, %v2931
          %v2934 = vsub.s32 32, %v2933
          %v2935 = vshll.u32 %v2926, %v2933
          %v2936 = vshrl.u32 %v2918, %v2934
          %v2937 = vor.u32 %v2935, %v2936
          %v2938 = vsub.s32 4294967266, %v2933
          %v2939 = vadd.s32 %v2938, 127
          %v2940 = vshll.u32 %v2939, 23
          %v2941 = vor.u32 4788187, %v2940
          %v2942 = vand.u32 2147483647, %v2941
          %v2944 = vcvt.s32.f32 %v2937
          %v2945 = vmul.f32 %v2944, %v2942
          %v2946 = vxor.u32 %v2945, 2147483648
          %v2947 = vsel %vm2864, %v2946, %v2945
          %v2948 = vsub.s32 4, %v2924
          %v2949 = vsel %vm2864, %v2948, %v2924
          %v2950 = vsel %vm2863, %v1507, %v2947
          %v2951 = vsel %vm2863, 0, %v2949
          %v2952 = vcosq.f32.pop %v2950
          %v2953 = vsinq.f32.pop %v2950
          %vm2954 = vweird.f32 %v1507
          %v2955 = vadd.s32 %v2951, 3
          %v2956 = vand.u32 %v2955, 3
          %vm2957 = vcmp.lt.s32.totalorder %v2956, 2
          %vm2958 = vcmp.eq.s32.totalorder %v2956, 0
          %v2959 = vxor.u32 %v2953, 2147483648
          %v2960 = vsel %vm2958, %v2952, %v2959
          %vm2961 = vcmp.eq.s32.totalorder %v2956, 2
          %v2962 = vxor.u32 %v2952, 2147483648
          %v2963 = vsel %vm2961, %v2962, %v2953
          %v2964 = vsel %vm2957, %v2960, %v2963
          %v2965 = vsel %vm2954, nan, %v2964
          %v2966 = vand.u32 2147483647, %v1508
          %vm2967 = vcmp.le.f32.partialorder %v2966, 0.7853982
          %vm2968 = vcmp.lt.s32.totalorder %v1508, 0
          %v2969 = vand.u32 %v1508, 2139095040
          %v2970 = vshrl.u32 %v2969, 23
          %v2971 = vsub.s32 %v2970, 127
          %v2972 = vand.u32 2147483647, %v1508
          %v2973 = vand.u32 %v2972, 8388607
          %v2974 = vor.u32 %v2973, 8388608
          %v2975 = vsub.s32 0, %v2974
          %v2976 = vadd.s32 %v2971, 1
          %vm2977 = vcmp.gt.s32.totalorder %v2976, 0
          %v2978 = vsel %vm2977, %v2976, 0
          %v2979 = vshrl.u32 %v2978, 5
          %v2980 = vand.u32 %v2978, 31
          %v2981 = vsub.s32 32, %v2980
          %v2982 = vshrl.u32 683565275, %v2981
          %v2983 = vshll.u32 683565275, %v2980
          %v2984 = vshrl.u32 2475754826, %v2981
          %v2985 = vor.u32 %v2983, %v2984
          %v2986 = vshll.u32 2475754826, %v2980
          %v2987 = vshrl.u32 2131351028, %v2981
          %v2988 = vor.u32 %v2986, %v2987
          %v2989 = vshll.u32 2131351028, %v2980
          %v2990 = vshrl.u32 2102212464, %v2981
          %v2991 = vor.u32 %v2989, %v2990
          %v2992 = vshll.u32 2102212464, %v2980
          %v2993 = vshrl.u32 920167782, %v2981
          %v2994 = vor.u32 %v2992, %v2993
          %v2995 = vshll.u32 920167782, %v2980
          %v2996 = vshrl.u32 1326507024, %v2981
          %v2997 = vor.u32 %v2995, %v2996
          %vm2998 = vcmp.lt.s32.totalorder %v2979, 1
          %vm2999 = vcmp.lt.s32.totalorder %v2979, 2
          %vm3000 = vcmp.lt.s32.totalorder %v2979, 3
          %vm3001 = vcmp.lt.s32.totalorder %v2979, 4
          %v3002 = vsel %vm2998, %v2982, %v2985
          %v3003 = vsel %vm3001, %v2991, 2102212464
          %v3004 = vsel %vm3000, %v2988, %v3003
          %v3005 = vsel %vm2999, %v3002, %v3004
          %v3006 = vsel %vm2998, %v2985, %v2988
          %v3007 = vsel %vm3001, %v2994, 920167782
          %v3008 = vsel %vm3000, %v2991, %v3007
          %v3009 = vsel %vm2999, %v3006, %v3008
          %v3010 = vsel %vm2998, %v2988, %v2991
          %v3011 = vsel %vm3001, %v2997, 1326507024
          %v3012 = vsel %vm3000, %v2994, %v3011
          %v3013 = vsel %vm2999, %v3010, %v3012
          %v3014 = vshll.u32 %v2974, 8
          %v3015 = vmul.u32.u64.compose %v3014, %v3013
          %v3016 = vextract.low.u32 %v3015
          %v3017 = vextract.high.u32 %v3015
          %v3018 = vmul.u32.u64.compose %v3014, %v3009
          %v3019 = vextract.low.u32 %v3018
          %v3020 = vextract.high.u32 %v3018
          %v3021 = vmul.u32 %v3014, %v3005
          %v3022 = vadd.s32 %v3017, %v3019
          %vm3023 = vc.u32 %v3017, %v3019
          %v3024 = vadd.s32 %v3020, 1
          %v3025 = vsel %vm3023, %v3024, %v3020
          %v3026 = vadd.s32 %v3021, %v3025
          %v3027 = vadd.s32 %v3026, 536870912
          %v3028 = vshrl.u32 %v3027, 30
          %v3029 = vshll.u32 %v3028, 30
          %v3030 = vsub.s32 %v3026, %v3029
          %vm3031 = vcmp.lt.s32.totalorder %v3030, 0
          %v3032 = vsub.s32 0, %v3030
          %v3033 = vsel %vm3031, %v3032, %v3030
          %v3034 = vclz %v3033
          %v3035 = vsub.s32 %v3034, 2
          %vm3036 = vcmp.gt.s32.totalorder 0, %v3035
          %v3037 = vsel %vm3036, 0, %v3035
          %v3038 = vsub.s32 32, %v3037
          %v3039 = vshll.u32 %v3030, %v3037
          %v3040 = vshrl.u32 %v3022, %v3038
          %v3041 = vor.u32 %v3039, %v3040
          %v3042 = vsub.s32 4294967266, %v3037
          %v3043 = vadd.s32 %v3042, 127
          %v3044 = vshll.u32 %v3043, 23
          %v3045 = vor.u32 4788187, %v3044
          %v3046 = vand.u32 2147483647, %v3045
          %v3048 = vcvt.s32.f32 %v3041
          %v3049 = vmul.f32 %v3048, %v3046
          %v3050 = vxor.u32 %v3049, 2147483648
          %v3051 = vsel %vm2968, %v3050, %v3049
          %v3052 = vsub.s32 4, %v3028
          %v3053 = vsel %vm2968, %v3052, %v3028
          %v3054 = vsel %vm2967, %v1508, %v3051
          %v3055 = vsel %vm2967, 0, %v3053
          %v3056 = vcosq.f32.pop %v3054
          %v3057 = vsinq.f32.pop %v3054
          %vm3058 = vweird.f32 %v1508
          %v3059 = vadd.s32 %v3055, 3
          %v3060 = vand.u32 %v3059, 3
          %vm3061 = vcmp.lt.s32.totalorder %v3060, 2
          %vm3062 = vcmp.eq.s32.totalorder %v3060, 0
          %v3063 = vxor.u32 %v3057, 2147483648
          %v3064 = vsel %vm3062, %v3056, %v3063
          %vm3065 = vcmp.eq.s32.totalorder %v3060, 2
          %v3066 = vxor.u32 %v3056, 2147483648
          %v3067 = vsel %vm3065, %v3066, %v3057
          %v3068 = vsel %vm3061, %v3064, %v3067
          %v3069 = vsel %vm3058, nan, %v3068
          %v3070 = vand.u32 2147483647, %v1509
          %vm3071 = vcmp.le.f32.partialorder %v3070, 0.7853982
          %vm3072 = vcmp.lt.s32.totalorder %v1509, 0
          %v3073 = vand.u32 %v1509, 2139095040
          %v3074 = vshrl.u32 %v3073, 23
          %v3075 = vsub.s32 %v3074, 127
          %v3076 = vand.u32 2147483647, %v1509
          %v3077 = vand.u32 %v3076, 8388607
          %v3078 = vor.u32 %v3077, 8388608
          %v3079 = vsub.s32 0, %v3078
          %v3080 = vadd.s32 %v3075, 1
          %vm3081 = vcmp.gt.s32.totalorder %v3080, 0
          %v3082 = vsel %vm3081, %v3080, 0
          %v3083 = vshrl.u32 %v3082, 5
          %v3084 = vand.u32 %v3082, 31
          %v3085 = vsub.s32 32, %v3084
          %v3086 = vshrl.u32 683565275, %v3085
          %v3087 = vshll.u32 683565275, %v3084
          %v3088 = vshrl.u32 2475754826, %v3085
          %v3089 = vor.u32 %v3087, %v3088
          %v3090 = vshll.u32 2475754826, %v3084
          %v3091 = vshrl.u32 2131351028, %v3085
          %v3092 = vor.u32 %v3090, %v3091
          %v3093 = vshll.u32 2131351028, %v3084
          %v3094 = vshrl.u32 2102212464, %v3085
          %v3095 = vor.u32 %v3093, %v3094
          %v3096 = vshll.u32 2102212464, %v3084
          %v3097 = vshrl.u32 920167782, %v3085
          %v3098 = vor.u32 %v3096, %v3097
          %v3099 = vshll.u32 920167782, %v3084
          %v3100 = vshrl.u32 1326507024, %v3085
          %v3101 = vor.u32 %v3099, %v3100
          %vm3102 = vcmp.lt.s32.totalorder %v3083, 1
          %vm3103 = vcmp.lt.s32.totalorder %v3083, 2
          %vm3104 = vcmp.lt.s32.totalorder %v3083, 3
          %vm3105 = vcmp.lt.s32.totalorder %v3083, 4
          %v3106 = vsel %vm3102, %v3086, %v3089
          %v3107 = vsel %vm3105, %v3095, 2102212464
          %v3108 = vsel %vm3104, %v3092, %v3107
          %v3109 = vsel %vm3103, %v3106, %v3108
          %v3110 = vsel %vm3102, %v3089, %v3092
          %v3111 = vsel %vm3105, %v3098, 920167782
          %v3112 = vsel %vm3104, %v3095, %v3111
          %v3113 = vsel %vm3103, %v3110, %v3112
          %v3114 = vsel %vm3102, %v3092, %v3095
          %v3115 = vsel %vm3105, %v3101, 1326507024
          %v3116 = vsel %vm3104, %v3098, %v3115
          %v3117 = vsel %vm3103, %v3114, %v3116
          %v3118 = vshll.u32 %v3078, 8
          %v3119 = vmul.u32.u64.compose %v3118, %v3117
          %v3120 = vextract.low.u32 %v3119
          %v3121 = vextract.high.u32 %v3119
          %v3122 = vmul.u32.u64.compose %v3118, %v3113
          %v3123 = vextract.low.u32 %v3122
          %v3124 = vextract.high.u32 %v3122
          %v3125 = vmul.u32 %v3118, %v3109
          %v3126 = vadd.s32 %v3121, %v3123
          %vm3127 = vc.u32 %v3121, %v3123
          %v3128 = vadd.s32 %v3124, 1
          %v3129 = vsel %vm3127, %v3128, %v3124
          %v3130 = vadd.s32 %v3125, %v3129
          %v3131 = vadd.s32 %v3130, 536870912
          %v3132 = vshrl.u32 %v3131, 30
          %v3133 = vshll.u32 %v3132, 30
          %v3134 = vsub.s32 %v3130, %v3133
          %vm3135 = vcmp.lt.s32.totalorder %v3134, 0
          %v3136 = vsub.s32 0, %v3134
          %v3137 = vsel %vm3135, %v3136, %v3134
          %v3138 = vclz %v3137
          %v3139 = vsub.s32 %v3138, 2
          %vm3140 = vcmp.gt.s32.totalorder 0, %v3139
          %v3141 = vsel %vm3140, 0, %v3139
          %v3142 = vsub.s32 32, %v3141
          %v3143 = vshll.u32 %v3134, %v3141
          %v3144 = vshrl.u32 %v3126, %v3142
          %v3145 = vor.u32 %v3143, %v3144
          %v3146 = vsub.s32 4294967266, %v3141
          %v3147 = vadd.s32 %v3146, 127
          %v3148 = vshll.u32 %v3147, 23
          %v3149 = vor.u32 4788187, %v3148
          %v3150 = vand.u32 2147483647, %v3149
          %v3152 = vcvt.s32.f32 %v3145
          %v3153 = vmul.f32 %v3152, %v3150
          %v3154 = vxor.u32 %v3153, 2147483648
          %v3155 = vsel %vm3072, %v3154, %v3153
          %v3156 = vsub.s32 4, %v3132
          %v3157 = vsel %vm3072, %v3156, %v3132
          %v3158 = vsel %vm3071, %v1509, %v3155
          %v3159 = vsel %vm3071, 0, %v3157
          %v3160 = vcosq.f32.pop %v3158
          %v3161 = vsinq.f32.pop %v3158
          %vm3162 = vweird.f32 %v1509
          %v3163 = vadd.s32 %v3159, 3
          %v3164 = vand.u32 %v3163, 3
          %vm3165 = vcmp.lt.s32.totalorder %v3164, 2
          %vm3166 = vcmp.eq.s32.totalorder %v3164, 0
          %v3167 = vxor.u32 %v3161, 2147483648
          %v3168 = vsel %vm3166, %v3160, %v3167
          %vm3169 = vcmp.eq.s32.totalorder %v3164, 2
          %v3170 = vxor.u32 %v3160, 2147483648
          %v3171 = vsel %vm3169, %v3170, %v3161
          %v3172 = vsel %vm3165, %v3168, %v3171
          %v3173 = vsel %vm3162, nan, %v3172
          %v3174 = vld [vmem:[#allocation2] sm:$0xff]
          %v3175 = vld [vmem:[#allocation2 + $0x8] sm:$0xff]
          %v3176 = vld [vmem:[#allocation2 + $0x10] sm:$0xff]
          %v3177 = vld [vmem:[#allocation2 + $0x18] sm:$0xff]
          %v3178 = vld [vmem:[#allocation2 + $0x20] sm:$0xff]
          %v3179 = vld [vmem:[#allocation2 + $0x28] sm:$0xff]
          %v3180 = vld [vmem:[#allocation2 + $0x30] sm:$0xff]
          %v3181 = vld [vmem:[#allocation2 + $0x38] sm:$0xff]
          %v3182 = vld [vmem:[#allocation2 + $0x40] sm:$0xff]
          %v3183 = vld [vmem:[#allocation2 + $0x48] sm:$0xff]
          %v3184 = vld [vmem:[#allocation2 + $0x50] sm:$0xff]
          %v3185 = vld [vmem:[#allocation2 + $0x58] sm:$0xff]
          %v3186 = vld [vmem:[#allocation2 + $0x60] sm:$0xff]
          %v3187 = vld [vmem:[#allocation2 + $0x68] sm:$0xff]
          %v3188 = vld [vmem:[#allocation2 + $0x70] sm:$0xff]
          %v3189 = vld [vmem:[#allocation2 + $0x78] sm:$0xff]
          %v3190 = vld [vmem:[%s5] sm:$0xff]
          %v3191 = vld [vmem:[%s5 + $0x8] sm:$0xff]
          %v3192 = vld [vmem:[%s5 + $0x10] sm:$0xff]
          %v3193 = vld [vmem:[%s5 + $0x18] sm:$0xff]
          %v3195 = vsel %vm1217, %v1613, 0
          %v3198 = vsel %vm1217, %v1717, 0
          %v3201 = vsel %vm1217, %v1821, 0
          %v3204 = vsel %vm1217, %v1925, 0
          %v3207 = vsel %vm1217, %v2029, 0
          %v3210 = vsel %vm1217, %v2133, 0
          %v3213 = vsel %vm1217, %v2237, 0
          %v3216 = vsel %vm1217, %v2341, 0
          %v3219 = vsel %vm1217, %v2445, 0
          %v3222 = vsel %vm1217, %v2549, 0
          %v3225 = vsel %vm1217, %v2653, 0
          %v3228 = vsel %vm1217, %v2757, 0
          %v3231 = vsel %vm1217, %v2861, 0
          %v3234 = vsel %vm1217, %v2965, 0
          %v3237 = vsel %vm1217, %v3069, 0
          %v3240 = vsel %vm1217, %v3173, 0
          %3242 = vmatprep.subr.mxu0 0.0
          %3243 = vmatpush1.msra.mxu0 %v3190
          %3244 = vmatprep.subr.mxu0 0.0
          %3245 = vmatpush1.msra.mxu0 %v3191
          %3246 = vmatprep.subr.mxu0 0.0
          %3247 = vmatpush1.msra.mxu0 %v3192
          %3248 = vmatprep.subr.mxu0 0.0
          %3249 = vmatpush1.msra.mxu0 %v3193
          %3250 = vmatprep.subr.mxu0 0.0
          %3251 = vmatpush1.msra.mxu0 0.0
          %3252 = vmatprep.subr.mxu0 0.0
          %3253 = vmatpush1.msra.mxu0 0.0
          %3254 = vmatprep.subr.mxu0 0.0
          %3255 = vmatpush1.msra.mxu0 0.0
          %3256 = vmatprep.subr.mxu0 0.0
          %3257 = vmatpush1.msra.mxu0 0.0
          %3258 = vmatprep.subr.mxu0 0.0
          %3259 = vmatpush1.msra.mxu0 0.0
          %3260 = vmatprep.subr.mxu0 0.0
          %3261 = vmatpush1.msra.mxu0 0.0
          %3262 = vmatprep.subr.mxu0 0.0
          %3263 = vmatpush1.msra.mxu0 0.0
          %3264 = vmatprep.subr.mxu0 0.0
          %3265 = vmatpush1.msra.mxu0 0.0
          %3266 = vmatprep.subr.mxu0 0.0
          %3267 = vmatpush1.msra.mxu0 0.0
          %3268 = vmatprep.subr.mxu0 0.0
          %3269 = vmatpush1.msra.mxu0 0.0
          %3270 = vmatprep.subr.mxu0 0.0
          %3271 = vmatpush1.msra.mxu0 0.0
          %3272 = vmatprep.subr.mxu0 0.0
          %3273 = vmatpush1.msra.mxu0 0.0
          %3274 = vmatprep.subr.mxu0 0.0
          %3275 = vmatpush1.msra.mxu0 0.0
          %3276 = vmatprep.subr.mxu0 0.0
          %3277 = vmatpush1.msra.mxu0 0.0
          %3278 = vmatprep.subr.mxu0 0.0
          %3279 = vmatpush1.msra.mxu0 0.0
          %3280 = vmatprep.subr.mxu0 0.0
          %3281 = vmatpush1.msra.mxu0 0.0
          %3282 = vmatprep.subr.mxu0 0.0
          %3283 = vmatpush1.msra.mxu0 0.0
          %3284 = vmatprep.subr.mxu0 0.0
          %3285 = vmatpush1.msra.mxu0 0.0
          %3286 = vmatprep.subr.mxu0 0.0
          %3287 = vmatpush1.msra.mxu0 0.0
          %3288 = vmatprep.subr.mxu0 0.0
          %3289 = vmatpush1.msra.mxu0 0.0
          %3290 = vmatprep.subr.mxu0 0.0
          %3291 = vmatpush1.msra.mxu0 0.0
          %3292 = vmatprep.subr.mxu0 0.0
          %3293 = vmatpush1.msra.mxu0 0.0
          %3294 = vmatprep.subr.mxu0 0.0
          %3295 = vmatpush1.msra.mxu0 0.0
          %3296 = vmatprep.subr.mxu0 0.0
          %3297 = vmatpush1.msra.mxu0 0.0
          %3298 = vmatprep.subr.mxu0 0.0
          %3299 = vmatpush1.msra.mxu0 0.0
          %3300 = vmatprep.subr.mxu0 0.0
          %3301 = vmatpush1.msra.mxu0 0.0
          %3302 = vmatprep.subr.mxu0 0.0
          %3303 = vmatpush1.msra.mxu0 0.0
          %3304 = vmatprep.subr.mxu0 0.0
          %3305 = vmatpush1.msra.mxu0 0.0
          %3306 = vmatprep.mubr.f32.mxu0 0.0
          %3307 = vmatmul.mubr.f32.gmra.mrb[0].mxu0 %v3195
          %v3308 = vpop.f32.mrb[0].mxu0
          %v3309 = vadd.f32 0.0, %v3308
          %v3310 = vpop.f32.mrb[0].mxu0
          %3311 = vmatprep.mubr.f32.mxu0 0.0
          %3312 = vmatmul.mubr.f32.gmra.mrb[0].mxu0 %v3198
          %v3313 = vpop.f32.mrb[0].mxu0
          %v3314 = vadd.f32 0.0, %v3313
          %v3315 = vpop.f32.mrb[0].mxu0
          %3316 = vmatprep.mubr.f32.mxu0 0.0
          %3317 = vmatmul.mubr.f32.gmra.mrb[0].mxu0 %v3201
          %v3318 = vpop.f32.mrb[0].mxu0
          %v3319 = vadd.f32 0.0, %v3318
          %v3320 = vpop.f32.mrb[0].mxu0
          %3321 = vmatprep.mubr.f32.mxu0 0.0
          %3322 = vmatmul.mubr.f32.gmra.mrb[0].mxu0 %v3204
          %v3323 = vpop.f32.mrb[0].mxu0
          %v3324 = vadd.f32 0.0, %v3323
          %v3325 = vpop.f32.mrb[0].mxu0
          %3326 = vmatprep.mubr.f32.mxu0 0.0
          %3327 = vmatmul.mubr.f32.gmra.mrb[0].mxu0 %v3207
          %v3328 = vpop.f32.mrb[0].mxu0
          %v3329 = vadd.f32 0.0, %v3328
          %v3330 = vpop.f32.mrb[0].mxu0
          %3331 = vmatprep.mubr.f32.mxu0 0.0
          %3332 = vmatmul.mubr.f32.gmra.mrb[0].mxu0 %v3210
          %v3333 = vpop.f32.mrb[0].mxu0
          %v3334 = vadd.f32 0.0, %v3333
          %v3335 = vpop.f32.mrb[0].mxu0
          %3336 = vmatprep.mubr.f32.mxu0 0.0
          %3337 = vmatmul.mubr.f32.gmra.mrb[0].mxu0 %v3213
          %v3338 = vpop.f32.mrb[0].mxu0
          %v3339 = vadd.f32 0.0, %v3338
          %v3340 = vpop.f32.mrb[0].mxu0
          %3341 = vmatprep.mubr.f32.mxu0 0.0
          %3342 = vmatmul.mubr.f32.gmra.mrb[0].mxu0 %v3216
          %v3343 = vpop.f32.mrb[0].mxu0
          %v3344 = vadd.f32 0.0, %v3343
          %v3345 = vpop.f32.mrb[0].mxu0
          %3346 = vmatprep.mubr.f32.mxu0 0.0
          %3347 = vmatmul.mubr.f32.gmra.mrb[0].mxu0 %v3219
          %v3348 = vpop.f32.mrb[0].mxu0
          %v3349 = vadd.f32 0.0, %v3348
          %v3350 = vpop.f32.mrb[0].mxu0
          %3351 = vmatprep.mubr.f32.mxu0 0.0
          %3352 = vmatmul.mubr.f32.gmra.mrb[0].mxu0 %v3222
          %v3353 = vpop.f32.mrb[0].mxu0
          %v3354 = vadd.f32 0.0, %v3353
          %v3355 = vpop.f32.mrb[0].mxu0
          %3356 = vmatprep.mubr.f32.mxu0 0.0
          %3357 = vmatmul.mubr.f32.gmra.mrb[0].mxu0 %v3225
          %v3358 = vpop.f32.mrb[0].mxu0
          %v3359 = vadd.f32 0.0, %v3358
          %v3360 = vpop.f32.mrb[0].mxu0
          %3361 = vmatprep.mubr.f32.mxu0 0.0
          %3362 = vmatmul.mubr.f32.gmra.mrb[0].mxu0 %v3228
          %v3363 = vpop.f32.mrb[0].mxu0
          %v3364 = vadd.f32 0.0, %v3363
          %v3365 = vpop.f32.mrb[0].mxu0
          %3366 = vmatprep.mubr.f32.mxu0 0.0
          %3367 = vmatmul.mubr.f32.gmra.mrb[0].mxu0 %v3231
          %v3368 = vpop.f32.mrb[0].mxu0
          %v3369 = vadd.f32 0.0, %v3368
          %v3370 = vpop.f32.mrb[0].mxu0
          %3371 = vmatprep.mubr.f32.mxu0 0.0
          %3372 = vmatmul.mubr.f32.gmra.mrb[0].mxu0 %v3234
          %v3373 = vpop.f32.mrb[0].mxu0
          %v3374 = vadd.f32 0.0, %v3373
          %v3375 = vpop.f32.mrb[0].mxu0
          %3376 = vmatprep.mubr.f32.mxu0 0.0
          %3377 = vmatmul.mubr.f32.gmra.mrb[0].mxu0 %v3237
          %v3378 = vpop.f32.mrb[0].mxu0
          %v3379 = vadd.f32 0.0, %v3378
          %v3380 = vpop.f32.mrb[0].mxu0
          %3381 = vmatprep.mubr.f32.mxu0 0.0
          %3382 = vmatmul.mubr.f32.gmra.mrb[0].mxu0 %v3240
          %v3383 = vpop.f32.mrb[0].mxu0
          %v3384 = vadd.f32 0.0, %v3383
          %v3385 = vpop.f32.mrb[0].mxu0
          %3386 = vdwg.mxu0
          %v3387 = vadd.f32 %v3174, %v3309
          %v3388 = vadd.f32 %v3175, %v3314
          %v3389 = vadd.f32 %v3176, %v3319
          %v3390 = vadd.f32 %v3177, %v3324
          %v3391 = vadd.f32 %v3178, %v3329
          %v3392 = vadd.f32 %v3179, %v3334
          %v3393 = vadd.f32 %v3180, %v3339
          %v3394 = vadd.f32 %v3181, %v3344
          %v3395 = vadd.f32 %v3182, %v3349
          %v3396 = vadd.f32 %v3183, %v3354
          %v3397 = vadd.f32 %v3184, %v3359
          %v3398 = vadd.f32 %v3185, %v3364
          %v3399 = vadd.f32 %v3186, %v3369
          %v3400 = vadd.f32 %v3187, %v3374
          %v3401 = vadd.f32 %v3188, %v3379
          %v3402 = vadd.f32 %v3189, %v3384
          %v3403 = vld [vmem:[%s7] sm:$0x1]
          %v3405 = vlaneseq
          %v3406 = vshrl.u32 %v3405, 7
          %v3407 = vsub.s32 0, %v3406
          %v3408 = vrot.slane %v3403, %v3407
          %v3410 = vadd.f32 %v3387, %v3408
          %v3411 = vadd.f32 %v3388, %v3408
          %v3412 = vadd.f32 %v3389, %v3408
          %v3413 = vadd.f32 %v3390, %v3408
          %v3414 = vadd.f32 %v3391, %v3408
          %v3415 = vadd.f32 %v3392, %v3408
          %v3416 = vadd.f32 %v3393, %v3408
          %v3417 = vadd.f32 %v3394, %v3408
          %v3418 = vadd.f32 %v3395, %v3408
          %v3419 = vadd.f32 %v3396, %v3408
          %v3420 = vadd.f32 %v3397, %v3408
          %v3421 = vadd.f32 %v3398, %v3408
          %v3422 = vadd.f32 %v3399, %v3408
          %v3423 = vadd.f32 %v3400, %v3408
          %v3424 = vadd.f32 %v3401, %v3408
          %v3425 = vadd.f32 %v3402, %v3408
          %v3426 = vmax.f32 %v3410, 0.0
          %v3427 = vmax.f32 %v3411, 0.0
          %v3428 = vmax.f32 %v3412, 0.0
          %v3429 = vmax.f32 %v3413, 0.0
          %v3430 = vmax.f32 %v3414, 0.0
          %v3431 = vmax.f32 %v3415, 0.0
          %v3432 = vmax.f32 %v3416, 0.0
          %v3433 = vmax.f32 %v3417, 0.0
          %v3434 = vmax.f32 %v3418, 0.0
          %v3435 = vmax.f32 %v3419, 0.0
          %v3436 = vmax.f32 %v3420, 0.0
          %v3437 = vmax.f32 %v3421, 0.0
          %v3438 = vmax.f32 %v3422, 0.0
          %v3439 = vmax.f32 %v3423, 0.0
          %v3440 = vmax.f32 %v3424, 0.0
          %v3441 = vmax.f32 %v3425, 0.0
          %v3442 = vld [vmem:[%s8] sm:$0xff]
          %v3443 = vld [vmem:[%s8 + $0x8] sm:$0xff]
          %v3444 = vld [vmem:[%s8 + $0x10] sm:$0xff]
          %v3445 = vld [vmem:[%s8 + $0x18] sm:$0xff]
          %v3446 = vld [vmem:[%s9] sm:$0x1]
          %v3448 = vlaneseq
          %v3449 = vshrl.u32 %v3448, 7
          %v3450 = vsub.s32 0, %v3449
          %v3451 = vrot.slane %v3446, %v3450
          %v3454 = vsel %vm1217, %v3426, 0
          %v3457 = vsel %vm1217, %v3427, 0
          %v3460 = vsel %vm1217, %v3428, 0
          %v3463 = vsel %vm1217, %v3429, 0
          %v3466 = vsel %vm1217, %v3430, 0
          %v3469 = vsel %vm1217, %v3431, 0
          %v3472 = vsel %vm1217, %v3432, 0
          %v3475 = vsel %vm1217, %v3433, 0
          %v3478 = vsel %vm1217, %v3434, 0
          %v3481 = vsel %vm1217, %v3435, 0
          %v3484 = vsel %vm1217, %v3436, 0
          %v3487 = vsel %vm1217, %v3437, 0
          %v3490 = vsel %vm1217, %v3438, 0
          %v3493 = vsel %vm1217, %v3439, 0
          %v3496 = vsel %vm1217, %v3440, 0
          %v3499 = vsel %vm1217, %v3441, 0
          %3501 = vmatprep.subr.mxu0 0.0
          %3502 = vmatpush1.msra.mxu0 %v3442
          %3503 = vmatprep.subr.mxu0 0.0
          %3504 = vmatpush1.msra.mxu0 %v3443
          %3505 = vmatprep.subr.mxu0 0.0
          %3506 = vmatpush1.msra.mxu0 %v3444
          %3507 = vmatprep.subr.mxu0 0.0
          %3508 = vmatpush1.msra.mxu0 %v3445
          %3509 = vmatprep.subr.mxu0 0.0
          %3510 = vmatpush1.msra.mxu0 0.0
          %3511 = vmatprep.subr.mxu0 0.0
          %3512 = vmatpush1.msra.mxu0 0.0
          %3513 = vmatprep.subr.mxu0 0.0
          %3514 = vmatpush1.msra.mxu0 0.0
          %3515 = vmatprep.subr.mxu0 0.0
          %3516 = vmatpush1.msra.mxu0 0.0
          %3517 = vmatprep.subr.mxu0 0.0
          %3518 = vmatpush1.msra.mxu0 0.0
          %3519 = vmatprep.subr.mxu0 0.0
          %3520 = vmatpush1.msra.mxu0 0.0
          %3521 = vmatprep.subr.mxu0 0.0
          %3522 = vmatpush1.msra.mxu0 0.0
          %3523 = vmatprep.subr.mxu0 0.0
          %3524 = vmatpush1.msra.mxu0 0.0
          %3525 = vmatprep.subr.mxu0 0.0
          %3526 = vmatpush1.msra.mxu0 0.0
          %3527 = vmatprep.subr.mxu0 0.0
          %3528 = vmatpush1.msra.mxu0 0.0
          %3529 = vmatprep.subr.mxu0 0.0
          %3530 = vmatpush1.msra.mxu0 0.0
          %3531 = vmatprep.subr.mxu0 0.0
          %3532 = vmatpush1.msra.mxu0 0.0
          %3533 = vmatprep.subr.mxu0 0.0
          %3534 = vmatpush1.msra.mxu0 0.0
          %3535 = vmatprep.subr.mxu0 0.0
          %3536 = vmatpush1.msra.mxu0 0.0
          %3537 = vmatprep.subr.mxu0 0.0
          %3538 = vmatpush1.msra.mxu0 0.0
          %3539 = vmatprep.subr.mxu0 0.0
          %3540 = vmatpush1.msra.mxu0 0.0
          %3541 = vmatprep.subr.mxu0 0.0
          %3542 = vmatpush1.msra.mxu0 0.0
          %3543 = vmatprep.subr.mxu0 0.0
          %3544 = vmatpush1.msra.mxu0 0.0
          %3545 = vmatprep.subr.mxu0 0.0
          %3546 = vmatpush1.msra.mxu0 0.0
          %3547 = vmatprep.subr.mxu0 0.0
          %3548 = vmatpush1.msra.mxu0 0.0
          %3549 = vmatprep.subr.mxu0 0.0
          %3550 = vmatpush1.msra.mxu0 0.0
          %3551 = vmatprep.subr.mxu0 0.0
          %3552 = vmatpush1.msra.mxu0 0.0
          %3553 = vmatprep.subr.mxu0 0.0
          %3554 = vmatpush1.msra.mxu0 0.0
          %3555 = vmatprep.subr.mxu0 0.0
          %3556 = vmatpush1.msra.mxu0 0.0
          %3557 = vmatprep.subr.mxu0 0.0
          %3558 = vmatpush1.msra.mxu0 0.0
          %3559 = vmatprep.subr.mxu0 0.0
          %3560 = vmatpush1.msra.mxu0 0.0
          %3561 = vmatprep.subr.mxu0 0.0
          %3562 = vmatpush1.msra.mxu0 0.0
          %3563 = vmatprep.subr.mxu0 0.0
          %3564 = vmatpush1.msra.mxu0 0.0
          %3565 = vmatprep.mubr.f32.mxu0 0.0
          %3566 = vmatmul.mubr.f32.gmra.mrb[0].mxu0 %v3454
          %v3567 = vpop.f32.mrb[0].mxu0
          %v3568 = vadd.f32 %v3451, %v3567
          %v3569 = vpop.f32.mrb[0].mxu0
          %3570 = vmatprep.mubr.f32.mxu0 0.0
          %3571 = vmatmul.mubr.f32.gmra.mrb[0].mxu0 %v3457
          %v3572 = vpop.f32.mrb[0].mxu0
          %v3573 = vadd.f32 %v3451, %v3572
          %v3574 = vpop.f32.mrb[0].mxu0
          %3575 = vmatprep.mubr.f32.mxu0 0.0
          %3576 = vmatmul.mubr.f32.gmra.mrb[0].mxu0 %v3460
          %v3577 = vpop.f32.mrb[0].mxu0
          %v3578 = vadd.f32 %v3451, %v3577
          %v3579 = vpop.f32.mrb[0].mxu0
          %3580 = vmatprep.mubr.f32.mxu0 0.0
          %3581 = vmatmul.mubr.f32.gmra.mrb[0].mxu0 %v3463
          %v3582 = vpop.f32.mrb[0].mxu0
          %v3583 = vadd.f32 %v3451, %v3582
          %v3584 = vpop.f32.mrb[0].mxu0
          %3585 = vmatprep.mubr.f32.mxu0 0.0
          %3586 = vmatmul.mubr.f32.gmra.mrb[0].mxu0 %v3466
          %v3587 = vpop.f32.mrb[0].mxu0
          %v3588 = vadd.f32 %v3451, %v3587
          %v3589 = vpop.f32.mrb[0].mxu0
          %3590 = vmatprep.mubr.f32.mxu0 0.0
          %3591 = vmatmul.mubr.f32.gmra.mrb[0].mxu0 %v3469
          %v3592 = vpop.f32.mrb[0].mxu0
          %v3593 = vadd.f32 %v3451, %v3592
          %v3594 = vpop.f32.mrb[0].mxu0
          %3595 = vmatprep.mubr.f32.mxu0 0.0
          %3596 = vmatmul.mubr.f32.gmra.mrb[0].mxu0 %v3472
          %v3597 = vpop.f32.mrb[0].mxu0
          %v3598 = vadd.f32 %v3451, %v3597
          %v3599 = vpop.f32.mrb[0].mxu0
          %3600 = vmatprep.mubr.f32.mxu0 0.0
          %3601 = vmatmul.mubr.f32.gmra.mrb[0].mxu0 %v3475
          %v3602 = vpop.f32.mrb[0].mxu0
          %v3603 = vadd.f32 %v3451, %v3602
          %v3604 = vpop.f32.mrb[0].mxu0
          %3605 = vmatprep.mubr.f32.mxu0 0.0
          %3606 = vmatmul.mubr.f32.gmra.mrb[0].mxu0 %v3478
          %v3607 = vpop.f32.mrb[0].mxu0
          %v3608 = vadd.f32 %v3451, %v3607
          %v3609 = vpop.f32.mrb[0].mxu0
          %3610 = vmatprep.mubr.f32.mxu0 0.0
          %3611 = vmatmul.mubr.f32.gmra.mrb[0].mxu0 %v3481
          %v3612 = vpop.f32.mrb[0].mxu0
          %v3613 = vadd.f32 %v3451, %v3612
          %v3614 = vpop.f32.mrb[0].mxu0
          %3615 = vmatprep.mubr.f32.mxu0 0.0
          %3616 = vmatmul.mubr.f32.gmra.mrb[0].mxu0 %v3484
          %v3617 = vpop.f32.mrb[0].mxu0
          %v3618 = vadd.f32 %v3451, %v3617
          %v3619 = vpop.f32.mrb[0].mxu0
          %3620 = vmatprep.mubr.f32.mxu0 0.0
          %3621 = vmatmul.mubr.f32.gmra.mrb[0].mxu0 %v3487
          %v3622 = vpop.f32.mrb[0].mxu0
          %v3623 = vadd.f32 %v3451, %v3622
          %v3624 = vpop.f32.mrb[0].mxu0
          %3625 = vmatprep.mubr.f32.mxu0 0.0
          %3626 = vmatmul.mubr.f32.gmra.mrb[0].mxu0 %v3490
          %v3627 = vpop.f32.mrb[0].mxu0
          %v3628 = vadd.f32 %v3451, %v3627
          %v3629 = vpop.f32.mrb[0].mxu0
          %3630 = vmatprep.mubr.f32.mxu0 0.0
          %3631 = vmatmul.mubr.f32.gmra.mrb[0].mxu0 %v3493
          %v3632 = vpop.f32.mrb[0].mxu0
          %v3633 = vadd.f32 %v3451, %v3632
          %v3634 = vpop.f32.mrb[0].mxu0
          %3635 = vmatprep.mubr.f32.mxu0 0.0
          %3636 = vmatmul.mubr.f32.gmra.mrb[0].mxu0 %v3496
          %v3637 = vpop.f32.mrb[0].mxu0
          %v3638 = vadd.f32 %v3451, %v3637
          %v3639 = vpop.f32.mrb[0].mxu0
          %3640 = vmatprep.mubr.f32.mxu0 0.0
          %3641 = vmatmul.mubr.f32.gmra.mrb[0].mxu0 %v3499
          %v3642 = vpop.f32.mrb[0].mxu0
          %v3643 = vadd.f32 %v3451, %v3642
          %v3644 = vpop.f32.mrb[0].mxu0
          %3645 = vdwg.mxu0
          %v3646 = vmax.f32 %v3568, 0.0
          %v3647 = vmax.f32 %v3573, 0.0
          %v3648 = vmax.f32 %v3578, 0.0
          %v3649 = vmax.f32 %v3583, 0.0
          %v3650 = vmax.f32 %v3588, 0.0
          %v3651 = vmax.f32 %v3593, 0.0
          %v3652 = vmax.f32 %v3598, 0.0
          %v3653 = vmax.f32 %v3603, 0.0
          %v3654 = vmax.f32 %v3608, 0.0
          %v3655 = vmax.f32 %v3613, 0.0
          %v3656 = vmax.f32 %v3618, 0.0
          %v3657 = vmax.f32 %v3623, 0.0
          %v3658 = vmax.f32 %v3628, 0.0
          %v3659 = vmax.f32 %v3633, 0.0
          %v3660 = vmax.f32 %v3638, 0.0
          %v3661 = vmax.f32 %v3643, 0.0
          %v3662 = vld [vmem:[%s10] sm:$0x1]
          %v3663 = vld [vmem:[#allocation3] sm:$0x1]
          %3665 = vset.pattern.permute.xlu0 0
          %3666 = vperm.xlu0 %3665, %v3663
          %v3667 = vpop.permute.xlu0 %3666
          %v3669 = vlaneseq
          %v3670 = vshrl.u32 %v3669, 7
          %v3671 = vsub.s32 0, %v3670
          %v3672 = vrot.slane %v3667, %v3671
          %v3674 = vsel %vm1217, %v3662, 0
          %v3677 = vsel %vm1217, %v3646, 0
          %v3680 = vsel %vm1217, %v3647, 0
          %v3683 = vsel %vm1217, %v3648, 0
          %v3686 = vsel %vm1217, %v3649, 0
          %v3689 = vsel %vm1217, %v3650, 0
          %v3692 = vsel %vm1217, %v3651, 0
          %v3695 = vsel %vm1217, %v3652, 0
          %v3698 = vsel %vm1217, %v3653, 0
          %v3701 = vsel %vm1217, %v3654, 0
          %v3704 = vsel %vm1217, %v3655, 0
          %v3707 = vsel %vm1217, %v3656, 0
          %v3710 = vsel %vm1217, %v3657, 0
          %v3713 = vsel %vm1217, %v3658, 0
          %v3716 = vsel %vm1217, %v3659, 0
          %v3719 = vsel %vm1217, %v3660, 0
          %v3722 = vsel %vm1217, %v3661, 0
          %3724 = vmatprep.subr.mxu0 0.0
          %3725 = vmatpush1.xpose.msra.mxu0 %v3677
          %3726 = vmatprep.subr.mxu0 0.0
          %3727 = vmatpush1.xpose.msra.mxu0 %v3680
          %3728 = vmatprep.subr.mxu0 0.0
          %3729 = vmatpush1.xpose.msra.mxu0 %v3683
          %3730 = vmatprep.subr.mxu0 0.0
          %3731 = vmatpush1.xpose.msra.mxu0 %v3686
          %3732 = vmatprep.subr.mxu0 0.0
          %3733 = vmatpush1.xpose.msra.mxu0 %v3689
          %3734 = vmatprep.subr.mxu0 0.0
          %3735 = vmatpush1.xpose.msra.mxu0 %v3692
          %3736 = vmatprep.subr.mxu0 0.0
          %3737 = vmatpush1.xpose.msra.mxu0 %v3695
          %3738 = vmatprep.subr.mxu0 0.0
          %3739 = vmatpush1.xpose.msra.mxu0 %v3698
          %3740 = vmatprep.subr.mxu0 0.0
          %3741 = vmatpush1.xpose.msra.mxu0 %v3701
          %3742 = vmatprep.subr.mxu0 0.0
          %3743 = vmatpush1.xpose.msra.mxu0 %v3704
          %3744 = vmatprep.subr.mxu0 0.0
          %3745 = vmatpush1.xpose.msra.mxu0 %v3707
          %3746 = vmatprep.subr.mxu0 0.0
          %3747 = vmatpush1.xpose.msra.mxu0 %v3710
          %3748 = vmatprep.subr.mxu0 0.0
          %3749 = vmatpush1.xpose.msra.mxu0 %v3713
          %3750 = vmatprep.subr.mxu0 0.0
          %3751 = vmatpush1.xpose.msra.mxu0 %v3716
          %3752 = vmatprep.subr.mxu0 0.0
          %3753 = vmatpush1.xpose.msra.mxu0 %v3719
          %3754 = vmatprep.subr.mxu0 0.0
          %3755 = vmatpush1.xpose.msra.mxu0 %v3722
          %3756 = vmatprep.subr.mxu0 0.0
          %3757 = vmatpush1.xpose.msra.mxu0 0.0
          %3758 = vmatprep.subr.mxu0 0.0
          %3759 = vmatpush1.xpose.msra.mxu0 0.0
          %3760 = vmatprep.subr.mxu0 0.0
          %3761 = vmatpush1.xpose.msra.mxu0 0.0
          %3762 = vmatprep.subr.mxu0 0.0
          %3763 = vmatpush1.xpose.msra.mxu0 0.0
          %3764 = vmatprep.subr.mxu0 0.0
          %3765 = vmatpush1.xpose.msra.mxu0 0.0
          %3766 = vmatprep.subr.mxu0 0.0
          %3767 = vmatpush1.xpose.msra.mxu0 0.0
          %3768 = vmatprep.subr.mxu0 0.0
          %3769 = vmatpush1.xpose.msra.mxu0 0.0
          %3770 = vmatprep.subr.mxu0 0.0
          %3771 = vmatpush1.xpose.msra.mxu0 0.0
          %3772 = vmatprep.subr.mxu0 0.0
          %3773 = vmatpush1.xpose.msra.mxu0 0.0
          %3774 = vmatprep.subr.mxu0 0.0
          %3775 = vmatpush1.xpose.msra.mxu0 0.0
          %3776 = vmatprep.subr.mxu0 0.0
          %3777 = vmatpush1.xpose.msra.mxu0 0.0
          %3778 = vmatprep.subr.mxu0 0.0
          %3779 = vmatpush1.xpose.msra.mxu0 0.0
          %3780 = vmatprep.subr.mxu0 0.0
          %3781 = vmatpush1.xpose.msra.mxu0 0.0
          %3782 = vmatprep.subr.mxu0 0.0
          %3783 = vmatpush1.xpose.msra.mxu0 0.0
          %3784 = vmatprep.subr.mxu0 0.0
          %3785 = vmatpush1.xpose.msra.mxu0 0.0
          %3786 = vmatprep.subr.mxu0 0.0
          %3787 = vmatpush1.xpose.msra.mxu0 0.0
          %3788 = vmatprep.mubr.f32.mxu0 0.0
          %3789 = vmatmul.mubr.f32.gmra.mrb[0].mxu0 %v3674
          %v3790 = vpop.f32.mrb[0].mxu0
          %v3791 = vadd.f32 %v3672, %v3790
          %v3792 = vpop.f32.mrb[0].mxu0
          %3793 = vdwg.mxu0
          %3794 = vst [vmem:[%s489] sm:$0x1] %v3791
        $region76: #{tpu_custom_call.1} parent=67 // pred_fallthru
          _
        %s3795 = sand.u32 %s333, 1
        %s3796 = scalar_lea.sflag [#allocation5], %s3795
        %s3797 = sand.u32 %s333, 1
        %s3798 = scalar_lea.vmem [#allocation4], %s3797
        // Predicated region
        $region77: #{tpu_custom_call.1} parent=67 // pred_check
          %p3799 = pneg %p343
        $region78: #{tpu_custom_call.1} parent=67 // pred_check_branch
          %3801 = sbr.rel (%p3799) target = $region80
        $region79: #{tpu_custom_call.1} parent=67 // pred_region
          %s3803 = ssub.s32 16, 16
          %3804 = vsyncadd %s3796, %s3803
          %s3805 = sadd.s32 %s34, %s33
          %s3806 = smul.addr %s3805, 16
          %s3807 = scalar_lea.hbm %s12, %s3806
          %s3809 = sshll.u32 %s3798, 4
          %s3810 = int_to_ptr.vmem [resolvable:$true] %s3809
          %3812 = dma.vmem_to_hbm [thread:$0]  %s3810, 16, %s3807, %s3796
        $region80: #{tpu_custom_call.1} parent=67 // pred_fallthru
          _
      $region68: #{tpu_custom_call.1} parent=5 // pred_fallthru
        _
      %p3813 = scmp.le.s32.totalorder 2, %s23
      // Predicated region
      $region81: #{tpu_custom_call.1} parent=5 // pred_check
        %p3814 = pneg %p3813
      $region82: #{tpu_custom_call.1} parent=5 // pred_check_branch
        %3816 = sbr.rel (%p3814) target = $region84
      $region83: #{tpu_custom_call.1} parent=5 // pred_region
        %s3817 = ssub.s32 %s23, 2
        // Predicated region
        $region85: #{tpu_custom_call.1} parent=83 // pred_check
          %p3818 = pneg %p349
        $region86: #{tpu_custom_call.1} parent=83 // pred_check_branch
          %3820 = sbr.rel (%p3818) target = $region88
        $region87: #{tpu_custom_call.1} parent=83 // pred_region
          %s3821 = sand.u32 %s334, 1
          %s3822 = scalar_lea.sflag [#allocation5], %s3821
          %s3823 = sand.u32 %s334, 1
          %s3824 = scalar_lea.vmem [#allocation4], %s3823
          %3825 = dma.done %s3822, 16
        $region88: #{tpu_custom_call.1} parent=83 // pred_fallthru
          _
      $region84: #{tpu_custom_call.1} parent=5 // pred_fallthru
        _
    $region6: #{tpu_custom_call.1} parent=1 // loop_footer
      %s27 = sadd.s32 1, %s23
    $region7: #{tpu_custom_call.1} parent=1 // loop_footer_branch
      %22 = sbr.rel target = $region3
    $region8: #{tpu_custom_call.1} parent=1 // loop_exit
      _
    %3826 = vsyncpa [#allocation5], 1
    %s3827 = scalar_lea.sflag [#allocation5], 1
    %3828 = vsyncpa %s3827, 1

</llo_original>
